<compile_context>
chip_gen: v7x
topology: tpu7x:2x2x1
jax: 0.10.0
libtpu: 0.0.40
codegen_flags: <defaults>
</compile_context>

<pallas_src>
import jax
import jax.numpy as jnp
import numpy as np
from jax import lax
from jax.experimental import pallas as pl
from jax.experimental.pallas import tpu as pltpu

INPUT_DIM = 16
QUERY_DIM = 32
VALUE_DIM = 32
HEADS = 8
M_INDUCE = 4
LN_EPS = 1e-5  # torch.nn.LayerNorm default

# (H, m, k) x (H, k, n) -> (H, m, n): head-batched matmul dimension numbers.
_BATCHED_MM = (((2,), (1,)), ((0,), (0,)))


def _layernorm(v, gamma, beta):
    mu = jnp.mean(v, axis=-1, keepdims=True)
    var = jnp.mean((v - mu) ** 2, axis=-1, keepdims=True)
    return (v - mu) * lax.rsqrt(var + LN_EPS) * gamma + beta


def _mab(xq, ykv, idx, wqkv_ref, bqkv_ref, wo_ref, wfc_ref, vecs_ref):
    """One MAB: lnorm2(h + fc(h)), h = lnorm1(xq + MHA(xq, ykv)).  All in VMEM/registers.

    idx is a static Python int selecting the parameter set (0 = mab1, 1 = mab2).
    All attention math is head-batched dot_generals: no per-head lane slices.
    """
    nq, nk = xq.shape[0], ykv.shape[0]
    scale = 1.0 / (QUERY_DIM ** 0.5)
    base = 3 * idx  # row offset into the (6, H, ...) projection slabs

    # Head broadcasts hoisted once per MAB (cheap vreg replication, not in a loop).
    xq_b = jnp.broadcast_to(xq[None], (HEADS, nq, INPUT_DIM))
    ykv_b = jnp.broadcast_to(ykv[None], (HEADS, nk, INPUT_DIM))

    # Per-head projections: 3 head-batched matmuls, one broadcast bias add each.
    q = lax.dot_general(xq_b, wqkv_ref[base + 0], _BATCHED_MM,
                        preferred_element_type=jnp.float32) + bqkv_ref[base + 0]
    k = lax.dot_general(ykv_b, wqkv_ref[base + 1], _BATCHED_MM,
                        preferred_element_type=jnp.float32) + bqkv_ref[base + 1]
    v = lax.dot_general(ykv_b, wqkv_ref[base + 2], _BATCHED_MM,
                        preferred_element_type=jnp.float32) + bqkv_ref[base + 2]

    # scores (H, nq, nk) = q . k^T / sqrt(query_dim); softmax over keys (exact division).
    s = lax.dot_general(q, k, (((2,), (2,)), ((0,), (0,))),
                        preferred_element_type=jnp.float32) * scale
    s = s - jnp.max(s, axis=-1, keepdims=True)
    p = jnp.exp(s)
    p = p / jnp.sum(p, axis=-1, keepdims=True)

    # Head outputs + folded output projection:  sum_h (p_h @ v_h) @ wo_h == cat_h(.) @ wo.
    o = lax.dot_general(p, v, (((2,), (1,)), ((0,), (0,))),
                        preferred_element_type=jnp.float32)             # (H, nq, 32)
    ho = lax.dot_general(o, wo_ref[idx], _BATCHED_MM,
                         preferred_element_type=jnp.float32)            # (H, nq, 16)

    vec = vecs_ref[idx]                        # (8, 16): rows = bo, bfc, g1, be1, g2, be2, pad, pad
    mha = jnp.sum(ho, axis=0) + vec[0:1]       # (nq, 16)

    h1 = _layernorm(xq + mha, vec[2:3], vec[3:4])
    post = jnp.dot(h1, wfc_ref[idx], preferred_element_type=jnp.float32) + vec[1:2]
    return _layernorm(h1 + post, vec[4:5], vec[5:6])


def isab_kernel(x_ref, ind_ref, wqkv_ref, bqkv_ref, wo_ref, wfc_ref, vecs_ref, out_ref):
    x = x_ref[0]          # (N, 16)         -- current set (per grid step)
    ind = ind_ref[...]    # (M_INDUCE, 16)  -- resident across the grid
    # Fused ISAB: `compressed` never leaves VMEM.
    compressed = _mab(ind, x, 0, wqkv_ref, bqkv_ref, wo_ref, wfc_ref, vecs_ref)
    out_ref[0] = _mab(x, compressed, 1, wqkv_ref, bqkv_ref, wo_ref, wfc_ref, vecs_ref)


# ----------------------------- host-side packing (once, at init) ------------------------------

def pack_isab_params(p1, p2):
    """Pack both MABs' parameters into 5 slabs.  Call ONCE at init (hoisted out of the
    per-call path); pass the returned slabs directly to isab_forward."""
    def proj_w(p): return [p["wq"], p["wk"], p["wv"]]
    def proj_b(p): return [p["bq"], p["bk"], p["bv"]]

    def vec(p):
        return jnp.concatenate(
            [p["bo"], p["bfc"], p["g1"], p["be1"], p["g2"], p["be2"],
             jnp.zeros((2, INPUT_DIM), jnp.float32)], axis=0)            # (8, 16)

    wqkv = jnp.stack(proj_w(p1) + proj_w(p2))                            # (6, H, 16, 32)
    bqkv = jnp.stack(proj_b(p1) + proj_b(p2))                            # (6, H, 1, 32)
    wo = jnp.stack([p1["wo"].reshape(HEADS, VALUE_DIM, INPUT_DIM),
                    p2["wo"].reshape(HEADS, VALUE_DIM, INPUT_DIM)])      # (2, H, 32, 16)
    wfc = jnp.stack([p1["wfc"], p2["wfc"]])                              # (2, 16, 16)
    vecs = jnp.stack([vec(p1), vec(p2)])                                 # (2, 8, 16)
    return wqkv, bqkv, wo, wfc, vecs


@jax.jit
def isab_forward(x, inducing_points, wqkv, bqkv, wo, wfc, vecs):
    """x: (B, N, 16) batch of sets (or (N, 16) single set); params already packed."""
    squeeze = x.ndim == 2
    if squeeze:
        x = x[None]
    B, N, D = x.shape

    def resident(arr):  # whole-array block + constant index_map -> stays in VMEM
        r = arr.ndim
        return pl.BlockSpec(arr.shape, lambda b: (0,) * r)

    out = pl.pallas_call(
        isab_kernel,
        out_shape=jax.ShapeDtypeStruct((B, N, D), jnp.float32),
        grid=(B,),
        in_specs=[
            pl.BlockSpec((1, N, D), lambda b: (b, 0, 0)),   # per-set input tile
            resident(inducing_points),
            resident(wqkv), resident(bqkv), resident(wo), resident(wfc), resident(vecs),
        ],
        out_specs=pl.BlockSpec((1, N, D), lambda b: (b, 0, 0)),
        compiler_params=pltpu.CompilerParams(
            dimension_semantics=("parallel",)),  # shard sets across both TCs on v7x
    )(x, inducing_points, wqkv, bqkv, wo, wfc, vecs)
    return out[0] if squeeze else out


# ----------------------- deterministic parameter setup ------------------------

def _init_linear(key, fan_in, fan_out):
    kw, kb = jax.random.split(key)
    bound = 1.0 / np.sqrt(fan_in)
    w = jax.random.uniform(kw, (fan_in, fan_out), jnp.float32, -bound, bound)
    b = jax.random.uniform(kb, (1, fan_out), jnp.float32, -bound, bound)
    return w, b


def init_mab_params(key):
    keys = jax.random.split(key, 3 * HEADS + 2)
    wq, bq, wk, bk, wv, bv = [], [], [], [], [], []
    for h in range(HEADS):
        w, b = _init_linear(keys[3 * h + 0], INPUT_DIM, QUERY_DIM); wq.append(w); bq.append(b)
        w, b = _init_linear(keys[3 * h + 1], INPUT_DIM, QUERY_DIM); wk.append(w); bk.append(b)
        w, b = _init_linear(keys[3 * h + 2], INPUT_DIM, VALUE_DIM); wv.append(w); bv.append(b)
    wo, bo = _init_linear(keys[-2], HEADS * VALUE_DIM, INPUT_DIM)
    wfc, bfc = _init_linear(keys[-1], INPUT_DIM, INPUT_DIM)
    return dict(
        wq=jnp.stack(wq), bq=jnp.stack(bq),      # (H, 16, 32), (H, 1, 32)
        wk=jnp.stack(wk), bk=jnp.stack(bk),
        wv=jnp.stack(wv), bv=jnp.stack(bv),
        wo=wo, bo=bo,                            # (256, 16), (1, 16)
        wfc=wfc, bfc=bfc,                        # (16, 16), (1, 16)
        g1=jnp.ones((1, INPUT_DIM), jnp.float32), be1=jnp.zeros((1, INPUT_DIM), jnp.float32),
        g2=jnp.ones((1, INPUT_DIM), jnp.float32), be2=jnp.zeros((1, INPUT_DIM), jnp.float32),
    )


# ----------------------------- pure-JAX reference -----------------------------

def mab_ref(x, y, p):
    outs = []
    for h in range(HEADS):
        q = x @ p["wq"][h] + p["bq"][h]
        k = y @ p["wk"][h] + p["bk"][h]
        v = y @ p["wv"][h] + p["bv"][h]
        s = (q @ k.T) / np.sqrt(QUERY_DIM)
        outs.append(jax.nn.softmax(s, axis=-1) @ v)
    cat = jnp.concatenate(outs, axis=-1)
    mha = cat @ p["wo"] + p["bo"]

    def ln(v, g, b):
        mu = v.mean(-1, keepdims=True)
        var = ((v - mu) ** 2).mean(-1, keepdims=True)
        return (v - mu) / jnp.sqrt(var + LN_EPS) * g + b

    h1 = ln(x + mha, p["g1"], p["be1"])
    return ln(h1 + h1 @ p["wfc"] + p["bfc"], p["g2"], p["be2"])


if __name__ == "__main__":
    key = jax.random.PRNGKey(0)
    kx, ki, k1, k2 = jax.random.split(key, 4)

    B, N = 4, 8                              # B sets, N elements per set
    x = jax.random.normal(kx, (B, N, INPUT_DIM), jnp.float32)
    inducing = jax.random.normal(ki, (M_INDUCE, INPUT_DIM), jnp.float32)
    p1 = init_mab_params(k1)
    p2 = init_mab_params(k2)

    packed = pack_isab_params(p1, p2)        # one-time packing, outside the call path

    out = isab_forward(x, inducing, *packed)
    out = jax.block_until_ready(out)
    assert out.shape == (B, N, INPUT_DIM)

    ref = jnp.stack([mab_ref(x[b], mab_ref(inducing, x[b], p1), p2) for b in range(B)])
    assert np.allclose(np.asarray(out), np.asarray(ref), rtol=1e-4, atol=1e-4), \
        "Pallas ISAB output mismatch vs JAX reference"
    print("KERNEL_OK")
</pallas_src>

<mosaic_0001>
module attributes {stable_mosaic.version = 11 : i64} {
  func.func @isab_kernel(%arg0: i32, %arg1: memref<1x8x16xf32, #tpu.memory_space<vmem>>, %arg2: memref<4x16xf32, #tpu.memory_space<vmem>>, %arg3: memref<6x8x16x32xf32, #tpu.memory_space<vmem>>, %arg4: memref<6x8x1x32xf32, #tpu.memory_space<vmem>>, %arg5: memref<2x8x32x16xf32, #tpu.memory_space<vmem>>, %arg6: memref<2x16x16xf32, #tpu.memory_space<vmem>>, %arg7: memref<2x8x16xf32, #tpu.memory_space<vmem>>, %arg8: memref<1x8x16xf32, #tpu.memory_space<vmem>>) attributes {dimension_semantics = [#tpu.dimension_semantics<parallel>], iteration_bounds = array<i64: 4>, scalar_prefetch = 0 : i64, scratch_operands = 0 : i64, tpu.core_type = #tpu.core_type<tc>, window_params = [{transform_indices = @transform_0, window_bounds = array<i64: 1, 8, 16>}, {pipeline_mode = #tpu.pipeline_mode<synchronous>, transform_indices = @transform_1, window_bounds = array<i64: 4, 16>}, {pipeline_mode = #tpu.pipeline_mode<synchronous>, transform_indices = @transform_2, window_bounds = array<i64: 6, 8, 16, 32>}, {pipeline_mode = #tpu.pipeline_mode<synchronous>, transform_indices = @transform_3, window_bounds = array<i64: 6, 8, 1, 32>}, {pipeline_mode = #tpu.pipeline_mode<synchronous>, transform_indices = @transform_4, window_bounds = array<i64: 2, 8, 32, 16>}, {pipeline_mode = #tpu.pipeline_mode<synchronous>, transform_indices = @transform_5, window_bounds = array<i64: 2, 16, 16>}, {pipeline_mode = #tpu.pipeline_mode<synchronous>, transform_indices = @transform_6, window_bounds = array<i64: 2, 8, 16>}, {transform_indices = @transform_7, window_bounds = array<i64: 1, 8, 16>}]} {
    %c0 = arith.constant 0 : index
    %c0_0 = arith.constant 0 : index
    %c0_1 = arith.constant 0 : index
    %0 = vector.load %arg1[%c0, %c0_0, %c0_1] : memref<1x8x16xf32, #tpu.memory_space<vmem>>, vector<1x8x16xf32>
    %1 = vector.shape_cast %0 : vector<1x8x16xf32> to vector<8x16xf32>
    %c0_2 = arith.constant 0 : index
    %c0_3 = arith.constant 0 : index
    %2 = vector.load %arg2[%c0_2, %c0_3] : memref<4x16xf32, #tpu.memory_space<vmem>>, vector<4x16xf32>
    %3 = vector.shape_cast %2 : vector<4x16xf32> to vector<1x4x16xf32>
    %4 = vector.shape_cast %3 : vector<1x4x16xf32> to vector<1x4x16xf32>
    %5 = vector.broadcast %4 : vector<1x4x16xf32> to vector<8x4x16xf32>
    %6 = vector.shape_cast %1 : vector<8x16xf32> to vector<1x8x16xf32>
    %7 = vector.shape_cast %6 : vector<1x8x16xf32> to vector<1x8x16xf32>
    %8 = vector.broadcast %7 : vector<1x8x16xf32> to vector<8x8x16xf32>
    %c0_4 = arith.constant 0 : index
    %c0_5 = arith.constant 0 : index
    %c0_6 = arith.constant 0 : index
    %c0_7 = arith.constant 0 : index
    %9 = vector.load %arg3[%c0_4, %c0_5, %c0_6, %c0_7] : memref<6x8x16x32xf32, #tpu.memory_space<vmem>>, vector<1x8x16x32xf32>
    %10 = vector.shape_cast %9 : vector<1x8x16x32xf32> to vector<8x16x32xf32>
    %cst = arith.constant dense<0.000000e+00> : vector<8x4x32xf32>
    %11 = tpu.matmul %5, %10, %cst {dimension_numbers = #tpu.dot_dimension_numbers<[2], [1], [1], [2], [0, 0, 0, 1, 1, 2], [0], [0]>} : vector<8x4x16xf32>, vector<8x16x32xf32>, vector<8x4x32xf32> -> vector<8x4x32xf32>
    %c0_8 = arith.constant 0 : index
    %c0_9 = arith.constant 0 : index
    %c0_10 = arith.constant 0 : index
    %c0_11 = arith.constant 0 : index
    %12 = vector.load %arg4[%c0_8, %c0_9, %c0_10, %c0_11] : memref<6x8x1x32xf32, #tpu.memory_space<vmem>>, vector<1x8x1x32xf32>
    %13 = vector.shape_cast %12 : vector<1x8x1x32xf32> to vector<8x1x32xf32>
    %14 = vector.broadcast %13 : vector<8x1x32xf32> to vector<8x4x32xf32>
    %15 = arith.addf %11, %14 : vector<8x4x32xf32>
    %c1 = arith.constant 1 : index
    %c0_12 = arith.constant 0 : index
    %c0_13 = arith.constant 0 : index
    %c0_14 = arith.constant 0 : index
    %16 = vector.load %arg3[%c1, %c0_12, %c0_13, %c0_14] : memref<6x8x16x32xf32, #tpu.memory_space<vmem>>, vector<1x8x16x32xf32>
    %17 = vector.shape_cast %16 : vector<1x8x16x32xf32> to vector<8x16x32xf32>
    %cst_15 = arith.constant dense<0.000000e+00> : vector<8x8x32xf32>
    %18 = tpu.matmul %8, %17, %cst_15 {dimension_numbers = #tpu.dot_dimension_numbers<[2], [1], [1], [2], [0, 0, 0, 1, 1, 2], [0], [0]>} : vector<8x8x16xf32>, vector<8x16x32xf32>, vector<8x8x32xf32> -> vector<8x8x32xf32>
    %c1_16 = arith.constant 1 : index
    %c0_17 = arith.constant 0 : index
    %c0_18 = arith.constant 0 : index
    %c0_19 = arith.constant 0 : index
    %19 = vector.load %arg4[%c1_16, %c0_17, %c0_18, %c0_19] : memref<6x8x1x32xf32, #tpu.memory_space<vmem>>, vector<1x8x1x32xf32>
    %20 = vector.shape_cast %19 : vector<1x8x1x32xf32> to vector<8x1x32xf32>
    %21 = vector.broadcast %20 : vector<8x1x32xf32> to vector<8x8x32xf32>
    %22 = arith.addf %18, %21 : vector<8x8x32xf32>
    %c2 = arith.constant 2 : index
    %c0_20 = arith.constant 0 : index
    %c0_21 = arith.constant 0 : index
    %c0_22 = arith.constant 0 : index
    %23 = vector.load %arg3[%c2, %c0_20, %c0_21, %c0_22] : memref<6x8x16x32xf32, #tpu.memory_space<vmem>>, vector<1x8x16x32xf32>
    %24 = vector.shape_cast %23 : vector<1x8x16x32xf32> to vector<8x16x32xf32>
    %cst_23 = arith.constant dense<0.000000e+00> : vector<8x8x32xf32>
    %25 = tpu.matmul %8, %24, %cst_23 {dimension_numbers = #tpu.dot_dimension_numbers<[2], [1], [1], [2], [0, 0, 0, 1, 1, 2], [0], [0]>} : vector<8x8x16xf32>, vector<8x16x32xf32>, vector<8x8x32xf32> -> vector<8x8x32xf32>
    %c2_24 = arith.constant 2 : index
    %c0_25 = arith.constant 0 : index
    %c0_26 = arith.constant 0 : index
    %c0_27 = arith.constant 0 : index
    %26 = vector.load %arg4[%c2_24, %c0_25, %c0_26, %c0_27] : memref<6x8x1x32xf32, #tpu.memory_space<vmem>>, vector<1x8x1x32xf32>
    %27 = vector.shape_cast %26 : vector<1x8x1x32xf32> to vector<8x1x32xf32>
    %28 = vector.broadcast %27 : vector<8x1x32xf32> to vector<8x8x32xf32>
    %29 = arith.addf %25, %28 : vector<8x8x32xf32>
    %cst_28 = arith.constant dense<0.000000e+00> : vector<8x4x8xf32>
    %30 = tpu.matmul %15, %22, %cst_28 {dimension_numbers = #tpu.dot_dimension_numbers<[2], [2], [1], [1], [0, 0, 0, 1, 1, 1], [0], [0]>} : vector<8x4x32xf32>, vector<8x8x32xf32>, vector<8x4x8xf32> -> vector<8x4x8xf32>
    %cst_29 = arith.constant 0.176776692 : f32
    %31 = vector.broadcast %cst_29 : f32 to vector<8x4x8xf32>
    %32 = arith.mulf %30, %31 : vector<8x4x8xf32>
    %cst_30 = arith.constant dense<0xFF800000> : vector<8x4xf32>
    %33 = vector.multi_reduction <maximumf>, %32, %cst_30 [2] : vector<8x4x8xf32> to vector<8x4xf32>
    %34 = vector.shape_cast %33 : vector<8x4xf32> to vector<8x4x1xf32>
    %35 = vector.broadcast %34 : vector<8x4x1xf32> to vector<8x4x8xf32>
    %36 = arith.subf %32, %35 : vector<8x4x8xf32>
    %37 = math.exp %36 : vector<8x4x8xf32>
    %cst_31 = arith.constant dense<0.000000e+00> : vector<8x4xf32>
    %38 = vector.multi_reduction <add>, %37, %cst_31 [2] : vector<8x4x8xf32> to vector<8x4xf32>
    %39 = vector.shape_cast %38 : vector<8x4xf32> to vector<8x4x1xf32>
    %40 = vector.broadcast %39 : vector<8x4x1xf32> to vector<8x4x8xf32>
    %41 = arith.divf %37, %40 : vector<8x4x8xf32>
    %cst_32 = arith.constant dense<0.000000e+00> : vector<8x4x32xf32>
    %42 = tpu.matmul %41, %29, %cst_32 {dimension_numbers = #tpu.dot_dimension_numbers<[2], [1], [1], [2], [0, 0, 0, 1, 1, 2], [0], [0]>} : vector<8x4x8xf32>, vector<8x8x32xf32>, vector<8x4x32xf32> -> vector<8x4x32xf32>
    %c0_33 = arith.constant 0 : index
    %c0_34 = arith.constant 0 : index
    %c0_35 = arith.constant 0 : index
    %c0_36 = arith.constant 0 : index
    %43 = vector.load %arg5[%c0_33, %c0_34, %c0_35, %c0_36] : memref<2x8x32x16xf32, #tpu.memory_space<vmem>>, vector<1x8x32x16xf32>
    %44 = vector.shape_cast %43 : vector<1x8x32x16xf32> to vector<8x32x16xf32>
    %cst_37 = arith.constant dense<0.000000e+00> : vector<8x4x16xf32>
    %45 = tpu.matmul %42, %44, %cst_37 {dimension_numbers = #tpu.dot_dimension_numbers<[2], [1], [1], [2], [0, 0, 0, 1, 1, 2], [0], [0]>} : vector<8x4x32xf32>, vector<8x32x16xf32>, vector<8x4x16xf32> -> vector<8x4x16xf32>
    %c0_38 = arith.constant 0 : index
    %c0_39 = arith.constant 0 : index
    %c0_40 = arith.constant 0 : index
    %46 = vector.load %arg7[%c0_38, %c0_39, %c0_40] : memref<2x8x16xf32, #tpu.memory_space<vmem>>, vector<1x8x16xf32>
    %47 = vector.shape_cast %46 : vector<1x8x16xf32> to vector<8x16xf32>
    %cst_41 = arith.constant dense<0.000000e+00> : vector<4x16xf32>
    %48 = vector.multi_reduction <add>, %45, %cst_41 [0] : vector<8x4x16xf32> to vector<4x16xf32>
    %49 = vector.extract_strided_slice %47 {offsets = [0, 0], sizes = [1, 16], strides = [1, 1]} : vector<8x16xf32> to vector<1x16xf32>
    %50 = vector.broadcast %49 : vector<1x16xf32> to vector<4x16xf32>
    %51 = arith.addf %48, %50 : vector<4x16xf32>
    %52 = arith.addf %2, %51 : vector<4x16xf32>
    %53 = vector.extract_strided_slice %47 {offsets = [2, 0], sizes = [1, 16], strides = [1, 1]} : vector<8x16xf32> to vector<1x16xf32>
    %54 = vector.extract_strided_slice %47 {offsets = [3, 0], sizes = [1, 16], strides = [1, 1]} : vector<8x16xf32> to vector<1x16xf32>
    %cst_42 = arith.constant dense<0.000000e+00> : vector<4xf32>
    %55 = vector.multi_reduction <add>, %52, %cst_42 [1] : vector<4x16xf32> to vector<4xf32>
    %56 = vector.shape_cast %55 : vector<4xf32> to vector<4x1xf32>
    %cst_43 = arith.constant 1.600000e+01 : f32
    %57 = vector.broadcast %cst_43 : f32 to vector<4x1xf32>
    %58 = arith.divf %56, %57 : vector<4x1xf32>
    %59 = vector.broadcast %58 : vector<4x1xf32> to vector<4x16xf32>
    %60 = arith.subf %52, %59 : vector<4x16xf32>
    %61 = arith.mulf %60, %60 : vector<4x16xf32>
    %cst_44 = arith.constant dense<0.000000e+00> : vector<4xf32>
    %62 = vector.multi_reduction <add>, %61, %cst_44 [1] : vector<4x16xf32> to vector<4xf32>
    %63 = vector.shape_cast %62 : vector<4xf32> to vector<4x1xf32>
    %cst_45 = arith.constant 1.600000e+01 : f32
    %64 = vector.broadcast %cst_45 : f32 to vector<4x1xf32>
    %65 = arith.divf %63, %64 : vector<4x1xf32>
    %66 = vector.broadcast %58 : vector<4x1xf32> to vector<4x16xf32>
    %67 = arith.subf %52, %66 : vector<4x16xf32>
    %cst_46 = arith.constant 9.99999974E-6 : f32
    %68 = vector.broadcast %cst_46 : f32 to vector<4x1xf32>
    %69 = arith.addf %65, %68 : vector<4x1xf32>
    %70 = math.rsqrt %69 : vector<4x1xf32>
    %71 = vector.broadcast %70 : vector<4x1xf32> to vector<4x16xf32>
    %72 = arith.mulf %67, %71 : vector<4x16xf32>
    %73 = vector.broadcast %53 : vector<1x16xf32> to vector<4x16xf32>
    %74 = arith.mulf %72, %73 : vector<4x16xf32>
    %75 = vector.broadcast %54 : vector<1x16xf32> to vector<4x16xf32>
    %76 = arith.addf %74, %75 : vector<4x16xf32>
    %c0_47 = arith.constant 0 : index
    %c0_48 = arith.constant 0 : index
    %c0_49 = arith.constant 0 : index
    %77 = vector.load %arg6[%c0_47, %c0_48, %c0_49] : memref<2x16x16xf32, #tpu.memory_space<vmem>>, vector<1x16x16xf32>
    %78 = vector.shape_cast %77 : vector<1x16x16xf32> to vector<16x16xf32>
    %cst_50 = arith.constant dense<0.000000e+00> : vector<4x16xf32>
    %79 = tpu.matmul %76, %78, %cst_50 {dimension_numbers = #tpu.dot_dimension_numbers<[1], [0], [0], [1], [0, 0, 1, 1], [], []>} : vector<4x16xf32>, vector<16x16xf32>, vector<4x16xf32> -> vector<4x16xf32>
    %80 = vector.extract_strided_slice %47 {offsets = [1, 0], sizes = [1, 16], strides = [1, 1]} : vector<8x16xf32> to vector<1x16xf32>
    %81 = vector.broadcast %80 : vector<1x16xf32> to vector<4x16xf32>
    %82 = arith.addf %79, %81 : vector<4x16xf32>
    %83 = arith.addf %76, %82 : vector<4x16xf32>
    %84 = vector.extract_strided_slice %47 {offsets = [4, 0], sizes = [1, 16], strides = [1, 1]} : vector<8x16xf32> to vector<1x16xf32>
    %85 = vector.extract_strided_slice %47 {offsets = [5, 0], sizes = [1, 16], strides = [1, 1]} : vector<8x16xf32> to vector<1x16xf32>
    %cst_51 = arith.constant dense<0.000000e+00> : vector<4xf32>
    %86 = vector.multi_reduction <add>, %83, %cst_51 [1] : vector<4x16xf32> to vector<4xf32>
    %87 = vector.shape_cast %86 : vector<4xf32> to vector<4x1xf32>
    %cst_52 = arith.constant 1.600000e+01 : f32
    %88 = vector.broadcast %cst_52 : f32 to vector<4x1xf32>
    %89 = arith.divf %87, %88 : vector<4x1xf32>
    %90 = vector.broadcast %89 : vector<4x1xf32> to vector<4x16xf32>
    %91 = arith.subf %83, %90 : vector<4x16xf32>
    %92 = arith.mulf %91, %91 : vector<4x16xf32>
    %cst_53 = arith.constant dense<0.000000e+00> : vector<4xf32>
    %93 = vector.multi_reduction <add>, %92, %cst_53 [1] : vector<4x16xf32> to vector<4xf32>
    %94 = vector.shape_cast %93 : vector<4xf32> to vector<4x1xf32>
    %cst_54 = arith.constant 1.600000e+01 : f32
    %95 = vector.broadcast %cst_54 : f32 to vector<4x1xf32>
    %96 = arith.divf %94, %95 : vector<4x1xf32>
    %97 = vector.broadcast %89 : vector<4x1xf32> to vector<4x16xf32>
    %98 = arith.subf %83, %97 : vector<4x16xf32>
    %cst_55 = arith.constant 9.99999974E-6 : f32
    %99 = vector.broadcast %cst_55 : f32 to vector<4x1xf32>
    %100 = arith.addf %96, %99 : vector<4x1xf32>
    %101 = math.rsqrt %100 : vector<4x1xf32>
    %102 = vector.broadcast %101 : vector<4x1xf32> to vector<4x16xf32>
    %103 = arith.mulf %98, %102 : vector<4x16xf32>
    %104 = vector.broadcast %84 : vector<1x16xf32> to vector<4x16xf32>
    %105 = arith.mulf %103, %104 : vector<4x16xf32>
    %106 = vector.broadcast %85 : vector<1x16xf32> to vector<4x16xf32>
    %107 = arith.addf %105, %106 : vector<4x16xf32>
    %108 = vector.shape_cast %1 : vector<8x16xf32> to vector<1x8x16xf32>
    %109 = vector.shape_cast %108 : vector<1x8x16xf32> to vector<1x8x16xf32>
    %110 = vector.broadcast %109 : vector<1x8x16xf32> to vector<8x8x16xf32>
    %111 = vector.shape_cast %107 : vector<4x16xf32> to vector<1x4x16xf32>
    %112 = vector.shape_cast %111 : vector<1x4x16xf32> to vector<1x4x16xf32>
    %113 = vector.broadcast %112 : vector<1x4x16xf32> to vector<8x4x16xf32>
    %c3 = arith.constant 3 : index
    %c0_56 = arith.constant 0 : index
    %c0_57 = arith.constant 0 : index
    %c0_58 = arith.constant 0 : index
    %114 = vector.load %arg3[%c3, %c0_56, %c0_57, %c0_58] : memref<6x8x16x32xf32, #tpu.memory_space<vmem>>, vector<1x8x16x32xf32>
    %115 = vector.shape_cast %114 : vector<1x8x16x32xf32> to vector<8x16x32xf32>
    %cst_59 = arith.constant dense<0.000000e+00> : vector<8x8x32xf32>
    %116 = tpu.matmul %110, %115, %cst_59 {dimension_numbers = #tpu.dot_dimension_numbers<[2], [1], [1], [2], [0, 0, 0, 1, 1, 2], [0], [0]>} : vector<8x8x16xf32>, vector<8x16x32xf32>, vector<8x8x32xf32> -> vector<8x8x32xf32>
    %c3_60 = arith.constant 3 : index
    %c0_61 = arith.constant 0 : index
    %c0_62 = arith.constant 0 : index
    %c0_63 = arith.constant 0 : index
    %117 = vector.load %arg4[%c3_60, %c0_61, %c0_62, %c0_63] : memref<6x8x1x32xf32, #tpu.memory_space<vmem>>, vector<1x8x1x32xf32>
    %118 = vector.shape_cast %117 : vector<1x8x1x32xf32> to vector<8x1x32xf32>
    %119 = vector.broadcast %118 : vector<8x1x32xf32> to vector<8x8x32xf32>
    %120 = arith.addf %116, %119 : vector<8x8x32xf32>
    %c4 = arith.constant 4 : index
    %c0_64 = arith.constant 0 : index
    %c0_65 = arith.constant 0 : index
    %c0_66 = arith.constant 0 : index
    %121 = vector.load %arg3[%c4, %c0_64, %c0_65, %c0_66] : memref<6x8x16x32xf32, #tpu.memory_space<vmem>>, vector<1x8x16x32xf32>
    %122 = vector.shape_cast %121 : vector<1x8x16x32xf32> to vector<8x16x32xf32>
    %cst_67 = arith.constant dense<0.000000e+00> : vector<8x4x32xf32>
    %123 = tpu.matmul %113, %122, %cst_67 {dimension_numbers = #tpu.dot_dimension_numbers<[2], [1], [1], [2], [0, 0, 0, 1, 1, 2], [0], [0]>} : vector<8x4x16xf32>, vector<8x16x32xf32>, vector<8x4x32xf32> -> vector<8x4x32xf32>
    %c4_68 = arith.constant 4 : index
    %c0_69 = arith.constant 0 : index
    %c0_70 = arith.constant 0 : index
    %c0_71 = arith.constant 0 : index
    %124 = vector.load %arg4[%c4_68, %c0_69, %c0_70, %c0_71] : memref<6x8x1x32xf32, #tpu.memory_space<vmem>>, vector<1x8x1x32xf32>
    %125 = vector.shape_cast %124 : vector<1x8x1x32xf32> to vector<8x1x32xf32>
    %126 = vector.broadcast %125 : vector<8x1x32xf32> to vector<8x4x32xf32>
    %127 = arith.addf %123, %126 : vector<8x4x32xf32>
    %c5 = arith.constant 5 : index
    %c0_72 = arith.constant 0 : index
    %c0_73 = arith.constant 0 : index
    %c0_74 = arith.constant 0 : index
    %128 = vector.load %arg3[%c5, %c0_72, %c0_73, %c0_74] : memref<6x8x16x32xf32, #tpu.memory_space<vmem>>, vector<1x8x16x32xf32>
    %129 = vector.shape_cast %128 : vector<1x8x16x32xf32> to vector<8x16x32xf32>
    %cst_75 = arith.constant dense<0.000000e+00> : vector<8x4x32xf32>
    %130 = tpu.matmul %113, %129, %cst_75 {dimension_numbers = #tpu.dot_dimension_numbers<[2], [1], [1], [2], [0, 0, 0, 1, 1, 2], [0], [0]>} : vector<8x4x16xf32>, vector<8x16x32xf32>, vector<8x4x32xf32> -> vector<8x4x32xf32>
    %c5_76 = arith.constant 5 : index
    %c0_77 = arith.constant 0 : index
    %c0_78 = arith.constant 0 : index
    %c0_79 = arith.constant 0 : index
    %131 = vector.load %arg4[%c5_76, %c0_77, %c0_78, %c0_79] : memref<6x8x1x32xf32, #tpu.memory_space<vmem>>, vector<1x8x1x32xf32>
    %132 = vector.shape_cast %131 : vector<1x8x1x32xf32> to vector<8x1x32xf32>
    %133 = vector.broadcast %132 : vector<8x1x32xf32> to vector<8x4x32xf32>
    %134 = arith.addf %130, %133 : vector<8x4x32xf32>
    %cst_80 = arith.constant dense<0.000000e+00> : vector<8x8x4xf32>
    %135 = tpu.matmul %120, %127, %cst_80 {dimension_numbers = #tpu.dot_dimension_numbers<[2], [2], [1], [1], [0, 0, 0, 1, 1, 1], [0], [0]>} : vector<8x8x32xf32>, vector<8x4x32xf32>, vector<8x8x4xf32> -> vector<8x8x4xf32>
    %cst_81 = arith.constant 0.176776692 : f32
    %136 = vector.broadcast %cst_81 : f32 to vector<8x8x4xf32>
    %137 = arith.mulf %135, %136 : vector<8x8x4xf32>
    %cst_82 = arith.constant dense<0xFF800000> : vector<8x8xf32>
    %138 = vector.multi_reduction <maximumf>, %137, %cst_82 [2] : vector<8x8x4xf32> to vector<8x8xf32>
    %139 = vector.shape_cast %138 : vector<8x8xf32> to vector<8x8x1xf32>
    %140 = vector.broadcast %139 : vector<8x8x1xf32> to vector<8x8x4xf32>
    %141 = arith.subf %137, %140 : vector<8x8x4xf32>
    %142 = math.exp %141 : vector<8x8x4xf32>
    %cst_83 = arith.constant dense<0.000000e+00> : vector<8x8xf32>
    %143 = vector.multi_reduction <add>, %142, %cst_83 [2] : vector<8x8x4xf32> to vector<8x8xf32>
    %144 = vector.shape_cast %143 : vector<8x8xf32> to vector<8x8x1xf32>
    %145 = vector.broadcast %144 : vector<8x8x1xf32> to vector<8x8x4xf32>
    %146 = arith.divf %142, %145 : vector<8x8x4xf32>
    %cst_84 = arith.constant dense<0.000000e+00> : vector<8x8x32xf32>
    %147 = tpu.matmul %146, %134, %cst_84 {dimension_numbers = #tpu.dot_dimension_numbers<[2], [1], [1], [2], [0, 0, 0, 1, 1, 2], [0], [0]>} : vector<8x8x4xf32>, vector<8x4x32xf32>, vector<8x8x32xf32> -> vector<8x8x32xf32>
    %c1_85 = arith.constant 1 : index
    %c0_86 = arith.constant 0 : index
    %c0_87 = arith.constant 0 : index
    %c0_88 = arith.constant 0 : index
    %148 = vector.load %arg5[%c1_85, %c0_86, %c0_87, %c0_88] : memref<2x8x32x16xf32, #tpu.memory_space<vmem>>, vector<1x8x32x16xf32>
    %149 = vector.shape_cast %148 : vector<1x8x32x16xf32> to vector<8x32x16xf32>
    %cst_89 = arith.constant dense<0.000000e+00> : vector<8x8x16xf32>
    %150 = tpu.matmul %147, %149, %cst_89 {dimension_numbers = #tpu.dot_dimension_numbers<[2], [1], [1], [2], [0, 0, 0, 1, 1, 2], [0], [0]>} : vector<8x8x32xf32>, vector<8x32x16xf32>, vector<8x8x16xf32> -> vector<8x8x16xf32>
    %c1_90 = arith.constant 1 : index
    %c0_91 = arith.constant 0 : index
    %c0_92 = arith.constant 0 : index
    %151 = vector.load %arg7[%c1_90, %c0_91, %c0_92] : memref<2x8x16xf32, #tpu.memory_space<vmem>>, vector<1x8x16xf32>
    %152 = vector.shape_cast %151 : vector<1x8x16xf32> to vector<8x16xf32>
    %cst_93 = arith.constant dense<0.000000e+00> : vector<8x16xf32>
    %153 = vector.multi_reduction <add>, %150, %cst_93 [0] : vector<8x8x16xf32> to vector<8x16xf32>
    %154 = vector.extract_strided_slice %152 {offsets = [0, 0], sizes = [1, 16], strides = [1, 1]} : vector<8x16xf32> to vector<1x16xf32>
    %155 = vector.broadcast %154 : vector<1x16xf32> to vector<8x16xf32>
    %156 = arith.addf %153, %155 : vector<8x16xf32>
    %157 = arith.addf %1, %156 : vector<8x16xf32>
    %158 = vector.extract_strided_slice %152 {offsets = [2, 0], sizes = [1, 16], strides = [1, 1]} : vector<8x16xf32> to vector<1x16xf32>
    %159 = vector.extract_strided_slice %152 {offsets = [3, 0], sizes = [1, 16], strides = [1, 1]} : vector<8x16xf32> to vector<1x16xf32>
    %cst_94 = arith.constant dense<0.000000e+00> : vector<8xf32>
    %160 = vector.multi_reduction <add>, %157, %cst_94 [1] : vector<8x16xf32> to vector<8xf32>
    %161 = vector.shape_cast %160 : vector<8xf32> to vector<8x1xf32>
    %cst_95 = arith.constant 1.600000e+01 : f32
    %162 = vector.broadcast %cst_95 : f32 to vector<8x1xf32>
    %163 = arith.divf %161, %162 : vector<8x1xf32>
    %164 = vector.broadcast %163 : vector<8x1xf32> to vector<8x16xf32>
    %165 = arith.subf %157, %164 : vector<8x16xf32>
    %166 = arith.mulf %165, %165 : vector<8x16xf32>
    %cst_96 = arith.constant dense<0.000000e+00> : vector<8xf32>
    %167 = vector.multi_reduction <add>, %166, %cst_96 [1] : vector<8x16xf32> to vector<8xf32>
    %168 = vector.shape_cast %167 : vector<8xf32> to vector<8x1xf32>
    %cst_97 = arith.constant 1.600000e+01 : f32
    %169 = vector.broadcast %cst_97 : f32 to vector<8x1xf32>
    %170 = arith.divf %168, %169 : vector<8x1xf32>
    %171 = vector.broadcast %163 : vector<8x1xf32> to vector<8x16xf32>
    %172 = arith.subf %157, %171 : vector<8x16xf32>
    %cst_98 = arith.constant 9.99999974E-6 : f32
    %173 = vector.broadcast %cst_98 : f32 to vector<8x1xf32>
    %174 = arith.addf %170, %173 : vector<8x1xf32>
    %175 = math.rsqrt %174 : vector<8x1xf32>
    %176 = vector.broadcast %175 : vector<8x1xf32> to vector<8x16xf32>
    %177 = arith.mulf %172, %176 : vector<8x16xf32>
    %178 = vector.broadcast %158 : vector<1x16xf32> to vector<8x16xf32>
    %179 = arith.mulf %177, %178 : vector<8x16xf32>
    %180 = vector.broadcast %159 : vector<1x16xf32> to vector<8x16xf32>
    %181 = arith.addf %179, %180 : vector<8x16xf32>
    %c1_99 = arith.constant 1 : index
    %c0_100 = arith.constant 0 : index
    %c0_101 = arith.constant 0 : index
    %182 = vector.load %arg6[%c1_99, %c0_100, %c0_101] : memref<2x16x16xf32, #tpu.memory_space<vmem>>, vector<1x16x16xf32>
    %183 = vector.shape_cast %182 : vector<1x16x16xf32> to vector<16x16xf32>
    %cst_102 = arith.constant dense<0.000000e+00> : vector<8x16xf32>
    %184 = tpu.matmul %181, %183, %cst_102 {dimension_numbers = #tpu.dot_dimension_numbers<[1], [0], [0], [1], [0, 0, 1, 1], [], []>} : vector<8x16xf32>, vector<16x16xf32>, vector<8x16xf32> -> vector<8x16xf32>
    %185 = vector.extract_strided_slice %152 {offsets = [1, 0], sizes = [1, 16], strides = [1, 1]} : vector<8x16xf32> to vector<1x16xf32>
    %186 = vector.broadcast %185 : vector<1x16xf32> to vector<8x16xf32>
    %187 = arith.addf %184, %186 : vector<8x16xf32>
    %188 = arith.addf %181, %187 : vector<8x16xf32>
    %189 = vector.extract_strided_slice %152 {offsets = [4, 0], sizes = [1, 16], strides = [1, 1]} : vector<8x16xf32> to vector<1x16xf32>
    %190 = vector.extract_strided_slice %152 {offsets = [5, 0], sizes = [1, 16], strides = [1, 1]} : vector<8x16xf32> to vector<1x16xf32>
    %cst_103 = arith.constant dense<0.000000e+00> : vector<8xf32>
    %191 = vector.multi_reduction <add>, %188, %cst_103 [1] : vector<8x16xf32> to vector<8xf32>
    %192 = vector.shape_cast %191 : vector<8xf32> to vector<8x1xf32>
    %cst_104 = arith.constant 1.600000e+01 : f32
    %193 = vector.broadcast %cst_104 : f32 to vector<8x1xf32>
    %194 = arith.divf %192, %193 : vector<8x1xf32>
    %195 = vector.broadcast %194 : vector<8x1xf32> to vector<8x16xf32>
    %196 = arith.subf %188, %195 : vector<8x16xf32>
    %197 = arith.mulf %196, %196 : vector<8x16xf32>
    %cst_105 = arith.constant dense<0.000000e+00> : vector<8xf32>
    %198 = vector.multi_reduction <add>, %197, %cst_105 [1] : vector<8x16xf32> to vector<8xf32>
    %199 = vector.shape_cast %198 : vector<8xf32> to vector<8x1xf32>
    %cst_106 = arith.constant 1.600000e+01 : f32
    %200 = vector.broadcast %cst_106 : f32 to vector<8x1xf32>
    %201 = arith.divf %199, %200 : vector<8x1xf32>
    %202 = vector.broadcast %194 : vector<8x1xf32> to vector<8x16xf32>
    %203 = arith.subf %188, %202 : vector<8x16xf32>
    %cst_107 = arith.constant 9.99999974E-6 : f32
    %204 = vector.broadcast %cst_107 : f32 to vector<8x1xf32>
    %205 = arith.addf %201, %204 : vector<8x1xf32>
    %206 = math.rsqrt %205 : vector<8x1xf32>
    %207 = vector.broadcast %206 : vector<8x1xf32> to vector<8x16xf32>
    %208 = arith.mulf %203, %207 : vector<8x16xf32>
    %209 = vector.broadcast %189 : vector<1x16xf32> to vector<8x16xf32>
    %210 = arith.mulf %208, %209 : vector<8x16xf32>
    %211 = vector.broadcast %190 : vector<1x16xf32> to vector<8x16xf32>
    %212 = arith.addf %210, %211 : vector<8x16xf32>
    %c0_108 = arith.constant 0 : index
    %c0_109 = arith.constant 0 : index
    %c0_110 = arith.constant 0 : index
    %213 = vector.load %arg8[%c0_108, %c0_109, %c0_110] : memref<1x8x16xf32, #tpu.memory_space<vmem>>, vector<1x8x16xf32>
    %214 = vector.shape_cast %213 : vector<1x8x16xf32> to vector<8x16xf32>
    %215 = vector.shape_cast %212 : vector<8x16xf32> to vector<1x8x16xf32>
    tpu.vector_store %arg8[%c0_108, %c0_109, %c0_110], %215 {strides = array<i32>} : memref<1x8x16xf32, #tpu.memory_space<vmem>>, vector<1x8x16xf32>,
    return
  }
  func.func @transform_0(%arg0: i32) -> (i32, i32, i32) {
    %c0_i32 = arith.constant 0 : i32
    %c0_i32_0 = arith.constant 0 : i32
    %c0_i32_1 = arith.constant 0 : i32
    return %arg0, %c0_i32, %c0_i32_0 : i32, i32, i32
  }
  func.func @transform_1(%arg0: i32) -> (i32, i32) {
    %c0_i32 = arith.constant 0 : i32
    %c0_i32_0 = arith.constant 0 : i32
    %c0_i32_1 = arith.constant 0 : i32
    return %c0_i32, %c0_i32_0 : i32, i32
  }
  func.func @transform_2(%arg0: i32) -> (i32, i32, i32, i32) {
    %c0_i32 = arith.constant 0 : i32
    %c0_i32_0 = arith.constant 0 : i32
    %c0_i32_1 = arith.constant 0 : i32
    %c0_i32_2 = arith.constant 0 : i32
    %c0_i32_3 = arith.constant 0 : i32
    return %c0_i32, %c0_i32_0, %c0_i32_1, %c0_i32_2 : i32, i32, i32, i32
  }
  func.func @transform_3(%arg0: i32) -> (i32, i32, i32, i32) {
    %c0_i32 = arith.constant 0 : i32
    %c0_i32_0 = arith.constant 0 : i32
    %c0_i32_1 = arith.constant 0 : i32
    %c0_i32_2 = arith.constant 0 : i32
    %c0_i32_3 = arith.constant 0 : i32
    return %c0_i32, %c0_i32_0, %c0_i32_1, %c0_i32_2 : i32, i32, i32, i32
  }
  func.func @transform_4(%arg0: i32) -> (i32, i32, i32, i32) {
    %c0_i32 = arith.constant 0 : i32
    %c0_i32_0 = arith.constant 0 : i32
    %c0_i32_1 = arith.constant 0 : i32
    %c0_i32_2 = arith.constant 0 : i32
    %c0_i32_3 = arith.constant 0 : i32
    return %c0_i32, %c0_i32_0, %c0_i32_1, %c0_i32_2 : i32, i32, i32, i32
  }
  func.func @transform_5(%arg0: i32) -> (i32, i32, i32) {
    %c0_i32 = arith.constant 0 : i32
    %c0_i32_0 = arith.constant 0 : i32
    %c0_i32_1 = arith.constant 0 : i32
    %c0_i32_2 = arith.constant 0 : i32
    return %c0_i32, %c0_i32_0, %c0_i32_1 : i32, i32, i32
  }
  func.func @transform_6(%arg0: i32) -> (i32, i32, i32) {
    %c0_i32 = arith.constant 0 : i32
    %c0_i32_0 = arith.constant 0 : i32
    %c0_i32_1 = arith.constant 0 : i32
    %c0_i32_2 = arith.constant 0 : i32
    return %c0_i32, %c0_i32_0, %c0_i32_1 : i32, i32, i32
  }
  func.func @transform_7(%arg0: i32) -> (i32, i32, i32) {
    %c0_i32 = arith.constant 0 : i32
    %c0_i32_0 = arith.constant 0 : i32
    %c0_i32_1 = arith.constant 0 : i32
    return %arg0, %c0_i32, %c0_i32_0 : i32, i32, i32
  }
}

</mosaic_0001>

<llo_original>
// kernel: isab_forward.1
$region0: #{isab_forward.1}
  #allocation0 [shape = 'u32[]', space=smem, size = 0x4, offset = 0x4, fixed_abs, tag = 'smem constant byte address 0x4 - core index']
  #allocation1 [shape = 'u32[144,128]{1,0:T(1,128)}', space=vmem, size = 0x12000, scoped, tag = 'internal scratch']
  %s0 = inlined_call_operand.hbm [shape: f32[4,8,16], index: 0, kind: input, shape index: {}]
  %s1 = inlined_call_operand.vmem [shape: f32[4,16], index: 1, kind: input, shape index: {}]
  %s2 = inlined_call_operand.vmem [shape: f32[6,8,16,32], index: 2, kind: input, shape index: {}]
  %s3 = inlined_call_operand.hbm [shape: f32[6,8,1,32], index: 3, kind: input, shape index: {}]
  %s4 = inlined_call_operand.vmem [shape: f32[2,8,32,16], index: 4, kind: input, shape index: {}]
  %s5 = inlined_call_operand.hbm [shape: f32[2,16,16], index: 5, kind: input, shape index: {}]
  %s6 = inlined_call_operand.vmem [shape: f32[2,8,16], index: 6, kind: input, shape index: {}]
  %s7 = inlined_call_operand.hbm [shape: f32[4,8,16], index: 7, kind: output, shape index: {}]
  %s8 = sld [smem:[#allocation0]]
  $region73: #{isab_forward.1} parent=0
    _
  %s10 = ssub.s32 1, %s8
  %s11 = scalar_select 0, %s10, %s8
  $region1: #{isab_forward.1} parent=0
    #allocation2 [shape = 'u8[8192]{0}', space=vmem, size = 0x2000, scoped, tag = 'input window, operand 0']
    #allocation3 [shape = 's32[2]{0}', space=sflag, size = 0x8, scoped, tag = 'scoped memory for isab_forward.1']
    #allocation4 [shape = 's32[2]{0}', space=sflag, size = 0x8, scoped, tag = 'scoped memory for isab_forward.1']
    #allocation5 [shape = 'u8[24576]{0}', space=vmem, size = 0x6000, scoped, tag = 'input window, operand 3, single buffered']
    #allocation6 [shape = 's32[1]{0}', space=sflag, size = 0x4, scoped, tag = 'scoped memory for isab_forward.1']
    #allocation7 [shape = 'u8[16384]{0}', space=vmem, size = 0x4000, scoped, tag = 'input window, operand 5, single buffered']
    #allocation8 [shape = 'u8[8192]{0}', space=vmem, size = 0x2000, scoped, tag = 'output window, operand 0']
    %12 = vsyncpa [#allocation3], 0
    %s13 = scalar_lea.sflag [#allocation3], 1
    %14 = vsyncpa %s13, 0
    %15 = vsyncpa [#allocation6], 0
    %16 = vsyncpa [#allocation4], 0
    %s17 = scalar_lea.sflag [#allocation4], 1
    %18 = vsyncpa %s17, 0
    loop: start=0, step=1, limit=6
    $region2: #{isab_forward.1} parent=1 // loop_pre_header
      _
    $region3: #{isab_forward.1} parent=1 // loop_header
      %s20 = sphi 0, %s24
      %p21 = scmp.ge.s32.totalorder %s20, 6
      %s30 = sphi 0, %s32
      %s33 = sphi 0, %s30
      %s34 = sphi 0, %s33
      %s50 = sphi 0, %s34
      %s54 = sphi 0, %s54
      %s56 = sphi 0, %s54
      %s57 = sphi 0, %s56
      %s71 = sphi 0, %s57
      %s75 = sphi 0, %s75
      %s77 = sphi 0, %s75
      %s78 = sphi 0, %s77
      %s92 = sphi 0, %s78
      %s96 = sphi 0, %s96
      %s98 = sphi 0, %s96
      %s99 = sphi 0, %s98
      %s113 = sphi 0, %s99
      %s117 = sphi 0, %s117
      %s119 = sphi 0, %s117
      %s120 = sphi 0, %s119
      %s134 = sphi 0, %s120
      %s138 = sphi 0, %s138
      %s140 = sphi 0, %s138
      %s141 = sphi 0, %s140
      %s155 = sphi 0, %s141
      %s159 = sphi 0, %s159
      %s161 = sphi 0, %s159
      %s162 = sphi 0, %s161
      %s176 = sphi 0, %s162
      %s182 = sphi 0, %s184
      %s185 = sphi 0, %s182
      %s186 = sphi 0, %s185
      %s202 = sphi 0, %s186
    $region4: #{isab_forward.1} parent=1 // loop_header_branch
      %23 = sbr.rel (%p21) target = $region8
    $region5: #{isab_forward.1} parent=1 // loop_body
      %s25 = ssub.s32 %s20, 1
      %s26 = ssub.s32 %s20, 2
      %s27 = sadd.s32 %s20, 1
      %s28 = ssub.s32 %s20, %s27
      %p29 = scmp.eq.s32.totalorder %s28, 0
      %s31 = sadd.s32 %s30, 1
      %s32 = scalar_select %p29, %s30, %s31
      %p35 = pneg %p29
      %p36 = scmp.eq.s32.totalorder %s20, 3
      %p37 = por %p35, %p36
      %p38 = scmp.ne.s32.totalorder %s30, %s33
      %p39 = scmp.eq.s32.totalorder %s20, 0
      %p40 = por %p38, %p39
      %p41 = scmp.ne.s32.totalorder %s30, %s33
      %p42 = scmp.eq.s32.totalorder %s25, 3
      %p43 = por %p41, %p42
      %p44 = scmp.ne.s32.totalorder %s33, %s34
      %p45 = scmp.eq.s32.totalorder %s25, 0
      %p46 = por %p44, %p45
      %p47 = scmp.ne.s32.totalorder %s33, %s34
      %p48 = scmp.eq.s32.totalorder %s26, 3
      %p49 = por %p47, %p48
      %p51 = scmp.ne.s32.totalorder %s34, %s50
      %p52 = scmp.eq.s32.totalorder %s26, 0
      %p53 = por %p51, %p52
      %s55 = sadd.s32 %s54, 1
      %p58 = scmp.eq.s32.totalorder %s20, 3
      %p59 = scmp.ne.s32.totalorder %s54, %s56
      %p60 = scmp.eq.s32.totalorder %s20, 0
      %p61 = por %p59, %p60
      %p62 = scmp.ne.s32.totalorder %s54, %s56
      %p63 = scmp.eq.s32.totalorder %s25, 3
      %p64 = por %p62, %p63
      %p65 = scmp.ne.s32.totalorder %s56, %s57
      %p66 = scmp.eq.s32.totalorder %s25, 0
      %p67 = por %p65, %p66
      %p68 = scmp.ne.s32.totalorder %s56, %s57
      %p69 = scmp.eq.s32.totalorder %s26, 3
      %p70 = por %p68, %p69
      %p72 = scmp.ne.s32.totalorder %s57, %s71
      %p73 = scmp.eq.s32.totalorder %s26, 0
      %p74 = por %p72, %p73
      %s76 = sadd.s32 %s75, 1
      %p79 = scmp.eq.s32.totalorder %s20, 3
      %p80 = scmp.ne.s32.totalorder %s75, %s77
      %p81 = scmp.eq.s32.totalorder %s20, 0
      %p82 = por %p80, %p81
      %p83 = scmp.ne.s32.totalorder %s75, %s77
      %p84 = scmp.eq.s32.totalorder %s25, 3
      %p85 = por %p83, %p84
      %p86 = scmp.ne.s32.totalorder %s77, %s78
      %p87 = scmp.eq.s32.totalorder %s25, 0
      %p88 = por %p86, %p87
      %p89 = scmp.ne.s32.totalorder %s77, %s78
      %p90 = scmp.eq.s32.totalorder %s26, 3
      %p91 = por %p89, %p90
      %p93 = scmp.ne.s32.totalorder %s78, %s92
      %p94 = scmp.eq.s32.totalorder %s26, 0
      %p95 = por %p93, %p94
      %s97 = sadd.s32 %s96, 1
      %p100 = scmp.eq.s32.totalorder %s20, 3
      %p101 = scmp.ne.s32.totalorder %s96, %s98
      %p102 = scmp.eq.s32.totalorder %s20, 0
      %p103 = por %p101, %p102
      %p104 = scmp.ne.s32.totalorder %s96, %s98
      %p105 = scmp.eq.s32.totalorder %s25, 3
      %p106 = por %p104, %p105
      %p107 = scmp.ne.s32.totalorder %s98, %s99
      %p108 = scmp.eq.s32.totalorder %s25, 0
      %p109 = por %p107, %p108
      %p110 = scmp.ne.s32.totalorder %s98, %s99
      %p111 = scmp.eq.s32.totalorder %s26, 3
      %p112 = por %p110, %p111
      %p114 = scmp.ne.s32.totalorder %s99, %s113
      %p115 = scmp.eq.s32.totalorder %s26, 0
      %p116 = por %p114, %p115
      %s118 = sadd.s32 %s117, 1
      %p121 = scmp.eq.s32.totalorder %s20, 3
      %p122 = scmp.ne.s32.totalorder %s117, %s119
      %p123 = scmp.eq.s32.totalorder %s20, 0
      %p124 = por %p122, %p123
      %p125 = scmp.ne.s32.totalorder %s117, %s119
      %p126 = scmp.eq.s32.totalorder %s25, 3
      %p127 = por %p125, %p126
      %p128 = scmp.ne.s32.totalorder %s119, %s120
      %p129 = scmp.eq.s32.totalorder %s25, 0
      %p130 = por %p128, %p129
      %p131 = scmp.ne.s32.totalorder %s119, %s120
      %p132 = scmp.eq.s32.totalorder %s26, 3
      %p133 = por %p131, %p132
      %p135 = scmp.ne.s32.totalorder %s120, %s134
      %p136 = scmp.eq.s32.totalorder %s26, 0
      %p137 = por %p135, %p136
      %s139 = sadd.s32 %s138, 1
      %p142 = scmp.eq.s32.totalorder %s20, 3
      %p143 = scmp.ne.s32.totalorder %s138, %s140
      %p144 = scmp.eq.s32.totalorder %s20, 0
      %p145 = por %p143, %p144
      %p146 = scmp.ne.s32.totalorder %s138, %s140
      %p147 = scmp.eq.s32.totalorder %s25, 3
      %p148 = por %p146, %p147
      %p149 = scmp.ne.s32.totalorder %s140, %s141
      %p150 = scmp.eq.s32.totalorder %s25, 0
      %p151 = por %p149, %p150
      %p152 = scmp.ne.s32.totalorder %s140, %s141
      %p153 = scmp.eq.s32.totalorder %s26, 3
      %p154 = por %p152, %p153
      %p156 = scmp.ne.s32.totalorder %s141, %s155
      %p157 = scmp.eq.s32.totalorder %s26, 0
      %p158 = por %p156, %p157
      %s160 = sadd.s32 %s159, 1
      %p163 = scmp.eq.s32.totalorder %s20, 3
      %p164 = scmp.ne.s32.totalorder %s159, %s161
      %p165 = scmp.eq.s32.totalorder %s20, 0
      %p166 = por %p164, %p165
      %p167 = scmp.ne.s32.totalorder %s159, %s161
      %p168 = scmp.eq.s32.totalorder %s25, 3
      %p169 = por %p167, %p168
      %p170 = scmp.ne.s32.totalorder %s161, %s162
      %p171 = scmp.eq.s32.totalorder %s25, 0
      %p172 = por %p170, %p171
      %p173 = scmp.ne.s32.totalorder %s161, %s162
      %p174 = scmp.eq.s32.totalorder %s26, 3
      %p175 = por %p173, %p174
      %p177 = scmp.ne.s32.totalorder %s162, %s176
      %p178 = scmp.eq.s32.totalorder %s26, 0
      %p179 = por %p177, %p178
      %s180 = ssub.s32 %s20, %s27
      %p181 = scmp.eq.s32.totalorder %s180, 0
      %s183 = sadd.s32 %s182, 1
      %s184 = scalar_select %p181, %s182, %s183
      %p187 = pneg %p181
      %p188 = scmp.eq.s32.totalorder %s20, 3
      %p189 = por %p187, %p188
      %p190 = scmp.ne.s32.totalorder %s182, %s185
      %p191 = scmp.eq.s32.totalorder %s20, 0
      %p192 = por %p190, %p191
      %p193 = scmp.ne.s32.totalorder %s182, %s185
      %p194 = scmp.eq.s32.totalorder %s25, 3
      %p195 = por %p193, %p194
      %p196 = scmp.ne.s32.totalorder %s185, %s186
      %p197 = scmp.eq.s32.totalorder %s25, 0
      %p198 = por %p196, %p197
      %p199 = scmp.ne.s32.totalorder %s185, %s186
      %p200 = scmp.eq.s32.totalorder %s26, 3
      %p201 = por %p199, %p200
      %p203 = scmp.ne.s32.totalorder %s186, %s202
      %p204 = scmp.eq.s32.totalorder %s26, 0
      %p205 = por %p203, %p204
      %p206 = scmp.le.s32.totalorder 1, %s20
      %p207 = scmp.lt.s32.totalorder %s20, 5
      %p208 = pnand %p206, %p207
      %p209 = pneg %p208
      // Predicated region
      $region9: #{isab_forward.1} parent=5 // pred_check
        _
      $region10: #{isab_forward.1} parent=5 // pred_check_branch
        %211 = sbr.rel (%p208) target = $region12
      $region11: #{isab_forward.1} parent=5 // pred_region
        %s212 = ssub.s32 %s20, 1
        // Predicated region
        $region13: #{isab_forward.1} parent=11 // pred_check
          %p213 = pneg %p67
        $region14: #{isab_forward.1} parent=11 // pred_check_branch
          %215 = sbr.rel (%p213) target = $region16
        $region15: #{isab_forward.1} parent=11 // pred_region
          _
        $region16: #{isab_forward.1} parent=11 // pred_fallthru
          _
        // Predicated region
        $region17: #{isab_forward.1} parent=11 // pred_check
          %p216 = pneg %p88
        $region18: #{isab_forward.1} parent=11 // pred_check_branch
          %218 = sbr.rel (%p216) target = $region20
        $region19: #{isab_forward.1} parent=11 // pred_region
          _
        $region20: #{isab_forward.1} parent=11 // pred_fallthru
          _
        // Predicated region
        $region21: #{isab_forward.1} parent=11 // pred_check
          %p219 = pneg %p109
        $region22: #{isab_forward.1} parent=11 // pred_check_branch
          %221 = sbr.rel (%p219) target = $region24
        $region23: #{isab_forward.1} parent=11 // pred_region
          %s223 = ssub.s32 768, 768
          %224 = vsyncadd [#allocation6], %s223
          %s225 = sshll.u32 [#allocation5], 4
          %s226 = int_to_ptr.vmem [resolvable:$true] %s225
          %231 = dma.hbm_to_vmem [thread:$0]  %s3, 768, %s226, [#allocation6], 16, 16, 1
        $region24: #{isab_forward.1} parent=11 // pred_fallthru
          _
        // Predicated region
        $region25: #{isab_forward.1} parent=11 // pred_check
          %p232 = pneg %p130
        $region26: #{isab_forward.1} parent=11 // pred_check_branch
          %234 = sbr.rel (%p232) target = $region28
        $region27: #{isab_forward.1} parent=11 // pred_region
          _
        $region28: #{isab_forward.1} parent=11 // pred_fallthru
          _
        // Predicated region
        $region29: #{isab_forward.1} parent=11 // pred_check
          %p235 = pneg %p151
        $region30: #{isab_forward.1} parent=11 // pred_check_branch
          %237 = sbr.rel (%p235) target = $region32
        $region31: #{isab_forward.1} parent=11 // pred_region
          %s239 = ssub.s32 512, 512
          %240 = vsyncadd [#allocation6], %s239
          %s241 = sshll.u32 [#allocation7], 4
          %s242 = int_to_ptr.vmem [resolvable:$true] %s241
          %247 = dma.hbm_to_vmem [thread:$0]  %s5, 512, %s242, [#allocation6], 128, 128, 8
        $region32: #{isab_forward.1} parent=11 // pred_fallthru
          _
        // Predicated region
        $region33: #{isab_forward.1} parent=11 // pred_check
          %p248 = pneg %p172
        $region34: #{isab_forward.1} parent=11 // pred_check_branch
          %250 = sbr.rel (%p248) target = $region36
        $region35: #{isab_forward.1} parent=11 // pred_region
          _
        $region36: #{isab_forward.1} parent=11 // pred_fallthru
          _
      $region12: #{isab_forward.1} parent=5 // pred_fallthru
        _
      %p251 = scmp.lt.s32.totalorder %s20, 4
      // Predicated region
      $region37: #{isab_forward.1} parent=5 // pred_check
        %p252 = pneg %p251
      $region38: #{isab_forward.1} parent=5 // pred_check_branch
        %254 = sbr.rel (%p252) target = $region40
      $region39: #{isab_forward.1} parent=5 // pred_region
        // Predicated region
        $region41: #{isab_forward.1} parent=39 // pred_check
          %p255 = pneg %p40
        $region42: #{isab_forward.1} parent=39 // pred_check_branch
          %257 = sbr.rel (%p255) target = $region44
        $region43: #{isab_forward.1} parent=39 // pred_region
          %s258 = sand.u32 %s30, 1
          %s259 = scalar_lea.sflag [#allocation3], %s258
          %s260 = sand.u32 %s30, 1
          %s261 = smul.addr %s260, 8
          %s262 = scalar_lea.vmem [#allocation2], %s261
          %s264 = ssub.s32 128, 128
          %265 = vsyncadd %s259, %s264
          %s266 = smul.addr %s20, 128
          %s267 = scalar_lea.hbm %s0, %s266
          %s269 = sshll.u32 %s262, 4
          %s270 = int_to_ptr.vmem [resolvable:$true] %s269
          %272 = dma.hbm_to_vmem [thread:$0]  %s267, 128, %s270, %s259
        $region44: #{isab_forward.1} parent=39 // pred_fallthru
          _
      $region40: #{isab_forward.1} parent=5 // pred_fallthru
        _
      %p273 = scmp.le.s32.totalorder 1, %s20
      %p274 = scmp.lt.s32.totalorder %s20, 5
      %p275 = pnand %p273, %p274
      %p276 = pneg %p275
      // Predicated region
      $region45: #{isab_forward.1} parent=5 // pred_check
        _
      $region46: #{isab_forward.1} parent=5 // pred_check_branch
        %278 = sbr.rel (%p275) target = $region48
      $region47: #{isab_forward.1} parent=5 // pred_region
        %s279 = ssub.s32 %s20, 1
        %s280 = sand.u32 %s33, 1
        %s281 = scalar_lea.sflag [#allocation3], %s280
        %s282 = sand.u32 %s33, 1
        %s283 = smul.addr %s282, 8
        %s284 = scalar_lea.vmem [#allocation2], %s283
        // Predicated region
        $region49: #{isab_forward.1} parent=47 // pred_check
          %p285 = pneg %p46
        $region50: #{isab_forward.1} parent=47 // pred_check_branch
          %287 = sbr.rel (%p285) target = $region52
        $region51: #{isab_forward.1} parent=47 // pred_region
          %288 = dma.done %s281, 128
        $region52: #{isab_forward.1} parent=47 // pred_fallthru
          _
        // Predicated region
        $region53: #{isab_forward.1} parent=47 // pred_check
          %p289 = pneg %p109
        $region54: #{isab_forward.1} parent=47 // pred_check_branch
          %291 = sbr.rel (%p289) target = $region56
        $region55: #{isab_forward.1} parent=47 // pred_region
          %292 = dma.done [#allocation6], 768
        $region56: #{isab_forward.1} parent=47 // pred_fallthru
          _
        // Predicated region
        $region57: #{isab_forward.1} parent=47 // pred_check
          %p293 = pneg %p151
        $region58: #{isab_forward.1} parent=47 // pred_check_branch
          %295 = sbr.rel (%p293) target = $region60
        $region59: #{isab_forward.1} parent=47 // pred_region
          %296 = dma.done [#allocation6], 512
        $region60: #{isab_forward.1} parent=47 // pred_fallthru
          _
        %s297 = sand.u32 %s33, 1
        %s298 = scalar_lea.sflag [#allocation3], %s297
        %s299 = sand.u32 %s33, 1
        %s300 = smul.addr %s299, 8
        %s301 = scalar_lea.vmem [#allocation2], %s300
        %p302 = pneg %p46
        %p303 = pneg %p43
        %p304 = pneg %p67
        %p305 = pneg %p64
        %p306 = pneg %p88
        %p307 = pneg %p85
        %p308 = pneg %p109
        %p309 = pneg %p106
        %p310 = pneg %p130
        %p311 = pneg %p127
        %p312 = pneg %p151
        %p313 = pneg %p148
        %p314 = pneg %p172
        %p315 = pneg %p169
        %p316 = pneg %p198
        %p317 = pneg %p195
        %s318 = sand.u32 %s185, 1
        %s319 = scalar_lea.sflag [#allocation4], %s318
        %s320 = sand.u32 %s185, 1
        %s321 = smul.addr %s320, 8
        %s322 = scalar_lea.vmem [#allocation8], %s321
        %v323 = vld [vmem:[%s284] sm:$0xff]
        %v324 = vld [vmem:[%s1] sm:$0xf]
        %v325 = vld [vmem:[%s2] sm:$0xff]
        %v326 = vld [vmem:[%s2 + $0x8] sm:$0xff]
        %v327 = vld [vmem:[%s2 + $0x10] sm:$0xff]
        %v328 = vld [vmem:[%s2 + $0x18] sm:$0xff]
        %v329 = vld [vmem:[%s2 + $0x20] sm:$0xff]
        %v330 = vld [vmem:[%s2 + $0x28] sm:$0xff]
        %v331 = vld [vmem:[%s2 + $0x30] sm:$0xff]
        %v332 = vld [vmem:[%s2 + $0x38] sm:$0xff]
        %v333 = vld [vmem:[%s2 + $0x40] sm:$0xff]
        %v334 = vld [vmem:[%s2 + $0x48] sm:$0xff]
        %v335 = vld [vmem:[%s2 + $0x50] sm:$0xff]
        %v336 = vld [vmem:[%s2 + $0x58] sm:$0xff]
        %v337 = vld [vmem:[%s2 + $0x60] sm:$0xff]
        %v338 = vld [vmem:[%s2 + $0x68] sm:$0xff]
        %v339 = vld [vmem:[%s2 + $0x70] sm:$0xff]
        %v340 = vld [vmem:[%s2 + $0x78] sm:$0xff]
        %v341 = vld [vmem:[#allocation5] sm:$0x1]
        %v342 = vld [vmem:[#allocation5 + $0x1] sm:$0x1]
        %v343 = vld [vmem:[#allocation5 + $0x2] sm:$0x1]
        %v344 = vld [vmem:[#allocation5 + $0x3] sm:$0x1]
        %v345 = vld [vmem:[#allocation5 + $0x4] sm:$0x1]
        %v346 = vld [vmem:[#allocation5 + $0x5] sm:$0x1]
        %v347 = vld [vmem:[#allocation5 + $0x6] sm:$0x1]
        %v348 = vld [vmem:[#allocation5 + $0x7] sm:$0x1]
        %v357 = vlaneseq
        %v358 = vshrl.u32 %v357, 7
        %v359 = vsub.s32 0, %v358
        %v360 = vrot.slane %v341, %v359
        %v361 = vlaneseq
        %v362 = vshrl.u32 %v361, 7
        %v363 = vsub.s32 0, %v362
        %v364 = vrot.slane %v342, %v363
        %v365 = vlaneseq
        %v366 = vshrl.u32 %v365, 7
        %v367 = vsub.s32 0, %v366
        %v368 = vrot.slane %v343, %v367
        %v369 = vlaneseq
        %v370 = vshrl.u32 %v369, 7
        %v371 = vsub.s32 0, %v370
        %v372 = vrot.slane %v344, %v371
        %v373 = vlaneseq
        %v374 = vshrl.u32 %v373, 7
        %v375 = vsub.s32 0, %v374
        %v376 = vrot.slane %v345, %v375
        %v377 = vlaneseq
        %v378 = vshrl.u32 %v377, 7
        %v379 = vsub.s32 0, %v378
        %v380 = vrot.slane %v346, %v379
        %v381 = vlaneseq
        %v382 = vshrl.u32 %v381, 7
        %v383 = vsub.s32 0, %v382
        %v384 = vrot.slane %v347, %v383
        %v385 = vlaneseq
        %v386 = vshrl.u32 %v385, 7
        %v387 = vsub.s32 0, %v386
        %v388 = vrot.slane %v348, %v387
        %vm397 = vcmask 130048
        %v399 = vsel %vm397, %v324, 0
        %401 = vmatprep.subr.mxu0 0.0
        %402 = vmatpush1.msra.mxu0 %v325
        %403 = vmatprep.subr.mxu0 0.0
        %404 = vmatpush1.msra.mxu0 %v326
        %405 = vmatprep.subr.mxu0 0.0
        %406 = vmatpush1.msra.mxu0 0.0
        %407 = vmatprep.subr.mxu0 0.0
        %408 = vmatpush1.msra.mxu0 0.0
        %409 = vmatprep.subr.mxu0 0.0
        %410 = vmatpush1.msra.mxu0 0.0
        %411 = vmatprep.subr.mxu0 0.0
        %412 = vmatpush1.msra.mxu0 0.0
        %413 = vmatprep.subr.mxu0 0.0
        %414 = vmatpush1.msra.mxu0 0.0
        %415 = vmatprep.subr.mxu0 0.0
        %416 = vmatpush1.msra.mxu0 0.0
        %417 = vmatprep.subr.mxu0 0.0
        %418 = vmatpush1.msra.mxu0 0.0
        %419 = vmatprep.subr.mxu0 0.0
        %420 = vmatpush1.msra.mxu0 0.0
        %421 = vmatprep.subr.mxu0 0.0
        %422 = vmatpush1.msra.mxu0 0.0
        %423 = vmatprep.subr.mxu0 0.0
        %424 = vmatpush1.msra.mxu0 0.0
        %425 = vmatprep.subr.mxu0 0.0
        %426 = vmatpush1.msra.mxu0 0.0
        %427 = vmatprep.subr.mxu0 0.0
        %428 = vmatpush1.msra.mxu0 0.0
        %429 = vmatprep.subr.mxu0 0.0
        %430 = vmatpush1.msra.mxu0 0.0
        %431 = vmatprep.subr.mxu0 0.0
        %432 = vmatpush1.msra.mxu0 0.0
        %433 = vmatprep.subr.mxu0 0.0
        %434 = vmatpush1.msra.mxu0 0.0
        %435 = vmatprep.subr.mxu0 0.0
        %436 = vmatpush1.msra.mxu0 0.0
        %437 = vmatprep.subr.mxu0 0.0
        %438 = vmatpush1.msra.mxu0 0.0
        %439 = vmatprep.subr.mxu0 0.0
        %440 = vmatpush1.msra.mxu0 0.0
        %441 = vmatprep.subr.mxu0 0.0
        %442 = vmatpush1.msra.mxu0 0.0
        %443 = vmatprep.subr.mxu0 0.0
        %444 = vmatpush1.msra.mxu0 0.0
        %445 = vmatprep.subr.mxu0 0.0
        %446 = vmatpush1.msra.mxu0 0.0
        %447 = vmatprep.subr.mxu0 0.0
        %448 = vmatpush1.msra.mxu0 0.0
        %449 = vmatprep.subr.mxu0 0.0
        %450 = vmatpush1.msra.mxu0 0.0
        %451 = vmatprep.subr.mxu0 0.0
        %452 = vmatpush1.msra.mxu0 0.0
        %453 = vmatprep.subr.mxu0 0.0
        %454 = vmatpush1.msra.mxu0 0.0
        %455 = vmatprep.subr.mxu0 0.0
        %456 = vmatpush1.msra.mxu0 0.0
        %457 = vmatprep.subr.mxu0 0.0
        %458 = vmatpush1.msra.mxu0 0.0
        %459 = vmatprep.subr.mxu0 0.0
        %460 = vmatpush1.msra.mxu0 0.0
        %461 = vmatprep.subr.mxu0 0.0
        %462 = vmatpush1.msra.mxu0 0.0
        %463 = vmatprep.subr.mxu0 0.0
        %464 = vmatpush1.msra.mxu0 0.0
        %465 = vmatprep.mubr.f32.mxu0 0.0
        %466 = vmatmul.mubr.f32.gmra.mrb[0].mxu0 %v399
        %v467 = vpop.f32.mrb[0].mxu0
        %v468 = vadd.f32 %v360, %v467
        %v469 = vpop.f32.mrb[0].mxu0
        %470 = vdwg.mxu0
        %471 = vmatprep.subr.mxu0 0.0
        %472 = vmatpush1.msra.mxu0 %v327
        %473 = vmatprep.subr.mxu0 0.0
        %474 = vmatpush1.msra.mxu0 %v328
        %475 = vmatprep.subr.mxu0 0.0
        %476 = vmatpush1.msra.mxu0 0.0
        %477 = vmatprep.subr.mxu0 0.0
        %478 = vmatpush1.msra.mxu0 0.0
        %479 = vmatprep.subr.mxu0 0.0
        %480 = vmatpush1.msra.mxu0 0.0
        %481 = vmatprep.subr.mxu0 0.0
        %482 = vmatpush1.msra.mxu0 0.0
        %483 = vmatprep.subr.mxu0 0.0
        %484 = vmatpush1.msra.mxu0 0.0
        %485 = vmatprep.subr.mxu0 0.0
        %486 = vmatpush1.msra.mxu0 0.0
        %487 = vmatprep.subr.mxu0 0.0
        %488 = vmatpush1.msra.mxu0 0.0
        %489 = vmatprep.subr.mxu0 0.0
        %490 = vmatpush1.msra.mxu0 0.0
        %491 = vmatprep.subr.mxu0 0.0
        %492 = vmatpush1.msra.mxu0 0.0
        %493 = vmatprep.subr.mxu0 0.0
        %494 = vmatpush1.msra.mxu0 0.0
        %495 = vmatprep.subr.mxu0 0.0
        %496 = vmatpush1.msra.mxu0 0.0
        %497 = vmatprep.subr.mxu0 0.0
        %498 = vmatpush1.msra.mxu0 0.0
        %499 = vmatprep.subr.mxu0 0.0
        %500 = vmatpush1.msra.mxu0 0.0
        %501 = vmatprep.subr.mxu0 0.0
        %502 = vmatpush1.msra.mxu0 0.0
        %503 = vmatprep.subr.mxu0 0.0
        %504 = vmatpush1.msra.mxu0 0.0
        %505 = vmatprep.subr.mxu0 0.0
        %506 = vmatpush1.msra.mxu0 0.0
        %507 = vmatprep.subr.mxu0 0.0
        %508 = vmatpush1.msra.mxu0 0.0
        %509 = vmatprep.subr.mxu0 0.0
        %510 = vmatpush1.msra.mxu0 0.0
        %511 = vmatprep.subr.mxu0 0.0
        %512 = vmatpush1.msra.mxu0 0.0
        %513 = vmatprep.subr.mxu0 0.0
        %514 = vmatpush1.msra.mxu0 0.0
        %515 = vmatprep.subr.mxu0 0.0
        %516 = vmatpush1.msra.mxu0 0.0
        %517 = vmatprep.subr.mxu0 0.0
        %518 = vmatpush1.msra.mxu0 0.0
        %519 = vmatprep.subr.mxu0 0.0
        %520 = vmatpush1.msra.mxu0 0.0
        %521 = vmatprep.subr.mxu0 0.0
        %522 = vmatpush1.msra.mxu0 0.0
        %523 = vmatprep.subr.mxu0 0.0
        %524 = vmatpush1.msra.mxu0 0.0
        %525 = vmatprep.subr.mxu0 0.0
        %526 = vmatpush1.msra.mxu0 0.0
        %527 = vmatprep.subr.mxu0 0.0
        %528 = vmatpush1.msra.mxu0 0.0
        %529 = vmatprep.subr.mxu0 0.0
        %530 = vmatpush1.msra.mxu0 0.0
        %531 = vmatprep.subr.mxu0 0.0
        %532 = vmatpush1.msra.mxu0 0.0
        %533 = vmatprep.subr.mxu0 0.0
        %534 = vmatpush1.msra.mxu0 0.0
        %535 = vmatprep.mubr.f32.mxu0 0.0
        %536 = vmatmul.mubr.f32.gmra.mrb[0].mxu0 %v399
        %v537 = vpop.f32.mrb[0].mxu0
        %v538 = vadd.f32 %v364, %v537
        %v539 = vpop.f32.mrb[0].mxu0
        %540 = vdwg.mxu0
        %541 = vmatprep.subr.mxu0 0.0
        %542 = vmatpush1.msra.mxu0 %v329
        %543 = vmatprep.subr.mxu0 0.0
        %544 = vmatpush1.msra.mxu0 %v330
        %545 = vmatprep.subr.mxu0 0.0
        %546 = vmatpush1.msra.mxu0 0.0
        %547 = vmatprep.subr.mxu0 0.0
        %548 = vmatpush1.msra.mxu0 0.0
        %549 = vmatprep.subr.mxu0 0.0
        %550 = vmatpush1.msra.mxu0 0.0
        %551 = vmatprep.subr.mxu0 0.0
        %552 = vmatpush1.msra.mxu0 0.0
        %553 = vmatprep.subr.mxu0 0.0
        %554 = vmatpush1.msra.mxu0 0.0
        %555 = vmatprep.subr.mxu0 0.0
        %556 = vmatpush1.msra.mxu0 0.0
        %557 = vmatprep.subr.mxu0 0.0
        %558 = vmatpush1.msra.mxu0 0.0
        %559 = vmatprep.subr.mxu0 0.0
        %560 = vmatpush1.msra.mxu0 0.0
        %561 = vmatprep.subr.mxu0 0.0
        %562 = vmatpush1.msra.mxu0 0.0
        %563 = vmatprep.subr.mxu0 0.0
        %564 = vmatpush1.msra.mxu0 0.0
        %565 = vmatprep.subr.mxu0 0.0
        %566 = vmatpush1.msra.mxu0 0.0
        %567 = vmatprep.subr.mxu0 0.0
        %568 = vmatpush1.msra.mxu0 0.0
        %569 = vmatprep.subr.mxu0 0.0
        %570 = vmatpush1.msra.mxu0 0.0
        %571 = vmatprep.subr.mxu0 0.0
        %572 = vmatpush1.msra.mxu0 0.0
        %573 = vmatprep.subr.mxu0 0.0
        %574 = vmatpush1.msra.mxu0 0.0
        %575 = vmatprep.subr.mxu0 0.0
        %576 = vmatpush1.msra.mxu0 0.0
        %577 = vmatprep.subr.mxu0 0.0
        %578 = vmatpush1.msra.mxu0 0.0
        %579 = vmatprep.subr.mxu0 0.0
        %580 = vmatpush1.msra.mxu0 0.0
        %581 = vmatprep.subr.mxu0 0.0
        %582 = vmatpush1.msra.mxu0 0.0
        %583 = vmatprep.subr.mxu0 0.0
        %584 = vmatpush1.msra.mxu0 0.0
        %585 = vmatprep.subr.mxu0 0.0
        %586 = vmatpush1.msra.mxu0 0.0
        %587 = vmatprep.subr.mxu0 0.0
        %588 = vmatpush1.msra.mxu0 0.0
        %589 = vmatprep.subr.mxu0 0.0
        %590 = vmatpush1.msra.mxu0 0.0
        %591 = vmatprep.subr.mxu0 0.0
        %592 = vmatpush1.msra.mxu0 0.0
        %593 = vmatprep.subr.mxu0 0.0
        %594 = vmatpush1.msra.mxu0 0.0
        %595 = vmatprep.subr.mxu0 0.0
        %596 = vmatpush1.msra.mxu0 0.0
        %597 = vmatprep.subr.mxu0 0.0
        %598 = vmatpush1.msra.mxu0 0.0
        %599 = vmatprep.subr.mxu0 0.0
        %600 = vmatpush1.msra.mxu0 0.0
        %601 = vmatprep.subr.mxu0 0.0
        %602 = vmatpush1.msra.mxu0 0.0
        %603 = vmatprep.subr.mxu0 0.0
        %604 = vmatpush1.msra.mxu0 0.0
        %605 = vmatprep.mubr.f32.mxu0 0.0
        %606 = vmatmul.mubr.f32.gmra.mrb[0].mxu0 %v399
        %v607 = vpop.f32.mrb[0].mxu0
        %v608 = vadd.f32 %v368, %v607
        %v609 = vpop.f32.mrb[0].mxu0
        %610 = vdwg.mxu0
        %611 = vmatprep.subr.mxu0 0.0
        %612 = vmatpush1.msra.mxu0 %v331
        %613 = vmatprep.subr.mxu0 0.0
        %614 = vmatpush1.msra.mxu0 %v332
        %615 = vmatprep.subr.mxu0 0.0
        %616 = vmatpush1.msra.mxu0 0.0
        %617 = vmatprep.subr.mxu0 0.0
        %618 = vmatpush1.msra.mxu0 0.0
        %619 = vmatprep.subr.mxu0 0.0
        %620 = vmatpush1.msra.mxu0 0.0
        %621 = vmatprep.subr.mxu0 0.0
        %622 = vmatpush1.msra.mxu0 0.0
        %623 = vmatprep.subr.mxu0 0.0
        %624 = vmatpush1.msra.mxu0 0.0
        %625 = vmatprep.subr.mxu0 0.0
        %626 = vmatpush1.msra.mxu0 0.0
        %627 = vmatprep.subr.mxu0 0.0
        %628 = vmatpush1.msra.mxu0 0.0
        %629 = vmatprep.subr.mxu0 0.0
        %630 = vmatpush1.msra.mxu0 0.0
        %631 = vmatprep.subr.mxu0 0.0
        %632 = vmatpush1.msra.mxu0 0.0
        %633 = vmatprep.subr.mxu0 0.0
        %634 = vmatpush1.msra.mxu0 0.0
        %635 = vmatprep.subr.mxu0 0.0
        %636 = vmatpush1.msra.mxu0 0.0
        %637 = vmatprep.subr.mxu0 0.0
        %638 = vmatpush1.msra.mxu0 0.0
        %639 = vmatprep.subr.mxu0 0.0
        %640 = vmatpush1.msra.mxu0 0.0
        %641 = vmatprep.subr.mxu0 0.0
        %642 = vmatpush1.msra.mxu0 0.0
        %643 = vmatprep.subr.mxu0 0.0
        %644 = vmatpush1.msra.mxu0 0.0
        %645 = vmatprep.subr.mxu0 0.0
        %646 = vmatpush1.msra.mxu0 0.0
        %647 = vmatprep.subr.mxu0 0.0
        %648 = vmatpush1.msra.mxu0 0.0
        %649 = vmatprep.subr.mxu0 0.0
        %650 = vmatpush1.msra.mxu0 0.0
        %651 = vmatprep.subr.mxu0 0.0
        %652 = vmatpush1.msra.mxu0 0.0
        %653 = vmatprep.subr.mxu0 0.0
        %654 = vmatpush1.msra.mxu0 0.0
        %655 = vmatprep.subr.mxu0 0.0
        %656 = vmatpush1.msra.mxu0 0.0
        %657 = vmatprep.subr.mxu0 0.0
        %658 = vmatpush1.msra.mxu0 0.0
        %659 = vmatprep.subr.mxu0 0.0
        %660 = vmatpush1.msra.mxu0 0.0
        %661 = vmatprep.subr.mxu0 0.0
        %662 = vmatpush1.msra.mxu0 0.0
        %663 = vmatprep.subr.mxu0 0.0
        %664 = vmatpush1.msra.mxu0 0.0
        %665 = vmatprep.subr.mxu0 0.0
        %666 = vmatpush1.msra.mxu0 0.0
        %667 = vmatprep.subr.mxu0 0.0
        %668 = vmatpush1.msra.mxu0 0.0
        %669 = vmatprep.subr.mxu0 0.0
        %670 = vmatpush1.msra.mxu0 0.0
        %671 = vmatprep.subr.mxu0 0.0
        %672 = vmatpush1.msra.mxu0 0.0
        %673 = vmatprep.subr.mxu0 0.0
        %674 = vmatpush1.msra.mxu0 0.0
        %675 = vmatprep.mubr.f32.mxu0 0.0
        %676 = vmatmul.mubr.f32.gmra.mrb[0].mxu0 %v399
        %v677 = vpop.f32.mrb[0].mxu0
        %v678 = vadd.f32 %v372, %v677
        %v679 = vpop.f32.mrb[0].mxu0
        %680 = vdwg.mxu0
        %681 = vmatprep.subr.mxu0 0.0
        %682 = vmatpush1.msra.mxu0 %v333
        %683 = vmatprep.subr.mxu0 0.0
        %684 = vmatpush1.msra.mxu0 %v334
        %685 = vmatprep.subr.mxu0 0.0
        %686 = vmatpush1.msra.mxu0 0.0
        %687 = vmatprep.subr.mxu0 0.0
        %688 = vmatpush1.msra.mxu0 0.0
        %689 = vmatprep.subr.mxu0 0.0
        %690 = vmatpush1.msra.mxu0 0.0
        %691 = vmatprep.subr.mxu0 0.0
        %692 = vmatpush1.msra.mxu0 0.0
        %693 = vmatprep.subr.mxu0 0.0
        %694 = vmatpush1.msra.mxu0 0.0
        %695 = vmatprep.subr.mxu0 0.0
        %696 = vmatpush1.msra.mxu0 0.0
        %697 = vmatprep.subr.mxu0 0.0
        %698 = vmatpush1.msra.mxu0 0.0
        %699 = vmatprep.subr.mxu0 0.0
        %700 = vmatpush1.msra.mxu0 0.0
        %701 = vmatprep.subr.mxu0 0.0
        %702 = vmatpush1.msra.mxu0 0.0
        %703 = vmatprep.subr.mxu0 0.0
        %704 = vmatpush1.msra.mxu0 0.0
        %705 = vmatprep.subr.mxu0 0.0
        %706 = vmatpush1.msra.mxu0 0.0
        %707 = vmatprep.subr.mxu0 0.0
        %708 = vmatpush1.msra.mxu0 0.0
        %709 = vmatprep.subr.mxu0 0.0
        %710 = vmatpush1.msra.mxu0 0.0
        %711 = vmatprep.subr.mxu0 0.0
        %712 = vmatpush1.msra.mxu0 0.0
        %713 = vmatprep.subr.mxu0 0.0
        %714 = vmatpush1.msra.mxu0 0.0
        %715 = vmatprep.subr.mxu0 0.0
        %716 = vmatpush1.msra.mxu0 0.0
        %717 = vmatprep.subr.mxu0 0.0
        %718 = vmatpush1.msra.mxu0 0.0
        %719 = vmatprep.subr.mxu0 0.0
        %720 = vmatpush1.msra.mxu0 0.0
        %721 = vmatprep.subr.mxu0 0.0
        %722 = vmatpush1.msra.mxu0 0.0
        %723 = vmatprep.subr.mxu0 0.0
        %724 = vmatpush1.msra.mxu0 0.0
        %725 = vmatprep.subr.mxu0 0.0
        %726 = vmatpush1.msra.mxu0 0.0
        %727 = vmatprep.subr.mxu0 0.0
        %728 = vmatpush1.msra.mxu0 0.0
        %729 = vmatprep.subr.mxu0 0.0
        %730 = vmatpush1.msra.mxu0 0.0
        %731 = vmatprep.subr.mxu0 0.0
        %732 = vmatpush1.msra.mxu0 0.0
        %733 = vmatprep.subr.mxu0 0.0
        %734 = vmatpush1.msra.mxu0 0.0
        %735 = vmatprep.subr.mxu0 0.0
        %736 = vmatpush1.msra.mxu0 0.0
        %737 = vmatprep.subr.mxu0 0.0
        %738 = vmatpush1.msra.mxu0 0.0
        %739 = vmatprep.subr.mxu0 0.0
        %740 = vmatpush1.msra.mxu0 0.0
        %741 = vmatprep.subr.mxu0 0.0
        %742 = vmatpush1.msra.mxu0 0.0
        %743 = vmatprep.subr.mxu0 0.0
        %744 = vmatpush1.msra.mxu0 0.0
        %745 = vmatprep.mubr.f32.mxu0 0.0
        %746 = vmatmul.mubr.f32.gmra.mrb[0].mxu0 %v399
        %v747 = vpop.f32.mrb[0].mxu0
        %v748 = vadd.f32 %v376, %v747
        %v749 = vpop.f32.mrb[0].mxu0
        %750 = vdwg.mxu0
        %751 = vmatprep.subr.mxu0 0.0
        %752 = vmatpush1.msra.mxu0 %v335
        %753 = vmatprep.subr.mxu0 0.0
        %754 = vmatpush1.msra.mxu0 %v336
        %755 = vmatprep.subr.mxu0 0.0
        %756 = vmatpush1.msra.mxu0 0.0
        %757 = vmatprep.subr.mxu0 0.0
        %758 = vmatpush1.msra.mxu0 0.0
        %759 = vmatprep.subr.mxu0 0.0
        %760 = vmatpush1.msra.mxu0 0.0
        %761 = vmatprep.subr.mxu0 0.0
        %762 = vmatpush1.msra.mxu0 0.0
        %763 = vmatprep.subr.mxu0 0.0
        %764 = vmatpush1.msra.mxu0 0.0
        %765 = vmatprep.subr.mxu0 0.0
        %766 = vmatpush1.msra.mxu0 0.0
        %767 = vmatprep.subr.mxu0 0.0
        %768 = vmatpush1.msra.mxu0 0.0
        %769 = vmatprep.subr.mxu0 0.0
        %770 = vmatpush1.msra.mxu0 0.0
        %771 = vmatprep.subr.mxu0 0.0
        %772 = vmatpush1.msra.mxu0 0.0
        %773 = vmatprep.subr.mxu0 0.0
        %774 = vmatpush1.msra.mxu0 0.0
        %775 = vmatprep.subr.mxu0 0.0
        %776 = vmatpush1.msra.mxu0 0.0
        %777 = vmatprep.subr.mxu0 0.0
        %778 = vmatpush1.msra.mxu0 0.0
        %779 = vmatprep.subr.mxu0 0.0
        %780 = vmatpush1.msra.mxu0 0.0
        %781 = vmatprep.subr.mxu0 0.0
        %782 = vmatpush1.msra.mxu0 0.0
        %783 = vmatprep.subr.mxu0 0.0
        %784 = vmatpush1.msra.mxu0 0.0
        %785 = vmatprep.subr.mxu0 0.0
        %786 = vmatpush1.msra.mxu0 0.0
        %787 = vmatprep.subr.mxu0 0.0
        %788 = vmatpush1.msra.mxu0 0.0
        %789 = vmatprep.subr.mxu0 0.0
        %790 = vmatpush1.msra.mxu0 0.0
        %791 = vmatprep.subr.mxu0 0.0
        %792 = vmatpush1.msra.mxu0 0.0
        %793 = vmatprep.subr.mxu0 0.0
        %794 = vmatpush1.msra.mxu0 0.0
        %795 = vmatprep.subr.mxu0 0.0
        %796 = vmatpush1.msra.mxu0 0.0
        %797 = vmatprep.subr.mxu0 0.0
        %798 = vmatpush1.msra.mxu0 0.0
        %799 = vmatprep.subr.mxu0 0.0
        %800 = vmatpush1.msra.mxu0 0.0
        %801 = vmatprep.subr.mxu0 0.0
        %802 = vmatpush1.msra.mxu0 0.0
        %803 = vmatprep.subr.mxu0 0.0
        %804 = vmatpush1.msra.mxu0 0.0
        %805 = vmatprep.subr.mxu0 0.0
        %806 = vmatpush1.msra.mxu0 0.0
        %807 = vmatprep.subr.mxu0 0.0
        %808 = vmatpush1.msra.mxu0 0.0
        %809 = vmatprep.subr.mxu0 0.0
        %810 = vmatpush1.msra.mxu0 0.0
        %811 = vmatprep.subr.mxu0 0.0
        %812 = vmatpush1.msra.mxu0 0.0
        %813 = vmatprep.subr.mxu0 0.0
        %814 = vmatpush1.msra.mxu0 0.0
        %815 = vmatprep.mubr.f32.mxu0 0.0
        %816 = vmatmul.mubr.f32.gmra.mrb[0].mxu0 %v399
        %v817 = vpop.f32.mrb[0].mxu0
        %v818 = vadd.f32 %v380, %v817
        %v819 = vpop.f32.mrb[0].mxu0
        %820 = vdwg.mxu0
        %821 = vmatprep.subr.mxu0 0.0
        %822 = vmatpush1.msra.mxu0 %v337
        %823 = vmatprep.subr.mxu0 0.0
        %824 = vmatpush1.msra.mxu0 %v338
        %825 = vmatprep.subr.mxu0 0.0
        %826 = vmatpush1.msra.mxu0 0.0
        %827 = vmatprep.subr.mxu0 0.0
        %828 = vmatpush1.msra.mxu0 0.0
        %829 = vmatprep.subr.mxu0 0.0
        %830 = vmatpush1.msra.mxu0 0.0
        %831 = vmatprep.subr.mxu0 0.0
        %832 = vmatpush1.msra.mxu0 0.0
        %833 = vmatprep.subr.mxu0 0.0
        %834 = vmatpush1.msra.mxu0 0.0
        %835 = vmatprep.subr.mxu0 0.0
        %836 = vmatpush1.msra.mxu0 0.0
        %837 = vmatprep.subr.mxu0 0.0
        %838 = vmatpush1.msra.mxu0 0.0
        %839 = vmatprep.subr.mxu0 0.0
        %840 = vmatpush1.msra.mxu0 0.0
        %841 = vmatprep.subr.mxu0 0.0
        %842 = vmatpush1.msra.mxu0 0.0
        %843 = vmatprep.subr.mxu0 0.0
        %844 = vmatpush1.msra.mxu0 0.0
        %845 = vmatprep.subr.mxu0 0.0
        %846 = vmatpush1.msra.mxu0 0.0
        %847 = vmatprep.subr.mxu0 0.0
        %848 = vmatpush1.msra.mxu0 0.0
        %849 = vmatprep.subr.mxu0 0.0
        %850 = vmatpush1.msra.mxu0 0.0
        %851 = vmatprep.subr.mxu0 0.0
        %852 = vmatpush1.msra.mxu0 0.0
        %853 = vmatprep.subr.mxu0 0.0
        %854 = vmatpush1.msra.mxu0 0.0
        %855 = vmatprep.subr.mxu0 0.0
        %856 = vmatpush1.msra.mxu0 0.0
        %857 = vmatprep.subr.mxu0 0.0
        %858 = vmatpush1.msra.mxu0 0.0
        %859 = vmatprep.subr.mxu0 0.0
        %860 = vmatpush1.msra.mxu0 0.0
        %861 = vmatprep.subr.mxu0 0.0
        %862 = vmatpush1.msra.mxu0 0.0
        %863 = vmatprep.subr.mxu0 0.0
        %864 = vmatpush1.msra.mxu0 0.0
        %865 = vmatprep.subr.mxu0 0.0
        %866 = vmatpush1.msra.mxu0 0.0
        %867 = vmatprep.subr.mxu0 0.0
        %868 = vmatpush1.msra.mxu0 0.0
        %869 = vmatprep.subr.mxu0 0.0
        %870 = vmatpush1.msra.mxu0 0.0
        %871 = vmatprep.subr.mxu0 0.0
        %872 = vmatpush1.msra.mxu0 0.0
        %873 = vmatprep.subr.mxu0 0.0
        %874 = vmatpush1.msra.mxu0 0.0
        %875 = vmatprep.subr.mxu0 0.0
        %876 = vmatpush1.msra.mxu0 0.0
        %877 = vmatprep.subr.mxu0 0.0
        %878 = vmatpush1.msra.mxu0 0.0
        %879 = vmatprep.subr.mxu0 0.0
        %880 = vmatpush1.msra.mxu0 0.0
        %881 = vmatprep.subr.mxu0 0.0
        %882 = vmatpush1.msra.mxu0 0.0
        %883 = vmatprep.subr.mxu0 0.0
        %884 = vmatpush1.msra.mxu0 0.0
        %885 = vmatprep.mubr.f32.mxu0 0.0
        %886 = vmatmul.mubr.f32.gmra.mrb[0].mxu0 %v399
        %v887 = vpop.f32.mrb[0].mxu0
        %v888 = vadd.f32 %v384, %v887
        %v889 = vpop.f32.mrb[0].mxu0
        %890 = vdwg.mxu0
        %891 = vmatprep.subr.mxu0 0.0
        %892 = vmatpush1.msra.mxu0 %v339
        %893 = vmatprep.subr.mxu0 0.0
        %894 = vmatpush1.msra.mxu0 %v340
        %895 = vmatprep.subr.mxu0 0.0
        %896 = vmatpush1.msra.mxu0 0.0
        %897 = vmatprep.subr.mxu0 0.0
        %898 = vmatpush1.msra.mxu0 0.0
        %899 = vmatprep.subr.mxu0 0.0
        %900 = vmatpush1.msra.mxu0 0.0
        %901 = vmatprep.subr.mxu0 0.0
        %902 = vmatpush1.msra.mxu0 0.0
        %903 = vmatprep.subr.mxu0 0.0
        %904 = vmatpush1.msra.mxu0 0.0
        %905 = vmatprep.subr.mxu0 0.0
        %906 = vmatpush1.msra.mxu0 0.0
        %907 = vmatprep.subr.mxu0 0.0
        %908 = vmatpush1.msra.mxu0 0.0
        %909 = vmatprep.subr.mxu0 0.0
        %910 = vmatpush1.msra.mxu0 0.0
        %911 = vmatprep.subr.mxu0 0.0
        %912 = vmatpush1.msra.mxu0 0.0
        %913 = vmatprep.subr.mxu0 0.0
        %914 = vmatpush1.msra.mxu0 0.0
        %915 = vmatprep.subr.mxu0 0.0
        %916 = vmatpush1.msra.mxu0 0.0
        %917 = vmatprep.subr.mxu0 0.0
        %918 = vmatpush1.msra.mxu0 0.0
        %919 = vmatprep.subr.mxu0 0.0
        %920 = vmatpush1.msra.mxu0 0.0
        %921 = vmatprep.subr.mxu0 0.0
        %922 = vmatpush1.msra.mxu0 0.0
        %923 = vmatprep.subr.mxu0 0.0
        %924 = vmatpush1.msra.mxu0 0.0
        %925 = vmatprep.subr.mxu0 0.0
        %926 = vmatpush1.msra.mxu0 0.0
        %927 = vmatprep.subr.mxu0 0.0
        %928 = vmatpush1.msra.mxu0 0.0
        %929 = vmatprep.subr.mxu0 0.0
        %930 = vmatpush1.msra.mxu0 0.0
        %931 = vmatprep.subr.mxu0 0.0
        %932 = vmatpush1.msra.mxu0 0.0
        %933 = vmatprep.subr.mxu0 0.0
        %934 = vmatpush1.msra.mxu0 0.0
        %935 = vmatprep.subr.mxu0 0.0
        %936 = vmatpush1.msra.mxu0 0.0
        %937 = vmatprep.subr.mxu0 0.0
        %938 = vmatpush1.msra.mxu0 0.0
        %939 = vmatprep.subr.mxu0 0.0
        %940 = vmatpush1.msra.mxu0 0.0
        %941 = vmatprep.subr.mxu0 0.0
        %942 = vmatpush1.msra.mxu0 0.0
        %943 = vmatprep.subr.mxu0 0.0
        %944 = vmatpush1.msra.mxu0 0.0
        %945 = vmatprep.subr.mxu0 0.0
        %946 = vmatpush1.msra.mxu0 0.0
        %947 = vmatprep.subr.mxu0 0.0
        %948 = vmatpush1.msra.mxu0 0.0
        %949 = vmatprep.subr.mxu0 0.0
        %950 = vmatpush1.msra.mxu0 0.0
        %951 = vmatprep.subr.mxu0 0.0
        %952 = vmatpush1.msra.mxu0 0.0
        %953 = vmatprep.subr.mxu0 0.0
        %954 = vmatpush1.msra.mxu0 0.0
        %955 = vmatprep.mubr.f32.mxu0 0.0
        %956 = vmatmul.mubr.f32.gmra.mrb[0].mxu0 %v399
        %v957 = vpop.f32.mrb[0].mxu0
        %v958 = vadd.f32 %v388, %v957
        %v959 = vpop.f32.mrb[0].mxu0
        %960 = vdwg.mxu0
        %s961 = scalar_lea.vmem %s2, 128
        %v962 = vld [vmem:[%s961] sm:$0xff]
        %v963 = vld [vmem:[%s961 + $0x8] sm:$0xff]
        %v964 = vld [vmem:[%s961 + $0x10] sm:$0xff]
        %v965 = vld [vmem:[%s961 + $0x18] sm:$0xff]
        %v966 = vld [vmem:[%s961 + $0x20] sm:$0xff]
        %v967 = vld [vmem:[%s961 + $0x28] sm:$0xff]
        %v968 = vld [vmem:[%s961 + $0x30] sm:$0xff]
        %v969 = vld [vmem:[%s961 + $0x38] sm:$0xff]
        %v970 = vld [vmem:[%s961 + $0x40] sm:$0xff]
        %v971 = vld [vmem:[%s961 + $0x48] sm:$0xff]
        %v972 = vld [vmem:[%s961 + $0x50] sm:$0xff]
        %v973 = vld [vmem:[%s961 + $0x58] sm:$0xff]
        %v974 = vld [vmem:[%s961 + $0x60] sm:$0xff]
        %v975 = vld [vmem:[%s961 + $0x68] sm:$0xff]
        %v976 = vld [vmem:[%s961 + $0x70] sm:$0xff]
        %v977 = vld [vmem:[%s961 + $0x78] sm:$0xff]
        %s978 = scalar_lea.vmem [#allocation5], 8
        %v979 = vld [vmem:[%s978] sm:$0x1]
        %v980 = vld [vmem:[%s978 + $0x1] sm:$0x1]
        %v981 = vld [vmem:[%s978 + $0x2] sm:$0x1]
        %v982 = vld [vmem:[%s978 + $0x3] sm:$0x1]
        %v983 = vld [vmem:[%s978 + $0x4] sm:$0x1]
        %v984 = vld [vmem:[%s978 + $0x5] sm:$0x1]
        %v985 = vld [vmem:[%s978 + $0x6] sm:$0x1]
        %v986 = vld [vmem:[%s978 + $0x7] sm:$0x1]
        %v995 = vlaneseq
        %v996 = vshrl.u32 %v995, 7
        %v997 = vsub.s32 0, %v996
        %v998 = vrot.slane %v979, %v997
        %v999 = vlaneseq
        %v1000 = vshrl.u32 %v999, 7
        %v1001 = vsub.s32 0, %v1000
        %v1002 = vrot.slane %v980, %v1001
        %v1003 = vlaneseq
        %v1004 = vshrl.u32 %v1003, 7
        %v1005 = vsub.s32 0, %v1004
        %v1006 = vrot.slane %v981, %v1005
        %v1007 = vlaneseq
        %v1008 = vshrl.u32 %v1007, 7
        %v1009 = vsub.s32 0, %v1008
        %v1010 = vrot.slane %v982, %v1009
        %v1011 = vlaneseq
        %v1012 = vshrl.u32 %v1011, 7
        %v1013 = vsub.s32 0, %v1012
        %v1014 = vrot.slane %v983, %v1013
        %v1015 = vlaneseq
        %v1016 = vshrl.u32 %v1015, 7
        %v1017 = vsub.s32 0, %v1016
        %v1018 = vrot.slane %v984, %v1017
        %v1019 = vlaneseq
        %v1020 = vshrl.u32 %v1019, 7
        %v1021 = vsub.s32 0, %v1020
        %v1022 = vrot.slane %v985, %v1021
        %v1023 = vlaneseq
        %v1024 = vshrl.u32 %v1023, 7
        %v1025 = vsub.s32 0, %v1024
        %v1026 = vrot.slane %v986, %v1025
        %v1036 = vsel %vm397, %v323, 0
        %1038 = vmatprep.subr.mxu0 0.0
        %1039 = vmatpush1.msra.mxu0 %v962
        %1040 = vmatprep.subr.mxu0 0.0
        %1041 = vmatpush1.msra.mxu0 %v963
        %1042 = vmatprep.subr.mxu0 0.0
        %1043 = vmatpush1.msra.mxu0 0.0
        %1044 = vmatprep.subr.mxu0 0.0
        %1045 = vmatpush1.msra.mxu0 0.0
        %1046 = vmatprep.subr.mxu0 0.0
        %1047 = vmatpush1.msra.mxu0 0.0
        %1048 = vmatprep.subr.mxu0 0.0
        %1049 = vmatpush1.msra.mxu0 0.0
        %1050 = vmatprep.subr.mxu0 0.0
        %1051 = vmatpush1.msra.mxu0 0.0
        %1052 = vmatprep.subr.mxu0 0.0
        %1053 = vmatpush1.msra.mxu0 0.0
        %1054 = vmatprep.subr.mxu0 0.0
        %1055 = vmatpush1.msra.mxu0 0.0
        %1056 = vmatprep.subr.mxu0 0.0
        %1057 = vmatpush1.msra.mxu0 0.0
        %1058 = vmatprep.subr.mxu0 0.0
        %1059 = vmatpush1.msra.mxu0 0.0
        %1060 = vmatprep.subr.mxu0 0.0
        %1061 = vmatpush1.msra.mxu0 0.0
        %1062 = vmatprep.subr.mxu0 0.0
        %1063 = vmatpush1.msra.mxu0 0.0
        %1064 = vmatprep.subr.mxu0 0.0
        %1065 = vmatpush1.msra.mxu0 0.0
        %1066 = vmatprep.subr.mxu0 0.0
        %1067 = vmatpush1.msra.mxu0 0.0
        %1068 = vmatprep.subr.mxu0 0.0
        %1069 = vmatpush1.msra.mxu0 0.0
        %1070 = vmatprep.subr.mxu0 0.0
        %1071 = vmatpush1.msra.mxu0 0.0
        %1072 = vmatprep.subr.mxu0 0.0
        %1073 = vmatpush1.msra.mxu0 0.0
        %1074 = vmatprep.subr.mxu0 0.0
        %1075 = vmatpush1.msra.mxu0 0.0
        %1076 = vmatprep.subr.mxu0 0.0
        %1077 = vmatpush1.msra.mxu0 0.0
        %1078 = vmatprep.subr.mxu0 0.0
        %1079 = vmatpush1.msra.mxu0 0.0
        %1080 = vmatprep.subr.mxu0 0.0
        %1081 = vmatpush1.msra.mxu0 0.0
        %1082 = vmatprep.subr.mxu0 0.0
        %1083 = vmatpush1.msra.mxu0 0.0
        %1084 = vmatprep.subr.mxu0 0.0
        %1085 = vmatpush1.msra.mxu0 0.0
        %1086 = vmatprep.subr.mxu0 0.0
        %1087 = vmatpush1.msra.mxu0 0.0
        %1088 = vmatprep.subr.mxu0 0.0
        %1089 = vmatpush1.msra.mxu0 0.0
        %1090 = vmatprep.subr.mxu0 0.0
        %1091 = vmatpush1.msra.mxu0 0.0
        %1092 = vmatprep.subr.mxu0 0.0
        %1093 = vmatpush1.msra.mxu0 0.0
        %1094 = vmatprep.subr.mxu0 0.0
        %1095 = vmatpush1.msra.mxu0 0.0
        %1096 = vmatprep.subr.mxu0 0.0
        %1097 = vmatpush1.msra.mxu0 0.0
        %1098 = vmatprep.subr.mxu0 0.0
        %1099 = vmatpush1.msra.mxu0 0.0
        %1100 = vmatprep.subr.mxu0 0.0
        %1101 = vmatpush1.msra.mxu0 0.0
        %1102 = vmatprep.mubr.f32.mxu0 0.0
        %1103 = vmatmul.mubr.f32.gmra.mrb[0].mxu0 %v1036
        %v1104 = vpop.f32.mrb[0].mxu0
        %v1105 = vadd.f32 %v998, %v1104
        %v1106 = vpop.f32.mrb[0].mxu0
        %1107 = vdwg.mxu0
        %1108 = vmatprep.subr.mxu0 0.0
        %1109 = vmatpush1.msra.mxu0 %v964
        %1110 = vmatprep.subr.mxu0 0.0
        %1111 = vmatpush1.msra.mxu0 %v965
        %1112 = vmatprep.subr.mxu0 0.0
        %1113 = vmatpush1.msra.mxu0 0.0
        %1114 = vmatprep.subr.mxu0 0.0
        %1115 = vmatpush1.msra.mxu0 0.0
        %1116 = vmatprep.subr.mxu0 0.0
        %1117 = vmatpush1.msra.mxu0 0.0
        %1118 = vmatprep.subr.mxu0 0.0
        %1119 = vmatpush1.msra.mxu0 0.0
        %1120 = vmatprep.subr.mxu0 0.0
        %1121 = vmatpush1.msra.mxu0 0.0
        %1122 = vmatprep.subr.mxu0 0.0
        %1123 = vmatpush1.msra.mxu0 0.0
        %1124 = vmatprep.subr.mxu0 0.0
        %1125 = vmatpush1.msra.mxu0 0.0
        %1126 = vmatprep.subr.mxu0 0.0
        %1127 = vmatpush1.msra.mxu0 0.0
        %1128 = vmatprep.subr.mxu0 0.0
        %1129 = vmatpush1.msra.mxu0 0.0
        %1130 = vmatprep.subr.mxu0 0.0
        %1131 = vmatpush1.msra.mxu0 0.0
        %1132 = vmatprep.subr.mxu0 0.0
        %1133 = vmatpush1.msra.mxu0 0.0
        %1134 = vmatprep.subr.mxu0 0.0
        %1135 = vmatpush1.msra.mxu0 0.0
        %1136 = vmatprep.subr.mxu0 0.0
        %1137 = vmatpush1.msra.mxu0 0.0
        %1138 = vmatprep.subr.mxu0 0.0
        %1139 = vmatpush1.msra.mxu0 0.0
        %1140 = vmatprep.subr.mxu0 0.0
        %1141 = vmatpush1.msra.mxu0 0.0
        %1142 = vmatprep.subr.mxu0 0.0
        %1143 = vmatpush1.msra.mxu0 0.0
        %1144 = vmatprep.subr.mxu0 0.0
        %1145 = vmatpush1.msra.mxu0 0.0
        %1146 = vmatprep.subr.mxu0 0.0
        %1147 = vmatpush1.msra.mxu0 0.0
        %1148 = vmatprep.subr.mxu0 0.0
        %1149 = vmatpush1.msra.mxu0 0.0
        %1150 = vmatprep.subr.mxu0 0.0
        %1151 = vmatpush1.msra.mxu0 0.0
        %1152 = vmatprep.subr.mxu0 0.0
        %1153 = vmatpush1.msra.mxu0 0.0
        %1154 = vmatprep.subr.mxu0 0.0
        %1155 = vmatpush1.msra.mxu0 0.0
        %1156 = vmatprep.subr.mxu0 0.0
        %1157 = vmatpush1.msra.mxu0 0.0
        %1158 = vmatprep.subr.mxu0 0.0
        %1159 = vmatpush1.msra.mxu0 0.0
        %1160 = vmatprep.subr.mxu0 0.0
        %1161 = vmatpush1.msra.mxu0 0.0
        %1162 = vmatprep.subr.mxu0 0.0
        %1163 = vmatpush1.msra.mxu0 0.0
        %1164 = vmatprep.subr.mxu0 0.0
        %1165 = vmatpush1.msra.mxu0 0.0
        %1166 = vmatprep.subr.mxu0 0.0
        %1167 = vmatpush1.msra.mxu0 0.0
        %1168 = vmatprep.subr.mxu0 0.0
        %1169 = vmatpush1.msra.mxu0 0.0
        %1170 = vmatprep.subr.mxu0 0.0
        %1171 = vmatpush1.msra.mxu0 0.0
        %1172 = vmatprep.mubr.f32.mxu0 0.0
        %1173 = vmatmul.mubr.f32.gmra.mrb[0].mxu0 %v1036
        %v1174 = vpop.f32.mrb[0].mxu0
        %v1175 = vadd.f32 %v1002, %v1174
        %v1176 = vpop.f32.mrb[0].mxu0
        %1177 = vdwg.mxu0
        %1178 = vmatprep.subr.mxu0 0.0
        %1179 = vmatpush1.msra.mxu0 %v966
        %1180 = vmatprep.subr.mxu0 0.0
        %1181 = vmatpush1.msra.mxu0 %v967
        %1182 = vmatprep.subr.mxu0 0.0
        %1183 = vmatpush1.msra.mxu0 0.0
        %1184 = vmatprep.subr.mxu0 0.0
        %1185 = vmatpush1.msra.mxu0 0.0
        %1186 = vmatprep.subr.mxu0 0.0
        %1187 = vmatpush1.msra.mxu0 0.0
        %1188 = vmatprep.subr.mxu0 0.0
        %1189 = vmatpush1.msra.mxu0 0.0
        %1190 = vmatprep.subr.mxu0 0.0
        %1191 = vmatpush1.msra.mxu0 0.0
        %1192 = vmatprep.subr.mxu0 0.0
        %1193 = vmatpush1.msra.mxu0 0.0
        %1194 = vmatprep.subr.mxu0 0.0
        %1195 = vmatpush1.msra.mxu0 0.0
        %1196 = vmatprep.subr.mxu0 0.0
        %1197 = vmatpush1.msra.mxu0 0.0
        %1198 = vmatprep.subr.mxu0 0.0
        %1199 = vmatpush1.msra.mxu0 0.0
        %1200 = vmatprep.subr.mxu0 0.0
        %1201 = vmatpush1.msra.mxu0 0.0
        %1202 = vmatprep.subr.mxu0 0.0
        %1203 = vmatpush1.msra.mxu0 0.0
        %1204 = vmatprep.subr.mxu0 0.0
        %1205 = vmatpush1.msra.mxu0 0.0
        %1206 = vmatprep.subr.mxu0 0.0
        %1207 = vmatpush1.msra.mxu0 0.0
        %1208 = vmatprep.subr.mxu0 0.0
        %1209 = vmatpush1.msra.mxu0 0.0
        %1210 = vmatprep.subr.mxu0 0.0
        %1211 = vmatpush1.msra.mxu0 0.0
        %1212 = vmatprep.subr.mxu0 0.0
        %1213 = vmatpush1.msra.mxu0 0.0
        %1214 = vmatprep.subr.mxu0 0.0
        %1215 = vmatpush1.msra.mxu0 0.0
        %1216 = vmatprep.subr.mxu0 0.0
        %1217 = vmatpush1.msra.mxu0 0.0
        %1218 = vmatprep.subr.mxu0 0.0
        %1219 = vmatpush1.msra.mxu0 0.0
        %1220 = vmatprep.subr.mxu0 0.0
        %1221 = vmatpush1.msra.mxu0 0.0
        %1222 = vmatprep.subr.mxu0 0.0
        %1223 = vmatpush1.msra.mxu0 0.0
        %1224 = vmatprep.subr.mxu0 0.0
        %1225 = vmatpush1.msra.mxu0 0.0
        %1226 = vmatprep.subr.mxu0 0.0
        %1227 = vmatpush1.msra.mxu0 0.0
        %1228 = vmatprep.subr.mxu0 0.0
        %1229 = vmatpush1.msra.mxu0 0.0
        %1230 = vmatprep.subr.mxu0 0.0
        %1231 = vmatpush1.msra.mxu0 0.0
        %1232 = vmatprep.subr.mxu0 0.0
        %1233 = vmatpush1.msra.mxu0 0.0
        %1234 = vmatprep.subr.mxu0 0.0
        %1235 = vmatpush1.msra.mxu0 0.0
        %1236 = vmatprep.subr.mxu0 0.0
        %1237 = vmatpush1.msra.mxu0 0.0
        %1238 = vmatprep.subr.mxu0 0.0
        %1239 = vmatpush1.msra.mxu0 0.0
        %1240 = vmatprep.subr.mxu0 0.0
        %1241 = vmatpush1.msra.mxu0 0.0
        %1242 = vmatprep.mubr.f32.mxu0 0.0
        %1243 = vmatmul.mubr.f32.gmra.mrb[0].mxu0 %v1036
        %v1244 = vpop.f32.mrb[0].mxu0
        %v1245 = vadd.f32 %v1006, %v1244
        %v1246 = vpop.f32.mrb[0].mxu0
        %1247 = vdwg.mxu0
        %1248 = vmatprep.subr.mxu0 0.0
        %1249 = vmatpush1.msra.mxu0 %v968
        %1250 = vmatprep.subr.mxu0 0.0
        %1251 = vmatpush1.msra.mxu0 %v969
        %1252 = vmatprep.subr.mxu0 0.0
        %1253 = vmatpush1.msra.mxu0 0.0
        %1254 = vmatprep.subr.mxu0 0.0
        %1255 = vmatpush1.msra.mxu0 0.0
        %1256 = vmatprep.subr.mxu0 0.0
        %1257 = vmatpush1.msra.mxu0 0.0
        %1258 = vmatprep.subr.mxu0 0.0
        %1259 = vmatpush1.msra.mxu0 0.0
        %1260 = vmatprep.subr.mxu0 0.0
        %1261 = vmatpush1.msra.mxu0 0.0
        %1262 = vmatprep.subr.mxu0 0.0
        %1263 = vmatpush1.msra.mxu0 0.0
        %1264 = vmatprep.subr.mxu0 0.0
        %1265 = vmatpush1.msra.mxu0 0.0
        %1266 = vmatprep.subr.mxu0 0.0
        %1267 = vmatpush1.msra.mxu0 0.0
        %1268 = vmatprep.subr.mxu0 0.0
        %1269 = vmatpush1.msra.mxu0 0.0
        %1270 = vmatprep.subr.mxu0 0.0
        %1271 = vmatpush1.msra.mxu0 0.0
        %1272 = vmatprep.subr.mxu0 0.0
        %1273 = vmatpush1.msra.mxu0 0.0
        %1274 = vmatprep.subr.mxu0 0.0
        %1275 = vmatpush1.msra.mxu0 0.0
        %1276 = vmatprep.subr.mxu0 0.0
        %1277 = vmatpush1.msra.mxu0 0.0
        %1278 = vmatprep.subr.mxu0 0.0
        %1279 = vmatpush1.msra.mxu0 0.0
        %1280 = vmatprep.subr.mxu0 0.0
        %1281 = vmatpush1.msra.mxu0 0.0
        %1282 = vmatprep.subr.mxu0 0.0
        %1283 = vmatpush1.msra.mxu0 0.0
        %1284 = vmatprep.subr.mxu0 0.0
        %1285 = vmatpush1.msra.mxu0 0.0
        %1286 = vmatprep.subr.mxu0 0.0
        %1287 = vmatpush1.msra.mxu0 0.0
        %1288 = vmatprep.subr.mxu0 0.0
        %1289 = vmatpush1.msra.mxu0 0.0
        %1290 = vmatprep.subr.mxu0 0.0
        %1291 = vmatpush1.msra.mxu0 0.0
        %1292 = vmatprep.subr.mxu0 0.0
        %1293 = vmatpush1.msra.mxu0 0.0
        %1294 = vmatprep.subr.mxu0 0.0
        %1295 = vmatpush1.msra.mxu0 0.0
        %1296 = vmatprep.subr.mxu0 0.0
        %1297 = vmatpush1.msra.mxu0 0.0
        %1298 = vmatprep.subr.mxu0 0.0
        %1299 = vmatpush1.msra.mxu0 0.0
        %1300 = vmatprep.subr.mxu0 0.0
        %1301 = vmatpush1.msra.mxu0 0.0
        %1302 = vmatprep.subr.mxu0 0.0
        %1303 = vmatpush1.msra.mxu0 0.0
        %1304 = vmatprep.subr.mxu0 0.0
        %1305 = vmatpush1.msra.mxu0 0.0
        %1306 = vmatprep.subr.mxu0 0.0
        %1307 = vmatpush1.msra.mxu0 0.0
        %1308 = vmatprep.subr.mxu0 0.0
        %1309 = vmatpush1.msra.mxu0 0.0
        %1310 = vmatprep.subr.mxu0 0.0
        %1311 = vmatpush1.msra.mxu0 0.0
        %1312 = vmatprep.mubr.f32.mxu0 0.0
        %1313 = vmatmul.mubr.f32.gmra.mrb[0].mxu0 %v1036
        %v1314 = vpop.f32.mrb[0].mxu0
        %v1315 = vadd.f32 %v1010, %v1314
        %v1316 = vpop.f32.mrb[0].mxu0
        %1317 = vdwg.mxu0
        %1318 = vmatprep.subr.mxu0 0.0
        %1319 = vmatpush1.msra.mxu0 %v970
        %1320 = vmatprep.subr.mxu0 0.0
        %1321 = vmatpush1.msra.mxu0 %v971
        %1322 = vmatprep.subr.mxu0 0.0
        %1323 = vmatpush1.msra.mxu0 0.0
        %1324 = vmatprep.subr.mxu0 0.0
        %1325 = vmatpush1.msra.mxu0 0.0
        %1326 = vmatprep.subr.mxu0 0.0
        %1327 = vmatpush1.msra.mxu0 0.0
        %1328 = vmatprep.subr.mxu0 0.0
        %1329 = vmatpush1.msra.mxu0 0.0
        %1330 = vmatprep.subr.mxu0 0.0
        %1331 = vmatpush1.msra.mxu0 0.0
        %1332 = vmatprep.subr.mxu0 0.0
        %1333 = vmatpush1.msra.mxu0 0.0
        %1334 = vmatprep.subr.mxu0 0.0
        %1335 = vmatpush1.msra.mxu0 0.0
        %1336 = vmatprep.subr.mxu0 0.0
        %1337 = vmatpush1.msra.mxu0 0.0
        %1338 = vmatprep.subr.mxu0 0.0
        %1339 = vmatpush1.msra.mxu0 0.0
        %1340 = vmatprep.subr.mxu0 0.0
        %1341 = vmatpush1.msra.mxu0 0.0
        %1342 = vmatprep.subr.mxu0 0.0
        %1343 = vmatpush1.msra.mxu0 0.0
        %1344 = vmatprep.subr.mxu0 0.0
        %1345 = vmatpush1.msra.mxu0 0.0
        %1346 = vmatprep.subr.mxu0 0.0
        %1347 = vmatpush1.msra.mxu0 0.0
        %1348 = vmatprep.subr.mxu0 0.0
        %1349 = vmatpush1.msra.mxu0 0.0
        %1350 = vmatprep.subr.mxu0 0.0
        %1351 = vmatpush1.msra.mxu0 0.0
        %1352 = vmatprep.subr.mxu0 0.0
        %1353 = vmatpush1.msra.mxu0 0.0
        %1354 = vmatprep.subr.mxu0 0.0
        %1355 = vmatpush1.msra.mxu0 0.0
        %1356 = vmatprep.subr.mxu0 0.0
        %1357 = vmatpush1.msra.mxu0 0.0
        %1358 = vmatprep.subr.mxu0 0.0
        %1359 = vmatpush1.msra.mxu0 0.0
        %1360 = vmatprep.subr.mxu0 0.0
        %1361 = vmatpush1.msra.mxu0 0.0
        %1362 = vmatprep.subr.mxu0 0.0
        %1363 = vmatpush1.msra.mxu0 0.0
        %1364 = vmatprep.subr.mxu0 0.0
        %1365 = vmatpush1.msra.mxu0 0.0
        %1366 = vmatprep.subr.mxu0 0.0
        %1367 = vmatpush1.msra.mxu0 0.0
        %1368 = vmatprep.subr.mxu0 0.0
        %1369 = vmatpush1.msra.mxu0 0.0
        %1370 = vmatprep.subr.mxu0 0.0
        %1371 = vmatpush1.msra.mxu0 0.0
        %1372 = vmatprep.subr.mxu0 0.0
        %1373 = vmatpush1.msra.mxu0 0.0
        %1374 = vmatprep.subr.mxu0 0.0
        %1375 = vmatpush1.msra.mxu0 0.0
        %1376 = vmatprep.subr.mxu0 0.0
        %1377 = vmatpush1.msra.mxu0 0.0
        %1378 = vmatprep.subr.mxu0 0.0
        %1379 = vmatpush1.msra.mxu0 0.0
        %1380 = vmatprep.subr.mxu0 0.0
        %1381 = vmatpush1.msra.mxu0 0.0
        %1382 = vmatprep.mubr.f32.mxu0 0.0
        %1383 = vmatmul.mubr.f32.gmra.mrb[0].mxu0 %v1036
        %v1384 = vpop.f32.mrb[0].mxu0
        %v1385 = vadd.f32 %v1014, %v1384
        %v1386 = vpop.f32.mrb[0].mxu0
        %1387 = vdwg.mxu0
        %1388 = vmatprep.subr.mxu0 0.0
        %1389 = vmatpush1.msra.mxu0 %v972
        %1390 = vmatprep.subr.mxu0 0.0
        %1391 = vmatpush1.msra.mxu0 %v973
        %1392 = vmatprep.subr.mxu0 0.0
        %1393 = vmatpush1.msra.mxu0 0.0
        %1394 = vmatprep.subr.mxu0 0.0
        %1395 = vmatpush1.msra.mxu0 0.0
        %1396 = vmatprep.subr.mxu0 0.0
        %1397 = vmatpush1.msra.mxu0 0.0
        %1398 = vmatprep.subr.mxu0 0.0
        %1399 = vmatpush1.msra.mxu0 0.0
        %1400 = vmatprep.subr.mxu0 0.0
        %1401 = vmatpush1.msra.mxu0 0.0
        %1402 = vmatprep.subr.mxu0 0.0
        %1403 = vmatpush1.msra.mxu0 0.0
        %1404 = vmatprep.subr.mxu0 0.0
        %1405 = vmatpush1.msra.mxu0 0.0
        %1406 = vmatprep.subr.mxu0 0.0
        %1407 = vmatpush1.msra.mxu0 0.0
        %1408 = vmatprep.subr.mxu0 0.0
        %1409 = vmatpush1.msra.mxu0 0.0
        %1410 = vmatprep.subr.mxu0 0.0
        %1411 = vmatpush1.msra.mxu0 0.0
        %1412 = vmatprep.subr.mxu0 0.0
        %1413 = vmatpush1.msra.mxu0 0.0
        %1414 = vmatprep.subr.mxu0 0.0
        %1415 = vmatpush1.msra.mxu0 0.0
        %1416 = vmatprep.subr.mxu0 0.0
        %1417 = vmatpush1.msra.mxu0 0.0
        %1418 = vmatprep.subr.mxu0 0.0
        %1419 = vmatpush1.msra.mxu0 0.0
        %1420 = vmatprep.subr.mxu0 0.0
        %1421 = vmatpush1.msra.mxu0 0.0
        %1422 = vmatprep.subr.mxu0 0.0
        %1423 = vmatpush1.msra.mxu0 0.0
        %1424 = vmatprep.subr.mxu0 0.0
        %1425 = vmatpush1.msra.mxu0 0.0
        %1426 = vmatprep.subr.mxu0 0.0
        %1427 = vmatpush1.msra.mxu0 0.0
        %1428 = vmatprep.subr.mxu0 0.0
        %1429 = vmatpush1.msra.mxu0 0.0
        %1430 = vmatprep.subr.mxu0 0.0
        %1431 = vmatpush1.msra.mxu0 0.0
        %1432 = vmatprep.subr.mxu0 0.0
        %1433 = vmatpush1.msra.mxu0 0.0
        %1434 = vmatprep.subr.mxu0 0.0
        %1435 = vmatpush1.msra.mxu0 0.0
        %1436 = vmatprep.subr.mxu0 0.0
        %1437 = vmatpush1.msra.mxu0 0.0
        %1438 = vmatprep.subr.mxu0 0.0
        %1439 = vmatpush1.msra.mxu0 0.0
        %1440 = vmatprep.subr.mxu0 0.0
        %1441 = vmatpush1.msra.mxu0 0.0
        %1442 = vmatprep.subr.mxu0 0.0
        %1443 = vmatpush1.msra.mxu0 0.0
        %1444 = vmatprep.subr.mxu0 0.0
        %1445 = vmatpush1.msra.mxu0 0.0
        %1446 = vmatprep.subr.mxu0 0.0
        %1447 = vmatpush1.msra.mxu0 0.0
        %1448 = vmatprep.subr.mxu0 0.0
        %1449 = vmatpush1.msra.mxu0 0.0
        %1450 = vmatprep.subr.mxu0 0.0
        %1451 = vmatpush1.msra.mxu0 0.0
        %1452 = vmatprep.mubr.f32.mxu0 0.0
        %1453 = vmatmul.mubr.f32.gmra.mrb[0].mxu0 %v1036
        %v1454 = vpop.f32.mrb[0].mxu0
        %v1455 = vadd.f32 %v1018, %v1454
        %v1456 = vpop.f32.mrb[0].mxu0
        %1457 = vdwg.mxu0
        %1458 = vmatprep.subr.mxu0 0.0
        %1459 = vmatpush1.msra.mxu0 %v974
        %1460 = vmatprep.subr.mxu0 0.0
        %1461 = vmatpush1.msra.mxu0 %v975
        %1462 = vmatprep.subr.mxu0 0.0
        %1463 = vmatpush1.msra.mxu0 0.0
        %1464 = vmatprep.subr.mxu0 0.0
        %1465 = vmatpush1.msra.mxu0 0.0
        %1466 = vmatprep.subr.mxu0 0.0
        %1467 = vmatpush1.msra.mxu0 0.0
        %1468 = vmatprep.subr.mxu0 0.0
        %1469 = vmatpush1.msra.mxu0 0.0
        %1470 = vmatprep.subr.mxu0 0.0
        %1471 = vmatpush1.msra.mxu0 0.0
        %1472 = vmatprep.subr.mxu0 0.0
        %1473 = vmatpush1.msra.mxu0 0.0
        %1474 = vmatprep.subr.mxu0 0.0
        %1475 = vmatpush1.msra.mxu0 0.0
        %1476 = vmatprep.subr.mxu0 0.0
        %1477 = vmatpush1.msra.mxu0 0.0
        %1478 = vmatprep.subr.mxu0 0.0
        %1479 = vmatpush1.msra.mxu0 0.0
        %1480 = vmatprep.subr.mxu0 0.0
        %1481 = vmatpush1.msra.mxu0 0.0
        %1482 = vmatprep.subr.mxu0 0.0
        %1483 = vmatpush1.msra.mxu0 0.0
        %1484 = vmatprep.subr.mxu0 0.0
        %1485 = vmatpush1.msra.mxu0 0.0
        %1486 = vmatprep.subr.mxu0 0.0
        %1487 = vmatpush1.msra.mxu0 0.0
        %1488 = vmatprep.subr.mxu0 0.0
        %1489 = vmatpush1.msra.mxu0 0.0
        %1490 = vmatprep.subr.mxu0 0.0
        %1491 = vmatpush1.msra.mxu0 0.0
        %1492 = vmatprep.subr.mxu0 0.0
        %1493 = vmatpush1.msra.mxu0 0.0
        %1494 = vmatprep.subr.mxu0 0.0
        %1495 = vmatpush1.msra.mxu0 0.0
        %1496 = vmatprep.subr.mxu0 0.0
        %1497 = vmatpush1.msra.mxu0 0.0
        %1498 = vmatprep.subr.mxu0 0.0
        %1499 = vmatpush1.msra.mxu0 0.0
        %1500 = vmatprep.subr.mxu0 0.0
        %1501 = vmatpush1.msra.mxu0 0.0
        %1502 = vmatprep.subr.mxu0 0.0
        %1503 = vmatpush1.msra.mxu0 0.0
        %1504 = vmatprep.subr.mxu0 0.0
        %1505 = vmatpush1.msra.mxu0 0.0
        %1506 = vmatprep.subr.mxu0 0.0
        %1507 = vmatpush1.msra.mxu0 0.0
        %1508 = vmatprep.subr.mxu0 0.0
        %1509 = vmatpush1.msra.mxu0 0.0
        %1510 = vmatprep.subr.mxu0 0.0
        %1511 = vmatpush1.msra.mxu0 0.0
        %1512 = vmatprep.subr.mxu0 0.0
        %1513 = vmatpush1.msra.mxu0 0.0
        %1514 = vmatprep.subr.mxu0 0.0
        %1515 = vmatpush1.msra.mxu0 0.0
        %1516 = vmatprep.subr.mxu0 0.0
        %1517 = vmatpush1.msra.mxu0 0.0
        %1518 = vmatprep.subr.mxu0 0.0
        %1519 = vmatpush1.msra.mxu0 0.0
        %1520 = vmatprep.subr.mxu0 0.0
        %1521 = vmatpush1.msra.mxu0 0.0
        %1522 = vmatprep.mubr.f32.mxu0 0.0
        %1523 = vmatmul.mubr.f32.gmra.mrb[0].mxu0 %v1036
        %v1524 = vpop.f32.mrb[0].mxu0
        %v1525 = vadd.f32 %v1022, %v1524
        %v1526 = vpop.f32.mrb[0].mxu0
        %1527 = vdwg.mxu0
        %1528 = vmatprep.subr.mxu0 0.0
        %1529 = vmatpush1.msra.mxu0 %v976
        %1530 = vmatprep.subr.mxu0 0.0
        %1531 = vmatpush1.msra.mxu0 %v977
        %1532 = vmatprep.subr.mxu0 0.0
        %1533 = vmatpush1.msra.mxu0 0.0
        %1534 = vmatprep.subr.mxu0 0.0
        %1535 = vmatpush1.msra.mxu0 0.0
        %1536 = vmatprep.subr.mxu0 0.0
        %1537 = vmatpush1.msra.mxu0 0.0
        %1538 = vmatprep.subr.mxu0 0.0
        %1539 = vmatpush1.msra.mxu0 0.0
        %1540 = vmatprep.subr.mxu0 0.0
        %1541 = vmatpush1.msra.mxu0 0.0
        %1542 = vmatprep.subr.mxu0 0.0
        %1543 = vmatpush1.msra.mxu0 0.0
        %1544 = vmatprep.subr.mxu0 0.0
        %1545 = vmatpush1.msra.mxu0 0.0
        %1546 = vmatprep.subr.mxu0 0.0
        %1547 = vmatpush1.msra.mxu0 0.0
        %1548 = vmatprep.subr.mxu0 0.0
        %1549 = vmatpush1.msra.mxu0 0.0
        %1550 = vmatprep.subr.mxu0 0.0
        %1551 = vmatpush1.msra.mxu0 0.0
        %1552 = vmatprep.subr.mxu0 0.0
        %1553 = vmatpush1.msra.mxu0 0.0
        %1554 = vmatprep.subr.mxu0 0.0
        %1555 = vmatpush1.msra.mxu0 0.0
        %1556 = vmatprep.subr.mxu0 0.0
        %1557 = vmatpush1.msra.mxu0 0.0
        %1558 = vmatprep.subr.mxu0 0.0
        %1559 = vmatpush1.msra.mxu0 0.0
        %1560 = vmatprep.subr.mxu0 0.0
        %1561 = vmatpush1.msra.mxu0 0.0
        %1562 = vmatprep.subr.mxu0 0.0
        %1563 = vmatpush1.msra.mxu0 0.0
        %1564 = vmatprep.subr.mxu0 0.0
        %1565 = vmatpush1.msra.mxu0 0.0
        %1566 = vmatprep.subr.mxu0 0.0
        %1567 = vmatpush1.msra.mxu0 0.0
        %1568 = vmatprep.subr.mxu0 0.0
        %1569 = vmatpush1.msra.mxu0 0.0
        %1570 = vmatprep.subr.mxu0 0.0
        %1571 = vmatpush1.msra.mxu0 0.0
        %1572 = vmatprep.subr.mxu0 0.0
        %1573 = vmatpush1.msra.mxu0 0.0
        %1574 = vmatprep.subr.mxu0 0.0
        %1575 = vmatpush1.msra.mxu0 0.0
        %1576 = vmatprep.subr.mxu0 0.0
        %1577 = vmatpush1.msra.mxu0 0.0
        %1578 = vmatprep.subr.mxu0 0.0
        %1579 = vmatpush1.msra.mxu0 0.0
        %1580 = vmatprep.subr.mxu0 0.0
        %1581 = vmatpush1.msra.mxu0 0.0
        %1582 = vmatprep.subr.mxu0 0.0
        %1583 = vmatpush1.msra.mxu0 0.0
        %1584 = vmatprep.subr.mxu0 0.0
        %1585 = vmatpush1.msra.mxu0 0.0
        %1586 = vmatprep.subr.mxu0 0.0
        %1587 = vmatpush1.msra.mxu0 0.0
        %1588 = vmatprep.subr.mxu0 0.0
        %1589 = vmatpush1.msra.mxu0 0.0
        %1590 = vmatprep.subr.mxu0 0.0
        %1591 = vmatpush1.msra.mxu0 0.0
        %1592 = vmatprep.mubr.f32.mxu0 0.0
        %1593 = vmatmul.mubr.f32.gmra.mrb[0].mxu0 %v1036
        %v1594 = vpop.f32.mrb[0].mxu0
        %v1595 = vadd.f32 %v1026, %v1594
        %v1596 = vpop.f32.mrb[0].mxu0
        %1597 = vdwg.mxu0
        %s1598 = scalar_lea.vmem %s2, 256
        %v1599 = vld [vmem:[%s1598] sm:$0xff]
        %v1600 = vld [vmem:[%s1598 + $0x8] sm:$0xff]
        %v1601 = vld [vmem:[%s1598 + $0x10] sm:$0xff]
        %v1602 = vld [vmem:[%s1598 + $0x18] sm:$0xff]
        %v1603 = vld [vmem:[%s1598 + $0x20] sm:$0xff]
        %v1604 = vld [vmem:[%s1598 + $0x28] sm:$0xff]
        %v1605 = vld [vmem:[%s1598 + $0x30] sm:$0xff]
        %v1606 = vld [vmem:[%s1598 + $0x38] sm:$0xff]
        %v1607 = vld [vmem:[%s1598 + $0x40] sm:$0xff]
        %v1608 = vld [vmem:[%s1598 + $0x48] sm:$0xff]
        %v1609 = vld [vmem:[%s1598 + $0x50] sm:$0xff]
        %v1610 = vld [vmem:[%s1598 + $0x58] sm:$0xff]
        %v1611 = vld [vmem:[%s1598 + $0x60] sm:$0xff]
        %v1612 = vld [vmem:[%s1598 + $0x68] sm:$0xff]
        %v1613 = vld [vmem:[%s1598 + $0x70] sm:$0xff]
        %v1614 = vld [vmem:[%s1598 + $0x78] sm:$0xff]
        %s1615 = scalar_lea.vmem [#allocation5], 16
        %v1616 = vld [vmem:[%s1615] sm:$0x1]
        %v1617 = vld [vmem:[%s1615 + $0x1] sm:$0x1]
        %v1618 = vld [vmem:[%s1615 + $0x2] sm:$0x1]
        %v1619 = vld [vmem:[%s1615 + $0x3] sm:$0x1]
        %v1620 = vld [vmem:[%s1615 + $0x4] sm:$0x1]
        %v1621 = vld [vmem:[%s1615 + $0x5] sm:$0x1]
        %v1622 = vld [vmem:[%s1615 + $0x6] sm:$0x1]
        %v1623 = vld [vmem:[%s1615 + $0x7] sm:$0x1]
        %v1632 = vlaneseq
        %v1633 = vshrl.u32 %v1632, 7
        %v1634 = vsub.s32 0, %v1633
        %v1635 = vrot.slane %v1616, %v1634
        %v1636 = vlaneseq
        %v1637 = vshrl.u32 %v1636, 7
        %v1638 = vsub.s32 0, %v1637
        %v1639 = vrot.slane %v1617, %v1638
        %v1640 = vlaneseq
        %v1641 = vshrl.u32 %v1640, 7
        %v1642 = vsub.s32 0, %v1641
        %v1643 = vrot.slane %v1618, %v1642
        %v1644 = vlaneseq
        %v1645 = vshrl.u32 %v1644, 7
        %v1646 = vsub.s32 0, %v1645
        %v1647 = vrot.slane %v1619, %v1646
        %v1648 = vlaneseq
        %v1649 = vshrl.u32 %v1648, 7
        %v1650 = vsub.s32 0, %v1649
        %v1651 = vrot.slane %v1620, %v1650
        %v1652 = vlaneseq
        %v1653 = vshrl.u32 %v1652, 7
        %v1654 = vsub.s32 0, %v1653
        %v1655 = vrot.slane %v1621, %v1654
        %v1656 = vlaneseq
        %v1657 = vshrl.u32 %v1656, 7
        %v1658 = vsub.s32 0, %v1657
        %v1659 = vrot.slane %v1622, %v1658
        %v1660 = vlaneseq
        %v1661 = vshrl.u32 %v1660, 7
        %v1662 = vsub.s32 0, %v1661
        %v1663 = vrot.slane %v1623, %v1662
        %1672 = vmatprep.subr.mxu0 0.0
        %1673 = vmatpush1.msra.mxu0 %v1599
        %1674 = vmatprep.subr.mxu0 0.0
        %1675 = vmatpush1.msra.mxu0 %v1600
        %1676 = vmatprep.subr.mxu0 0.0
        %1677 = vmatpush1.msra.mxu0 0.0
        %1678 = vmatprep.subr.mxu0 0.0
        %1679 = vmatpush1.msra.mxu0 0.0
        %1680 = vmatprep.subr.mxu0 0.0
        %1681 = vmatpush1.msra.mxu0 0.0
        %1682 = vmatprep.subr.mxu0 0.0
        %1683 = vmatpush1.msra.mxu0 0.0
        %1684 = vmatprep.subr.mxu0 0.0
        %1685 = vmatpush1.msra.mxu0 0.0
        %1686 = vmatprep.subr.mxu0 0.0
        %1687 = vmatpush1.msra.mxu0 0.0
        %1688 = vmatprep.subr.mxu0 0.0
        %1689 = vmatpush1.msra.mxu0 0.0
        %1690 = vmatprep.subr.mxu0 0.0
        %1691 = vmatpush1.msra.mxu0 0.0
        %1692 = vmatprep.subr.mxu0 0.0
        %1693 = vmatpush1.msra.mxu0 0.0
        %1694 = vmatprep.subr.mxu0 0.0
        %1695 = vmatpush1.msra.mxu0 0.0
        %1696 = vmatprep.subr.mxu0 0.0
        %1697 = vmatpush1.msra.mxu0 0.0
        %1698 = vmatprep.subr.mxu0 0.0
        %1699 = vmatpush1.msra.mxu0 0.0
        %1700 = vmatprep.subr.mxu0 0.0
        %1701 = vmatpush1.msra.mxu0 0.0
        %1702 = vmatprep.subr.mxu0 0.0
        %1703 = vmatpush1.msra.mxu0 0.0
        %1704 = vmatprep.subr.mxu0 0.0
        %1705 = vmatpush1.msra.mxu0 0.0
        %1706 = vmatprep.subr.mxu0 0.0
        %1707 = vmatpush1.msra.mxu0 0.0
        %1708 = vmatprep.subr.mxu0 0.0
        %1709 = vmatpush1.msra.mxu0 0.0
        %1710 = vmatprep.subr.mxu0 0.0
        %1711 = vmatpush1.msra.mxu0 0.0
        %1712 = vmatprep.subr.mxu0 0.0
        %1713 = vmatpush1.msra.mxu0 0.0
        %1714 = vmatprep.subr.mxu0 0.0
        %1715 = vmatpush1.msra.mxu0 0.0
        %1716 = vmatprep.subr.mxu0 0.0
        %1717 = vmatpush1.msra.mxu0 0.0
        %1718 = vmatprep.subr.mxu0 0.0
        %1719 = vmatpush1.msra.mxu0 0.0
        %1720 = vmatprep.subr.mxu0 0.0
        %1721 = vmatpush1.msra.mxu0 0.0
        %1722 = vmatprep.subr.mxu0 0.0
        %1723 = vmatpush1.msra.mxu0 0.0
        %1724 = vmatprep.subr.mxu0 0.0
        %1725 = vmatpush1.msra.mxu0 0.0
        %1726 = vmatprep.subr.mxu0 0.0
        %1727 = vmatpush1.msra.mxu0 0.0
        %1728 = vmatprep.subr.mxu0 0.0
        %1729 = vmatpush1.msra.mxu0 0.0
        %1730 = vmatprep.subr.mxu0 0.0
        %1731 = vmatpush1.msra.mxu0 0.0
        %1732 = vmatprep.subr.mxu0 0.0
        %1733 = vmatpush1.msra.mxu0 0.0
        %1734 = vmatprep.subr.mxu0 0.0
        %1735 = vmatpush1.msra.mxu0 0.0
        %1736 = vmatprep.mubr.f32.mxu0 0.0
        %1737 = vmatmul.mubr.f32.gmra.mrb[0].mxu0 %v1036
        %v1738 = vpop.f32.mrb[0].mxu0
        %v1739 = vadd.f32 %v1635, %v1738
        %v1740 = vpop.f32.mrb[0].mxu0
        %1741 = vdwg.mxu0
        %1742 = vmatprep.subr.mxu0 0.0
        %1743 = vmatpush1.msra.mxu0 %v1601
        %1744 = vmatprep.subr.mxu0 0.0
        %1745 = vmatpush1.msra.mxu0 %v1602
        %1746 = vmatprep.subr.mxu0 0.0
        %1747 = vmatpush1.msra.mxu0 0.0
        %1748 = vmatprep.subr.mxu0 0.0
        %1749 = vmatpush1.msra.mxu0 0.0
        %1750 = vmatprep.subr.mxu0 0.0
        %1751 = vmatpush1.msra.mxu0 0.0
        %1752 = vmatprep.subr.mxu0 0.0
        %1753 = vmatpush1.msra.mxu0 0.0
        %1754 = vmatprep.subr.mxu0 0.0
        %1755 = vmatpush1.msra.mxu0 0.0
        %1756 = vmatprep.subr.mxu0 0.0
        %1757 = vmatpush1.msra.mxu0 0.0
        %1758 = vmatprep.subr.mxu0 0.0
        %1759 = vmatpush1.msra.mxu0 0.0
        %1760 = vmatprep.subr.mxu0 0.0
        %1761 = vmatpush1.msra.mxu0 0.0
        %1762 = vmatprep.subr.mxu0 0.0
        %1763 = vmatpush1.msra.mxu0 0.0
        %1764 = vmatprep.subr.mxu0 0.0
        %1765 = vmatpush1.msra.mxu0 0.0
        %1766 = vmatprep.subr.mxu0 0.0
        %1767 = vmatpush1.msra.mxu0 0.0
        %1768 = vmatprep.subr.mxu0 0.0
        %1769 = vmatpush1.msra.mxu0 0.0
        %1770 = vmatprep.subr.mxu0 0.0
        %1771 = vmatpush1.msra.mxu0 0.0
        %1772 = vmatprep.subr.mxu0 0.0
        %1773 = vmatpush1.msra.mxu0 0.0
        %1774 = vmatprep.subr.mxu0 0.0
        %1775 = vmatpush1.msra.mxu0 0.0
        %1776 = vmatprep.subr.mxu0 0.0
        %1777 = vmatpush1.msra.mxu0 0.0
        %1778 = vmatprep.subr.mxu0 0.0
        %1779 = vmatpush1.msra.mxu0 0.0
        %1780 = vmatprep.subr.mxu0 0.0
        %1781 = vmatpush1.msra.mxu0 0.0
        %1782 = vmatprep.subr.mxu0 0.0
        %1783 = vmatpush1.msra.mxu0 0.0
        %1784 = vmatprep.subr.mxu0 0.0
        %1785 = vmatpush1.msra.mxu0 0.0
        %1786 = vmatprep.subr.mxu0 0.0
        %1787 = vmatpush1.msra.mxu0 0.0
        %1788 = vmatprep.subr.mxu0 0.0
        %1789 = vmatpush1.msra.mxu0 0.0
        %1790 = vmatprep.subr.mxu0 0.0
        %1791 = vmatpush1.msra.mxu0 0.0
        %1792 = vmatprep.subr.mxu0 0.0
        %1793 = vmatpush1.msra.mxu0 0.0
        %1794 = vmatprep.subr.mxu0 0.0
        %1795 = vmatpush1.msra.mxu0 0.0
        %1796 = vmatprep.subr.mxu0 0.0
        %1797 = vmatpush1.msra.mxu0 0.0
        %1798 = vmatprep.subr.mxu0 0.0
        %1799 = vmatpush1.msra.mxu0 0.0
        %1800 = vmatprep.subr.mxu0 0.0
        %1801 = vmatpush1.msra.mxu0 0.0
        %1802 = vmatprep.subr.mxu0 0.0
        %1803 = vmatpush1.msra.mxu0 0.0
        %1804 = vmatprep.subr.mxu0 0.0
        %1805 = vmatpush1.msra.mxu0 0.0
        %1806 = vmatprep.mubr.f32.mxu0 0.0
        %1807 = vmatmul.mubr.f32.gmra.mrb[0].mxu0 %v1036
        %v1808 = vpop.f32.mrb[0].mxu0
        %v1809 = vadd.f32 %v1639, %v1808
        %v1810 = vpop.f32.mrb[0].mxu0
        %1811 = vdwg.mxu0
        %1812 = vmatprep.subr.mxu0 0.0
        %1813 = vmatpush1.msra.mxu0 %v1603
        %1814 = vmatprep.subr.mxu0 0.0
        %1815 = vmatpush1.msra.mxu0 %v1604
        %1816 = vmatprep.subr.mxu0 0.0
        %1817 = vmatpush1.msra.mxu0 0.0
        %1818 = vmatprep.subr.mxu0 0.0
        %1819 = vmatpush1.msra.mxu0 0.0
        %1820 = vmatprep.subr.mxu0 0.0
        %1821 = vmatpush1.msra.mxu0 0.0
        %1822 = vmatprep.subr.mxu0 0.0
        %1823 = vmatpush1.msra.mxu0 0.0
        %1824 = vmatprep.subr.mxu0 0.0
        %1825 = vmatpush1.msra.mxu0 0.0
        %1826 = vmatprep.subr.mxu0 0.0
        %1827 = vmatpush1.msra.mxu0 0.0
        %1828 = vmatprep.subr.mxu0 0.0
        %1829 = vmatpush1.msra.mxu0 0.0
        %1830 = vmatprep.subr.mxu0 0.0
        %1831 = vmatpush1.msra.mxu0 0.0
        %1832 = vmatprep.subr.mxu0 0.0
        %1833 = vmatpush1.msra.mxu0 0.0
        %1834 = vmatprep.subr.mxu0 0.0
        %1835 = vmatpush1.msra.mxu0 0.0
        %1836 = vmatprep.subr.mxu0 0.0
        %1837 = vmatpush1.msra.mxu0 0.0
        %1838 = vmatprep.subr.mxu0 0.0
        %1839 = vmatpush1.msra.mxu0 0.0
        %1840 = vmatprep.subr.mxu0 0.0
        %1841 = vmatpush1.msra.mxu0 0.0
        %1842 = vmatprep.subr.mxu0 0.0
        %1843 = vmatpush1.msra.mxu0 0.0
        %1844 = vmatprep.subr.mxu0 0.0
        %1845 = vmatpush1.msra.mxu0 0.0
        %1846 = vmatprep.subr.mxu0 0.0
        %1847 = vmatpush1.msra.mxu0 0.0
        %1848 = vmatprep.subr.mxu0 0.0
        %1849 = vmatpush1.msra.mxu0 0.0
        %1850 = vmatprep.subr.mxu0 0.0
        %1851 = vmatpush1.msra.mxu0 0.0
        %1852 = vmatprep.subr.mxu0 0.0
        %1853 = vmatpush1.msra.mxu0 0.0
        %1854 = vmatprep.subr.mxu0 0.0
        %1855 = vmatpush1.msra.mxu0 0.0
        %1856 = vmatprep.subr.mxu0 0.0
        %1857 = vmatpush1.msra.mxu0 0.0
        %1858 = vmatprep.subr.mxu0 0.0
        %1859 = vmatpush1.msra.mxu0 0.0
        %1860 = vmatprep.subr.mxu0 0.0
        %1861 = vmatpush1.msra.mxu0 0.0
        %1862 = vmatprep.subr.mxu0 0.0
        %1863 = vmatpush1.msra.mxu0 0.0
        %1864 = vmatprep.subr.mxu0 0.0
        %1865 = vmatpush1.msra.mxu0 0.0
        %1866 = vmatprep.subr.mxu0 0.0
        %1867 = vmatpush1.msra.mxu0 0.0
        %1868 = vmatprep.subr.mxu0 0.0
        %1869 = vmatpush1.msra.mxu0 0.0
        %1870 = vmatprep.subr.mxu0 0.0
        %1871 = vmatpush1.msra.mxu0 0.0
        %1872 = vmatprep.subr.mxu0 0.0
        %1873 = vmatpush1.msra.mxu0 0.0
        %1874 = vmatprep.subr.mxu0 0.0
        %1875 = vmatpush1.msra.mxu0 0.0
        %1876 = vmatprep.mubr.f32.mxu0 0.0
        %1877 = vmatmul.mubr.f32.gmra.mrb[0].mxu0 %v1036
        %v1878 = vpop.f32.mrb[0].mxu0
        %v1879 = vadd.f32 %v1643, %v1878
        %v1880 = vpop.f32.mrb[0].mxu0
        %1881 = vdwg.mxu0
        %1882 = vmatprep.subr.mxu0 0.0
        %1883 = vmatpush1.msra.mxu0 %v1605
        %1884 = vmatprep.subr.mxu0 0.0
        %1885 = vmatpush1.msra.mxu0 %v1606
        %1886 = vmatprep.subr.mxu0 0.0
        %1887 = vmatpush1.msra.mxu0 0.0
        %1888 = vmatprep.subr.mxu0 0.0
        %1889 = vmatpush1.msra.mxu0 0.0
        %1890 = vmatprep.subr.mxu0 0.0
        %1891 = vmatpush1.msra.mxu0 0.0
        %1892 = vmatprep.subr.mxu0 0.0
        %1893 = vmatpush1.msra.mxu0 0.0
        %1894 = vmatprep.subr.mxu0 0.0
        %1895 = vmatpush1.msra.mxu0 0.0
        %1896 = vmatprep.subr.mxu0 0.0
        %1897 = vmatpush1.msra.mxu0 0.0
        %1898 = vmatprep.subr.mxu0 0.0
        %1899 = vmatpush1.msra.mxu0 0.0
        %1900 = vmatprep.subr.mxu0 0.0
        %1901 = vmatpush1.msra.mxu0 0.0
        %1902 = vmatprep.subr.mxu0 0.0
        %1903 = vmatpush1.msra.mxu0 0.0
        %1904 = vmatprep.subr.mxu0 0.0
        %1905 = vmatpush1.msra.mxu0 0.0
        %1906 = vmatprep.subr.mxu0 0.0
        %1907 = vmatpush1.msra.mxu0 0.0
        %1908 = vmatprep.subr.mxu0 0.0
        %1909 = vmatpush1.msra.mxu0 0.0
        %1910 = vmatprep.subr.mxu0 0.0
        %1911 = vmatpush1.msra.mxu0 0.0
        %1912 = vmatprep.subr.mxu0 0.0
        %1913 = vmatpush1.msra.mxu0 0.0
        %1914 = vmatprep.subr.mxu0 0.0
        %1915 = vmatpush1.msra.mxu0 0.0
        %1916 = vmatprep.subr.mxu0 0.0
        %1917 = vmatpush1.msra.mxu0 0.0
        %1918 = vmatprep.subr.mxu0 0.0
        %1919 = vmatpush1.msra.mxu0 0.0
        %1920 = vmatprep.subr.mxu0 0.0
        %1921 = vmatpush1.msra.mxu0 0.0
        %1922 = vmatprep.subr.mxu0 0.0
        %1923 = vmatpush1.msra.mxu0 0.0
        %1924 = vmatprep.subr.mxu0 0.0
        %1925 = vmatpush1.msra.mxu0 0.0
        %1926 = vmatprep.subr.mxu0 0.0
        %1927 = vmatpush1.msra.mxu0 0.0
        %1928 = vmatprep.subr.mxu0 0.0
        %1929 = vmatpush1.msra.mxu0 0.0
        %1930 = vmatprep.subr.mxu0 0.0
        %1931 = vmatpush1.msra.mxu0 0.0
        %1932 = vmatprep.subr.mxu0 0.0
        %1933 = vmatpush1.msra.mxu0 0.0
        %1934 = vmatprep.subr.mxu0 0.0
        %1935 = vmatpush1.msra.mxu0 0.0
        %1936 = vmatprep.subr.mxu0 0.0
        %1937 = vmatpush1.msra.mxu0 0.0
        %1938 = vmatprep.subr.mxu0 0.0
        %1939 = vmatpush1.msra.mxu0 0.0
        %1940 = vmatprep.subr.mxu0 0.0
        %1941 = vmatpush1.msra.mxu0 0.0
        %1942 = vmatprep.subr.mxu0 0.0
        %1943 = vmatpush1.msra.mxu0 0.0
        %1944 = vmatprep.subr.mxu0 0.0
        %1945 = vmatpush1.msra.mxu0 0.0
        %1946 = vmatprep.mubr.f32.mxu0 0.0
        %1947 = vmatmul.mubr.f32.gmra.mrb[0].mxu0 %v1036
        %v1948 = vpop.f32.mrb[0].mxu0
        %v1949 = vadd.f32 %v1647, %v1948
        %v1950 = vpop.f32.mrb[0].mxu0
        %1951 = vdwg.mxu0
        %1952 = vmatprep.subr.mxu0 0.0
        %1953 = vmatpush1.msra.mxu0 %v1607
        %1954 = vmatprep.subr.mxu0 0.0
        %1955 = vmatpush1.msra.mxu0 %v1608
        %1956 = vmatprep.subr.mxu0 0.0
        %1957 = vmatpush1.msra.mxu0 0.0
        %1958 = vmatprep.subr.mxu0 0.0
        %1959 = vmatpush1.msra.mxu0 0.0
        %1960 = vmatprep.subr.mxu0 0.0
        %1961 = vmatpush1.msra.mxu0 0.0
        %1962 = vmatprep.subr.mxu0 0.0
        %1963 = vmatpush1.msra.mxu0 0.0
        %1964 = vmatprep.subr.mxu0 0.0
        %1965 = vmatpush1.msra.mxu0 0.0
        %1966 = vmatprep.subr.mxu0 0.0
        %1967 = vmatpush1.msra.mxu0 0.0
        %1968 = vmatprep.subr.mxu0 0.0
        %1969 = vmatpush1.msra.mxu0 0.0
        %1970 = vmatprep.subr.mxu0 0.0
        %1971 = vmatpush1.msra.mxu0 0.0
        %1972 = vmatprep.subr.mxu0 0.0
        %1973 = vmatpush1.msra.mxu0 0.0
        %1974 = vmatprep.subr.mxu0 0.0
        %1975 = vmatpush1.msra.mxu0 0.0
        %1976 = vmatprep.subr.mxu0 0.0
        %1977 = vmatpush1.msra.mxu0 0.0
        %1978 = vmatprep.subr.mxu0 0.0
        %1979 = vmatpush1.msra.mxu0 0.0
        %1980 = vmatprep.subr.mxu0 0.0
        %1981 = vmatpush1.msra.mxu0 0.0
        %1982 = vmatprep.subr.mxu0 0.0
        %1983 = vmatpush1.msra.mxu0 0.0
        %1984 = vmatprep.subr.mxu0 0.0
        %1985 = vmatpush1.msra.mxu0 0.0
        %1986 = vmatprep.subr.mxu0 0.0
        %1987 = vmatpush1.msra.mxu0 0.0
        %1988 = vmatprep.subr.mxu0 0.0
        %1989 = vmatpush1.msra.mxu0 0.0
        %1990 = vmatprep.subr.mxu0 0.0
        %1991 = vmatpush1.msra.mxu0 0.0
        %1992 = vmatprep.subr.mxu0 0.0
        %1993 = vmatpush1.msra.mxu0 0.0
        %1994 = vmatprep.subr.mxu0 0.0
        %1995 = vmatpush1.msra.mxu0 0.0
        %1996 = vmatprep.subr.mxu0 0.0
        %1997 = vmatpush1.msra.mxu0 0.0
        %1998 = vmatprep.subr.mxu0 0.0
        %1999 = vmatpush1.msra.mxu0 0.0
        %2000 = vmatprep.subr.mxu0 0.0
        %2001 = vmatpush1.msra.mxu0 0.0
        %2002 = vmatprep.subr.mxu0 0.0
        %2003 = vmatpush1.msra.mxu0 0.0
        %2004 = vmatprep.subr.mxu0 0.0
        %2005 = vmatpush1.msra.mxu0 0.0
        %2006 = vmatprep.subr.mxu0 0.0
        %2007 = vmatpush1.msra.mxu0 0.0
        %2008 = vmatprep.subr.mxu0 0.0
        %2009 = vmatpush1.msra.mxu0 0.0
        %2010 = vmatprep.subr.mxu0 0.0
        %2011 = vmatpush1.msra.mxu0 0.0
        %2012 = vmatprep.subr.mxu0 0.0
        %2013 = vmatpush1.msra.mxu0 0.0
        %2014 = vmatprep.subr.mxu0 0.0
        %2015 = vmatpush1.msra.mxu0 0.0
        %2016 = vmatprep.mubr.f32.mxu0 0.0
        %2017 = vmatmul.mubr.f32.gmra.mrb[0].mxu0 %v1036
        %v2018 = vpop.f32.mrb[0].mxu0
        %v2019 = vadd.f32 %v1651, %v2018
        %v2020 = vpop.f32.mrb[0].mxu0
        %2021 = vdwg.mxu0
        %2022 = vmatprep.subr.mxu0 0.0
        %2023 = vmatpush1.msra.mxu0 %v1609
        %2024 = vmatprep.subr.mxu0 0.0
        %2025 = vmatpush1.msra.mxu0 %v1610
        %2026 = vmatprep.subr.mxu0 0.0
        %2027 = vmatpush1.msra.mxu0 0.0
        %2028 = vmatprep.subr.mxu0 0.0
        %2029 = vmatpush1.msra.mxu0 0.0
        %2030 = vmatprep.subr.mxu0 0.0
        %2031 = vmatpush1.msra.mxu0 0.0
        %2032 = vmatprep.subr.mxu0 0.0
        %2033 = vmatpush1.msra.mxu0 0.0
        %2034 = vmatprep.subr.mxu0 0.0
        %2035 = vmatpush1.msra.mxu0 0.0
        %2036 = vmatprep.subr.mxu0 0.0
        %2037 = vmatpush1.msra.mxu0 0.0
        %2038 = vmatprep.subr.mxu0 0.0
        %2039 = vmatpush1.msra.mxu0 0.0
        %2040 = vmatprep.subr.mxu0 0.0
        %2041 = vmatpush1.msra.mxu0 0.0
        %2042 = vmatprep.subr.mxu0 0.0
        %2043 = vmatpush1.msra.mxu0 0.0
        %2044 = vmatprep.subr.mxu0 0.0
        %2045 = vmatpush1.msra.mxu0 0.0
        %2046 = vmatprep.subr.mxu0 0.0
        %2047 = vmatpush1.msra.mxu0 0.0
        %2048 = vmatprep.subr.mxu0 0.0
        %2049 = vmatpush1.msra.mxu0 0.0
        %2050 = vmatprep.subr.mxu0 0.0
        %2051 = vmatpush1.msra.mxu0 0.0
        %2052 = vmatprep.subr.mxu0 0.0
        %2053 = vmatpush1.msra.mxu0 0.0
        %2054 = vmatprep.subr.mxu0 0.0
        %2055 = vmatpush1.msra.mxu0 0.0
        %2056 = vmatprep.subr.mxu0 0.0
        %2057 = vmatpush1.msra.mxu0 0.0
        %2058 = vmatprep.subr.mxu0 0.0
        %2059 = vmatpush1.msra.mxu0 0.0
        %2060 = vmatprep.subr.mxu0 0.0
        %2061 = vmatpush1.msra.mxu0 0.0
        %2062 = vmatprep.subr.mxu0 0.0
        %2063 = vmatpush1.msra.mxu0 0.0
        %2064 = vmatprep.subr.mxu0 0.0
        %2065 = vmatpush1.msra.mxu0 0.0
        %2066 = vmatprep.subr.mxu0 0.0
        %2067 = vmatpush1.msra.mxu0 0.0
        %2068 = vmatprep.subr.mxu0 0.0
        %2069 = vmatpush1.msra.mxu0 0.0
        %2070 = vmatprep.subr.mxu0 0.0
        %2071 = vmatpush1.msra.mxu0 0.0
        %2072 = vmatprep.subr.mxu0 0.0
        %2073 = vmatpush1.msra.mxu0 0.0
        %2074 = vmatprep.subr.mxu0 0.0
        %2075 = vmatpush1.msra.mxu0 0.0
        %2076 = vmatprep.subr.mxu0 0.0
        %2077 = vmatpush1.msra.mxu0 0.0
        %2078 = vmatprep.subr.mxu0 0.0
        %2079 = vmatpush1.msra.mxu0 0.0
        %2080 = vmatprep.subr.mxu0 0.0
        %2081 = vmatpush1.msra.mxu0 0.0
        %2082 = vmatprep.subr.mxu0 0.0
        %2083 = vmatpush1.msra.mxu0 0.0
        %2084 = vmatprep.subr.mxu0 0.0
        %2085 = vmatpush1.msra.mxu0 0.0
        %2086 = vmatprep.mubr.f32.mxu0 0.0
        %2087 = vmatmul.mubr.f32.gmra.mrb[0].mxu0 %v1036
        %v2088 = vpop.f32.mrb[0].mxu0
        %v2089 = vadd.f32 %v1655, %v2088
        %v2090 = vpop.f32.mrb[0].mxu0
        %2091 = vdwg.mxu0
        %2092 = vmatprep.subr.mxu0 0.0
        %2093 = vmatpush1.msra.mxu0 %v1611
        %2094 = vmatprep.subr.mxu0 0.0
        %2095 = vmatpush1.msra.mxu0 %v1612
        %2096 = vmatprep.subr.mxu0 0.0
        %2097 = vmatpush1.msra.mxu0 0.0
        %2098 = vmatprep.subr.mxu0 0.0
        %2099 = vmatpush1.msra.mxu0 0.0
        %2100 = vmatprep.subr.mxu0 0.0
        %2101 = vmatpush1.msra.mxu0 0.0
        %2102 = vmatprep.subr.mxu0 0.0
        %2103 = vmatpush1.msra.mxu0 0.0
        %2104 = vmatprep.subr.mxu0 0.0
        %2105 = vmatpush1.msra.mxu0 0.0
        %2106 = vmatprep.subr.mxu0 0.0
        %2107 = vmatpush1.msra.mxu0 0.0
        %2108 = vmatprep.subr.mxu0 0.0
        %2109 = vmatpush1.msra.mxu0 0.0
        %2110 = vmatprep.subr.mxu0 0.0
        %2111 = vmatpush1.msra.mxu0 0.0
        %2112 = vmatprep.subr.mxu0 0.0
        %2113 = vmatpush1.msra.mxu0 0.0
        %2114 = vmatprep.subr.mxu0 0.0
        %2115 = vmatpush1.msra.mxu0 0.0
        %2116 = vmatprep.subr.mxu0 0.0
        %2117 = vmatpush1.msra.mxu0 0.0
        %2118 = vmatprep.subr.mxu0 0.0
        %2119 = vmatpush1.msra.mxu0 0.0
        %2120 = vmatprep.subr.mxu0 0.0
        %2121 = vmatpush1.msra.mxu0 0.0
        %2122 = vmatprep.subr.mxu0 0.0
        %2123 = vmatpush1.msra.mxu0 0.0
        %2124 = vmatprep.subr.mxu0 0.0
        %2125 = vmatpush1.msra.mxu0 0.0
        %2126 = vmatprep.subr.mxu0 0.0
        %2127 = vmatpush1.msra.mxu0 0.0
        %2128 = vmatprep.subr.mxu0 0.0
        %2129 = vmatpush1.msra.mxu0 0.0
        %2130 = vmatprep.subr.mxu0 0.0
        %2131 = vmatpush1.msra.mxu0 0.0
        %2132 = vmatprep.subr.mxu0 0.0
        %2133 = vmatpush1.msra.mxu0 0.0
        %2134 = vmatprep.subr.mxu0 0.0
        %2135 = vmatpush1.msra.mxu0 0.0
        %2136 = vmatprep.subr.mxu0 0.0
        %2137 = vmatpush1.msra.mxu0 0.0
        %2138 = vmatprep.subr.mxu0 0.0
        %2139 = vmatpush1.msra.mxu0 0.0
        %2140 = vmatprep.subr.mxu0 0.0
        %2141 = vmatpush1.msra.mxu0 0.0
        %2142 = vmatprep.subr.mxu0 0.0
        %2143 = vmatpush1.msra.mxu0 0.0
        %2144 = vmatprep.subr.mxu0 0.0
        %2145 = vmatpush1.msra.mxu0 0.0
        %2146 = vmatprep.subr.mxu0 0.0
        %2147 = vmatpush1.msra.mxu0 0.0
        %2148 = vmatprep.subr.mxu0 0.0
        %2149 = vmatpush1.msra.mxu0 0.0
        %2150 = vmatprep.subr.mxu0 0.0
        %2151 = vmatpush1.msra.mxu0 0.0
        %2152 = vmatprep.subr.mxu0 0.0
        %2153 = vmatpush1.msra.mxu0 0.0
        %2154 = vmatprep.subr.mxu0 0.0
        %2155 = vmatpush1.msra.mxu0 0.0
        %2156 = vmatprep.mubr.f32.mxu0 0.0
        %2157 = vmatmul.mubr.f32.gmra.mrb[0].mxu0 %v1036
        %v2158 = vpop.f32.mrb[0].mxu0
        %v2159 = vadd.f32 %v1659, %v2158
        %v2160 = vpop.f32.mrb[0].mxu0
        %2161 = vdwg.mxu0
        %2162 = vmatprep.subr.mxu0 0.0
        %2163 = vmatpush1.msra.mxu0 %v1613
        %2164 = vmatprep.subr.mxu0 0.0
        %2165 = vmatpush1.msra.mxu0 %v1614
        %2166 = vmatprep.subr.mxu0 0.0
        %2167 = vmatpush1.msra.mxu0 0.0
        %2168 = vmatprep.subr.mxu0 0.0
        %2169 = vmatpush1.msra.mxu0 0.0
        %2170 = vmatprep.subr.mxu0 0.0
        %2171 = vmatpush1.msra.mxu0 0.0
        %2172 = vmatprep.subr.mxu0 0.0
        %2173 = vmatpush1.msra.mxu0 0.0
        %2174 = vmatprep.subr.mxu0 0.0
        %2175 = vmatpush1.msra.mxu0 0.0
        %2176 = vmatprep.subr.mxu0 0.0
        %2177 = vmatpush1.msra.mxu0 0.0
        %2178 = vmatprep.subr.mxu0 0.0
        %2179 = vmatpush1.msra.mxu0 0.0
        %2180 = vmatprep.subr.mxu0 0.0
        %2181 = vmatpush1.msra.mxu0 0.0
        %2182 = vmatprep.subr.mxu0 0.0
        %2183 = vmatpush1.msra.mxu0 0.0
        %2184 = vmatprep.subr.mxu0 0.0
        %2185 = vmatpush1.msra.mxu0 0.0
        %2186 = vmatprep.subr.mxu0 0.0
        %2187 = vmatpush1.msra.mxu0 0.0
        %2188 = vmatprep.subr.mxu0 0.0
        %2189 = vmatpush1.msra.mxu0 0.0
        %2190 = vmatprep.subr.mxu0 0.0
        %2191 = vmatpush1.msra.mxu0 0.0
        %2192 = vmatprep.subr.mxu0 0.0
        %2193 = vmatpush1.msra.mxu0 0.0
        %2194 = vmatprep.subr.mxu0 0.0
        %2195 = vmatpush1.msra.mxu0 0.0
        %2196 = vmatprep.subr.mxu0 0.0
        %2197 = vmatpush1.msra.mxu0 0.0
        %2198 = vmatprep.subr.mxu0 0.0
        %2199 = vmatpush1.msra.mxu0 0.0
        %2200 = vmatprep.subr.mxu0 0.0
        %2201 = vmatpush1.msra.mxu0 0.0
        %2202 = vmatprep.subr.mxu0 0.0
        %2203 = vmatpush1.msra.mxu0 0.0
        %2204 = vmatprep.subr.mxu0 0.0
        %2205 = vmatpush1.msra.mxu0 0.0
        %2206 = vmatprep.subr.mxu0 0.0
        %2207 = vmatpush1.msra.mxu0 0.0
        %2208 = vmatprep.subr.mxu0 0.0
        %2209 = vmatpush1.msra.mxu0 0.0
        %2210 = vmatprep.subr.mxu0 0.0
        %2211 = vmatpush1.msra.mxu0 0.0
        %2212 = vmatprep.subr.mxu0 0.0
        %2213 = vmatpush1.msra.mxu0 0.0
        %2214 = vmatprep.subr.mxu0 0.0
        %2215 = vmatpush1.msra.mxu0 0.0
        %2216 = vmatprep.subr.mxu0 0.0
        %2217 = vmatpush1.msra.mxu0 0.0
        %2218 = vmatprep.subr.mxu0 0.0
        %2219 = vmatpush1.msra.mxu0 0.0
        %2220 = vmatprep.subr.mxu0 0.0
        %2221 = vmatpush1.msra.mxu0 0.0
        %2222 = vmatprep.subr.mxu0 0.0
        %2223 = vmatpush1.msra.mxu0 0.0
        %2224 = vmatprep.subr.mxu0 0.0
        %2225 = vmatpush1.msra.mxu0 0.0
        %2226 = vmatprep.mubr.f32.mxu0 0.0
        %2227 = vmatmul.mubr.f32.gmra.mrb[0].mxu0 %v1036
        %v2228 = vpop.f32.mrb[0].mxu0
        %v2229 = vadd.f32 %v1663, %v2228
        %v2230 = vpop.f32.mrb[0].mxu0
        %2231 = vdwg.mxu0
        %vm2232 = vcmask 261120
        %v2234 = vsel %vm2232, %v468, 0
        %v2237 = vsel %vm2232, %v1105, 0
        %2239 = vmatprep.subr.mxu0 0.0
        %2240 = vmatpush1.xpose.msra.mxu0 %v2237
        %2241 = vmatprep.subr.mxu0 0.0
        %2242 = vmatpush1.xpose.msra.mxu0 0.0
        %2243 = vmatprep.subr.mxu0 0.0
        %2244 = vmatpush1.xpose.msra.mxu0 0.0
        %2245 = vmatprep.subr.mxu0 0.0
        %2246 = vmatpush1.xpose.msra.mxu0 0.0
        %2247 = vmatprep.subr.mxu0 0.0
        %2248 = vmatpush1.xpose.msra.mxu0 0.0
        %2249 = vmatprep.subr.mxu0 0.0
        %2250 = vmatpush1.xpose.msra.mxu0 0.0
        %2251 = vmatprep.subr.mxu0 0.0
        %2252 = vmatpush1.xpose.msra.mxu0 0.0
        %2253 = vmatprep.subr.mxu0 0.0
        %2254 = vmatpush1.xpose.msra.mxu0 0.0
        %2255 = vmatprep.subr.mxu0 0.0
        %2256 = vmatpush1.xpose.msra.mxu0 0.0
        %2257 = vmatprep.subr.mxu0 0.0
        %2258 = vmatpush1.xpose.msra.mxu0 0.0
        %2259 = vmatprep.subr.mxu0 0.0
        %2260 = vmatpush1.xpose.msra.mxu0 0.0
        %2261 = vmatprep.subr.mxu0 0.0
        %2262 = vmatpush1.xpose.msra.mxu0 0.0
        %2263 = vmatprep.subr.mxu0 0.0
        %2264 = vmatpush1.xpose.msra.mxu0 0.0
        %2265 = vmatprep.subr.mxu0 0.0
        %2266 = vmatpush1.xpose.msra.mxu0 0.0
        %2267 = vmatprep.subr.mxu0 0.0
        %2268 = vmatpush1.xpose.msra.mxu0 0.0
        %2269 = vmatprep.subr.mxu0 0.0
        %2270 = vmatpush1.xpose.msra.mxu0 0.0
        %2271 = vmatprep.subr.mxu0 0.0
        %2272 = vmatpush1.xpose.msra.mxu0 0.0
        %2273 = vmatprep.subr.mxu0 0.0
        %2274 = vmatpush1.xpose.msra.mxu0 0.0
        %2275 = vmatprep.subr.mxu0 0.0
        %2276 = vmatpush1.xpose.msra.mxu0 0.0
        %2277 = vmatprep.subr.mxu0 0.0
        %2278 = vmatpush1.xpose.msra.mxu0 0.0
        %2279 = vmatprep.subr.mxu0 0.0
        %2280 = vmatpush1.xpose.msra.mxu0 0.0
        %2281 = vmatprep.subr.mxu0 0.0
        %2282 = vmatpush1.xpose.msra.mxu0 0.0
        %2283 = vmatprep.subr.mxu0 0.0
        %2284 = vmatpush1.xpose.msra.mxu0 0.0
        %2285 = vmatprep.subr.mxu0 0.0
        %2286 = vmatpush1.xpose.msra.mxu0 0.0
        %2287 = vmatprep.subr.mxu0 0.0
        %2288 = vmatpush1.xpose.msra.mxu0 0.0
        %2289 = vmatprep.subr.mxu0 0.0
        %2290 = vmatpush1.xpose.msra.mxu0 0.0
        %2291 = vmatprep.subr.mxu0 0.0
        %2292 = vmatpush1.xpose.msra.mxu0 0.0
        %2293 = vmatprep.subr.mxu0 0.0
        %2294 = vmatpush1.xpose.msra.mxu0 0.0
        %2295 = vmatprep.subr.mxu0 0.0
        %2296 = vmatpush1.xpose.msra.mxu0 0.0
        %2297 = vmatprep.subr.mxu0 0.0
        %2298 = vmatpush1.xpose.msra.mxu0 0.0
        %2299 = vmatprep.subr.mxu0 0.0
        %2300 = vmatpush1.xpose.msra.mxu0 0.0
        %2301 = vmatprep.subr.mxu0 0.0
        %2302 = vmatpush1.xpose.msra.mxu0 0.0
        %2303 = vmatprep.mubr.f32.mxu0 0.0
        %2304 = vmatmul.mubr.f32.gmra.mrb[0].mxu0 %v2234
        %v2305 = vpop.f32.mrb[0].mxu0
        %v2306 = vadd.f32 0.0, %v2305
        %v2307 = vpop.f32.mrb[0].mxu0
        %2308 = vdwg.mxu0
        %v2310 = vsel %vm2232, %v538, 0
        %v2313 = vsel %vm2232, %v1175, 0
        %2315 = vmatprep.subr.mxu0 0.0
        %2316 = vmatpush1.xpose.msra.mxu0 %v2313
        %2317 = vmatprep.subr.mxu0 0.0
        %2318 = vmatpush1.xpose.msra.mxu0 0.0
        %2319 = vmatprep.subr.mxu0 0.0
        %2320 = vmatpush1.xpose.msra.mxu0 0.0
        %2321 = vmatprep.subr.mxu0 0.0
        %2322 = vmatpush1.xpose.msra.mxu0 0.0
        %2323 = vmatprep.subr.mxu0 0.0
        %2324 = vmatpush1.xpose.msra.mxu0 0.0
        %2325 = vmatprep.subr.mxu0 0.0
        %2326 = vmatpush1.xpose.msra.mxu0 0.0
        %2327 = vmatprep.subr.mxu0 0.0
        %2328 = vmatpush1.xpose.msra.mxu0 0.0
        %2329 = vmatprep.subr.mxu0 0.0
        %2330 = vmatpush1.xpose.msra.mxu0 0.0
        %2331 = vmatprep.subr.mxu0 0.0
        %2332 = vmatpush1.xpose.msra.mxu0 0.0
        %2333 = vmatprep.subr.mxu0 0.0
        %2334 = vmatpush1.xpose.msra.mxu0 0.0
        %2335 = vmatprep.subr.mxu0 0.0
        %2336 = vmatpush1.xpose.msra.mxu0 0.0
        %2337 = vmatprep.subr.mxu0 0.0
        %2338 = vmatpush1.xpose.msra.mxu0 0.0
        %2339 = vmatprep.subr.mxu0 0.0
        %2340 = vmatpush1.xpose.msra.mxu0 0.0
        %2341 = vmatprep.subr.mxu0 0.0
        %2342 = vmatpush1.xpose.msra.mxu0 0.0
        %2343 = vmatprep.subr.mxu0 0.0
        %2344 = vmatpush1.xpose.msra.mxu0 0.0
        %2345 = vmatprep.subr.mxu0 0.0
        %2346 = vmatpush1.xpose.msra.mxu0 0.0
        %2347 = vmatprep.subr.mxu0 0.0
        %2348 = vmatpush1.xpose.msra.mxu0 0.0
        %2349 = vmatprep.subr.mxu0 0.0
        %2350 = vmatpush1.xpose.msra.mxu0 0.0
        %2351 = vmatprep.subr.mxu0 0.0
        %2352 = vmatpush1.xpose.msra.mxu0 0.0
        %2353 = vmatprep.subr.mxu0 0.0
        %2354 = vmatpush1.xpose.msra.mxu0 0.0
        %2355 = vmatprep.subr.mxu0 0.0
        %2356 = vmatpush1.xpose.msra.mxu0 0.0
        %2357 = vmatprep.subr.mxu0 0.0
        %2358 = vmatpush1.xpose.msra.mxu0 0.0
        %2359 = vmatprep.subr.mxu0 0.0
        %2360 = vmatpush1.xpose.msra.mxu0 0.0
        %2361 = vmatprep.subr.mxu0 0.0
        %2362 = vmatpush1.xpose.msra.mxu0 0.0
        %2363 = vmatprep.subr.mxu0 0.0
        %2364 = vmatpush1.xpose.msra.mxu0 0.0
        %2365 = vmatprep.subr.mxu0 0.0
        %2366 = vmatpush1.xpose.msra.mxu0 0.0
        %2367 = vmatprep.subr.mxu0 0.0
        %2368 = vmatpush1.xpose.msra.mxu0 0.0
        %2369 = vmatprep.subr.mxu0 0.0
        %2370 = vmatpush1.xpose.msra.mxu0 0.0
        %2371 = vmatprep.subr.mxu0 0.0
        %2372 = vmatpush1.xpose.msra.mxu0 0.0
        %2373 = vmatprep.subr.mxu0 0.0
        %2374 = vmatpush1.xpose.msra.mxu0 0.0
        %2375 = vmatprep.subr.mxu0 0.0
        %2376 = vmatpush1.xpose.msra.mxu0 0.0
        %2377 = vmatprep.subr.mxu0 0.0
        %2378 = vmatpush1.xpose.msra.mxu0 0.0
        %2379 = vmatprep.mubr.f32.mxu0 0.0
        %2380 = vmatmul.mubr.f32.gmra.mrb[0].mxu0 %v2310
        %v2381 = vpop.f32.mrb[0].mxu0
        %v2382 = vadd.f32 0.0, %v2381
        %v2383 = vpop.f32.mrb[0].mxu0
        %2384 = vdwg.mxu0
        %v2386 = vsel %vm2232, %v608, 0
        %v2389 = vsel %vm2232, %v1245, 0
        %2391 = vmatprep.subr.mxu0 0.0
        %2392 = vmatpush1.xpose.msra.mxu0 %v2389
        %2393 = vmatprep.subr.mxu0 0.0
        %2394 = vmatpush1.xpose.msra.mxu0 0.0
        %2395 = vmatprep.subr.mxu0 0.0
        %2396 = vmatpush1.xpose.msra.mxu0 0.0
        %2397 = vmatprep.subr.mxu0 0.0
        %2398 = vmatpush1.xpose.msra.mxu0 0.0
        %2399 = vmatprep.subr.mxu0 0.0
        %2400 = vmatpush1.xpose.msra.mxu0 0.0
        %2401 = vmatprep.subr.mxu0 0.0
        %2402 = vmatpush1.xpose.msra.mxu0 0.0
        %2403 = vmatprep.subr.mxu0 0.0
        %2404 = vmatpush1.xpose.msra.mxu0 0.0
        %2405 = vmatprep.subr.mxu0 0.0
        %2406 = vmatpush1.xpose.msra.mxu0 0.0
        %2407 = vmatprep.subr.mxu0 0.0
        %2408 = vmatpush1.xpose.msra.mxu0 0.0
        %2409 = vmatprep.subr.mxu0 0.0
        %2410 = vmatpush1.xpose.msra.mxu0 0.0
        %2411 = vmatprep.subr.mxu0 0.0
        %2412 = vmatpush1.xpose.msra.mxu0 0.0
        %2413 = vmatprep.subr.mxu0 0.0
        %2414 = vmatpush1.xpose.msra.mxu0 0.0
        %2415 = vmatprep.subr.mxu0 0.0
        %2416 = vmatpush1.xpose.msra.mxu0 0.0
        %2417 = vmatprep.subr.mxu0 0.0
        %2418 = vmatpush1.xpose.msra.mxu0 0.0
        %2419 = vmatprep.subr.mxu0 0.0
        %2420 = vmatpush1.xpose.msra.mxu0 0.0
        %2421 = vmatprep.subr.mxu0 0.0
        %2422 = vmatpush1.xpose.msra.mxu0 0.0
        %2423 = vmatprep.subr.mxu0 0.0
        %2424 = vmatpush1.xpose.msra.mxu0 0.0
        %2425 = vmatprep.subr.mxu0 0.0
        %2426 = vmatpush1.xpose.msra.mxu0 0.0
        %2427 = vmatprep.subr.mxu0 0.0
        %2428 = vmatpush1.xpose.msra.mxu0 0.0
        %2429 = vmatprep.subr.mxu0 0.0
        %2430 = vmatpush1.xpose.msra.mxu0 0.0
        %2431 = vmatprep.subr.mxu0 0.0
        %2432 = vmatpush1.xpose.msra.mxu0 0.0
        %2433 = vmatprep.subr.mxu0 0.0
        %2434 = vmatpush1.xpose.msra.mxu0 0.0
        %2435 = vmatprep.subr.mxu0 0.0
        %2436 = vmatpush1.xpose.msra.mxu0 0.0
        %2437 = vmatprep.subr.mxu0 0.0
        %2438 = vmatpush1.xpose.msra.mxu0 0.0
        %2439 = vmatprep.subr.mxu0 0.0
        %2440 = vmatpush1.xpose.msra.mxu0 0.0
        %2441 = vmatprep.subr.mxu0 0.0
        %2442 = vmatpush1.xpose.msra.mxu0 0.0
        %2443 = vmatprep.subr.mxu0 0.0
        %2444 = vmatpush1.xpose.msra.mxu0 0.0
        %2445 = vmatprep.subr.mxu0 0.0
        %2446 = vmatpush1.xpose.msra.mxu0 0.0
        %2447 = vmatprep.subr.mxu0 0.0
        %2448 = vmatpush1.xpose.msra.mxu0 0.0
        %2449 = vmatprep.subr.mxu0 0.0
        %2450 = vmatpush1.xpose.msra.mxu0 0.0
        %2451 = vmatprep.subr.mxu0 0.0
        %2452 = vmatpush1.xpose.msra.mxu0 0.0
        %2453 = vmatprep.subr.mxu0 0.0
        %2454 = vmatpush1.xpose.msra.mxu0 0.0
        %2455 = vmatprep.mubr.f32.mxu0 0.0
        %2456 = vmatmul.mubr.f32.gmra.mrb[0].mxu0 %v2386
        %v2457 = vpop.f32.mrb[0].mxu0
        %v2458 = vadd.f32 0.0, %v2457
        %v2459 = vpop.f32.mrb[0].mxu0
        %2460 = vdwg.mxu0
        %v2462 = vsel %vm2232, %v678, 0
        %v2465 = vsel %vm2232, %v1315, 0
        %2467 = vmatprep.subr.mxu0 0.0
        %2468 = vmatpush1.xpose.msra.mxu0 %v2465
        %2469 = vmatprep.subr.mxu0 0.0
        %2470 = vmatpush1.xpose.msra.mxu0 0.0
        %2471 = vmatprep.subr.mxu0 0.0
        %2472 = vmatpush1.xpose.msra.mxu0 0.0
        %2473 = vmatprep.subr.mxu0 0.0
        %2474 = vmatpush1.xpose.msra.mxu0 0.0
        %2475 = vmatprep.subr.mxu0 0.0
        %2476 = vmatpush1.xpose.msra.mxu0 0.0
        %2477 = vmatprep.subr.mxu0 0.0
        %2478 = vmatpush1.xpose.msra.mxu0 0.0
        %2479 = vmatprep.subr.mxu0 0.0
        %2480 = vmatpush1.xpose.msra.mxu0 0.0
        %2481 = vmatprep.subr.mxu0 0.0
        %2482 = vmatpush1.xpose.msra.mxu0 0.0
        %2483 = vmatprep.subr.mxu0 0.0
        %2484 = vmatpush1.xpose.msra.mxu0 0.0
        %2485 = vmatprep.subr.mxu0 0.0
        %2486 = vmatpush1.xpose.msra.mxu0 0.0
        %2487 = vmatprep.subr.mxu0 0.0
        %2488 = vmatpush1.xpose.msra.mxu0 0.0
        %2489 = vmatprep.subr.mxu0 0.0
        %2490 = vmatpush1.xpose.msra.mxu0 0.0
        %2491 = vmatprep.subr.mxu0 0.0
        %2492 = vmatpush1.xpose.msra.mxu0 0.0
        %2493 = vmatprep.subr.mxu0 0.0
        %2494 = vmatpush1.xpose.msra.mxu0 0.0
        %2495 = vmatprep.subr.mxu0 0.0
        %2496 = vmatpush1.xpose.msra.mxu0 0.0
        %2497 = vmatprep.subr.mxu0 0.0
        %2498 = vmatpush1.xpose.msra.mxu0 0.0
        %2499 = vmatprep.subr.mxu0 0.0
        %2500 = vmatpush1.xpose.msra.mxu0 0.0
        %2501 = vmatprep.subr.mxu0 0.0
        %2502 = vmatpush1.xpose.msra.mxu0 0.0
        %2503 = vmatprep.subr.mxu0 0.0
        %2504 = vmatpush1.xpose.msra.mxu0 0.0
        %2505 = vmatprep.subr.mxu0 0.0
        %2506 = vmatpush1.xpose.msra.mxu0 0.0
        %2507 = vmatprep.subr.mxu0 0.0
        %2508 = vmatpush1.xpose.msra.mxu0 0.0
        %2509 = vmatprep.subr.mxu0 0.0
        %2510 = vmatpush1.xpose.msra.mxu0 0.0
        %2511 = vmatprep.subr.mxu0 0.0
        %2512 = vmatpush1.xpose.msra.mxu0 0.0
        %2513 = vmatprep.subr.mxu0 0.0
        %2514 = vmatpush1.xpose.msra.mxu0 0.0
        %2515 = vmatprep.subr.mxu0 0.0
        %2516 = vmatpush1.xpose.msra.mxu0 0.0
        %2517 = vmatprep.subr.mxu0 0.0
        %2518 = vmatpush1.xpose.msra.mxu0 0.0
        %2519 = vmatprep.subr.mxu0 0.0
        %2520 = vmatpush1.xpose.msra.mxu0 0.0
        %2521 = vmatprep.subr.mxu0 0.0
        %2522 = vmatpush1.xpose.msra.mxu0 0.0
        %2523 = vmatprep.subr.mxu0 0.0
        %2524 = vmatpush1.xpose.msra.mxu0 0.0
        %2525 = vmatprep.subr.mxu0 0.0
        %2526 = vmatpush1.xpose.msra.mxu0 0.0
        %2527 = vmatprep.subr.mxu0 0.0
        %2528 = vmatpush1.xpose.msra.mxu0 0.0
        %2529 = vmatprep.subr.mxu0 0.0
        %2530 = vmatpush1.xpose.msra.mxu0 0.0
        %2531 = vmatprep.mubr.f32.mxu0 0.0
        %2532 = vmatmul.mubr.f32.gmra.mrb[0].mxu0 %v2462
        %v2533 = vpop.f32.mrb[0].mxu0
        %v2534 = vadd.f32 0.0, %v2533
        %v2535 = vpop.f32.mrb[0].mxu0
        %2536 = vdwg.mxu0
        %v2538 = vsel %vm2232, %v748, 0
        %v2541 = vsel %vm2232, %v1385, 0
        %2543 = vmatprep.subr.mxu0 0.0
        %2544 = vmatpush1.xpose.msra.mxu0 %v2541
        %2545 = vmatprep.subr.mxu0 0.0
        %2546 = vmatpush1.xpose.msra.mxu0 0.0
        %2547 = vmatprep.subr.mxu0 0.0
        %2548 = vmatpush1.xpose.msra.mxu0 0.0
        %2549 = vmatprep.subr.mxu0 0.0
        %2550 = vmatpush1.xpose.msra.mxu0 0.0
        %2551 = vmatprep.subr.mxu0 0.0
        %2552 = vmatpush1.xpose.msra.mxu0 0.0
        %2553 = vmatprep.subr.mxu0 0.0
        %2554 = vmatpush1.xpose.msra.mxu0 0.0
        %2555 = vmatprep.subr.mxu0 0.0
        %2556 = vmatpush1.xpose.msra.mxu0 0.0
        %2557 = vmatprep.subr.mxu0 0.0
        %2558 = vmatpush1.xpose.msra.mxu0 0.0
        %2559 = vmatprep.subr.mxu0 0.0
        %2560 = vmatpush1.xpose.msra.mxu0 0.0
        %2561 = vmatprep.subr.mxu0 0.0
        %2562 = vmatpush1.xpose.msra.mxu0 0.0
        %2563 = vmatprep.subr.mxu0 0.0
        %2564 = vmatpush1.xpose.msra.mxu0 0.0
        %2565 = vmatprep.subr.mxu0 0.0
        %2566 = vmatpush1.xpose.msra.mxu0 0.0
        %2567 = vmatprep.subr.mxu0 0.0
        %2568 = vmatpush1.xpose.msra.mxu0 0.0
        %2569 = vmatprep.subr.mxu0 0.0
        %2570 = vmatpush1.xpose.msra.mxu0 0.0
        %2571 = vmatprep.subr.mxu0 0.0
        %2572 = vmatpush1.xpose.msra.mxu0 0.0
        %2573 = vmatprep.subr.mxu0 0.0
        %2574 = vmatpush1.xpose.msra.mxu0 0.0
        %2575 = vmatprep.subr.mxu0 0.0
        %2576 = vmatpush1.xpose.msra.mxu0 0.0
        %2577 = vmatprep.subr.mxu0 0.0
        %2578 = vmatpush1.xpose.msra.mxu0 0.0
        %2579 = vmatprep.subr.mxu0 0.0
        %2580 = vmatpush1.xpose.msra.mxu0 0.0
        %2581 = vmatprep.subr.mxu0 0.0
        %2582 = vmatpush1.xpose.msra.mxu0 0.0
        %2583 = vmatprep.subr.mxu0 0.0
        %2584 = vmatpush1.xpose.msra.mxu0 0.0
        %2585 = vmatprep.subr.mxu0 0.0
        %2586 = vmatpush1.xpose.msra.mxu0 0.0
        %2587 = vmatprep.subr.mxu0 0.0
        %2588 = vmatpush1.xpose.msra.mxu0 0.0
        %2589 = vmatprep.subr.mxu0 0.0
        %2590 = vmatpush1.xpose.msra.mxu0 0.0
        %2591 = vmatprep.subr.mxu0 0.0
        %2592 = vmatpush1.xpose.msra.mxu0 0.0
        %2593 = vmatprep.subr.mxu0 0.0
        %2594 = vmatpush1.xpose.msra.mxu0 0.0
        %2595 = vmatprep.subr.mxu0 0.0
        %2596 = vmatpush1.xpose.msra.mxu0 0.0
        %2597 = vmatprep.subr.mxu0 0.0
        %2598 = vmatpush1.xpose.msra.mxu0 0.0
        %2599 = vmatprep.subr.mxu0 0.0
        %2600 = vmatpush1.xpose.msra.mxu0 0.0
        %2601 = vmatprep.subr.mxu0 0.0
        %2602 = vmatpush1.xpose.msra.mxu0 0.0
        %2603 = vmatprep.subr.mxu0 0.0
        %2604 = vmatpush1.xpose.msra.mxu0 0.0
        %2605 = vmatprep.subr.mxu0 0.0
        %2606 = vmatpush1.xpose.msra.mxu0 0.0
        %2607 = vmatprep.mubr.f32.mxu0 0.0
        %2608 = vmatmul.mubr.f32.gmra.mrb[0].mxu0 %v2538
        %v2609 = vpop.f32.mrb[0].mxu0
        %v2610 = vadd.f32 0.0, %v2609
        %v2611 = vpop.f32.mrb[0].mxu0
        %2612 = vdwg.mxu0
        %v2614 = vsel %vm2232, %v818, 0
        %v2617 = vsel %vm2232, %v1455, 0
        %2619 = vmatprep.subr.mxu0 0.0
        %2620 = vmatpush1.xpose.msra.mxu0 %v2617
        %2621 = vmatprep.subr.mxu0 0.0
        %2622 = vmatpush1.xpose.msra.mxu0 0.0
        %2623 = vmatprep.subr.mxu0 0.0
        %2624 = vmatpush1.xpose.msra.mxu0 0.0
        %2625 = vmatprep.subr.mxu0 0.0
        %2626 = vmatpush1.xpose.msra.mxu0 0.0
        %2627 = vmatprep.subr.mxu0 0.0
        %2628 = vmatpush1.xpose.msra.mxu0 0.0
        %2629 = vmatprep.subr.mxu0 0.0
        %2630 = vmatpush1.xpose.msra.mxu0 0.0
        %2631 = vmatprep.subr.mxu0 0.0
        %2632 = vmatpush1.xpose.msra.mxu0 0.0
        %2633 = vmatprep.subr.mxu0 0.0
        %2634 = vmatpush1.xpose.msra.mxu0 0.0
        %2635 = vmatprep.subr.mxu0 0.0
        %2636 = vmatpush1.xpose.msra.mxu0 0.0
        %2637 = vmatprep.subr.mxu0 0.0
        %2638 = vmatpush1.xpose.msra.mxu0 0.0
        %2639 = vmatprep.subr.mxu0 0.0
        %2640 = vmatpush1.xpose.msra.mxu0 0.0
        %2641 = vmatprep.subr.mxu0 0.0
        %2642 = vmatpush1.xpose.msra.mxu0 0.0
        %2643 = vmatprep.subr.mxu0 0.0
        %2644 = vmatpush1.xpose.msra.mxu0 0.0
        %2645 = vmatprep.subr.mxu0 0.0
        %2646 = vmatpush1.xpose.msra.mxu0 0.0
        %2647 = vmatprep.subr.mxu0 0.0
        %2648 = vmatpush1.xpose.msra.mxu0 0.0
        %2649 = vmatprep.subr.mxu0 0.0
        %2650 = vmatpush1.xpose.msra.mxu0 0.0
        %2651 = vmatprep.subr.mxu0 0.0
        %2652 = vmatpush1.xpose.msra.mxu0 0.0
        %2653 = vmatprep.subr.mxu0 0.0
        %2654 = vmatpush1.xpose.msra.mxu0 0.0
        %2655 = vmatprep.subr.mxu0 0.0
        %2656 = vmatpush1.xpose.msra.mxu0 0.0
        %2657 = vmatprep.subr.mxu0 0.0
        %2658 = vmatpush1.xpose.msra.mxu0 0.0
        %2659 = vmatprep.subr.mxu0 0.0
        %2660 = vmatpush1.xpose.msra.mxu0 0.0
        %2661 = vmatprep.subr.mxu0 0.0
        %2662 = vmatpush1.xpose.msra.mxu0 0.0
        %2663 = vmatprep.subr.mxu0 0.0
        %2664 = vmatpush1.xpose.msra.mxu0 0.0
        %2665 = vmatprep.subr.mxu0 0.0
        %2666 = vmatpush1.xpose.msra.mxu0 0.0
        %2667 = vmatprep.subr.mxu0 0.0
        %2668 = vmatpush1.xpose.msra.mxu0 0.0
        %2669 = vmatprep.subr.mxu0 0.0
        %2670 = vmatpush1.xpose.msra.mxu0 0.0
        %2671 = vmatprep.subr.mxu0 0.0
        %2672 = vmatpush1.xpose.msra.mxu0 0.0
        %2673 = vmatprep.subr.mxu0 0.0
        %2674 = vmatpush1.xpose.msra.mxu0 0.0
        %2675 = vmatprep.subr.mxu0 0.0
        %2676 = vmatpush1.xpose.msra.mxu0 0.0
        %2677 = vmatprep.subr.mxu0 0.0
        %2678 = vmatpush1.xpose.msra.mxu0 0.0
        %2679 = vmatprep.subr.mxu0 0.0
        %2680 = vmatpush1.xpose.msra.mxu0 0.0
        %2681 = vmatprep.subr.mxu0 0.0
        %2682 = vmatpush1.xpose.msra.mxu0 0.0
        %2683 = vmatprep.mubr.f32.mxu0 0.0
        %2684 = vmatmul.mubr.f32.gmra.mrb[0].mxu0 %v2614
        %v2685 = vpop.f32.mrb[0].mxu0
        %v2686 = vadd.f32 0.0, %v2685
        %v2687 = vpop.f32.mrb[0].mxu0
        %2688 = vdwg.mxu0
        %v2690 = vsel %vm2232, %v888, 0
        %v2693 = vsel %vm2232, %v1525, 0
        %2695 = vmatprep.subr.mxu0 0.0
        %2696 = vmatpush1.xpose.msra.mxu0 %v2693
        %2697 = vmatprep.subr.mxu0 0.0
        %2698 = vmatpush1.xpose.msra.mxu0 0.0
        %2699 = vmatprep.subr.mxu0 0.0
        %2700 = vmatpush1.xpose.msra.mxu0 0.0
        %2701 = vmatprep.subr.mxu0 0.0
        %2702 = vmatpush1.xpose.msra.mxu0 0.0
        %2703 = vmatprep.subr.mxu0 0.0
        %2704 = vmatpush1.xpose.msra.mxu0 0.0
        %2705 = vmatprep.subr.mxu0 0.0
        %2706 = vmatpush1.xpose.msra.mxu0 0.0
        %2707 = vmatprep.subr.mxu0 0.0
        %2708 = vmatpush1.xpose.msra.mxu0 0.0
        %2709 = vmatprep.subr.mxu0 0.0
        %2710 = vmatpush1.xpose.msra.mxu0 0.0
        %2711 = vmatprep.subr.mxu0 0.0
        %2712 = vmatpush1.xpose.msra.mxu0 0.0
        %2713 = vmatprep.subr.mxu0 0.0
        %2714 = vmatpush1.xpose.msra.mxu0 0.0
        %2715 = vmatprep.subr.mxu0 0.0
        %2716 = vmatpush1.xpose.msra.mxu0 0.0
        %2717 = vmatprep.subr.mxu0 0.0
        %2718 = vmatpush1.xpose.msra.mxu0 0.0
        %2719 = vmatprep.subr.mxu0 0.0
        %2720 = vmatpush1.xpose.msra.mxu0 0.0
        %2721 = vmatprep.subr.mxu0 0.0
        %2722 = vmatpush1.xpose.msra.mxu0 0.0
        %2723 = vmatprep.subr.mxu0 0.0
        %2724 = vmatpush1.xpose.msra.mxu0 0.0
        %2725 = vmatprep.subr.mxu0 0.0
        %2726 = vmatpush1.xpose.msra.mxu0 0.0
        %2727 = vmatprep.subr.mxu0 0.0
        %2728 = vmatpush1.xpose.msra.mxu0 0.0
        %2729 = vmatprep.subr.mxu0 0.0
        %2730 = vmatpush1.xpose.msra.mxu0 0.0
        %2731 = vmatprep.subr.mxu0 0.0
        %2732 = vmatpush1.xpose.msra.mxu0 0.0
        %2733 = vmatprep.subr.mxu0 0.0
        %2734 = vmatpush1.xpose.msra.mxu0 0.0
        %2735 = vmatprep.subr.mxu0 0.0
        %2736 = vmatpush1.xpose.msra.mxu0 0.0
        %2737 = vmatprep.subr.mxu0 0.0
        %2738 = vmatpush1.xpose.msra.mxu0 0.0
        %2739 = vmatprep.subr.mxu0 0.0
        %2740 = vmatpush1.xpose.msra.mxu0 0.0
        %2741 = vmatprep.subr.mxu0 0.0
        %2742 = vmatpush1.xpose.msra.mxu0 0.0
        %2743 = vmatprep.subr.mxu0 0.0
        %2744 = vmatpush1.xpose.msra.mxu0 0.0
        %2745 = vmatprep.subr.mxu0 0.0
        %2746 = vmatpush1.xpose.msra.mxu0 0.0
        %2747 = vmatprep.subr.mxu0 0.0
        %2748 = vmatpush1.xpose.msra.mxu0 0.0
        %2749 = vmatprep.subr.mxu0 0.0
        %2750 = vmatpush1.xpose.msra.mxu0 0.0
        %2751 = vmatprep.subr.mxu0 0.0
        %2752 = vmatpush1.xpose.msra.mxu0 0.0
        %2753 = vmatprep.subr.mxu0 0.0
        %2754 = vmatpush1.xpose.msra.mxu0 0.0
        %2755 = vmatprep.subr.mxu0 0.0
        %2756 = vmatpush1.xpose.msra.mxu0 0.0
        %2757 = vmatprep.subr.mxu0 0.0
        %2758 = vmatpush1.xpose.msra.mxu0 0.0
        %2759 = vmatprep.mubr.f32.mxu0 0.0
        %2760 = vmatmul.mubr.f32.gmra.mrb[0].mxu0 %v2690
        %v2761 = vpop.f32.mrb[0].mxu0
        %v2762 = vadd.f32 0.0, %v2761
        %v2763 = vpop.f32.mrb[0].mxu0
        %2764 = vdwg.mxu0
        %v2766 = vsel %vm2232, %v958, 0
        %v2769 = vsel %vm2232, %v1595, 0
        %2771 = vmatprep.subr.mxu0 0.0
        %2772 = vmatpush1.xpose.msra.mxu0 %v2769
        %2773 = vmatprep.subr.mxu0 0.0
        %2774 = vmatpush1.xpose.msra.mxu0 0.0
        %2775 = vmatprep.subr.mxu0 0.0
        %2776 = vmatpush1.xpose.msra.mxu0 0.0
        %2777 = vmatprep.subr.mxu0 0.0
        %2778 = vmatpush1.xpose.msra.mxu0 0.0
        %2779 = vmatprep.subr.mxu0 0.0
        %2780 = vmatpush1.xpose.msra.mxu0 0.0
        %2781 = vmatprep.subr.mxu0 0.0
        %2782 = vmatpush1.xpose.msra.mxu0 0.0
        %2783 = vmatprep.subr.mxu0 0.0
        %2784 = vmatpush1.xpose.msra.mxu0 0.0
        %2785 = vmatprep.subr.mxu0 0.0
        %2786 = vmatpush1.xpose.msra.mxu0 0.0
        %2787 = vmatprep.subr.mxu0 0.0
        %2788 = vmatpush1.xpose.msra.mxu0 0.0
        %2789 = vmatprep.subr.mxu0 0.0
        %2790 = vmatpush1.xpose.msra.mxu0 0.0
        %2791 = vmatprep.subr.mxu0 0.0
        %2792 = vmatpush1.xpose.msra.mxu0 0.0
        %2793 = vmatprep.subr.mxu0 0.0
        %2794 = vmatpush1.xpose.msra.mxu0 0.0
        %2795 = vmatprep.subr.mxu0 0.0
        %2796 = vmatpush1.xpose.msra.mxu0 0.0
        %2797 = vmatprep.subr.mxu0 0.0
        %2798 = vmatpush1.xpose.msra.mxu0 0.0
        %2799 = vmatprep.subr.mxu0 0.0
        %2800 = vmatpush1.xpose.msra.mxu0 0.0
        %2801 = vmatprep.subr.mxu0 0.0
        %2802 = vmatpush1.xpose.msra.mxu0 0.0
        %2803 = vmatprep.subr.mxu0 0.0
        %2804 = vmatpush1.xpose.msra.mxu0 0.0
        %2805 = vmatprep.subr.mxu0 0.0
        %2806 = vmatpush1.xpose.msra.mxu0 0.0
        %2807 = vmatprep.subr.mxu0 0.0
        %2808 = vmatpush1.xpose.msra.mxu0 0.0
        %2809 = vmatprep.subr.mxu0 0.0
        %2810 = vmatpush1.xpose.msra.mxu0 0.0
        %2811 = vmatprep.subr.mxu0 0.0
        %2812 = vmatpush1.xpose.msra.mxu0 0.0
        %2813 = vmatprep.subr.mxu0 0.0
        %2814 = vmatpush1.xpose.msra.mxu0 0.0
        %2815 = vmatprep.subr.mxu0 0.0
        %2816 = vmatpush1.xpose.msra.mxu0 0.0
        %2817 = vmatprep.subr.mxu0 0.0
        %2818 = vmatpush1.xpose.msra.mxu0 0.0
        %2819 = vmatprep.subr.mxu0 0.0
        %2820 = vmatpush1.xpose.msra.mxu0 0.0
        %2821 = vmatprep.subr.mxu0 0.0
        %2822 = vmatpush1.xpose.msra.mxu0 0.0
        %2823 = vmatprep.subr.mxu0 0.0
        %2824 = vmatpush1.xpose.msra.mxu0 0.0
        %2825 = vmatprep.subr.mxu0 0.0
        %2826 = vmatpush1.xpose.msra.mxu0 0.0
        %2827 = vmatprep.subr.mxu0 0.0
        %2828 = vmatpush1.xpose.msra.mxu0 0.0
        %2829 = vmatprep.subr.mxu0 0.0
        %2830 = vmatpush1.xpose.msra.mxu0 0.0
        %2831 = vmatprep.subr.mxu0 0.0
        %2832 = vmatpush1.xpose.msra.mxu0 0.0
        %2833 = vmatprep.subr.mxu0 0.0
        %2834 = vmatpush1.xpose.msra.mxu0 0.0
        %2835 = vmatprep.mubr.f32.mxu0 0.0
        %2836 = vmatmul.mubr.f32.gmra.mrb[0].mxu0 %v2766
        %v2837 = vpop.f32.mrb[0].mxu0
        %v2838 = vadd.f32 0.0, %v2837
        %v2839 = vpop.f32.mrb[0].mxu0
        %2840 = vdwg.mxu0
        %v2841 = vmul.f32 %v2306, 0.17677669
        %v2842 = vmul.f32 %v2382, 0.17677669
        %v2843 = vmul.f32 %v2458, 0.17677669
        %v2844 = vmul.f32 %v2534, 0.17677669
        %v2845 = vmul.f32 %v2610, 0.17677669
        %v2846 = vmul.f32 %v2686, 0.17677669
        %v2847 = vmul.f32 %v2762, 0.17677669
        %v2848 = vmul.f32 %v2838, 0.17677669
        %vm2849 = vcmask 60416
        %v2850 = vsel %vm2849, %v2841, -inf
        %2851 = vmax.xlane.f32.xlu0 %v2850
        %v2852 = vpop.xlane.xlu0 %2851
        %v2853 = vsel %vm2849, %v2842, -inf
        %2854 = vmax.xlane.f32.xlu0 %v2853
        %v2855 = vpop.xlane.xlu0 %2854
        %v2856 = vsel %vm2849, %v2843, -inf
        %2857 = vmax.xlane.f32.xlu0 %v2856
        %v2858 = vpop.xlane.xlu0 %2857
        %v2859 = vsel %vm2849, %v2844, -inf
        %2860 = vmax.xlane.f32.xlu0 %v2859
        %v2861 = vpop.xlane.xlu0 %2860
        %v2862 = vsel %vm2849, %v2845, -inf
        %2863 = vmax.xlane.f32.xlu0 %v2862
        %v2864 = vpop.xlane.xlu0 %2863
        %v2865 = vsel %vm2849, %v2846, -inf
        %2866 = vmax.xlane.f32.xlu0 %v2865
        %v2867 = vpop.xlane.xlu0 %2866
        %v2868 = vsel %vm2849, %v2847, -inf
        %2869 = vmax.xlane.f32.xlu0 %v2868
        %v2870 = vpop.xlane.xlu0 %2869
        %v2871 = vsel %vm2849, %v2848, -inf
        %2872 = vmax.xlane.f32.xlu0 %v2871
        %v2873 = vpop.xlane.xlu0 %2872
        %v2874 = vsub.f32 %v2841, %v2852
        %v2875 = vsub.f32 %v2842, %v2855
        %v2876 = vsub.f32 %v2843, %v2858
        %v2877 = vsub.f32 %v2844, %v2861
        %v2878 = vsub.f32 %v2845, %v2864
        %v2879 = vsub.f32 %v2846, %v2867
        %v2880 = vsub.f32 %v2847, %v2870
        %v2881 = vsub.f32 %v2848, %v2873
        %v2882 = vmul.f32 %v2874, 1.442695
        %v2883 = vpow.pop %v2882
        %v2884 = vmul.f32 %v2875, 1.442695
        %v2885 = vpow.pop %v2884
        %v2886 = vmul.f32 %v2876, 1.442695
        %v2887 = vpow.pop %v2886
        %v2888 = vmul.f32 %v2877, 1.442695
        %v2889 = vpow.pop %v2888
        %v2890 = vmul.f32 %v2878, 1.442695
        %v2891 = vpow.pop %v2890
        %v2892 = vmul.f32 %v2879, 1.442695
        %v2893 = vpow.pop %v2892
        %v2894 = vmul.f32 %v2880, 1.442695
        %v2895 = vpow.pop %v2894
        %v2896 = vmul.f32 %v2881, 1.442695
        %v2897 = vpow.pop %v2896
        %v2898 = vsel %vm2849, %v2883, 0.0
        %2899 = vadd.xlane.f32.xlu0 %v2898
        %v2900 = vpop.xlane.xlu0 %2899
        %v2901 = vsel %vm2849, %v2885, 0.0
        %2902 = vadd.xlane.f32.xlu0 %v2901
        %v2903 = vpop.xlane.xlu0 %2902
        %v2904 = vsel %vm2849, %v2887, 0.0
        %2905 = vadd.xlane.f32.xlu0 %v2904
        %v2906 = vpop.xlane.xlu0 %2905
        %v2907 = vsel %vm2849, %v2889, 0.0
        %2908 = vadd.xlane.f32.xlu0 %v2907
        %v2909 = vpop.xlane.xlu0 %2908
        %v2910 = vsel %vm2849, %v2891, 0.0
        %2911 = vadd.xlane.f32.xlu0 %v2910
        %v2912 = vpop.xlane.xlu0 %2911
        %v2913 = vsel %vm2849, %v2893, 0.0
        %2914 = vadd.xlane.f32.xlu0 %v2913
        %v2915 = vpop.xlane.xlu0 %2914
        %v2916 = vsel %vm2849, %v2895, 0.0
        %2917 = vadd.xlane.f32.xlu0 %v2916
        %v2918 = vpop.xlane.xlu0 %2917
        %v2919 = vsel %vm2849, %v2897, 0.0
        %2920 = vadd.xlane.f32.xlu0 %v2919
        %v2921 = vpop.xlane.xlu0 %2920
        %v2922 = vrcp.pop %v2900
        %v2923 = vmul.f32 %v2883, %v2922
        %v2924 = vrcp.pop %v2903
        %v2925 = vmul.f32 %v2885, %v2924
        %v2926 = vrcp.pop %v2906
        %v2927 = vmul.f32 %v2887, %v2926
        %v2928 = vrcp.pop %v2909
        %v2929 = vmul.f32 %v2889, %v2928
        %v2930 = vrcp.pop %v2912
        %v2931 = vmul.f32 %v2891, %v2930
        %v2932 = vrcp.pop %v2915
        %v2933 = vmul.f32 %v2893, %v2932
        %v2934 = vrcp.pop %v2918
        %v2935 = vmul.f32 %v2895, %v2934
        %v2936 = vrcp.pop %v2921
        %v2937 = vmul.f32 %v2897, %v2936
        %vm2938 = vcmask 64512
        %v2940 = vsel %vm2938, %v2923, 0
        %2942 = vmatprep.subr.mxu0 0.0
        %2943 = vmatpush1.msra.mxu0 %v1739
        %2944 = vmatprep.subr.mxu0 0.0
        %2945 = vmatpush1.msra.mxu0 0.0
        %2946 = vmatprep.subr.mxu0 0.0
        %2947 = vmatpush1.msra.mxu0 0.0
        %2948 = vmatprep.subr.mxu0 0.0
        %2949 = vmatpush1.msra.mxu0 0.0
        %2950 = vmatprep.subr.mxu0 0.0
        %2951 = vmatpush1.msra.mxu0 0.0
        %2952 = vmatprep.subr.mxu0 0.0
        %2953 = vmatpush1.msra.mxu0 0.0
        %2954 = vmatprep.subr.mxu0 0.0
        %2955 = vmatpush1.msra.mxu0 0.0
        %2956 = vmatprep.subr.mxu0 0.0
        %2957 = vmatpush1.msra.mxu0 0.0
        %2958 = vmatprep.subr.mxu0 0.0
        %2959 = vmatpush1.msra.mxu0 0.0
        %2960 = vmatprep.subr.mxu0 0.0
        %2961 = vmatpush1.msra.mxu0 0.0
        %2962 = vmatprep.subr.mxu0 0.0
        %2963 = vmatpush1.msra.mxu0 0.0
        %2964 = vmatprep.subr.mxu0 0.0
        %2965 = vmatpush1.msra.mxu0 0.0
        %2966 = vmatprep.subr.mxu0 0.0
        %2967 = vmatpush1.msra.mxu0 0.0
        %2968 = vmatprep.subr.mxu0 0.0
        %2969 = vmatpush1.msra.mxu0 0.0
        %2970 = vmatprep.subr.mxu0 0.0
        %2971 = vmatpush1.msra.mxu0 0.0
        %2972 = vmatprep.subr.mxu0 0.0
        %2973 = vmatpush1.msra.mxu0 0.0
        %2974 = vmatprep.subr.mxu0 0.0
        %2975 = vmatpush1.msra.mxu0 0.0
        %2976 = vmatprep.subr.mxu0 0.0
        %2977 = vmatpush1.msra.mxu0 0.0
        %2978 = vmatprep.subr.mxu0 0.0
        %2979 = vmatpush1.msra.mxu0 0.0
        %2980 = vmatprep.subr.mxu0 0.0
        %2981 = vmatpush1.msra.mxu0 0.0
        %2982 = vmatprep.subr.mxu0 0.0
        %2983 = vmatpush1.msra.mxu0 0.0
        %2984 = vmatprep.subr.mxu0 0.0
        %2985 = vmatpush1.msra.mxu0 0.0
        %2986 = vmatprep.subr.mxu0 0.0
        %2987 = vmatpush1.msra.mxu0 0.0
        %2988 = vmatprep.subr.mxu0 0.0
        %2989 = vmatpush1.msra.mxu0 0.0
        %2990 = vmatprep.subr.mxu0 0.0
        %2991 = vmatpush1.msra.mxu0 0.0
        %2992 = vmatprep.subr.mxu0 0.0
        %2993 = vmatpush1.msra.mxu0 0.0
        %2994 = vmatprep.subr.mxu0 0.0
        %2995 = vmatpush1.msra.mxu0 0.0
        %2996 = vmatprep.subr.mxu0 0.0
        %2997 = vmatpush1.msra.mxu0 0.0
        %2998 = vmatprep.subr.mxu0 0.0
        %2999 = vmatpush1.msra.mxu0 0.0
        %3000 = vmatprep.subr.mxu0 0.0
        %3001 = vmatpush1.msra.mxu0 0.0
        %3002 = vmatprep.subr.mxu0 0.0
        %3003 = vmatpush1.msra.mxu0 0.0
        %3004 = vmatprep.subr.mxu0 0.0
        %3005 = vmatpush1.msra.mxu0 0.0
        %3006 = vmatprep.mubr.f32.mxu0 0.0
        %3007 = vmatmul.mubr.f32.gmra.mrb[0].mxu0 %v2940
        %v3008 = vpop.f32.mrb[0].mxu0
        %v3009 = vadd.f32 0.0, %v3008
        %v3010 = vpop.f32.mrb[0].mxu0
        %3011 = vdwg.mxu0
        %v3013 = vsel %vm2938, %v2925, 0
        %3015 = vmatprep.subr.mxu0 0.0
        %3016 = vmatpush1.msra.mxu0 %v1809
        %3017 = vmatprep.subr.mxu0 0.0
        %3018 = vmatpush1.msra.mxu0 0.0
        %3019 = vmatprep.subr.mxu0 0.0
        %3020 = vmatpush1.msra.mxu0 0.0
        %3021 = vmatprep.subr.mxu0 0.0
        %3022 = vmatpush1.msra.mxu0 0.0
        %3023 = vmatprep.subr.mxu0 0.0
        %3024 = vmatpush1.msra.mxu0 0.0
        %3025 = vmatprep.subr.mxu0 0.0
        %3026 = vmatpush1.msra.mxu0 0.0
        %3027 = vmatprep.subr.mxu0 0.0
        %3028 = vmatpush1.msra.mxu0 0.0
        %3029 = vmatprep.subr.mxu0 0.0
        %3030 = vmatpush1.msra.mxu0 0.0
        %3031 = vmatprep.subr.mxu0 0.0
        %3032 = vmatpush1.msra.mxu0 0.0
        %3033 = vmatprep.subr.mxu0 0.0
        %3034 = vmatpush1.msra.mxu0 0.0
        %3035 = vmatprep.subr.mxu0 0.0
        %3036 = vmatpush1.msra.mxu0 0.0
        %3037 = vmatprep.subr.mxu0 0.0
        %3038 = vmatpush1.msra.mxu0 0.0
        %3039 = vmatprep.subr.mxu0 0.0
        %3040 = vmatpush1.msra.mxu0 0.0
        %3041 = vmatprep.subr.mxu0 0.0
        %3042 = vmatpush1.msra.mxu0 0.0
        %3043 = vmatprep.subr.mxu0 0.0
        %3044 = vmatpush1.msra.mxu0 0.0
        %3045 = vmatprep.subr.mxu0 0.0
        %3046 = vmatpush1.msra.mxu0 0.0
        %3047 = vmatprep.subr.mxu0 0.0
        %3048 = vmatpush1.msra.mxu0 0.0
        %3049 = vmatprep.subr.mxu0 0.0
        %3050 = vmatpush1.msra.mxu0 0.0
        %3051 = vmatprep.subr.mxu0 0.0
        %3052 = vmatpush1.msra.mxu0 0.0
        %3053 = vmatprep.subr.mxu0 0.0
        %3054 = vmatpush1.msra.mxu0 0.0
        %3055 = vmatprep.subr.mxu0 0.0
        %3056 = vmatpush1.msra.mxu0 0.0
        %3057 = vmatprep.subr.mxu0 0.0
        %3058 = vmatpush1.msra.mxu0 0.0
        %3059 = vmatprep.subr.mxu0 0.0
        %3060 = vmatpush1.msra.mxu0 0.0
        %3061 = vmatprep.subr.mxu0 0.0
        %3062 = vmatpush1.msra.mxu0 0.0
        %3063 = vmatprep.subr.mxu0 0.0
        %3064 = vmatpush1.msra.mxu0 0.0
        %3065 = vmatprep.subr.mxu0 0.0
        %3066 = vmatpush1.msra.mxu0 0.0
        %3067 = vmatprep.subr.mxu0 0.0
        %3068 = vmatpush1.msra.mxu0 0.0
        %3069 = vmatprep.subr.mxu0 0.0
        %3070 = vmatpush1.msra.mxu0 0.0
        %3071 = vmatprep.subr.mxu0 0.0
        %3072 = vmatpush1.msra.mxu0 0.0
        %3073 = vmatprep.subr.mxu0 0.0
        %3074 = vmatpush1.msra.mxu0 0.0
        %3075 = vmatprep.subr.mxu0 0.0
        %3076 = vmatpush1.msra.mxu0 0.0
        %3077 = vmatprep.subr.mxu0 0.0
        %3078 = vmatpush1.msra.mxu0 0.0
        %3079 = vmatprep.mubr.f32.mxu0 0.0
        %3080 = vmatmul.mubr.f32.gmra.mrb[0].mxu0 %v3013
        %v3081 = vpop.f32.mrb[0].mxu0
        %v3082 = vadd.f32 0.0, %v3081
        %v3083 = vpop.f32.mrb[0].mxu0
        %3084 = vdwg.mxu0
        %v3086 = vsel %vm2938, %v2927, 0
        %3088 = vmatprep.subr.mxu0 0.0
        %3089 = vmatpush1.msra.mxu0 %v1879
        %3090 = vmatprep.subr.mxu0 0.0
        %3091 = vmatpush1.msra.mxu0 0.0
        %3092 = vmatprep.subr.mxu0 0.0
        %3093 = vmatpush1.msra.mxu0 0.0
        %3094 = vmatprep.subr.mxu0 0.0
        %3095 = vmatpush1.msra.mxu0 0.0
        %3096 = vmatprep.subr.mxu0 0.0
        %3097 = vmatpush1.msra.mxu0 0.0
        %3098 = vmatprep.subr.mxu0 0.0
        %3099 = vmatpush1.msra.mxu0 0.0
        %3100 = vmatprep.subr.mxu0 0.0
        %3101 = vmatpush1.msra.mxu0 0.0
        %3102 = vmatprep.subr.mxu0 0.0
        %3103 = vmatpush1.msra.mxu0 0.0
        %3104 = vmatprep.subr.mxu0 0.0
        %3105 = vmatpush1.msra.mxu0 0.0
        %3106 = vmatprep.subr.mxu0 0.0
        %3107 = vmatpush1.msra.mxu0 0.0
        %3108 = vmatprep.subr.mxu0 0.0
        %3109 = vmatpush1.msra.mxu0 0.0
        %3110 = vmatprep.subr.mxu0 0.0
        %3111 = vmatpush1.msra.mxu0 0.0
        %3112 = vmatprep.subr.mxu0 0.0
        %3113 = vmatpush1.msra.mxu0 0.0
        %3114 = vmatprep.subr.mxu0 0.0
        %3115 = vmatpush1.msra.mxu0 0.0
        %3116 = vmatprep.subr.mxu0 0.0
        %3117 = vmatpush1.msra.mxu0 0.0
        %3118 = vmatprep.subr.mxu0 0.0
        %3119 = vmatpush1.msra.mxu0 0.0
        %3120 = vmatprep.subr.mxu0 0.0
        %3121 = vmatpush1.msra.mxu0 0.0
        %3122 = vmatprep.subr.mxu0 0.0
        %3123 = vmatpush1.msra.mxu0 0.0
        %3124 = vmatprep.subr.mxu0 0.0
        %3125 = vmatpush1.msra.mxu0 0.0
        %3126 = vmatprep.subr.mxu0 0.0
        %3127 = vmatpush1.msra.mxu0 0.0
        %3128 = vmatprep.subr.mxu0 0.0
        %3129 = vmatpush1.msra.mxu0 0.0
        %3130 = vmatprep.subr.mxu0 0.0
        %3131 = vmatpush1.msra.mxu0 0.0
        %3132 = vmatprep.subr.mxu0 0.0
        %3133 = vmatpush1.msra.mxu0 0.0
        %3134 = vmatprep.subr.mxu0 0.0
        %3135 = vmatpush1.msra.mxu0 0.0
        %3136 = vmatprep.subr.mxu0 0.0
        %3137 = vmatpush1.msra.mxu0 0.0
        %3138 = vmatprep.subr.mxu0 0.0
        %3139 = vmatpush1.msra.mxu0 0.0
        %3140 = vmatprep.subr.mxu0 0.0
        %3141 = vmatpush1.msra.mxu0 0.0
        %3142 = vmatprep.subr.mxu0 0.0
        %3143 = vmatpush1.msra.mxu0 0.0
        %3144 = vmatprep.subr.mxu0 0.0
        %3145 = vmatpush1.msra.mxu0 0.0
        %3146 = vmatprep.subr.mxu0 0.0
        %3147 = vmatpush1.msra.mxu0 0.0
        %3148 = vmatprep.subr.mxu0 0.0
        %3149 = vmatpush1.msra.mxu0 0.0
        %3150 = vmatprep.subr.mxu0 0.0
        %3151 = vmatpush1.msra.mxu0 0.0
        %3152 = vmatprep.mubr.f32.mxu0 0.0
        %3153 = vmatmul.mubr.f32.gmra.mrb[0].mxu0 %v3086
        %v3154 = vpop.f32.mrb[0].mxu0
        %v3155 = vadd.f32 0.0, %v3154
        %v3156 = vpop.f32.mrb[0].mxu0
        %3157 = vdwg.mxu0
        %v3159 = vsel %vm2938, %v2929, 0
        %3161 = vmatprep.subr.mxu0 0.0
        %3162 = vmatpush1.msra.mxu0 %v1949
        %3163 = vmatprep.subr.mxu0 0.0
        %3164 = vmatpush1.msra.mxu0 0.0
        %3165 = vmatprep.subr.mxu0 0.0
        %3166 = vmatpush1.msra.mxu0 0.0
        %3167 = vmatprep.subr.mxu0 0.0
        %3168 = vmatpush1.msra.mxu0 0.0
        %3169 = vmatprep.subr.mxu0 0.0
        %3170 = vmatpush1.msra.mxu0 0.0
        %3171 = vmatprep.subr.mxu0 0.0
        %3172 = vmatpush1.msra.mxu0 0.0
        %3173 = vmatprep.subr.mxu0 0.0
        %3174 = vmatpush1.msra.mxu0 0.0
        %3175 = vmatprep.subr.mxu0 0.0
        %3176 = vmatpush1.msra.mxu0 0.0
        %3177 = vmatprep.subr.mxu0 0.0
        %3178 = vmatpush1.msra.mxu0 0.0
        %3179 = vmatprep.subr.mxu0 0.0
        %3180 = vmatpush1.msra.mxu0 0.0
        %3181 = vmatprep.subr.mxu0 0.0
        %3182 = vmatpush1.msra.mxu0 0.0
        %3183 = vmatprep.subr.mxu0 0.0
        %3184 = vmatpush1.msra.mxu0 0.0
        %3185 = vmatprep.subr.mxu0 0.0
        %3186 = vmatpush1.msra.mxu0 0.0
        %3187 = vmatprep.subr.mxu0 0.0
        %3188 = vmatpush1.msra.mxu0 0.0
        %3189 = vmatprep.subr.mxu0 0.0
        %3190 = vmatpush1.msra.mxu0 0.0
        %3191 = vmatprep.subr.mxu0 0.0
        %3192 = vmatpush1.msra.mxu0 0.0
        %3193 = vmatprep.subr.mxu0 0.0
        %3194 = vmatpush1.msra.mxu0 0.0
        %3195 = vmatprep.subr.mxu0 0.0
        %3196 = vmatpush1.msra.mxu0 0.0
        %3197 = vmatprep.subr.mxu0 0.0
        %3198 = vmatpush1.msra.mxu0 0.0
        %3199 = vmatprep.subr.mxu0 0.0
        %3200 = vmatpush1.msra.mxu0 0.0
        %3201 = vmatprep.subr.mxu0 0.0
        %3202 = vmatpush1.msra.mxu0 0.0
        %3203 = vmatprep.subr.mxu0 0.0
        %3204 = vmatpush1.msra.mxu0 0.0
        %3205 = vmatprep.subr.mxu0 0.0
        %3206 = vmatpush1.msra.mxu0 0.0
        %3207 = vmatprep.subr.mxu0 0.0
        %3208 = vmatpush1.msra.mxu0 0.0
        %3209 = vmatprep.subr.mxu0 0.0
        %3210 = vmatpush1.msra.mxu0 0.0
        %3211 = vmatprep.subr.mxu0 0.0
        %3212 = vmatpush1.msra.mxu0 0.0
        %3213 = vmatprep.subr.mxu0 0.0
        %3214 = vmatpush1.msra.mxu0 0.0
        %3215 = vmatprep.subr.mxu0 0.0
        %3216 = vmatpush1.msra.mxu0 0.0
        %3217 = vmatprep.subr.mxu0 0.0
        %3218 = vmatpush1.msra.mxu0 0.0
        %3219 = vmatprep.subr.mxu0 0.0
        %3220 = vmatpush1.msra.mxu0 0.0
        %3221 = vmatprep.subr.mxu0 0.0
        %3222 = vmatpush1.msra.mxu0 0.0
        %3223 = vmatprep.subr.mxu0 0.0
        %3224 = vmatpush1.msra.mxu0 0.0
        %3225 = vmatprep.mubr.f32.mxu0 0.0
        %3226 = vmatmul.mubr.f32.gmra.mrb[0].mxu0 %v3159
        %v3227 = vpop.f32.mrb[0].mxu0
        %v3228 = vadd.f32 0.0, %v3227
        %v3229 = vpop.f32.mrb[0].mxu0
        %3230 = vdwg.mxu0
        %v3232 = vsel %vm2938, %v2931, 0
        %3234 = vmatprep.subr.mxu0 0.0
        %3235 = vmatpush1.msra.mxu0 %v2019
        %3236 = vmatprep.subr.mxu0 0.0
        %3237 = vmatpush1.msra.mxu0 0.0
        %3238 = vmatprep.subr.mxu0 0.0
        %3239 = vmatpush1.msra.mxu0 0.0
        %3240 = vmatprep.subr.mxu0 0.0
        %3241 = vmatpush1.msra.mxu0 0.0
        %3242 = vmatprep.subr.mxu0 0.0
        %3243 = vmatpush1.msra.mxu0 0.0
        %3244 = vmatprep.subr.mxu0 0.0
        %3245 = vmatpush1.msra.mxu0 0.0
        %3246 = vmatprep.subr.mxu0 0.0
        %3247 = vmatpush1.msra.mxu0 0.0
        %3248 = vmatprep.subr.mxu0 0.0
        %3249 = vmatpush1.msra.mxu0 0.0
        %3250 = vmatprep.subr.mxu0 0.0
        %3251 = vmatpush1.msra.mxu0 0.0
        %3252 = vmatprep.subr.mxu0 0.0
        %3253 = vmatpush1.msra.mxu0 0.0
        %3254 = vmatprep.subr.mxu0 0.0
        %3255 = vmatpush1.msra.mxu0 0.0
        %3256 = vmatprep.subr.mxu0 0.0
        %3257 = vmatpush1.msra.mxu0 0.0
        %3258 = vmatprep.subr.mxu0 0.0
        %3259 = vmatpush1.msra.mxu0 0.0
        %3260 = vmatprep.subr.mxu0 0.0
        %3261 = vmatpush1.msra.mxu0 0.0
        %3262 = vmatprep.subr.mxu0 0.0
        %3263 = vmatpush1.msra.mxu0 0.0
        %3264 = vmatprep.subr.mxu0 0.0
        %3265 = vmatpush1.msra.mxu0 0.0
        %3266 = vmatprep.subr.mxu0 0.0
        %3267 = vmatpush1.msra.mxu0 0.0
        %3268 = vmatprep.subr.mxu0 0.0
        %3269 = vmatpush1.msra.mxu0 0.0
        %3270 = vmatprep.subr.mxu0 0.0
        %3271 = vmatpush1.msra.mxu0 0.0
        %3272 = vmatprep.subr.mxu0 0.0
        %3273 = vmatpush1.msra.mxu0 0.0
        %3274 = vmatprep.subr.mxu0 0.0
        %3275 = vmatpush1.msra.mxu0 0.0
        %3276 = vmatprep.subr.mxu0 0.0
        %3277 = vmatpush1.msra.mxu0 0.0
        %3278 = vmatprep.subr.mxu0 0.0
        %3279 = vmatpush1.msra.mxu0 0.0
        %3280 = vmatprep.subr.mxu0 0.0
        %3281 = vmatpush1.msra.mxu0 0.0
        %3282 = vmatprep.subr.mxu0 0.0
        %3283 = vmatpush1.msra.mxu0 0.0
        %3284 = vmatprep.subr.mxu0 0.0
        %3285 = vmatpush1.msra.mxu0 0.0
        %3286 = vmatprep.subr.mxu0 0.0
        %3287 = vmatpush1.msra.mxu0 0.0
        %3288 = vmatprep.subr.mxu0 0.0
        %3289 = vmatpush1.msra.mxu0 0.0
        %3290 = vmatprep.subr.mxu0 0.0
        %3291 = vmatpush1.msra.mxu0 0.0
        %3292 = vmatprep.subr.mxu0 0.0
        %3293 = vmatpush1.msra.mxu0 0.0
        %3294 = vmatprep.subr.mxu0 0.0
        %3295 = vmatpush1.msra.mxu0 0.0
        %3296 = vmatprep.subr.mxu0 0.0
        %3297 = vmatpush1.msra.mxu0 0.0
        %3298 = vmatprep.mubr.f32.mxu0 0.0
        %3299 = vmatmul.mubr.f32.gmra.mrb[0].mxu0 %v3232
        %v3300 = vpop.f32.mrb[0].mxu0
        %v3301 = vadd.f32 0.0, %v3300
        %v3302 = vpop.f32.mrb[0].mxu0
        %3303 = vdwg.mxu0
        %v3305 = vsel %vm2938, %v2933, 0
        %3307 = vmatprep.subr.mxu0 0.0
        %3308 = vmatpush1.msra.mxu0 %v2089
        %3309 = vmatprep.subr.mxu0 0.0
        %3310 = vmatpush1.msra.mxu0 0.0
        %3311 = vmatprep.subr.mxu0 0.0
        %3312 = vmatpush1.msra.mxu0 0.0
        %3313 = vmatprep.subr.mxu0 0.0
        %3314 = vmatpush1.msra.mxu0 0.0
        %3315 = vmatprep.subr.mxu0 0.0
        %3316 = vmatpush1.msra.mxu0 0.0
        %3317 = vmatprep.subr.mxu0 0.0
        %3318 = vmatpush1.msra.mxu0 0.0
        %3319 = vmatprep.subr.mxu0 0.0
        %3320 = vmatpush1.msra.mxu0 0.0
        %3321 = vmatprep.subr.mxu0 0.0
        %3322 = vmatpush1.msra.mxu0 0.0
        %3323 = vmatprep.subr.mxu0 0.0
        %3324 = vmatpush1.msra.mxu0 0.0
        %3325 = vmatprep.subr.mxu0 0.0
        %3326 = vmatpush1.msra.mxu0 0.0
        %3327 = vmatprep.subr.mxu0 0.0
        %3328 = vmatpush1.msra.mxu0 0.0
        %3329 = vmatprep.subr.mxu0 0.0
        %3330 = vmatpush1.msra.mxu0 0.0
        %3331 = vmatprep.subr.mxu0 0.0
        %3332 = vmatpush1.msra.mxu0 0.0
        %3333 = vmatprep.subr.mxu0 0.0
        %3334 = vmatpush1.msra.mxu0 0.0
        %3335 = vmatprep.subr.mxu0 0.0
        %3336 = vmatpush1.msra.mxu0 0.0
        %3337 = vmatprep.subr.mxu0 0.0
        %3338 = vmatpush1.msra.mxu0 0.0
        %3339 = vmatprep.subr.mxu0 0.0
        %3340 = vmatpush1.msra.mxu0 0.0
        %3341 = vmatprep.subr.mxu0 0.0
        %3342 = vmatpush1.msra.mxu0 0.0
        %3343 = vmatprep.subr.mxu0 0.0
        %3344 = vmatpush1.msra.mxu0 0.0
        %3345 = vmatprep.subr.mxu0 0.0
        %3346 = vmatpush1.msra.mxu0 0.0
        %3347 = vmatprep.subr.mxu0 0.0
        %3348 = vmatpush1.msra.mxu0 0.0
        %3349 = vmatprep.subr.mxu0 0.0
        %3350 = vmatpush1.msra.mxu0 0.0
        %3351 = vmatprep.subr.mxu0 0.0
        %3352 = vmatpush1.msra.mxu0 0.0
        %3353 = vmatprep.subr.mxu0 0.0
        %3354 = vmatpush1.msra.mxu0 0.0
        %3355 = vmatprep.subr.mxu0 0.0
        %3356 = vmatpush1.msra.mxu0 0.0
        %3357 = vmatprep.subr.mxu0 0.0
        %3358 = vmatpush1.msra.mxu0 0.0
        %3359 = vmatprep.subr.mxu0 0.0
        %3360 = vmatpush1.msra.mxu0 0.0
        %3361 = vmatprep.subr.mxu0 0.0
        %3362 = vmatpush1.msra.mxu0 0.0
        %3363 = vmatprep.subr.mxu0 0.0
        %3364 = vmatpush1.msra.mxu0 0.0
        %3365 = vmatprep.subr.mxu0 0.0
        %3366 = vmatpush1.msra.mxu0 0.0
        %3367 = vmatprep.subr.mxu0 0.0
        %3368 = vmatpush1.msra.mxu0 0.0
        %3369 = vmatprep.subr.mxu0 0.0
        %3370 = vmatpush1.msra.mxu0 0.0
        %3371 = vmatprep.mubr.f32.mxu0 0.0
        %3372 = vmatmul.mubr.f32.gmra.mrb[0].mxu0 %v3305
        %v3373 = vpop.f32.mrb[0].mxu0
        %v3374 = vadd.f32 0.0, %v3373
        %v3375 = vpop.f32.mrb[0].mxu0
        %3376 = vdwg.mxu0
        %v3378 = vsel %vm2938, %v2935, 0
        %3380 = vmatprep.subr.mxu0 0.0
        %3381 = vmatpush1.msra.mxu0 %v2159
        %3382 = vmatprep.subr.mxu0 0.0
        %3383 = vmatpush1.msra.mxu0 0.0
        %3384 = vmatprep.subr.mxu0 0.0
        %3385 = vmatpush1.msra.mxu0 0.0
        %3386 = vmatprep.subr.mxu0 0.0
        %3387 = vmatpush1.msra.mxu0 0.0
        %3388 = vmatprep.subr.mxu0 0.0
        %3389 = vmatpush1.msra.mxu0 0.0
        %3390 = vmatprep.subr.mxu0 0.0
        %3391 = vmatpush1.msra.mxu0 0.0
        %3392 = vmatprep.subr.mxu0 0.0
        %3393 = vmatpush1.msra.mxu0 0.0
        %3394 = vmatprep.subr.mxu0 0.0
        %3395 = vmatpush1.msra.mxu0 0.0
        %3396 = vmatprep.subr.mxu0 0.0
        %3397 = vmatpush1.msra.mxu0 0.0
        %3398 = vmatprep.subr.mxu0 0.0
        %3399 = vmatpush1.msra.mxu0 0.0
        %3400 = vmatprep.subr.mxu0 0.0
        %3401 = vmatpush1.msra.mxu0 0.0
        %3402 = vmatprep.subr.mxu0 0.0
        %3403 = vmatpush1.msra.mxu0 0.0
        %3404 = vmatprep.subr.mxu0 0.0
        %3405 = vmatpush1.msra.mxu0 0.0
        %3406 = vmatprep.subr.mxu0 0.0
        %3407 = vmatpush1.msra.mxu0 0.0
        %3408 = vmatprep.subr.mxu0 0.0
        %3409 = vmatpush1.msra.mxu0 0.0
        %3410 = vmatprep.subr.mxu0 0.0
        %3411 = vmatpush1.msra.mxu0 0.0
        %3412 = vmatprep.subr.mxu0 0.0
        %3413 = vmatpush1.msra.mxu0 0.0
        %3414 = vmatprep.subr.mxu0 0.0
        %3415 = vmatpush1.msra.mxu0 0.0
        %3416 = vmatprep.subr.mxu0 0.0
        %3417 = vmatpush1.msra.mxu0 0.0
        %3418 = vmatprep.subr.mxu0 0.0
        %3419 = vmatpush1.msra.mxu0 0.0
        %3420 = vmatprep.subr.mxu0 0.0
        %3421 = vmatpush1.msra.mxu0 0.0
        %3422 = vmatprep.subr.mxu0 0.0
        %3423 = vmatpush1.msra.mxu0 0.0
        %3424 = vmatprep.subr.mxu0 0.0
        %3425 = vmatpush1.msra.mxu0 0.0
        %3426 = vmatprep.subr.mxu0 0.0
        %3427 = vmatpush1.msra.mxu0 0.0
        %3428 = vmatprep.subr.mxu0 0.0
        %3429 = vmatpush1.msra.mxu0 0.0
        %3430 = vmatprep.subr.mxu0 0.0
        %3431 = vmatpush1.msra.mxu0 0.0
        %3432 = vmatprep.subr.mxu0 0.0
        %3433 = vmatpush1.msra.mxu0 0.0
        %3434 = vmatprep.subr.mxu0 0.0
        %3435 = vmatpush1.msra.mxu0 0.0
        %3436 = vmatprep.subr.mxu0 0.0
        %3437 = vmatpush1.msra.mxu0 0.0
        %3438 = vmatprep.subr.mxu0 0.0
        %3439 = vmatpush1.msra.mxu0 0.0
        %3440 = vmatprep.subr.mxu0 0.0
        %3441 = vmatpush1.msra.mxu0 0.0
        %3442 = vmatprep.subr.mxu0 0.0
        %3443 = vmatpush1.msra.mxu0 0.0
        %3444 = vmatprep.mubr.f32.mxu0 0.0
        %3445 = vmatmul.mubr.f32.gmra.mrb[0].mxu0 %v3378
        %v3446 = vpop.f32.mrb[0].mxu0
        %v3447 = vadd.f32 0.0, %v3446
        %v3448 = vpop.f32.mrb[0].mxu0
        %3449 = vdwg.mxu0
        %v3451 = vsel %vm2938, %v2937, 0
        %3453 = vmatprep.subr.mxu0 0.0
        %3454 = vmatpush1.msra.mxu0 %v2229
        %3455 = vmatprep.subr.mxu0 0.0
        %3456 = vmatpush1.msra.mxu0 0.0
        %3457 = vmatprep.subr.mxu0 0.0
        %3458 = vmatpush1.msra.mxu0 0.0
        %3459 = vmatprep.subr.mxu0 0.0
        %3460 = vmatpush1.msra.mxu0 0.0
        %3461 = vmatprep.subr.mxu0 0.0
        %3462 = vmatpush1.msra.mxu0 0.0
        %3463 = vmatprep.subr.mxu0 0.0
        %3464 = vmatpush1.msra.mxu0 0.0
        %3465 = vmatprep.subr.mxu0 0.0
        %3466 = vmatpush1.msra.mxu0 0.0
        %3467 = vmatprep.subr.mxu0 0.0
        %3468 = vmatpush1.msra.mxu0 0.0
        %3469 = vmatprep.subr.mxu0 0.0
        %3470 = vmatpush1.msra.mxu0 0.0
        %3471 = vmatprep.subr.mxu0 0.0
        %3472 = vmatpush1.msra.mxu0 0.0
        %3473 = vmatprep.subr.mxu0 0.0
        %3474 = vmatpush1.msra.mxu0 0.0
        %3475 = vmatprep.subr.mxu0 0.0
        %3476 = vmatpush1.msra.mxu0 0.0
        %3477 = vmatprep.subr.mxu0 0.0
        %3478 = vmatpush1.msra.mxu0 0.0
        %3479 = vmatprep.subr.mxu0 0.0
        %3480 = vmatpush1.msra.mxu0 0.0
        %3481 = vmatprep.subr.mxu0 0.0
        %3482 = vmatpush1.msra.mxu0 0.0
        %3483 = vmatprep.subr.mxu0 0.0
        %3484 = vmatpush1.msra.mxu0 0.0
        %3485 = vmatprep.subr.mxu0 0.0
        %3486 = vmatpush1.msra.mxu0 0.0
        %3487 = vmatprep.subr.mxu0 0.0
        %3488 = vmatpush1.msra.mxu0 0.0
        %3489 = vmatprep.subr.mxu0 0.0
        %3490 = vmatpush1.msra.mxu0 0.0
        %3491 = vmatprep.subr.mxu0 0.0
        %3492 = vmatpush1.msra.mxu0 0.0
        %3493 = vmatprep.subr.mxu0 0.0
        %3494 = vmatpush1.msra.mxu0 0.0
        %3495 = vmatprep.subr.mxu0 0.0
        %3496 = vmatpush1.msra.mxu0 0.0
        %3497 = vmatprep.subr.mxu0 0.0
        %3498 = vmatpush1.msra.mxu0 0.0
        %3499 = vmatprep.subr.mxu0 0.0
        %3500 = vmatpush1.msra.mxu0 0.0
        %3501 = vmatprep.subr.mxu0 0.0
        %3502 = vmatpush1.msra.mxu0 0.0
        %3503 = vmatprep.subr.mxu0 0.0
        %3504 = vmatpush1.msra.mxu0 0.0
        %3505 = vmatprep.subr.mxu0 0.0
        %3506 = vmatpush1.msra.mxu0 0.0
        %3507 = vmatprep.subr.mxu0 0.0
        %3508 = vmatpush1.msra.mxu0 0.0
        %3509 = vmatprep.subr.mxu0 0.0
        %3510 = vmatpush1.msra.mxu0 0.0
        %3511 = vmatprep.subr.mxu0 0.0
        %3512 = vmatpush1.msra.mxu0 0.0
        %3513 = vmatprep.subr.mxu0 0.0
        %3514 = vmatpush1.msra.mxu0 0.0
        %3515 = vmatprep.subr.mxu0 0.0
        %3516 = vmatpush1.msra.mxu0 0.0
        %3517 = vmatprep.mubr.f32.mxu0 0.0
        %3518 = vmatmul.mubr.f32.gmra.mrb[0].mxu0 %v3451
        %v3519 = vpop.f32.mrb[0].mxu0
        %v3520 = vadd.f32 0.0, %v3519
        %v3521 = vpop.f32.mrb[0].mxu0
        %3522 = vdwg.mxu0
        %v3523 = vld [vmem:[%s4] sm:$0xff]
        %v3524 = vld [vmem:[%s4 + $0x8] sm:$0xff]
        %v3525 = vld [vmem:[%s4 + $0x10] sm:$0xff]
        %v3526 = vld [vmem:[%s4 + $0x18] sm:$0xff]
        %v3527 = vld [vmem:[%s4 + $0x20] sm:$0xff]
        %v3528 = vld [vmem:[%s4 + $0x28] sm:$0xff]
        %v3529 = vld [vmem:[%s4 + $0x30] sm:$0xff]
        %v3530 = vld [vmem:[%s4 + $0x38] sm:$0xff]
        %v3531 = vld [vmem:[%s4 + $0x40] sm:$0xff]
        %v3532 = vld [vmem:[%s4 + $0x48] sm:$0xff]
        %v3533 = vld [vmem:[%s4 + $0x50] sm:$0xff]
        %v3534 = vld [vmem:[%s4 + $0x58] sm:$0xff]
        %v3535 = vld [vmem:[%s4 + $0x60] sm:$0xff]
        %v3536 = vld [vmem:[%s4 + $0x68] sm:$0xff]
        %v3537 = vld [vmem:[%s4 + $0x70] sm:$0xff]
        %v3538 = vld [vmem:[%s4 + $0x78] sm:$0xff]
        %v3539 = vld [vmem:[%s4 + $0x80] sm:$0xff]
        %v3540 = vld [vmem:[%s4 + $0x88] sm:$0xff]
        %v3541 = vld [vmem:[%s4 + $0x90] sm:$0xff]
        %v3542 = vld [vmem:[%s4 + $0x98] sm:$0xff]
        %v3543 = vld [vmem:[%s4 + $0xa0] sm:$0xff]
        %v3544 = vld [vmem:[%s4 + $0xa8] sm:$0xff]
        %v3545 = vld [vmem:[%s4 + $0xb0] sm:$0xff]
        %v3546 = vld [vmem:[%s4 + $0xb8] sm:$0xff]
        %v3547 = vld [vmem:[%s4 + $0xc0] sm:$0xff]
        %v3548 = vld [vmem:[%s4 + $0xc8] sm:$0xff]
        %v3549 = vld [vmem:[%s4 + $0xd0] sm:$0xff]
        %v3550 = vld [vmem:[%s4 + $0xd8] sm:$0xff]
        %v3551 = vld [vmem:[%s4 + $0xe0] sm:$0xff]
        %v3552 = vld [vmem:[%s4 + $0xe8] sm:$0xff]
        %v3553 = vld [vmem:[%s4 + $0xf0] sm:$0xff]
        %v3554 = vld [vmem:[%s4 + $0xf8] sm:$0xff]
        %v3556 = vsel %vm2232, %v3009, 0
        %3558 = vmatprep.subr.mxu0 0.0
        %3559 = vmatpush1.msra.mxu0 %v3523
        %3560 = vmatprep.subr.mxu0 0.0
        %3561 = vmatpush1.msra.mxu0 %v3524
        %3562 = vmatprep.subr.mxu0 0.0
        %3563 = vmatpush1.msra.mxu0 %v3525
        %3564 = vmatprep.subr.mxu0 0.0
        %3565 = vmatpush1.msra.mxu0 %v3526
        %3566 = vmatprep.subr.mxu0 0.0
        %3567 = vmatpush1.msra.mxu0 0.0
        %3568 = vmatprep.subr.mxu0 0.0
        %3569 = vmatpush1.msra.mxu0 0.0
        %3570 = vmatprep.subr.mxu0 0.0
        %3571 = vmatpush1.msra.mxu0 0.0
        %3572 = vmatprep.subr.mxu0 0.0
        %3573 = vmatpush1.msra.mxu0 0.0
        %3574 = vmatprep.subr.mxu0 0.0
        %3575 = vmatpush1.msra.mxu0 0.0
        %3576 = vmatprep.subr.mxu0 0.0
        %3577 = vmatpush1.msra.mxu0 0.0
        %3578 = vmatprep.subr.mxu0 0.0
        %3579 = vmatpush1.msra.mxu0 0.0
        %3580 = vmatprep.subr.mxu0 0.0
        %3581 = vmatpush1.msra.mxu0 0.0
        %3582 = vmatprep.subr.mxu0 0.0
        %3583 = vmatpush1.msra.mxu0 0.0
        %3584 = vmatprep.subr.mxu0 0.0
        %3585 = vmatpush1.msra.mxu0 0.0
        %3586 = vmatprep.subr.mxu0 0.0
        %3587 = vmatpush1.msra.mxu0 0.0
        %3588 = vmatprep.subr.mxu0 0.0
        %3589 = vmatpush1.msra.mxu0 0.0
        %3590 = vmatprep.subr.mxu0 0.0
        %3591 = vmatpush1.msra.mxu0 0.0
        %3592 = vmatprep.subr.mxu0 0.0
        %3593 = vmatpush1.msra.mxu0 0.0
        %3594 = vmatprep.subr.mxu0 0.0
        %3595 = vmatpush1.msra.mxu0 0.0
        %3596 = vmatprep.subr.mxu0 0.0
        %3597 = vmatpush1.msra.mxu0 0.0
        %3598 = vmatprep.subr.mxu0 0.0
        %3599 = vmatpush1.msra.mxu0 0.0
        %3600 = vmatprep.subr.mxu0 0.0
        %3601 = vmatpush1.msra.mxu0 0.0
        %3602 = vmatprep.subr.mxu0 0.0
        %3603 = vmatpush1.msra.mxu0 0.0
        %3604 = vmatprep.subr.mxu0 0.0
        %3605 = vmatpush1.msra.mxu0 0.0
        %3606 = vmatprep.subr.mxu0 0.0
        %3607 = vmatpush1.msra.mxu0 0.0
        %3608 = vmatprep.subr.mxu0 0.0
        %3609 = vmatpush1.msra.mxu0 0.0
        %3610 = vmatprep.subr.mxu0 0.0
        %3611 = vmatpush1.msra.mxu0 0.0
        %3612 = vmatprep.subr.mxu0 0.0
        %3613 = vmatpush1.msra.mxu0 0.0
        %3614 = vmatprep.subr.mxu0 0.0
        %3615 = vmatpush1.msra.mxu0 0.0
        %3616 = vmatprep.subr.mxu0 0.0
        %3617 = vmatpush1.msra.mxu0 0.0
        %3618 = vmatprep.subr.mxu0 0.0
        %3619 = vmatpush1.msra.mxu0 0.0
        %3620 = vmatprep.subr.mxu0 0.0
        %3621 = vmatpush1.msra.mxu0 0.0
        %3622 = vmatprep.mubr.f32.mxu0 0.0
        %3623 = vmatmul.mubr.f32.gmra.mrb[0].mxu0 %v3556
        %v3624 = vpop.f32.mrb[0].mxu0
        %v3625 = vadd.f32 0.0, %v3624
        %v3626 = vpop.f32.mrb[0].mxu0
        %3627 = vdwg.mxu0
        %v3629 = vsel %vm2232, %v3082, 0
        %3631 = vmatprep.subr.mxu0 0.0
        %3632 = vmatpush1.msra.mxu0 %v3527
        %3633 = vmatprep.subr.mxu0 0.0
        %3634 = vmatpush1.msra.mxu0 %v3528
        %3635 = vmatprep.subr.mxu0 0.0
        %3636 = vmatpush1.msra.mxu0 %v3529
        %3637 = vmatprep.subr.mxu0 0.0
        %3638 = vmatpush1.msra.mxu0 %v3530
        %3639 = vmatprep.subr.mxu0 0.0
        %3640 = vmatpush1.msra.mxu0 0.0
        %3641 = vmatprep.subr.mxu0 0.0
        %3642 = vmatpush1.msra.mxu0 0.0
        %3643 = vmatprep.subr.mxu0 0.0
        %3644 = vmatpush1.msra.mxu0 0.0
        %3645 = vmatprep.subr.mxu0 0.0
        %3646 = vmatpush1.msra.mxu0 0.0
        %3647 = vmatprep.subr.mxu0 0.0
        %3648 = vmatpush1.msra.mxu0 0.0
        %3649 = vmatprep.subr.mxu0 0.0
        %3650 = vmatpush1.msra.mxu0 0.0
        %3651 = vmatprep.subr.mxu0 0.0
        %3652 = vmatpush1.msra.mxu0 0.0
        %3653 = vmatprep.subr.mxu0 0.0
        %3654 = vmatpush1.msra.mxu0 0.0
        %3655 = vmatprep.subr.mxu0 0.0
        %3656 = vmatpush1.msra.mxu0 0.0
        %3657 = vmatprep.subr.mxu0 0.0
        %3658 = vmatpush1.msra.mxu0 0.0
        %3659 = vmatprep.subr.mxu0 0.0
        %3660 = vmatpush1.msra.mxu0 0.0
        %3661 = vmatprep.subr.mxu0 0.0
        %3662 = vmatpush1.msra.mxu0 0.0
        %3663 = vmatprep.subr.mxu0 0.0
        %3664 = vmatpush1.msra.mxu0 0.0
        %3665 = vmatprep.subr.mxu0 0.0
        %3666 = vmatpush1.msra.mxu0 0.0
        %3667 = vmatprep.subr.mxu0 0.0
        %3668 = vmatpush1.msra.mxu0 0.0
        %3669 = vmatprep.subr.mxu0 0.0
        %3670 = vmatpush1.msra.mxu0 0.0
        %3671 = vmatprep.subr.mxu0 0.0
        %3672 = vmatpush1.msra.mxu0 0.0
        %3673 = vmatprep.subr.mxu0 0.0
        %3674 = vmatpush1.msra.mxu0 0.0
        %3675 = vmatprep.subr.mxu0 0.0
        %3676 = vmatpush1.msra.mxu0 0.0
        %3677 = vmatprep.subr.mxu0 0.0
        %3678 = vmatpush1.msra.mxu0 0.0
        %3679 = vmatprep.subr.mxu0 0.0
        %3680 = vmatpush1.msra.mxu0 0.0
        %3681 = vmatprep.subr.mxu0 0.0
        %3682 = vmatpush1.msra.mxu0 0.0
        %3683 = vmatprep.subr.mxu0 0.0
        %3684 = vmatpush1.msra.mxu0 0.0
        %3685 = vmatprep.subr.mxu0 0.0
        %3686 = vmatpush1.msra.mxu0 0.0
        %3687 = vmatprep.subr.mxu0 0.0
        %3688 = vmatpush1.msra.mxu0 0.0
        %3689 = vmatprep.subr.mxu0 0.0
        %3690 = vmatpush1.msra.mxu0 0.0
        %3691 = vmatprep.subr.mxu0 0.0
        %3692 = vmatpush1.msra.mxu0 0.0
        %3693 = vmatprep.subr.mxu0 0.0
        %3694 = vmatpush1.msra.mxu0 0.0
        %3695 = vmatprep.mubr.f32.mxu0 0.0
        %3696 = vmatmul.mubr.f32.gmra.mrb[0].mxu0 %v3629
        %v3697 = vpop.f32.mrb[0].mxu0
        %v3698 = vadd.f32 0.0, %v3697
        %v3699 = vpop.f32.mrb[0].mxu0
        %3700 = vdwg.mxu0
        %v3702 = vsel %vm2232, %v3155, 0
        %3704 = vmatprep.subr.mxu0 0.0
        %3705 = vmatpush1.msra.mxu0 %v3531
        %3706 = vmatprep.subr.mxu0 0.0
        %3707 = vmatpush1.msra.mxu0 %v3532
        %3708 = vmatprep.subr.mxu0 0.0
        %3709 = vmatpush1.msra.mxu0 %v3533
        %3710 = vmatprep.subr.mxu0 0.0
        %3711 = vmatpush1.msra.mxu0 %v3534
        %3712 = vmatprep.subr.mxu0 0.0
        %3713 = vmatpush1.msra.mxu0 0.0
        %3714 = vmatprep.subr.mxu0 0.0
        %3715 = vmatpush1.msra.mxu0 0.0
        %3716 = vmatprep.subr.mxu0 0.0
        %3717 = vmatpush1.msra.mxu0 0.0
        %3718 = vmatprep.subr.mxu0 0.0
        %3719 = vmatpush1.msra.mxu0 0.0
        %3720 = vmatprep.subr.mxu0 0.0
        %3721 = vmatpush1.msra.mxu0 0.0
        %3722 = vmatprep.subr.mxu0 0.0
        %3723 = vmatpush1.msra.mxu0 0.0
        %3724 = vmatprep.subr.mxu0 0.0
        %3725 = vmatpush1.msra.mxu0 0.0
        %3726 = vmatprep.subr.mxu0 0.0
        %3727 = vmatpush1.msra.mxu0 0.0
        %3728 = vmatprep.subr.mxu0 0.0
        %3729 = vmatpush1.msra.mxu0 0.0
        %3730 = vmatprep.subr.mxu0 0.0
        %3731 = vmatpush1.msra.mxu0 0.0
        %3732 = vmatprep.subr.mxu0 0.0
        %3733 = vmatpush1.msra.mxu0 0.0
        %3734 = vmatprep.subr.mxu0 0.0
        %3735 = vmatpush1.msra.mxu0 0.0
        %3736 = vmatprep.subr.mxu0 0.0
        %3737 = vmatpush1.msra.mxu0 0.0
        %3738 = vmatprep.subr.mxu0 0.0
        %3739 = vmatpush1.msra.mxu0 0.0
        %3740 = vmatprep.subr.mxu0 0.0
        %3741 = vmatpush1.msra.mxu0 0.0
        %3742 = vmatprep.subr.mxu0 0.0
        %3743 = vmatpush1.msra.mxu0 0.0
        %3744 = vmatprep.subr.mxu0 0.0
        %3745 = vmatpush1.msra.mxu0 0.0
        %3746 = vmatprep.subr.mxu0 0.0
        %3747 = vmatpush1.msra.mxu0 0.0
        %3748 = vmatprep.subr.mxu0 0.0
        %3749 = vmatpush1.msra.mxu0 0.0
        %3750 = vmatprep.subr.mxu0 0.0
        %3751 = vmatpush1.msra.mxu0 0.0
        %3752 = vmatprep.subr.mxu0 0.0
        %3753 = vmatpush1.msra.mxu0 0.0
        %3754 = vmatprep.subr.mxu0 0.0
        %3755 = vmatpush1.msra.mxu0 0.0
        %3756 = vmatprep.subr.mxu0 0.0
        %3757 = vmatpush1.msra.mxu0 0.0
        %3758 = vmatprep.subr.mxu0 0.0
        %3759 = vmatpush1.msra.mxu0 0.0
        %3760 = vmatprep.subr.mxu0 0.0
        %3761 = vmatpush1.msra.mxu0 0.0
        %3762 = vmatprep.subr.mxu0 0.0
        %3763 = vmatpush1.msra.mxu0 0.0
        %3764 = vmatprep.subr.mxu0 0.0
        %3765 = vmatpush1.msra.mxu0 0.0
        %3766 = vmatprep.subr.mxu0 0.0
        %3767 = vmatpush1.msra.mxu0 0.0
        %3768 = vmatprep.mubr.f32.mxu0 0.0
        %3769 = vmatmul.mubr.f32.gmra.mrb[0].mxu0 %v3702
        %v3770 = vpop.f32.mrb[0].mxu0
        %v3771 = vadd.f32 0.0, %v3770
        %v3772 = vpop.f32.mrb[0].mxu0
        %3773 = vdwg.mxu0
        %v3775 = vsel %vm2232, %v3228, 0
        %3777 = vmatprep.subr.mxu0 0.0
        %3778 = vmatpush1.msra.mxu0 %v3535
        %3779 = vmatprep.subr.mxu0 0.0
        %3780 = vmatpush1.msra.mxu0 %v3536
        %3781 = vmatprep.subr.mxu0 0.0
        %3782 = vmatpush1.msra.mxu0 %v3537
        %3783 = vmatprep.subr.mxu0 0.0
        %3784 = vmatpush1.msra.mxu0 %v3538
        %3785 = vmatprep.subr.mxu0 0.0
        %3786 = vmatpush1.msra.mxu0 0.0
        %3787 = vmatprep.subr.mxu0 0.0
        %3788 = vmatpush1.msra.mxu0 0.0
        %3789 = vmatprep.subr.mxu0 0.0
        %3790 = vmatpush1.msra.mxu0 0.0
        %3791 = vmatprep.subr.mxu0 0.0
        %3792 = vmatpush1.msra.mxu0 0.0
        %3793 = vmatprep.subr.mxu0 0.0
        %3794 = vmatpush1.msra.mxu0 0.0
        %3795 = vmatprep.subr.mxu0 0.0
        %3796 = vmatpush1.msra.mxu0 0.0
        %3797 = vmatprep.subr.mxu0 0.0
        %3798 = vmatpush1.msra.mxu0 0.0
        %3799 = vmatprep.subr.mxu0 0.0
        %3800 = vmatpush1.msra.mxu0 0.0
        %3801 = vmatprep.subr.mxu0 0.0
        %3802 = vmatpush1.msra.mxu0 0.0
        %3803 = vmatprep.subr.mxu0 0.0
        %3804 = vmatpush1.msra.mxu0 0.0
        %3805 = vmatprep.subr.mxu0 0.0
        %3806 = vmatpush1.msra.mxu0 0.0
        %3807 = vmatprep.subr.mxu0 0.0
        %3808 = vmatpush1.msra.mxu0 0.0
        %3809 = vmatprep.subr.mxu0 0.0
        %3810 = vmatpush1.msra.mxu0 0.0
        %3811 = vmatprep.subr.mxu0 0.0
        %3812 = vmatpush1.msra.mxu0 0.0
        %3813 = vmatprep.subr.mxu0 0.0
        %3814 = vmatpush1.msra.mxu0 0.0
        %3815 = vmatprep.subr.mxu0 0.0
        %3816 = vmatpush1.msra.mxu0 0.0
        %3817 = vmatprep.subr.mxu0 0.0
        %3818 = vmatpush1.msra.mxu0 0.0
        %3819 = vmatprep.subr.mxu0 0.0
        %3820 = vmatpush1.msra.mxu0 0.0
        %3821 = vmatprep.subr.mxu0 0.0
        %3822 = vmatpush1.msra.mxu0 0.0
        %3823 = vmatprep.subr.mxu0 0.0
        %3824 = vmatpush1.msra.mxu0 0.0
        %3825 = vmatprep.subr.mxu0 0.0
        %3826 = vmatpush1.msra.mxu0 0.0
        %3827 = vmatprep.subr.mxu0 0.0
        %3828 = vmatpush1.msra.mxu0 0.0
        %3829 = vmatprep.subr.mxu0 0.0
        %3830 = vmatpush1.msra.mxu0 0.0
        %3831 = vmatprep.subr.mxu0 0.0
        %3832 = vmatpush1.msra.mxu0 0.0
        %3833 = vmatprep.subr.mxu0 0.0
        %3834 = vmatpush1.msra.mxu0 0.0
        %3835 = vmatprep.subr.mxu0 0.0
        %3836 = vmatpush1.msra.mxu0 0.0
        %3837 = vmatprep.subr.mxu0 0.0
        %3838 = vmatpush1.msra.mxu0 0.0
        %3839 = vmatprep.subr.mxu0 0.0
        %3840 = vmatpush1.msra.mxu0 0.0
        %3841 = vmatprep.mubr.f32.mxu0 0.0
        %3842 = vmatmul.mubr.f32.gmra.mrb[0].mxu0 %v3775
        %v3843 = vpop.f32.mrb[0].mxu0
        %v3844 = vadd.f32 0.0, %v3843
        %v3845 = vpop.f32.mrb[0].mxu0
        %3846 = vdwg.mxu0
        %v3848 = vsel %vm2232, %v3301, 0
        %3850 = vmatprep.subr.mxu0 0.0
        %3851 = vmatpush1.msra.mxu0 %v3539
        %3852 = vmatprep.subr.mxu0 0.0
        %3853 = vmatpush1.msra.mxu0 %v3540
        %3854 = vmatprep.subr.mxu0 0.0
        %3855 = vmatpush1.msra.mxu0 %v3541
        %3856 = vmatprep.subr.mxu0 0.0
        %3857 = vmatpush1.msra.mxu0 %v3542
        %3858 = vmatprep.subr.mxu0 0.0
        %3859 = vmatpush1.msra.mxu0 0.0
        %3860 = vmatprep.subr.mxu0 0.0
        %3861 = vmatpush1.msra.mxu0 0.0
        %3862 = vmatprep.subr.mxu0 0.0
        %3863 = vmatpush1.msra.mxu0 0.0
        %3864 = vmatprep.subr.mxu0 0.0
        %3865 = vmatpush1.msra.mxu0 0.0
        %3866 = vmatprep.subr.mxu0 0.0
        %3867 = vmatpush1.msra.mxu0 0.0
        %3868 = vmatprep.subr.mxu0 0.0
        %3869 = vmatpush1.msra.mxu0 0.0
        %3870 = vmatprep.subr.mxu0 0.0
        %3871 = vmatpush1.msra.mxu0 0.0
        %3872 = vmatprep.subr.mxu0 0.0
        %3873 = vmatpush1.msra.mxu0 0.0
        %3874 = vmatprep.subr.mxu0 0.0
        %3875 = vmatpush1.msra.mxu0 0.0
        %3876 = vmatprep.subr.mxu0 0.0
        %3877 = vmatpush1.msra.mxu0 0.0
        %3878 = vmatprep.subr.mxu0 0.0
        %3879 = vmatpush1.msra.mxu0 0.0
        %3880 = vmatprep.subr.mxu0 0.0
        %3881 = vmatpush1.msra.mxu0 0.0
        %3882 = vmatprep.subr.mxu0 0.0
        %3883 = vmatpush1.msra.mxu0 0.0
        %3884 = vmatprep.subr.mxu0 0.0
        %3885 = vmatpush1.msra.mxu0 0.0
        %3886 = vmatprep.subr.mxu0 0.0
        %3887 = vmatpush1.msra.mxu0 0.0
        %3888 = vmatprep.subr.mxu0 0.0
        %3889 = vmatpush1.msra.mxu0 0.0
        %3890 = vmatprep.subr.mxu0 0.0
        %3891 = vmatpush1.msra.mxu0 0.0
        %3892 = vmatprep.subr.mxu0 0.0
        %3893 = vmatpush1.msra.mxu0 0.0
        %3894 = vmatprep.subr.mxu0 0.0
        %3895 = vmatpush1.msra.mxu0 0.0
        %3896 = vmatprep.subr.mxu0 0.0
        %3897 = vmatpush1.msra.mxu0 0.0
        %3898 = vmatprep.subr.mxu0 0.0
        %3899 = vmatpush1.msra.mxu0 0.0
        %3900 = vmatprep.subr.mxu0 0.0
        %3901 = vmatpush1.msra.mxu0 0.0
        %3902 = vmatprep.subr.mxu0 0.0
        %3903 = vmatpush1.msra.mxu0 0.0
        %3904 = vmatprep.subr.mxu0 0.0
        %3905 = vmatpush1.msra.mxu0 0.0
        %3906 = vmatprep.subr.mxu0 0.0
        %3907 = vmatpush1.msra.mxu0 0.0
        %3908 = vmatprep.subr.mxu0 0.0
        %3909 = vmatpush1.msra.mxu0 0.0
        %3910 = vmatprep.subr.mxu0 0.0
        %3911 = vmatpush1.msra.mxu0 0.0
        %3912 = vmatprep.subr.mxu0 0.0
        %3913 = vmatpush1.msra.mxu0 0.0
        %3914 = vmatprep.mubr.f32.mxu0 0.0
        %3915 = vmatmul.mubr.f32.gmra.mrb[0].mxu0 %v3848
        %v3916 = vpop.f32.mrb[0].mxu0
        %v3917 = vadd.f32 0.0, %v3916
        %v3918 = vpop.f32.mrb[0].mxu0
        %3919 = vdwg.mxu0
        %v3921 = vsel %vm2232, %v3374, 0
        %3923 = vmatprep.subr.mxu0 0.0
        %3924 = vmatpush1.msra.mxu0 %v3543
        %3925 = vmatprep.subr.mxu0 0.0
        %3926 = vmatpush1.msra.mxu0 %v3544
        %3927 = vmatprep.subr.mxu0 0.0
        %3928 = vmatpush1.msra.mxu0 %v3545
        %3929 = vmatprep.subr.mxu0 0.0
        %3930 = vmatpush1.msra.mxu0 %v3546
        %3931 = vmatprep.subr.mxu0 0.0
        %3932 = vmatpush1.msra.mxu0 0.0
        %3933 = vmatprep.subr.mxu0 0.0
        %3934 = vmatpush1.msra.mxu0 0.0
        %3935 = vmatprep.subr.mxu0 0.0
        %3936 = vmatpush1.msra.mxu0 0.0
        %3937 = vmatprep.subr.mxu0 0.0
        %3938 = vmatpush1.msra.mxu0 0.0
        %3939 = vmatprep.subr.mxu0 0.0
        %3940 = vmatpush1.msra.mxu0 0.0
        %3941 = vmatprep.subr.mxu0 0.0
        %3942 = vmatpush1.msra.mxu0 0.0
        %3943 = vmatprep.subr.mxu0 0.0
        %3944 = vmatpush1.msra.mxu0 0.0
        %3945 = vmatprep.subr.mxu0 0.0
        %3946 = vmatpush1.msra.mxu0 0.0
        %3947 = vmatprep.subr.mxu0 0.0
        %3948 = vmatpush1.msra.mxu0 0.0
        %3949 = vmatprep.subr.mxu0 0.0
        %3950 = vmatpush1.msra.mxu0 0.0
        %3951 = vmatprep.subr.mxu0 0.0
        %3952 = vmatpush1.msra.mxu0 0.0
        %3953 = vmatprep.subr.mxu0 0.0
        %3954 = vmatpush1.msra.mxu0 0.0
        %3955 = vmatprep.subr.mxu0 0.0
        %3956 = vmatpush1.msra.mxu0 0.0
        %3957 = vmatprep.subr.mxu0 0.0
        %3958 = vmatpush1.msra.mxu0 0.0
        %3959 = vmatprep.subr.mxu0 0.0
        %3960 = vmatpush1.msra.mxu0 0.0
        %3961 = vmatprep.subr.mxu0 0.0
        %3962 = vmatpush1.msra.mxu0 0.0
        %3963 = vmatprep.subr.mxu0 0.0
        %3964 = vmatpush1.msra.mxu0 0.0
        %3965 = vmatprep.subr.mxu0 0.0
        %3966 = vmatpush1.msra.mxu0 0.0
        %3967 = vmatprep.subr.mxu0 0.0
        %3968 = vmatpush1.msra.mxu0 0.0
        %3969 = vmatprep.subr.mxu0 0.0
        %3970 = vmatpush1.msra.mxu0 0.0
        %3971 = vmatprep.subr.mxu0 0.0
        %3972 = vmatpush1.msra.mxu0 0.0
        %3973 = vmatprep.subr.mxu0 0.0
        %3974 = vmatpush1.msra.mxu0 0.0
        %3975 = vmatprep.subr.mxu0 0.0
        %3976 = vmatpush1.msra.mxu0 0.0
        %3977 = vmatprep.subr.mxu0 0.0
        %3978 = vmatpush1.msra.mxu0 0.0
        %3979 = vmatprep.subr.mxu0 0.0
        %3980 = vmatpush1.msra.mxu0 0.0
        %3981 = vmatprep.subr.mxu0 0.0
        %3982 = vmatpush1.msra.mxu0 0.0
        %3983 = vmatprep.subr.mxu0 0.0
        %3984 = vmatpush1.msra.mxu0 0.0
        %3985 = vmatprep.subr.mxu0 0.0
        %3986 = vmatpush1.msra.mxu0 0.0
        %3987 = vmatprep.mubr.f32.mxu0 0.0
        %3988 = vmatmul.mubr.f32.gmra.mrb[0].mxu0 %v3921
        %v3989 = vpop.f32.mrb[0].mxu0
        %v3990 = vadd.f32 0.0, %v3989
        %v3991 = vpop.f32.mrb[0].mxu0
        %3992 = vdwg.mxu0
        %v3994 = vsel %vm2232, %v3447, 0
        %3996 = vmatprep.subr.mxu0 0.0
        %3997 = vmatpush1.msra.mxu0 %v3547
        %3998 = vmatprep.subr.mxu0 0.0
        %3999 = vmatpush1.msra.mxu0 %v3548
        %4000 = vmatprep.subr.mxu0 0.0
        %4001 = vmatpush1.msra.mxu0 %v3549
        %4002 = vmatprep.subr.mxu0 0.0
        %4003 = vmatpush1.msra.mxu0 %v3550
        %4004 = vmatprep.subr.mxu0 0.0
        %4005 = vmatpush1.msra.mxu0 0.0
        %4006 = vmatprep.subr.mxu0 0.0
        %4007 = vmatpush1.msra.mxu0 0.0
        %4008 = vmatprep.subr.mxu0 0.0
        %4009 = vmatpush1.msra.mxu0 0.0
        %4010 = vmatprep.subr.mxu0 0.0
        %4011 = vmatpush1.msra.mxu0 0.0
        %4012 = vmatprep.subr.mxu0 0.0
        %4013 = vmatpush1.msra.mxu0 0.0
        %4014 = vmatprep.subr.mxu0 0.0
        %4015 = vmatpush1.msra.mxu0 0.0
        %4016 = vmatprep.subr.mxu0 0.0
        %4017 = vmatpush1.msra.mxu0 0.0
        %4018 = vmatprep.subr.mxu0 0.0
        %4019 = vmatpush1.msra.mxu0 0.0
        %4020 = vmatprep.subr.mxu0 0.0
        %4021 = vmatpush1.msra.mxu0 0.0
        %4022 = vmatprep.subr.mxu0 0.0
        %4023 = vmatpush1.msra.mxu0 0.0
        %4024 = vmatprep.subr.mxu0 0.0
        %4025 = vmatpush1.msra.mxu0 0.0
        %4026 = vmatprep.subr.mxu0 0.0
        %4027 = vmatpush1.msra.mxu0 0.0
        %4028 = vmatprep.subr.mxu0 0.0
        %4029 = vmatpush1.msra.mxu0 0.0
        %4030 = vmatprep.subr.mxu0 0.0
        %4031 = vmatpush1.msra.mxu0 0.0
        %4032 = vmatprep.subr.mxu0 0.0
        %4033 = vmatpush1.msra.mxu0 0.0
        %4034 = vmatprep.subr.mxu0 0.0
        %4035 = vmatpush1.msra.mxu0 0.0
        %4036 = vmatprep.subr.mxu0 0.0
        %4037 = vmatpush1.msra.mxu0 0.0
        %4038 = vmatprep.subr.mxu0 0.0
        %4039 = vmatpush1.msra.mxu0 0.0
        %4040 = vmatprep.subr.mxu0 0.0
        %4041 = vmatpush1.msra.mxu0 0.0
        %4042 = vmatprep.subr.mxu0 0.0
        %4043 = vmatpush1.msra.mxu0 0.0
        %4044 = vmatprep.subr.mxu0 0.0
        %4045 = vmatpush1.msra.mxu0 0.0
        %4046 = vmatprep.subr.mxu0 0.0
        %4047 = vmatpush1.msra.mxu0 0.0
        %4048 = vmatprep.subr.mxu0 0.0
        %4049 = vmatpush1.msra.mxu0 0.0
        %4050 = vmatprep.subr.mxu0 0.0
        %4051 = vmatpush1.msra.mxu0 0.0
        %4052 = vmatprep.subr.mxu0 0.0
        %4053 = vmatpush1.msra.mxu0 0.0
        %4054 = vmatprep.subr.mxu0 0.0
        %4055 = vmatpush1.msra.mxu0 0.0
        %4056 = vmatprep.subr.mxu0 0.0
        %4057 = vmatpush1.msra.mxu0 0.0
        %4058 = vmatprep.subr.mxu0 0.0
        %4059 = vmatpush1.msra.mxu0 0.0
        %4060 = vmatprep.mubr.f32.mxu0 0.0
        %4061 = vmatmul.mubr.f32.gmra.mrb[0].mxu0 %v3994
        %v4062 = vpop.f32.mrb[0].mxu0
        %v4063 = vadd.f32 0.0, %v4062
        %v4064 = vpop.f32.mrb[0].mxu0
        %4065 = vdwg.mxu0
        %v4067 = vsel %vm2232, %v3520, 0
        %4069 = vmatprep.subr.mxu0 0.0
        %4070 = vmatpush1.msra.mxu0 %v3551
        %4071 = vmatprep.subr.mxu0 0.0
        %4072 = vmatpush1.msra.mxu0 %v3552
        %4073 = vmatprep.subr.mxu0 0.0
        %4074 = vmatpush1.msra.mxu0 %v3553
        %4075 = vmatprep.subr.mxu0 0.0
        %4076 = vmatpush1.msra.mxu0 %v3554
        %4077 = vmatprep.subr.mxu0 0.0
        %4078 = vmatpush1.msra.mxu0 0.0
        %4079 = vmatprep.subr.mxu0 0.0
        %4080 = vmatpush1.msra.mxu0 0.0
        %4081 = vmatprep.subr.mxu0 0.0
        %4082 = vmatpush1.msra.mxu0 0.0
        %4083 = vmatprep.subr.mxu0 0.0
        %4084 = vmatpush1.msra.mxu0 0.0
        %4085 = vmatprep.subr.mxu0 0.0
        %4086 = vmatpush1.msra.mxu0 0.0
        %4087 = vmatprep.subr.mxu0 0.0
        %4088 = vmatpush1.msra.mxu0 0.0
        %4089 = vmatprep.subr.mxu0 0.0
        %4090 = vmatpush1.msra.mxu0 0.0
        %4091 = vmatprep.subr.mxu0 0.0
        %4092 = vmatpush1.msra.mxu0 0.0
        %4093 = vmatprep.subr.mxu0 0.0
        %4094 = vmatpush1.msra.mxu0 0.0
        %4095 = vmatprep.subr.mxu0 0.0
        %4096 = vmatpush1.msra.mxu0 0.0
        %4097 = vmatprep.subr.mxu0 0.0
        %4098 = vmatpush1.msra.mxu0 0.0
        %4099 = vmatprep.subr.mxu0 0.0
        %4100 = vmatpush1.msra.mxu0 0.0
        %4101 = vmatprep.subr.mxu0 0.0
        %4102 = vmatpush1.msra.mxu0 0.0
        %4103 = vmatprep.subr.mxu0 0.0
        %4104 = vmatpush1.msra.mxu0 0.0
        %4105 = vmatprep.subr.mxu0 0.0
        %4106 = vmatpush1.msra.mxu0 0.0
        %4107 = vmatprep.subr.mxu0 0.0
        %4108 = vmatpush1.msra.mxu0 0.0
        %4109 = vmatprep.subr.mxu0 0.0
        %4110 = vmatpush1.msra.mxu0 0.0
        %4111 = vmatprep.subr.mxu0 0.0
        %4112 = vmatpush1.msra.mxu0 0.0
        %4113 = vmatprep.subr.mxu0 0.0
        %4114 = vmatpush1.msra.mxu0 0.0
        %4115 = vmatprep.subr.mxu0 0.0
        %4116 = vmatpush1.msra.mxu0 0.0
        %4117 = vmatprep.subr.mxu0 0.0
        %4118 = vmatpush1.msra.mxu0 0.0
        %4119 = vmatprep.subr.mxu0 0.0
        %4120 = vmatpush1.msra.mxu0 0.0
        %4121 = vmatprep.subr.mxu0 0.0
        %4122 = vmatpush1.msra.mxu0 0.0
        %4123 = vmatprep.subr.mxu0 0.0
        %4124 = vmatpush1.msra.mxu0 0.0
        %4125 = vmatprep.subr.mxu0 0.0
        %4126 = vmatpush1.msra.mxu0 0.0
        %4127 = vmatprep.subr.mxu0 0.0
        %4128 = vmatpush1.msra.mxu0 0.0
        %4129 = vmatprep.subr.mxu0 0.0
        %4130 = vmatpush1.msra.mxu0 0.0
        %4131 = vmatprep.subr.mxu0 0.0
        %4132 = vmatpush1.msra.mxu0 0.0
        %4133 = vmatprep.mubr.f32.mxu0 0.0
        %4134 = vmatmul.mubr.f32.gmra.mrb[0].mxu0 %v4067
        %v4135 = vpop.f32.mrb[0].mxu0
        %v4136 = vadd.f32 0.0, %v4135
        %v4137 = vpop.f32.mrb[0].mxu0
        %4138 = vdwg.mxu0
        %v4139 = vld [vmem:[%s6] sm:$0xff]
        %vm4140 = vcmask 125952
        %v4141 = vsel %vm4140, %v3625, 0.0
        %v4142 = vsel %vm4140, %v3698, 0.0
        %v4143 = vadd.f32 %v4141, %v4142
        %v4144 = vsel %vm4140, %v3771, 0.0
        %v4145 = vadd.f32 %v4143, %v4144
        %v4146 = vsel %vm4140, %v3844, 0.0
        %v4147 = vadd.f32 %v4145, %v4146
        %v4148 = vsel %vm4140, %v3917, 0.0
        %v4149 = vadd.f32 %v4147, %v4148
        %v4150 = vsel %vm4140, %v3990, 0.0
        %v4151 = vadd.f32 %v4149, %v4150
        %v4152 = vsel %vm4140, %v4063, 0.0
        %v4153 = vadd.f32 %v4151, %v4152
        %v4154 = vsel %vm4140, %v4136, 0.0
        %v4155 = vadd.f32 %v4153, %v4154
        %v4156 = vlaneseq
        %v4157 = vshrl.u32 %v4156, 7
        %v4158 = vsub.s32 0, %v4157
        %v4159 = vrot.slane %v4139, %v4158
        %v4160 = vadd.f32 %v4155, %v4159
        %v4161 = vadd.f32 %v324, %v4160
        %v4162 = vsel %vm4140, %v4161, 0.0
        %4163 = vadd.xlane.f32.xlu0 %v4162
        %v4164 = vpop.xlane.xlu0 %4163
        %v4165 = vrcp.pop 16.0
        %v4166 = vmul.f32 %v4164, %v4165
        %v4167 = vsub.f32 %v4161, %v4166
        %v4168 = vmul.f32 %v4167, %v4167
        %v4169 = vsel %vm4140, %v4168, 0.0
        %4170 = vadd.xlane.f32.xlu0 %v4169
        %v4171 = vpop.xlane.xlu0 %4170
        %v4172 = vmul.f32 %v4171, %v4165
        %v4173 = vadd.f32 %v4172, 1e-05
        %v4174 = vrsqrt.pop %v4173
        %v4175 = vmul.f32 %v4167, %v4174
        %v4176 = vlaneseq
        %v4177 = vshrl.u32 %v4176, 7
        %v4178 = vsub.s32 2, %v4177
        %v4179 = vrot.slane %v4139, %v4178
        %v4180 = vmul.f32 %v4175, %v4179
        %v4181 = vlaneseq
        %v4182 = vshrl.u32 %v4181, 7
        %v4183 = vsub.s32 3, %v4182
        %v4184 = vrot.slane %v4139, %v4183
        %v4185 = vadd.f32 %v4180, %v4184
        %v4186 = vld [vmem:[#allocation7] sm:$0xff]
        %v4187 = vld [vmem:[#allocation7 + $0x8] sm:$0xff]
        %v4188 = vlaneseq
        %v4189 = vshrl.u32 %v4188, 7
        %v4190 = vsub.s32 1, %v4189
        %v4191 = vrot.slane %v4139, %v4190
        %v4193 = vsel %vm397, %v4185, 0
        %4195 = vmatprep.subr.mxu0 0.0
        %4196 = vmatpush1.msra.mxu0 %v4186
        %4197 = vmatprep.subr.mxu0 0.0
        %4198 = vmatpush1.msra.mxu0 %v4187
        %4199 = vmatprep.subr.mxu0 0.0
        %4200 = vmatpush1.msra.mxu0 0.0
        %4201 = vmatprep.subr.mxu0 0.0
        %4202 = vmatpush1.msra.mxu0 0.0
        %4203 = vmatprep.subr.mxu0 0.0
        %4204 = vmatpush1.msra.mxu0 0.0
        %4205 = vmatprep.subr.mxu0 0.0
        %4206 = vmatpush1.msra.mxu0 0.0
        %4207 = vmatprep.subr.mxu0 0.0
        %4208 = vmatpush1.msra.mxu0 0.0
        %4209 = vmatprep.subr.mxu0 0.0
        %4210 = vmatpush1.msra.mxu0 0.0
        %4211 = vmatprep.subr.mxu0 0.0
        %4212 = vmatpush1.msra.mxu0 0.0
        %4213 = vmatprep.subr.mxu0 0.0
        %4214 = vmatpush1.msra.mxu0 0.0
        %4215 = vmatprep.subr.mxu0 0.0
        %4216 = vmatpush1.msra.mxu0 0.0
        %4217 = vmatprep.subr.mxu0 0.0
        %4218 = vmatpush1.msra.mxu0 0.0
        %4219 = vmatprep.subr.mxu0 0.0
        %4220 = vmatpush1.msra.mxu0 0.0
        %4221 = vmatprep.subr.mxu0 0.0
        %4222 = vmatpush1.msra.mxu0 0.0
        %4223 = vmatprep.subr.mxu0 0.0
        %4224 = vmatpush1.msra.mxu0 0.0
        %4225 = vmatprep.subr.mxu0 0.0
        %4226 = vmatpush1.msra.mxu0 0.0
        %4227 = vmatprep.subr.mxu0 0.0
        %4228 = vmatpush1.msra.mxu0 0.0
        %4229 = vmatprep.subr.mxu0 0.0
        %4230 = vmatpush1.msra.mxu0 0.0
        %4231 = vmatprep.subr.mxu0 0.0
        %4232 = vmatpush1.msra.mxu0 0.0
        %4233 = vmatprep.subr.mxu0 0.0
        %4234 = vmatpush1.msra.mxu0 0.0
        %4235 = vmatprep.subr.mxu0 0.0
        %4236 = vmatpush1.msra.mxu0 0.0
        %4237 = vmatprep.subr.mxu0 0.0
        %4238 = vmatpush1.msra.mxu0 0.0
        %4239 = vmatprep.subr.mxu0 0.0
        %4240 = vmatpush1.msra.mxu0 0.0
        %4241 = vmatprep.subr.mxu0 0.0
        %4242 = vmatpush1.msra.mxu0 0.0
        %4243 = vmatprep.subr.mxu0 0.0
        %4244 = vmatpush1.msra.mxu0 0.0
        %4245 = vmatprep.subr.mxu0 0.0
        %4246 = vmatpush1.msra.mxu0 0.0
        %4247 = vmatprep.subr.mxu0 0.0
        %4248 = vmatpush1.msra.mxu0 0.0
        %4249 = vmatprep.subr.mxu0 0.0
        %4250 = vmatpush1.msra.mxu0 0.0
        %4251 = vmatprep.subr.mxu0 0.0
        %4252 = vmatpush1.msra.mxu0 0.0
        %4253 = vmatprep.subr.mxu0 0.0
        %4254 = vmatpush1.msra.mxu0 0.0
        %4255 = vmatprep.subr.mxu0 0.0
        %4256 = vmatpush1.msra.mxu0 0.0
        %4257 = vmatprep.subr.mxu0 0.0
        %4258 = vmatpush1.msra.mxu0 0.0
        %4259 = vmatprep.mubr.f32.mxu0 0.0
        %4260 = vmatmul.mubr.f32.gmra.mrb[0].mxu0 %v4193
        %v4261 = vpop.f32.mrb[0].mxu0
        %v4262 = vadd.f32 %v4191, %v4261
        %v4263 = vpop.f32.mrb[0].mxu0
        %4264 = vdwg.mxu0
        %v4265 = vadd.f32 %v4185, %v4262
        %v4266 = vsel %vm4140, %v4265, 0.0
        %4267 = vadd.xlane.f32.xlu0 %v4266
        %v4268 = vpop.xlane.xlu0 %4267
        %v4269 = vmul.f32 %v4268, %v4165
        %v4270 = vsub.f32 %v4265, %v4269
        %v4271 = vmul.f32 %v4270, %v4270
        %v4272 = vsel %vm4140, %v4271, 0.0
        %4273 = vadd.xlane.f32.xlu0 %v4272
        %v4274 = vpop.xlane.xlu0 %4273
        %v4275 = vmul.f32 %v4274, %v4165
        %v4276 = vadd.f32 %v4275, 1e-05
        %v4277 = vrsqrt.pop %v4276
        %v4278 = vmul.f32 %v4270, %v4277
        %v4279 = vlaneseq
        %v4280 = vshrl.u32 %v4279, 7
        %v4281 = vsub.s32 4, %v4280
        %v4282 = vrot.slane %v4139, %v4281
        %v4283 = vmul.f32 %v4278, %v4282
        %v4284 = vlaneseq
        %v4285 = vshrl.u32 %v4284, 7
        %v4286 = vsub.s32 5, %v4285
        %v4287 = vrot.slane %v4139, %v4286
        %v4288 = vadd.f32 %v4283, %v4287
        %s4289 = scalar_lea.vmem %s2, 384
        %v4290 = vld [vmem:[%s4289] sm:$0xff]
        %v4291 = vld [vmem:[%s4289 + $0x8] sm:$0xff]
        %v4292 = vld [vmem:[%s4289 + $0x10] sm:$0xff]
        %v4293 = vld [vmem:[%s4289 + $0x18] sm:$0xff]
        %v4294 = vld [vmem:[%s4289 + $0x20] sm:$0xff]
        %v4295 = vld [vmem:[%s4289 + $0x28] sm:$0xff]
        %v4296 = vld [vmem:[%s4289 + $0x30] sm:$0xff]
        %v4297 = vld [vmem:[%s4289 + $0x38] sm:$0xff]
        %v4298 = vld [vmem:[%s4289 + $0x40] sm:$0xff]
        %v4299 = vld [vmem:[%s4289 + $0x48] sm:$0xff]
        %v4300 = vld [vmem:[%s4289 + $0x50] sm:$0xff]
        %v4301 = vld [vmem:[%s4289 + $0x58] sm:$0xff]
        %v4302 = vld [vmem:[%s4289 + $0x60] sm:$0xff]
        %v4303 = vld [vmem:[%s4289 + $0x68] sm:$0xff]
        %v4304 = vld [vmem:[%s4289 + $0x70] sm:$0xff]
        %v4305 = vld [vmem:[%s4289 + $0x78] sm:$0xff]
        %s4306 = scalar_lea.vmem [#allocation5], 24
        %v4307 = vld [vmem:[%s4306] sm:$0x1]
        %v4308 = vld [vmem:[%s4306 + $0x1] sm:$0x1]
        %v4309 = vld [vmem:[%s4306 + $0x2] sm:$0x1]
        %v4310 = vld [vmem:[%s4306 + $0x3] sm:$0x1]
        %v4311 = vld [vmem:[%s4306 + $0x4] sm:$0x1]
        %v4312 = vld [vmem:[%s4306 + $0x5] sm:$0x1]
        %v4313 = vld [vmem:[%s4306 + $0x6] sm:$0x1]
        %v4314 = vld [vmem:[%s4306 + $0x7] sm:$0x1]
        %v4323 = vlaneseq
        %v4324 = vshrl.u32 %v4323, 7
        %v4325 = vsub.s32 0, %v4324
        %v4326 = vrot.slane %v4307, %v4325
        %v4327 = vlaneseq
        %v4328 = vshrl.u32 %v4327, 7
        %v4329 = vsub.s32 0, %v4328
        %v4330 = vrot.slane %v4308, %v4329
        %v4331 = vlaneseq
        %v4332 = vshrl.u32 %v4331, 7
        %v4333 = vsub.s32 0, %v4332
        %v4334 = vrot.slane %v4309, %v4333
        %v4335 = vlaneseq
        %v4336 = vshrl.u32 %v4335, 7
        %v4337 = vsub.s32 0, %v4336
        %v4338 = vrot.slane %v4310, %v4337
        %v4339 = vlaneseq
        %v4340 = vshrl.u32 %v4339, 7
        %v4341 = vsub.s32 0, %v4340
        %v4342 = vrot.slane %v4311, %v4341
        %v4343 = vlaneseq
        %v4344 = vshrl.u32 %v4343, 7
        %v4345 = vsub.s32 0, %v4344
        %v4346 = vrot.slane %v4312, %v4345
        %v4347 = vlaneseq
        %v4348 = vshrl.u32 %v4347, 7
        %v4349 = vsub.s32 0, %v4348
        %v4350 = vrot.slane %v4313, %v4349
        %v4351 = vlaneseq
        %v4352 = vshrl.u32 %v4351, 7
        %v4353 = vsub.s32 0, %v4352
        %v4354 = vrot.slane %v4314, %v4353
        %4363 = vmatprep.subr.mxu0 0.0
        %4364 = vmatpush1.msra.mxu0 %v4290
        %4365 = vmatprep.subr.mxu0 0.0
        %4366 = vmatpush1.msra.mxu0 %v4291
        %4367 = vmatprep.subr.mxu0 0.0
        %4368 = vmatpush1.msra.mxu0 0.0
        %4369 = vmatprep.subr.mxu0 0.0
        %4370 = vmatpush1.msra.mxu0 0.0
        %4371 = vmatprep.subr.mxu0 0.0
        %4372 = vmatpush1.msra.mxu0 0.0
        %4373 = vmatprep.subr.mxu0 0.0
        %4374 = vmatpush1.msra.mxu0 0.0
        %4375 = vmatprep.subr.mxu0 0.0
        %4376 = vmatpush1.msra.mxu0 0.0
        %4377 = vmatprep.subr.mxu0 0.0
        %4378 = vmatpush1.msra.mxu0 0.0
        %4379 = vmatprep.subr.mxu0 0.0
        %4380 = vmatpush1.msra.mxu0 0.0
        %4381 = vmatprep.subr.mxu0 0.0
        %4382 = vmatpush1.msra.mxu0 0.0
        %4383 = vmatprep.subr.mxu0 0.0
        %4384 = vmatpush1.msra.mxu0 0.0
        %4385 = vmatprep.subr.mxu0 0.0
        %4386 = vmatpush1.msra.mxu0 0.0
        %4387 = vmatprep.subr.mxu0 0.0
        %4388 = vmatpush1.msra.mxu0 0.0
        %4389 = vmatprep.subr.mxu0 0.0
        %4390 = vmatpush1.msra.mxu0 0.0
        %4391 = vmatprep.subr.mxu0 0.0
        %4392 = vmatpush1.msra.mxu0 0.0
        %4393 = vmatprep.subr.mxu0 0.0
        %4394 = vmatpush1.msra.mxu0 0.0
        %4395 = vmatprep.subr.mxu0 0.0
        %4396 = vmatpush1.msra.mxu0 0.0
        %4397 = vmatprep.subr.mxu0 0.0
        %4398 = vmatpush1.msra.mxu0 0.0
        %4399 = vmatprep.subr.mxu0 0.0
        %4400 = vmatpush1.msra.mxu0 0.0
        %4401 = vmatprep.subr.mxu0 0.0
        %4402 = vmatpush1.msra.mxu0 0.0
        %4403 = vmatprep.subr.mxu0 0.0
        %4404 = vmatpush1.msra.mxu0 0.0
        %4405 = vmatprep.subr.mxu0 0.0
        %4406 = vmatpush1.msra.mxu0 0.0
        %4407 = vmatprep.subr.mxu0 0.0
        %4408 = vmatpush1.msra.mxu0 0.0
        %4409 = vmatprep.subr.mxu0 0.0
        %4410 = vmatpush1.msra.mxu0 0.0
        %4411 = vmatprep.subr.mxu0 0.0
        %4412 = vmatpush1.msra.mxu0 0.0
        %4413 = vmatprep.subr.mxu0 0.0
        %4414 = vmatpush1.msra.mxu0 0.0
        %4415 = vmatprep.subr.mxu0 0.0
        %4416 = vmatpush1.msra.mxu0 0.0
        %4417 = vmatprep.subr.mxu0 0.0
        %4418 = vmatpush1.msra.mxu0 0.0
        %4419 = vmatprep.subr.mxu0 0.0
        %4420 = vmatpush1.msra.mxu0 0.0
        %4421 = vmatprep.subr.mxu0 0.0
        %4422 = vmatpush1.msra.mxu0 0.0
        %4423 = vmatprep.subr.mxu0 0.0
        %4424 = vmatpush1.msra.mxu0 0.0
        %4425 = vmatprep.subr.mxu0 0.0
        %4426 = vmatpush1.msra.mxu0 0.0
        %4427 = vmatprep.mubr.f32.mxu0 0.0
        %4428 = vmatmul.mubr.f32.gmra.mrb[0].mxu0 %v1036
        %v4429 = vpop.f32.mrb[0].mxu0
        %v4430 = vadd.f32 %v4326, %v4429
        %v4431 = vpop.f32.mrb[0].mxu0
        %4432 = vdwg.mxu0
        %4433 = vmatprep.subr.mxu0 0.0
        %4434 = vmatpush1.msra.mxu0 %v4292
        %4435 = vmatprep.subr.mxu0 0.0
        %4436 = vmatpush1.msra.mxu0 %v4293
        %4437 = vmatprep.subr.mxu0 0.0
        %4438 = vmatpush1.msra.mxu0 0.0
        %4439 = vmatprep.subr.mxu0 0.0
        %4440 = vmatpush1.msra.mxu0 0.0
        %4441 = vmatprep.subr.mxu0 0.0
        %4442 = vmatpush1.msra.mxu0 0.0
        %4443 = vmatprep.subr.mxu0 0.0
        %4444 = vmatpush1.msra.mxu0 0.0
        %4445 = vmatprep.subr.mxu0 0.0
        %4446 = vmatpush1.msra.mxu0 0.0
        %4447 = vmatprep.subr.mxu0 0.0
        %4448 = vmatpush1.msra.mxu0 0.0
        %4449 = vmatprep.subr.mxu0 0.0
        %4450 = vmatpush1.msra.mxu0 0.0
        %4451 = vmatprep.subr.mxu0 0.0
        %4452 = vmatpush1.msra.mxu0 0.0
        %4453 = vmatprep.subr.mxu0 0.0
        %4454 = vmatpush1.msra.mxu0 0.0
        %4455 = vmatprep.subr.mxu0 0.0
        %4456 = vmatpush1.msra.mxu0 0.0
        %4457 = vmatprep.subr.mxu0 0.0
        %4458 = vmatpush1.msra.mxu0 0.0
        %4459 = vmatprep.subr.mxu0 0.0
        %4460 = vmatpush1.msra.mxu0 0.0
        %4461 = vmatprep.subr.mxu0 0.0
        %4462 = vmatpush1.msra.mxu0 0.0
        %4463 = vmatprep.subr.mxu0 0.0
        %4464 = vmatpush1.msra.mxu0 0.0
        %4465 = vmatprep.subr.mxu0 0.0
        %4466 = vmatpush1.msra.mxu0 0.0
        %4467 = vmatprep.subr.mxu0 0.0
        %4468 = vmatpush1.msra.mxu0 0.0
        %4469 = vmatprep.subr.mxu0 0.0
        %4470 = vmatpush1.msra.mxu0 0.0
        %4471 = vmatprep.subr.mxu0 0.0
        %4472 = vmatpush1.msra.mxu0 0.0
        %4473 = vmatprep.subr.mxu0 0.0
        %4474 = vmatpush1.msra.mxu0 0.0
        %4475 = vmatprep.subr.mxu0 0.0
        %4476 = vmatpush1.msra.mxu0 0.0
        %4477 = vmatprep.subr.mxu0 0.0
        %4478 = vmatpush1.msra.mxu0 0.0
        %4479 = vmatprep.subr.mxu0 0.0
        %4480 = vmatpush1.msra.mxu0 0.0
        %4481 = vmatprep.subr.mxu0 0.0
        %4482 = vmatpush1.msra.mxu0 0.0
        %4483 = vmatprep.subr.mxu0 0.0
        %4484 = vmatpush1.msra.mxu0 0.0
        %4485 = vmatprep.subr.mxu0 0.0
        %4486 = vmatpush1.msra.mxu0 0.0
        %4487 = vmatprep.subr.mxu0 0.0
        %4488 = vmatpush1.msra.mxu0 0.0
        %4489 = vmatprep.subr.mxu0 0.0
        %4490 = vmatpush1.msra.mxu0 0.0
        %4491 = vmatprep.subr.mxu0 0.0
        %4492 = vmatpush1.msra.mxu0 0.0
        %4493 = vmatprep.subr.mxu0 0.0
        %4494 = vmatpush1.msra.mxu0 0.0
        %4495 = vmatprep.subr.mxu0 0.0
        %4496 = vmatpush1.msra.mxu0 0.0
        %4497 = vmatprep.mubr.f32.mxu0 0.0
        %4498 = vmatmul.mubr.f32.gmra.mrb[0].mxu0 %v1036
        %v4499 = vpop.f32.mrb[0].mxu0
        %v4500 = vadd.f32 %v4330, %v4499
        %v4501 = vpop.f32.mrb[0].mxu0
        %4502 = vdwg.mxu0
        %4503 = vmatprep.subr.mxu0 0.0
        %4504 = vmatpush1.msra.mxu0 %v4294
        %4505 = vmatprep.subr.mxu0 0.0
        %4506 = vmatpush1.msra.mxu0 %v4295
        %4507 = vmatprep.subr.mxu0 0.0
        %4508 = vmatpush1.msra.mxu0 0.0
        %4509 = vmatprep.subr.mxu0 0.0
        %4510 = vmatpush1.msra.mxu0 0.0
        %4511 = vmatprep.subr.mxu0 0.0
        %4512 = vmatpush1.msra.mxu0 0.0
        %4513 = vmatprep.subr.mxu0 0.0
        %4514 = vmatpush1.msra.mxu0 0.0
        %4515 = vmatprep.subr.mxu0 0.0
        %4516 = vmatpush1.msra.mxu0 0.0
        %4517 = vmatprep.subr.mxu0 0.0
        %4518 = vmatpush1.msra.mxu0 0.0
        %4519 = vmatprep.subr.mxu0 0.0
        %4520 = vmatpush1.msra.mxu0 0.0
        %4521 = vmatprep.subr.mxu0 0.0
        %4522 = vmatpush1.msra.mxu0 0.0
        %4523 = vmatprep.subr.mxu0 0.0
        %4524 = vmatpush1.msra.mxu0 0.0
        %4525 = vmatprep.subr.mxu0 0.0
        %4526 = vmatpush1.msra.mxu0 0.0
        %4527 = vmatprep.subr.mxu0 0.0
        %4528 = vmatpush1.msra.mxu0 0.0
        %4529 = vmatprep.subr.mxu0 0.0
        %4530 = vmatpush1.msra.mxu0 0.0
        %4531 = vmatprep.subr.mxu0 0.0
        %4532 = vmatpush1.msra.mxu0 0.0
        %4533 = vmatprep.subr.mxu0 0.0
        %4534 = vmatpush1.msra.mxu0 0.0
        %4535 = vmatprep.subr.mxu0 0.0
        %4536 = vmatpush1.msra.mxu0 0.0
        %4537 = vmatprep.subr.mxu0 0.0
        %4538 = vmatpush1.msra.mxu0 0.0
        %4539 = vmatprep.subr.mxu0 0.0
        %4540 = vmatpush1.msra.mxu0 0.0
        %4541 = vmatprep.subr.mxu0 0.0
        %4542 = vmatpush1.msra.mxu0 0.0
        %4543 = vmatprep.subr.mxu0 0.0
        %4544 = vmatpush1.msra.mxu0 0.0
        %4545 = vmatprep.subr.mxu0 0.0
        %4546 = vmatpush1.msra.mxu0 0.0
        %4547 = vmatprep.subr.mxu0 0.0
        %4548 = vmatpush1.msra.mxu0 0.0
        %4549 = vmatprep.subr.mxu0 0.0
        %4550 = vmatpush1.msra.mxu0 0.0
        %4551 = vmatprep.subr.mxu0 0.0
        %4552 = vmatpush1.msra.mxu0 0.0
        %4553 = vmatprep.subr.mxu0 0.0
        %4554 = vmatpush1.msra.mxu0 0.0
        %4555 = vmatprep.subr.mxu0 0.0
        %4556 = vmatpush1.msra.mxu0 0.0
        %4557 = vmatprep.subr.mxu0 0.0
        %4558 = vmatpush1.msra.mxu0 0.0
        %4559 = vmatprep.subr.mxu0 0.0
        %4560 = vmatpush1.msra.mxu0 0.0
        %4561 = vmatprep.subr.mxu0 0.0
        %4562 = vmatpush1.msra.mxu0 0.0
        %4563 = vmatprep.subr.mxu0 0.0
        %4564 = vmatpush1.msra.mxu0 0.0
        %4565 = vmatprep.subr.mxu0 0.0
        %4566 = vmatpush1.msra.mxu0 0.0
        %4567 = vmatprep.mubr.f32.mxu0 0.0
        %4568 = vmatmul.mubr.f32.gmra.mrb[0].mxu0 %v1036
        %v4569 = vpop.f32.mrb[0].mxu0
        %v4570 = vadd.f32 %v4334, %v4569
        %v4571 = vpop.f32.mrb[0].mxu0
        %4572 = vdwg.mxu0
        %4573 = vmatprep.subr.mxu0 0.0
        %4574 = vmatpush1.msra.mxu0 %v4296
        %4575 = vmatprep.subr.mxu0 0.0
        %4576 = vmatpush1.msra.mxu0 %v4297
        %4577 = vmatprep.subr.mxu0 0.0
        %4578 = vmatpush1.msra.mxu0 0.0
        %4579 = vmatprep.subr.mxu0 0.0
        %4580 = vmatpush1.msra.mxu0 0.0
        %4581 = vmatprep.subr.mxu0 0.0
        %4582 = vmatpush1.msra.mxu0 0.0
        %4583 = vmatprep.subr.mxu0 0.0
        %4584 = vmatpush1.msra.mxu0 0.0
        %4585 = vmatprep.subr.mxu0 0.0
        %4586 = vmatpush1.msra.mxu0 0.0
        %4587 = vmatprep.subr.mxu0 0.0
        %4588 = vmatpush1.msra.mxu0 0.0
        %4589 = vmatprep.subr.mxu0 0.0
        %4590 = vmatpush1.msra.mxu0 0.0
        %4591 = vmatprep.subr.mxu0 0.0
        %4592 = vmatpush1.msra.mxu0 0.0
        %4593 = vmatprep.subr.mxu0 0.0
        %4594 = vmatpush1.msra.mxu0 0.0
        %4595 = vmatprep.subr.mxu0 0.0
        %4596 = vmatpush1.msra.mxu0 0.0
        %4597 = vmatprep.subr.mxu0 0.0
        %4598 = vmatpush1.msra.mxu0 0.0
        %4599 = vmatprep.subr.mxu0 0.0
        %4600 = vmatpush1.msra.mxu0 0.0
        %4601 = vmatprep.subr.mxu0 0.0
        %4602 = vmatpush1.msra.mxu0 0.0
        %4603 = vmatprep.subr.mxu0 0.0
        %4604 = vmatpush1.msra.mxu0 0.0
        %4605 = vmatprep.subr.mxu0 0.0
        %4606 = vmatpush1.msra.mxu0 0.0
        %4607 = vmatprep.subr.mxu0 0.0
        %4608 = vmatpush1.msra.mxu0 0.0
        %4609 = vmatprep.subr.mxu0 0.0
        %4610 = vmatpush1.msra.mxu0 0.0
        %4611 = vmatprep.subr.mxu0 0.0
        %4612 = vmatpush1.msra.mxu0 0.0
        %4613 = vmatprep.subr.mxu0 0.0
        %4614 = vmatpush1.msra.mxu0 0.0
        %4615 = vmatprep.subr.mxu0 0.0
        %4616 = vmatpush1.msra.mxu0 0.0
        %4617 = vmatprep.subr.mxu0 0.0
        %4618 = vmatpush1.msra.mxu0 0.0
        %4619 = vmatprep.subr.mxu0 0.0
        %4620 = vmatpush1.msra.mxu0 0.0
        %4621 = vmatprep.subr.mxu0 0.0
        %4622 = vmatpush1.msra.mxu0 0.0
        %4623 = vmatprep.subr.mxu0 0.0
        %4624 = vmatpush1.msra.mxu0 0.0
        %4625 = vmatprep.subr.mxu0 0.0
        %4626 = vmatpush1.msra.mxu0 0.0
        %4627 = vmatprep.subr.mxu0 0.0
        %4628 = vmatpush1.msra.mxu0 0.0
        %4629 = vmatprep.subr.mxu0 0.0
        %4630 = vmatpush1.msra.mxu0 0.0
        %4631 = vmatprep.subr.mxu0 0.0
        %4632 = vmatpush1.msra.mxu0 0.0
        %4633 = vmatprep.subr.mxu0 0.0
        %4634 = vmatpush1.msra.mxu0 0.0
        %4635 = vmatprep.subr.mxu0 0.0
        %4636 = vmatpush1.msra.mxu0 0.0
        %4637 = vmatprep.mubr.f32.mxu0 0.0
        %4638 = vmatmul.mubr.f32.gmra.mrb[0].mxu0 %v1036
        %v4639 = vpop.f32.mrb[0].mxu0
        %v4640 = vadd.f32 %v4338, %v4639
        %v4641 = vpop.f32.mrb[0].mxu0
        %4642 = vdwg.mxu0
        %4643 = vmatprep.subr.mxu0 0.0
        %4644 = vmatpush1.msra.mxu0 %v4298
        %4645 = vmatprep.subr.mxu0 0.0
        %4646 = vmatpush1.msra.mxu0 %v4299
        %4647 = vmatprep.subr.mxu0 0.0
        %4648 = vmatpush1.msra.mxu0 0.0
        %4649 = vmatprep.subr.mxu0 0.0
        %4650 = vmatpush1.msra.mxu0 0.0
        %4651 = vmatprep.subr.mxu0 0.0
        %4652 = vmatpush1.msra.mxu0 0.0
        %4653 = vmatprep.subr.mxu0 0.0
        %4654 = vmatpush1.msra.mxu0 0.0
        %4655 = vmatprep.subr.mxu0 0.0
        %4656 = vmatpush1.msra.mxu0 0.0
        %4657 = vmatprep.subr.mxu0 0.0
        %4658 = vmatpush1.msra.mxu0 0.0
        %4659 = vmatprep.subr.mxu0 0.0
        %4660 = vmatpush1.msra.mxu0 0.0
        %4661 = vmatprep.subr.mxu0 0.0
        %4662 = vmatpush1.msra.mxu0 0.0
        %4663 = vmatprep.subr.mxu0 0.0
        %4664 = vmatpush1.msra.mxu0 0.0
        %4665 = vmatprep.subr.mxu0 0.0
        %4666 = vmatpush1.msra.mxu0 0.0
        %4667 = vmatprep.subr.mxu0 0.0
        %4668 = vmatpush1.msra.mxu0 0.0
        %4669 = vmatprep.subr.mxu0 0.0
        %4670 = vmatpush1.msra.mxu0 0.0
        %4671 = vmatprep.subr.mxu0 0.0
        %4672 = vmatpush1.msra.mxu0 0.0
        %4673 = vmatprep.subr.mxu0 0.0
        %4674 = vmatpush1.msra.mxu0 0.0
        %4675 = vmatprep.subr.mxu0 0.0
        %4676 = vmatpush1.msra.mxu0 0.0
        %4677 = vmatprep.subr.mxu0 0.0
        %4678 = vmatpush1.msra.mxu0 0.0
        %4679 = vmatprep.subr.mxu0 0.0
        %4680 = vmatpush1.msra.mxu0 0.0
        %4681 = vmatprep.subr.mxu0 0.0
        %4682 = vmatpush1.msra.mxu0 0.0
        %4683 = vmatprep.subr.mxu0 0.0
        %4684 = vmatpush1.msra.mxu0 0.0
        %4685 = vmatprep.subr.mxu0 0.0
        %4686 = vmatpush1.msra.mxu0 0.0
        %4687 = vmatprep.subr.mxu0 0.0
        %4688 = vmatpush1.msra.mxu0 0.0
        %4689 = vmatprep.subr.mxu0 0.0
        %4690 = vmatpush1.msra.mxu0 0.0
        %4691 = vmatprep.subr.mxu0 0.0
        %4692 = vmatpush1.msra.mxu0 0.0
        %4693 = vmatprep.subr.mxu0 0.0
        %4694 = vmatpush1.msra.mxu0 0.0
        %4695 = vmatprep.subr.mxu0 0.0
        %4696 = vmatpush1.msra.mxu0 0.0
        %4697 = vmatprep.subr.mxu0 0.0
        %4698 = vmatpush1.msra.mxu0 0.0
        %4699 = vmatprep.subr.mxu0 0.0
        %4700 = vmatpush1.msra.mxu0 0.0
        %4701 = vmatprep.subr.mxu0 0.0
        %4702 = vmatpush1.msra.mxu0 0.0
        %4703 = vmatprep.subr.mxu0 0.0
        %4704 = vmatpush1.msra.mxu0 0.0
        %4705 = vmatprep.subr.mxu0 0.0
        %4706 = vmatpush1.msra.mxu0 0.0
        %4707 = vmatprep.mubr.f32.mxu0 0.0
        %4708 = vmatmul.mubr.f32.gmra.mrb[0].mxu0 %v1036
        %v4709 = vpop.f32.mrb[0].mxu0
        %v4710 = vadd.f32 %v4342, %v4709
        %v4711 = vpop.f32.mrb[0].mxu0
        %4712 = vdwg.mxu0
        %4713 = vmatprep.subr.mxu0 0.0
        %4714 = vmatpush1.msra.mxu0 %v4300
        %4715 = vmatprep.subr.mxu0 0.0
        %4716 = vmatpush1.msra.mxu0 %v4301
        %4717 = vmatprep.subr.mxu0 0.0
        %4718 = vmatpush1.msra.mxu0 0.0
        %4719 = vmatprep.subr.mxu0 0.0
        %4720 = vmatpush1.msra.mxu0 0.0
        %4721 = vmatprep.subr.mxu0 0.0
        %4722 = vmatpush1.msra.mxu0 0.0
        %4723 = vmatprep.subr.mxu0 0.0
        %4724 = vmatpush1.msra.mxu0 0.0
        %4725 = vmatprep.subr.mxu0 0.0
        %4726 = vmatpush1.msra.mxu0 0.0
        %4727 = vmatprep.subr.mxu0 0.0
        %4728 = vmatpush1.msra.mxu0 0.0
        %4729 = vmatprep.subr.mxu0 0.0
        %4730 = vmatpush1.msra.mxu0 0.0
        %4731 = vmatprep.subr.mxu0 0.0
        %4732 = vmatpush1.msra.mxu0 0.0
        %4733 = vmatprep.subr.mxu0 0.0
        %4734 = vmatpush1.msra.mxu0 0.0
        %4735 = vmatprep.subr.mxu0 0.0
        %4736 = vmatpush1.msra.mxu0 0.0
        %4737 = vmatprep.subr.mxu0 0.0
        %4738 = vmatpush1.msra.mxu0 0.0
        %4739 = vmatprep.subr.mxu0 0.0
        %4740 = vmatpush1.msra.mxu0 0.0
        %4741 = vmatprep.subr.mxu0 0.0
        %4742 = vmatpush1.msra.mxu0 0.0
        %4743 = vmatprep.subr.mxu0 0.0
        %4744 = vmatpush1.msra.mxu0 0.0
        %4745 = vmatprep.subr.mxu0 0.0
        %4746 = vmatpush1.msra.mxu0 0.0
        %4747 = vmatprep.subr.mxu0 0.0
        %4748 = vmatpush1.msra.mxu0 0.0
        %4749 = vmatprep.subr.mxu0 0.0
        %4750 = vmatpush1.msra.mxu0 0.0
        %4751 = vmatprep.subr.mxu0 0.0
        %4752 = vmatpush1.msra.mxu0 0.0
        %4753 = vmatprep.subr.mxu0 0.0
        %4754 = vmatpush1.msra.mxu0 0.0
        %4755 = vmatprep.subr.mxu0 0.0
        %4756 = vmatpush1.msra.mxu0 0.0
        %4757 = vmatprep.subr.mxu0 0.0
        %4758 = vmatpush1.msra.mxu0 0.0
        %4759 = vmatprep.subr.mxu0 0.0
        %4760 = vmatpush1.msra.mxu0 0.0
        %4761 = vmatprep.subr.mxu0 0.0
        %4762 = vmatpush1.msra.mxu0 0.0
        %4763 = vmatprep.subr.mxu0 0.0
        %4764 = vmatpush1.msra.mxu0 0.0
        %4765 = vmatprep.subr.mxu0 0.0
        %4766 = vmatpush1.msra.mxu0 0.0
        %4767 = vmatprep.subr.mxu0 0.0
        %4768 = vmatpush1.msra.mxu0 0.0
        %4769 = vmatprep.subr.mxu0 0.0
        %4770 = vmatpush1.msra.mxu0 0.0
        %4771 = vmatprep.subr.mxu0 0.0
        %4772 = vmatpush1.msra.mxu0 0.0
        %4773 = vmatprep.subr.mxu0 0.0
        %4774 = vmatpush1.msra.mxu0 0.0
        %4775 = vmatprep.subr.mxu0 0.0
        %4776 = vmatpush1.msra.mxu0 0.0
        %4777 = vmatprep.mubr.f32.mxu0 0.0
        %4778 = vmatmul.mubr.f32.gmra.mrb[0].mxu0 %v1036
        %v4779 = vpop.f32.mrb[0].mxu0
        %v4780 = vadd.f32 %v4346, %v4779
        %v4781 = vpop.f32.mrb[0].mxu0
        %4782 = vdwg.mxu0
        %4783 = vmatprep.subr.mxu0 0.0
        %4784 = vmatpush1.msra.mxu0 %v4302
        %4785 = vmatprep.subr.mxu0 0.0
        %4786 = vmatpush1.msra.mxu0 %v4303
        %4787 = vmatprep.subr.mxu0 0.0
        %4788 = vmatpush1.msra.mxu0 0.0
        %4789 = vmatprep.subr.mxu0 0.0
        %4790 = vmatpush1.msra.mxu0 0.0
        %4791 = vmatprep.subr.mxu0 0.0
        %4792 = vmatpush1.msra.mxu0 0.0
        %4793 = vmatprep.subr.mxu0 0.0
        %4794 = vmatpush1.msra.mxu0 0.0
        %4795 = vmatprep.subr.mxu0 0.0
        %4796 = vmatpush1.msra.mxu0 0.0
        %4797 = vmatprep.subr.mxu0 0.0
        %4798 = vmatpush1.msra.mxu0 0.0
        %4799 = vmatprep.subr.mxu0 0.0
        %4800 = vmatpush1.msra.mxu0 0.0
        %4801 = vmatprep.subr.mxu0 0.0
        %4802 = vmatpush1.msra.mxu0 0.0
        %4803 = vmatprep.subr.mxu0 0.0
        %4804 = vmatpush1.msra.mxu0 0.0
        %4805 = vmatprep.subr.mxu0 0.0
        %4806 = vmatpush1.msra.mxu0 0.0
        %4807 = vmatprep.subr.mxu0 0.0
        %4808 = vmatpush1.msra.mxu0 0.0
        %4809 = vmatprep.subr.mxu0 0.0
        %4810 = vmatpush1.msra.mxu0 0.0
        %4811 = vmatprep.subr.mxu0 0.0
        %4812 = vmatpush1.msra.mxu0 0.0
        %4813 = vmatprep.subr.mxu0 0.0
        %4814 = vmatpush1.msra.mxu0 0.0
        %4815 = vmatprep.subr.mxu0 0.0
        %4816 = vmatpush1.msra.mxu0 0.0
        %4817 = vmatprep.subr.mxu0 0.0
        %4818 = vmatpush1.msra.mxu0 0.0
        %4819 = vmatprep.subr.mxu0 0.0
        %4820 = vmatpush1.msra.mxu0 0.0
        %4821 = vmatprep.subr.mxu0 0.0
        %4822 = vmatpush1.msra.mxu0 0.0
        %4823 = vmatprep.subr.mxu0 0.0
        %4824 = vmatpush1.msra.mxu0 0.0
        %4825 = vmatprep.subr.mxu0 0.0
        %4826 = vmatpush1.msra.mxu0 0.0
        %4827 = vmatprep.subr.mxu0 0.0
        %4828 = vmatpush1.msra.mxu0 0.0
        %4829 = vmatprep.subr.mxu0 0.0
        %4830 = vmatpush1.msra.mxu0 0.0
        %4831 = vmatprep.subr.mxu0 0.0
        %4832 = vmatpush1.msra.mxu0 0.0
        %4833 = vmatprep.subr.mxu0 0.0
        %4834 = vmatpush1.msra.mxu0 0.0
        %4835 = vmatprep.subr.mxu0 0.0
        %4836 = vmatpush1.msra.mxu0 0.0
        %4837 = vmatprep.subr.mxu0 0.0
        %4838 = vmatpush1.msra.mxu0 0.0
        %4839 = vmatprep.subr.mxu0 0.0
        %4840 = vmatpush1.msra.mxu0 0.0
        %4841 = vmatprep.subr.mxu0 0.0
        %4842 = vmatpush1.msra.mxu0 0.0
        %4843 = vmatprep.subr.mxu0 0.0
        %4844 = vmatpush1.msra.mxu0 0.0
        %4845 = vmatprep.subr.mxu0 0.0
        %4846 = vmatpush1.msra.mxu0 0.0
        %4847 = vmatprep.mubr.f32.mxu0 0.0
        %4848 = vmatmul.mubr.f32.gmra.mrb[0].mxu0 %v1036
        %v4849 = vpop.f32.mrb[0].mxu0
        %v4850 = vadd.f32 %v4350, %v4849
        %v4851 = vpop.f32.mrb[0].mxu0
        %4852 = vdwg.mxu0
        %4853 = vmatprep.subr.mxu0 0.0
        %4854 = vmatpush1.msra.mxu0 %v4304
        %4855 = vmatprep.subr.mxu0 0.0
        %4856 = vmatpush1.msra.mxu0 %v4305
        %4857 = vmatprep.subr.mxu0 0.0
        %4858 = vmatpush1.msra.mxu0 0.0
        %4859 = vmatprep.subr.mxu0 0.0
        %4860 = vmatpush1.msra.mxu0 0.0
        %4861 = vmatprep.subr.mxu0 0.0
        %4862 = vmatpush1.msra.mxu0 0.0
        %4863 = vmatprep.subr.mxu0 0.0
        %4864 = vmatpush1.msra.mxu0 0.0
        %4865 = vmatprep.subr.mxu0 0.0
        %4866 = vmatpush1.msra.mxu0 0.0
        %4867 = vmatprep.subr.mxu0 0.0
        %4868 = vmatpush1.msra.mxu0 0.0
        %4869 = vmatprep.subr.mxu0 0.0
        %4870 = vmatpush1.msra.mxu0 0.0
        %4871 = vmatprep.subr.mxu0 0.0
        %4872 = vmatpush1.msra.mxu0 0.0
        %4873 = vmatprep.subr.mxu0 0.0
        %4874 = vmatpush1.msra.mxu0 0.0
        %4875 = vmatprep.subr.mxu0 0.0
        %4876 = vmatpush1.msra.mxu0 0.0
        %4877 = vmatprep.subr.mxu0 0.0
        %4878 = vmatpush1.msra.mxu0 0.0
        %4879 = vmatprep.subr.mxu0 0.0
        %4880 = vmatpush1.msra.mxu0 0.0
        %4881 = vmatprep.subr.mxu0 0.0
        %4882 = vmatpush1.msra.mxu0 0.0
        %4883 = vmatprep.subr.mxu0 0.0
        %4884 = vmatpush1.msra.mxu0 0.0
        %4885 = vmatprep.subr.mxu0 0.0
        %4886 = vmatpush1.msra.mxu0 0.0
        %4887 = vmatprep.subr.mxu0 0.0
        %4888 = vmatpush1.msra.mxu0 0.0
        %4889 = vmatprep.subr.mxu0 0.0
        %4890 = vmatpush1.msra.mxu0 0.0
        %4891 = vmatprep.subr.mxu0 0.0
        %4892 = vmatpush1.msra.mxu0 0.0
        %4893 = vmatprep.subr.mxu0 0.0
        %4894 = vmatpush1.msra.mxu0 0.0
        %4895 = vmatprep.subr.mxu0 0.0
        %4896 = vmatpush1.msra.mxu0 0.0
        %4897 = vmatprep.subr.mxu0 0.0
        %4898 = vmatpush1.msra.mxu0 0.0
        %4899 = vmatprep.subr.mxu0 0.0
        %4900 = vmatpush1.msra.mxu0 0.0
        %4901 = vmatprep.subr.mxu0 0.0
        %4902 = vmatpush1.msra.mxu0 0.0
        %4903 = vmatprep.subr.mxu0 0.0
        %4904 = vmatpush1.msra.mxu0 0.0
        %4905 = vmatprep.subr.mxu0 0.0
        %4906 = vmatpush1.msra.mxu0 0.0
        %4907 = vmatprep.subr.mxu0 0.0
        %4908 = vmatpush1.msra.mxu0 0.0
        %4909 = vmatprep.subr.mxu0 0.0
        %4910 = vmatpush1.msra.mxu0 0.0
        %4911 = vmatprep.subr.mxu0 0.0
        %4912 = vmatpush1.msra.mxu0 0.0
        %4913 = vmatprep.subr.mxu0 0.0
        %4914 = vmatpush1.msra.mxu0 0.0
        %4915 = vmatprep.subr.mxu0 0.0
        %4916 = vmatpush1.msra.mxu0 0.0
        %4917 = vmatprep.mubr.f32.mxu0 0.0
        %4918 = vmatmul.mubr.f32.gmra.mrb[0].mxu0 %v1036
        %v4919 = vpop.f32.mrb[0].mxu0
        %v4920 = vadd.f32 %v4354, %v4919
        %v4921 = vpop.f32.mrb[0].mxu0
        %4922 = vdwg.mxu0
        %s4923 = scalar_lea.vmem %s2, 512
        %v4924 = vld [vmem:[%s4923] sm:$0xff]
        %v4925 = vld [vmem:[%s4923 + $0x8] sm:$0xff]
        %v4926 = vld [vmem:[%s4923 + $0x10] sm:$0xff]
        %v4927 = vld [vmem:[%s4923 + $0x18] sm:$0xff]
        %v4928 = vld [vmem:[%s4923 + $0x20] sm:$0xff]
        %v4929 = vld [vmem:[%s4923 + $0x28] sm:$0xff]
        %v4930 = vld [vmem:[%s4923 + $0x30] sm:$0xff]
        %v4931 = vld [vmem:[%s4923 + $0x38] sm:$0xff]
        %v4932 = vld [vmem:[%s4923 + $0x40] sm:$0xff]
        %v4933 = vld [vmem:[%s4923 + $0x48] sm:$0xff]
        %v4934 = vld [vmem:[%s4923 + $0x50] sm:$0xff]
        %v4935 = vld [vmem:[%s4923 + $0x58] sm:$0xff]
        %v4936 = vld [vmem:[%s4923 + $0x60] sm:$0xff]
        %v4937 = vld [vmem:[%s4923 + $0x68] sm:$0xff]
        %v4938 = vld [vmem:[%s4923 + $0x70] sm:$0xff]
        %v4939 = vld [vmem:[%s4923 + $0x78] sm:$0xff]
        %s4940 = scalar_lea.vmem [#allocation5], 32
        %v4941 = vld [vmem:[%s4940] sm:$0x1]
        %v4942 = vld [vmem:[%s4940 + $0x1] sm:$0x1]
        %v4943 = vld [vmem:[%s4940 + $0x2] sm:$0x1]
        %v4944 = vld [vmem:[%s4940 + $0x3] sm:$0x1]
        %v4945 = vld [vmem:[%s4940 + $0x4] sm:$0x1]
        %v4946 = vld [vmem:[%s4940 + $0x5] sm:$0x1]
        %v4947 = vld [vmem:[%s4940 + $0x6] sm:$0x1]
        %v4948 = vld [vmem:[%s4940 + $0x7] sm:$0x1]
        %v4957 = vlaneseq
        %v4958 = vshrl.u32 %v4957, 7
        %v4959 = vsub.s32 0, %v4958
        %v4960 = vrot.slane %v4941, %v4959
        %v4961 = vlaneseq
        %v4962 = vshrl.u32 %v4961, 7
        %v4963 = vsub.s32 0, %v4962
        %v4964 = vrot.slane %v4942, %v4963
        %v4965 = vlaneseq
        %v4966 = vshrl.u32 %v4965, 7
        %v4967 = vsub.s32 0, %v4966
        %v4968 = vrot.slane %v4943, %v4967
        %v4969 = vlaneseq
        %v4970 = vshrl.u32 %v4969, 7
        %v4971 = vsub.s32 0, %v4970
        %v4972 = vrot.slane %v4944, %v4971
        %v4973 = vlaneseq
        %v4974 = vshrl.u32 %v4973, 7
        %v4975 = vsub.s32 0, %v4974
        %v4976 = vrot.slane %v4945, %v4975
        %v4977 = vlaneseq
        %v4978 = vshrl.u32 %v4977, 7
        %v4979 = vsub.s32 0, %v4978
        %v4980 = vrot.slane %v4946, %v4979
        %v4981 = vlaneseq
        %v4982 = vshrl.u32 %v4981, 7
        %v4983 = vsub.s32 0, %v4982
        %v4984 = vrot.slane %v4947, %v4983
        %v4985 = vlaneseq
        %v4986 = vshrl.u32 %v4985, 7
        %v4987 = vsub.s32 0, %v4986
        %v4988 = vrot.slane %v4948, %v4987
        %v4998 = vsel %vm397, %v4288, 0
        %5000 = vmatprep.subr.mxu0 0.0
        %5001 = vmatpush1.msra.mxu0 %v4924
        %5002 = vmatprep.subr.mxu0 0.0
        %5003 = vmatpush1.msra.mxu0 %v4925
        %5004 = vmatprep.subr.mxu0 0.0
        %5005 = vmatpush1.msra.mxu0 0.0
        %5006 = vmatprep.subr.mxu0 0.0
        %5007 = vmatpush1.msra.mxu0 0.0
        %5008 = vmatprep.subr.mxu0 0.0
        %5009 = vmatpush1.msra.mxu0 0.0
        %5010 = vmatprep.subr.mxu0 0.0
        %5011 = vmatpush1.msra.mxu0 0.0
        %5012 = vmatprep.subr.mxu0 0.0
        %5013 = vmatpush1.msra.mxu0 0.0
        %5014 = vmatprep.subr.mxu0 0.0
        %5015 = vmatpush1.msra.mxu0 0.0
        %5016 = vmatprep.subr.mxu0 0.0
        %5017 = vmatpush1.msra.mxu0 0.0
        %5018 = vmatprep.subr.mxu0 0.0
        %5019 = vmatpush1.msra.mxu0 0.0
        %5020 = vmatprep.subr.mxu0 0.0
        %5021 = vmatpush1.msra.mxu0 0.0
        %5022 = vmatprep.subr.mxu0 0.0
        %5023 = vmatpush1.msra.mxu0 0.0
        %5024 = vmatprep.subr.mxu0 0.0
        %5025 = vmatpush1.msra.mxu0 0.0
        %5026 = vmatprep.subr.mxu0 0.0
        %5027 = vmatpush1.msra.mxu0 0.0
        %5028 = vmatprep.subr.mxu0 0.0
        %5029 = vmatpush1.msra.mxu0 0.0
        %5030 = vmatprep.subr.mxu0 0.0
        %5031 = vmatpush1.msra.mxu0 0.0
        %5032 = vmatprep.subr.mxu0 0.0
        %5033 = vmatpush1.msra.mxu0 0.0
        %5034 = vmatprep.subr.mxu0 0.0
        %5035 = vmatpush1.msra.mxu0 0.0
        %5036 = vmatprep.subr.mxu0 0.0
        %5037 = vmatpush1.msra.mxu0 0.0
        %5038 = vmatprep.subr.mxu0 0.0
        %5039 = vmatpush1.msra.mxu0 0.0
        %5040 = vmatprep.subr.mxu0 0.0
        %5041 = vmatpush1.msra.mxu0 0.0
        %5042 = vmatprep.subr.mxu0 0.0
        %5043 = vmatpush1.msra.mxu0 0.0
        %5044 = vmatprep.subr.mxu0 0.0
        %5045 = vmatpush1.msra.mxu0 0.0
        %5046 = vmatprep.subr.mxu0 0.0
        %5047 = vmatpush1.msra.mxu0 0.0
        %5048 = vmatprep.subr.mxu0 0.0
        %5049 = vmatpush1.msra.mxu0 0.0
        %5050 = vmatprep.subr.mxu0 0.0
        %5051 = vmatpush1.msra.mxu0 0.0
        %5052 = vmatprep.subr.mxu0 0.0
        %5053 = vmatpush1.msra.mxu0 0.0
        %5054 = vmatprep.subr.mxu0 0.0
        %5055 = vmatpush1.msra.mxu0 0.0
        %5056 = vmatprep.subr.mxu0 0.0
        %5057 = vmatpush1.msra.mxu0 0.0
        %5058 = vmatprep.subr.mxu0 0.0
        %5059 = vmatpush1.msra.mxu0 0.0
        %5060 = vmatprep.subr.mxu0 0.0
        %5061 = vmatpush1.msra.mxu0 0.0
        %5062 = vmatprep.subr.mxu0 0.0
        %5063 = vmatpush1.msra.mxu0 0.0
        %5064 = vmatprep.mubr.f32.mxu0 0.0
        %5065 = vmatmul.mubr.f32.gmra.mrb[0].mxu0 %v4998
        %v5066 = vpop.f32.mrb[0].mxu0
        %v5067 = vadd.f32 %v4960, %v5066
        %v5068 = vpop.f32.mrb[0].mxu0
        %5069 = vdwg.mxu0
        %5070 = vmatprep.subr.mxu0 0.0
        %5071 = vmatpush1.msra.mxu0 %v4926
        %5072 = vmatprep.subr.mxu0 0.0
        %5073 = vmatpush1.msra.mxu0 %v4927
        %5074 = vmatprep.subr.mxu0 0.0
        %5075 = vmatpush1.msra.mxu0 0.0
        %5076 = vmatprep.subr.mxu0 0.0
        %5077 = vmatpush1.msra.mxu0 0.0
        %5078 = vmatprep.subr.mxu0 0.0
        %5079 = vmatpush1.msra.mxu0 0.0
        %5080 = vmatprep.subr.mxu0 0.0
        %5081 = vmatpush1.msra.mxu0 0.0
        %5082 = vmatprep.subr.mxu0 0.0
        %5083 = vmatpush1.msra.mxu0 0.0
        %5084 = vmatprep.subr.mxu0 0.0
        %5085 = vmatpush1.msra.mxu0 0.0
        %5086 = vmatprep.subr.mxu0 0.0
        %5087 = vmatpush1.msra.mxu0 0.0
        %5088 = vmatprep.subr.mxu0 0.0
        %5089 = vmatpush1.msra.mxu0 0.0
        %5090 = vmatprep.subr.mxu0 0.0
        %5091 = vmatpush1.msra.mxu0 0.0
        %5092 = vmatprep.subr.mxu0 0.0
        %5093 = vmatpush1.msra.mxu0 0.0
        %5094 = vmatprep.subr.mxu0 0.0
        %5095 = vmatpush1.msra.mxu0 0.0
        %5096 = vmatprep.subr.mxu0 0.0
        %5097 = vmatpush1.msra.mxu0 0.0
        %5098 = vmatprep.subr.mxu0 0.0
        %5099 = vmatpush1.msra.mxu0 0.0
        %5100 = vmatprep.subr.mxu0 0.0
        %5101 = vmatpush1.msra.mxu0 0.0
        %5102 = vmatprep.subr.mxu0 0.0
        %5103 = vmatpush1.msra.mxu0 0.0
        %5104 = vmatprep.subr.mxu0 0.0
        %5105 = vmatpush1.msra.mxu0 0.0
        %5106 = vmatprep.subr.mxu0 0.0
        %5107 = vmatpush1.msra.mxu0 0.0
        %5108 = vmatprep.subr.mxu0 0.0
        %5109 = vmatpush1.msra.mxu0 0.0
        %5110 = vmatprep.subr.mxu0 0.0
        %5111 = vmatpush1.msra.mxu0 0.0
        %5112 = vmatprep.subr.mxu0 0.0
        %5113 = vmatpush1.msra.mxu0 0.0
        %5114 = vmatprep.subr.mxu0 0.0
        %5115 = vmatpush1.msra.mxu0 0.0
        %5116 = vmatprep.subr.mxu0 0.0
        %5117 = vmatpush1.msra.mxu0 0.0
        %5118 = vmatprep.subr.mxu0 0.0
        %5119 = vmatpush1.msra.mxu0 0.0
        %5120 = vmatprep.subr.mxu0 0.0
        %5121 = vmatpush1.msra.mxu0 0.0
        %5122 = vmatprep.subr.mxu0 0.0
        %5123 = vmatpush1.msra.mxu0 0.0
        %5124 = vmatprep.subr.mxu0 0.0
        %5125 = vmatpush1.msra.mxu0 0.0
        %5126 = vmatprep.subr.mxu0 0.0
        %5127 = vmatpush1.msra.mxu0 0.0
        %5128 = vmatprep.subr.mxu0 0.0
        %5129 = vmatpush1.msra.mxu0 0.0
        %5130 = vmatprep.subr.mxu0 0.0
        %5131 = vmatpush1.msra.mxu0 0.0
        %5132 = vmatprep.subr.mxu0 0.0
        %5133 = vmatpush1.msra.mxu0 0.0
        %5134 = vmatprep.mubr.f32.mxu0 0.0
        %5135 = vmatmul.mubr.f32.gmra.mrb[0].mxu0 %v4998
        %v5136 = vpop.f32.mrb[0].mxu0
        %v5137 = vadd.f32 %v4964, %v5136
        %v5138 = vpop.f32.mrb[0].mxu0
        %5139 = vdwg.mxu0
        %5140 = vmatprep.subr.mxu0 0.0
        %5141 = vmatpush1.msra.mxu0 %v4928
        %5142 = vmatprep.subr.mxu0 0.0
        %5143 = vmatpush1.msra.mxu0 %v4929
        %5144 = vmatprep.subr.mxu0 0.0
        %5145 = vmatpush1.msra.mxu0 0.0
        %5146 = vmatprep.subr.mxu0 0.0
        %5147 = vmatpush1.msra.mxu0 0.0
        %5148 = vmatprep.subr.mxu0 0.0
        %5149 = vmatpush1.msra.mxu0 0.0
        %5150 = vmatprep.subr.mxu0 0.0
        %5151 = vmatpush1.msra.mxu0 0.0
        %5152 = vmatprep.subr.mxu0 0.0
        %5153 = vmatpush1.msra.mxu0 0.0
        %5154 = vmatprep.subr.mxu0 0.0
        %5155 = vmatpush1.msra.mxu0 0.0
        %5156 = vmatprep.subr.mxu0 0.0
        %5157 = vmatpush1.msra.mxu0 0.0
        %5158 = vmatprep.subr.mxu0 0.0
        %5159 = vmatpush1.msra.mxu0 0.0
        %5160 = vmatprep.subr.mxu0 0.0
        %5161 = vmatpush1.msra.mxu0 0.0
        %5162 = vmatprep.subr.mxu0 0.0
        %5163 = vmatpush1.msra.mxu0 0.0
        %5164 = vmatprep.subr.mxu0 0.0
        %5165 = vmatpush1.msra.mxu0 0.0
        %5166 = vmatprep.subr.mxu0 0.0
        %5167 = vmatpush1.msra.mxu0 0.0
        %5168 = vmatprep.subr.mxu0 0.0
        %5169 = vmatpush1.msra.mxu0 0.0
        %5170 = vmatprep.subr.mxu0 0.0
        %5171 = vmatpush1.msra.mxu0 0.0
        %5172 = vmatprep.subr.mxu0 0.0
        %5173 = vmatpush1.msra.mxu0 0.0
        %5174 = vmatprep.subr.mxu0 0.0
        %5175 = vmatpush1.msra.mxu0 0.0
        %5176 = vmatprep.subr.mxu0 0.0
        %5177 = vmatpush1.msra.mxu0 0.0
        %5178 = vmatprep.subr.mxu0 0.0
        %5179 = vmatpush1.msra.mxu0 0.0
        %5180 = vmatprep.subr.mxu0 0.0
        %5181 = vmatpush1.msra.mxu0 0.0
        %5182 = vmatprep.subr.mxu0 0.0
        %5183 = vmatpush1.msra.mxu0 0.0
        %5184 = vmatprep.subr.mxu0 0.0
        %5185 = vmatpush1.msra.mxu0 0.0
        %5186 = vmatprep.subr.mxu0 0.0
        %5187 = vmatpush1.msra.mxu0 0.0
        %5188 = vmatprep.subr.mxu0 0.0
        %5189 = vmatpush1.msra.mxu0 0.0
        %5190 = vmatprep.subr.mxu0 0.0
        %5191 = vmatpush1.msra.mxu0 0.0
        %5192 = vmatprep.subr.mxu0 0.0
        %5193 = vmatpush1.msra.mxu0 0.0
        %5194 = vmatprep.subr.mxu0 0.0
        %5195 = vmatpush1.msra.mxu0 0.0
        %5196 = vmatprep.subr.mxu0 0.0
        %5197 = vmatpush1.msra.mxu0 0.0
        %5198 = vmatprep.subr.mxu0 0.0
        %5199 = vmatpush1.msra.mxu0 0.0
        %5200 = vmatprep.subr.mxu0 0.0
        %5201 = vmatpush1.msra.mxu0 0.0
        %5202 = vmatprep.subr.mxu0 0.0
        %5203 = vmatpush1.msra.mxu0 0.0
        %5204 = vmatprep.mubr.f32.mxu0 0.0
        %5205 = vmatmul.mubr.f32.gmra.mrb[0].mxu0 %v4998
        %v5206 = vpop.f32.mrb[0].mxu0
        %v5207 = vadd.f32 %v4968, %v5206
        %v5208 = vpop.f32.mrb[0].mxu0
        %5209 = vdwg.mxu0
        %5210 = vmatprep.subr.mxu0 0.0
        %5211 = vmatpush1.msra.mxu0 %v4930
        %5212 = vmatprep.subr.mxu0 0.0
        %5213 = vmatpush1.msra.mxu0 %v4931
        %5214 = vmatprep.subr.mxu0 0.0
        %5215 = vmatpush1.msra.mxu0 0.0
        %5216 = vmatprep.subr.mxu0 0.0
        %5217 = vmatpush1.msra.mxu0 0.0
        %5218 = vmatprep.subr.mxu0 0.0
        %5219 = vmatpush1.msra.mxu0 0.0
        %5220 = vmatprep.subr.mxu0 0.0
        %5221 = vmatpush1.msra.mxu0 0.0
        %5222 = vmatprep.subr.mxu0 0.0
        %5223 = vmatpush1.msra.mxu0 0.0
        %5224 = vmatprep.subr.mxu0 0.0
        %5225 = vmatpush1.msra.mxu0 0.0
        %5226 = vmatprep.subr.mxu0 0.0
        %5227 = vmatpush1.msra.mxu0 0.0
        %5228 = vmatprep.subr.mxu0 0.0
        %5229 = vmatpush1.msra.mxu0 0.0
        %5230 = vmatprep.subr.mxu0 0.0
        %5231 = vmatpush1.msra.mxu0 0.0
        %5232 = vmatprep.subr.mxu0 0.0
        %5233 = vmatpush1.msra.mxu0 0.0
        %5234 = vmatprep.subr.mxu0 0.0
        %5235 = vmatpush1.msra.mxu0 0.0
        %5236 = vmatprep.subr.mxu0 0.0
        %5237 = vmatpush1.msra.mxu0 0.0
        %5238 = vmatprep.subr.mxu0 0.0
        %5239 = vmatpush1.msra.mxu0 0.0
        %5240 = vmatprep.subr.mxu0 0.0
        %5241 = vmatpush1.msra.mxu0 0.0
        %5242 = vmatprep.subr.mxu0 0.0
        %5243 = vmatpush1.msra.mxu0 0.0
        %5244 = vmatprep.subr.mxu0 0.0
        %5245 = vmatpush1.msra.mxu0 0.0
        %5246 = vmatprep.subr.mxu0 0.0
        %5247 = vmatpush1.msra.mxu0 0.0
        %5248 = vmatprep.subr.mxu0 0.0
        %5249 = vmatpush1.msra.mxu0 0.0
        %5250 = vmatprep.subr.mxu0 0.0
        %5251 = vmatpush1.msra.mxu0 0.0
        %5252 = vmatprep.subr.mxu0 0.0
        %5253 = vmatpush1.msra.mxu0 0.0
        %5254 = vmatprep.subr.mxu0 0.0
        %5255 = vmatpush1.msra.mxu0 0.0
        %5256 = vmatprep.subr.mxu0 0.0
        %5257 = vmatpush1.msra.mxu0 0.0
        %5258 = vmatprep.subr.mxu0 0.0
        %5259 = vmatpush1.msra.mxu0 0.0
        %5260 = vmatprep.subr.mxu0 0.0
        %5261 = vmatpush1.msra.mxu0 0.0
        %5262 = vmatprep.subr.mxu0 0.0
        %5263 = vmatpush1.msra.mxu0 0.0
        %5264 = vmatprep.subr.mxu0 0.0
        %5265 = vmatpush1.msra.mxu0 0.0
        %5266 = vmatprep.subr.mxu0 0.0
        %5267 = vmatpush1.msra.mxu0 0.0
        %5268 = vmatprep.subr.mxu0 0.0
        %5269 = vmatpush1.msra.mxu0 0.0
        %5270 = vmatprep.subr.mxu0 0.0
        %5271 = vmatpush1.msra.mxu0 0.0
        %5272 = vmatprep.subr.mxu0 0.0
        %5273 = vmatpush1.msra.mxu0 0.0
        %5274 = vmatprep.mubr.f32.mxu0 0.0
        %5275 = vmatmul.mubr.f32.gmra.mrb[0].mxu0 %v4998
        %v5276 = vpop.f32.mrb[0].mxu0
        %v5277 = vadd.f32 %v4972, %v5276
        %v5278 = vpop.f32.mrb[0].mxu0
        %5279 = vdwg.mxu0
        %5280 = vmatprep.subr.mxu0 0.0
        %5281 = vmatpush1.msra.mxu0 %v4932
        %5282 = vmatprep.subr.mxu0 0.0
        %5283 = vmatpush1.msra.mxu0 %v4933
        %5284 = vmatprep.subr.mxu0 0.0
        %5285 = vmatpush1.msra.mxu0 0.0
        %5286 = vmatprep.subr.mxu0 0.0
        %5287 = vmatpush1.msra.mxu0 0.0
        %5288 = vmatprep.subr.mxu0 0.0
        %5289 = vmatpush1.msra.mxu0 0.0
        %5290 = vmatprep.subr.mxu0 0.0
        %5291 = vmatpush1.msra.mxu0 0.0
        %5292 = vmatprep.subr.mxu0 0.0
        %5293 = vmatpush1.msra.mxu0 0.0
        %5294 = vmatprep.subr.mxu0 0.0
        %5295 = vmatpush1.msra.mxu0 0.0
        %5296 = vmatprep.subr.mxu0 0.0
        %5297 = vmatpush1.msra.mxu0 0.0
        %5298 = vmatprep.subr.mxu0 0.0
        %5299 = vmatpush1.msra.mxu0 0.0
        %5300 = vmatprep.subr.mxu0 0.0
        %5301 = vmatpush1.msra.mxu0 0.0
        %5302 = vmatprep.subr.mxu0 0.0
        %5303 = vmatpush1.msra.mxu0 0.0
        %5304 = vmatprep.subr.mxu0 0.0
        %5305 = vmatpush1.msra.mxu0 0.0
        %5306 = vmatprep.subr.mxu0 0.0
        %5307 = vmatpush1.msra.mxu0 0.0
        %5308 = vmatprep.subr.mxu0 0.0
        %5309 = vmatpush1.msra.mxu0 0.0
        %5310 = vmatprep.subr.mxu0 0.0
        %5311 = vmatpush1.msra.mxu0 0.0
        %5312 = vmatprep.subr.mxu0 0.0
        %5313 = vmatpush1.msra.mxu0 0.0
        %5314 = vmatprep.subr.mxu0 0.0
        %5315 = vmatpush1.msra.mxu0 0.0
        %5316 = vmatprep.subr.mxu0 0.0
        %5317 = vmatpush1.msra.mxu0 0.0
        %5318 = vmatprep.subr.mxu0 0.0
        %5319 = vmatpush1.msra.mxu0 0.0
        %5320 = vmatprep.subr.mxu0 0.0
        %5321 = vmatpush1.msra.mxu0 0.0
        %5322 = vmatprep.subr.mxu0 0.0
        %5323 = vmatpush1.msra.mxu0 0.0
        %5324 = vmatprep.subr.mxu0 0.0
        %5325 = vmatpush1.msra.mxu0 0.0
        %5326 = vmatprep.subr.mxu0 0.0
        %5327 = vmatpush1.msra.mxu0 0.0
        %5328 = vmatprep.subr.mxu0 0.0
        %5329 = vmatpush1.msra.mxu0 0.0
        %5330 = vmatprep.subr.mxu0 0.0
        %5331 = vmatpush1.msra.mxu0 0.0
        %5332 = vmatprep.subr.mxu0 0.0
        %5333 = vmatpush1.msra.mxu0 0.0
        %5334 = vmatprep.subr.mxu0 0.0
        %5335 = vmatpush1.msra.mxu0 0.0
        %5336 = vmatprep.subr.mxu0 0.0
        %5337 = vmatpush1.msra.mxu0 0.0
        %5338 = vmatprep.subr.mxu0 0.0
        %5339 = vmatpush1.msra.mxu0 0.0
        %5340 = vmatprep.subr.mxu0 0.0
        %5341 = vmatpush1.msra.mxu0 0.0
        %5342 = vmatprep.subr.mxu0 0.0
        %5343 = vmatpush1.msra.mxu0 0.0
        %5344 = vmatprep.mubr.f32.mxu0 0.0
        %5345 = vmatmul.mubr.f32.gmra.mrb[0].mxu0 %v4998
        %v5346 = vpop.f32.mrb[0].mxu0
        %v5347 = vadd.f32 %v4976, %v5346
        %v5348 = vpop.f32.mrb[0].mxu0
        %5349 = vdwg.mxu0
        %5350 = vmatprep.subr.mxu0 0.0
        %5351 = vmatpush1.msra.mxu0 %v4934
        %5352 = vmatprep.subr.mxu0 0.0
        %5353 = vmatpush1.msra.mxu0 %v4935
        %5354 = vmatprep.subr.mxu0 0.0
        %5355 = vmatpush1.msra.mxu0 0.0
        %5356 = vmatprep.subr.mxu0 0.0
        %5357 = vmatpush1.msra.mxu0 0.0
        %5358 = vmatprep.subr.mxu0 0.0
        %5359 = vmatpush1.msra.mxu0 0.0
        %5360 = vmatprep.subr.mxu0 0.0
        %5361 = vmatpush1.msra.mxu0 0.0
        %5362 = vmatprep.subr.mxu0 0.0
        %5363 = vmatpush1.msra.mxu0 0.0
        %5364 = vmatprep.subr.mxu0 0.0
        %5365 = vmatpush1.msra.mxu0 0.0
        %5366 = vmatprep.subr.mxu0 0.0
        %5367 = vmatpush1.msra.mxu0 0.0
        %5368 = vmatprep.subr.mxu0 0.0
        %5369 = vmatpush1.msra.mxu0 0.0
        %5370 = vmatprep.subr.mxu0 0.0
        %5371 = vmatpush1.msra.mxu0 0.0
        %5372 = vmatprep.subr.mxu0 0.0
        %5373 = vmatpush1.msra.mxu0 0.0
        %5374 = vmatprep.subr.mxu0 0.0
        %5375 = vmatpush1.msra.mxu0 0.0
        %5376 = vmatprep.subr.mxu0 0.0
        %5377 = vmatpush1.msra.mxu0 0.0
        %5378 = vmatprep.subr.mxu0 0.0
        %5379 = vmatpush1.msra.mxu0 0.0
        %5380 = vmatprep.subr.mxu0 0.0
        %5381 = vmatpush1.msra.mxu0 0.0
        %5382 = vmatprep.subr.mxu0 0.0
        %5383 = vmatpush1.msra.mxu0 0.0
        %5384 = vmatprep.subr.mxu0 0.0
        %5385 = vmatpush1.msra.mxu0 0.0
        %5386 = vmatprep.subr.mxu0 0.0
        %5387 = vmatpush1.msra.mxu0 0.0
        %5388 = vmatprep.subr.mxu0 0.0
        %5389 = vmatpush1.msra.mxu0 0.0
        %5390 = vmatprep.subr.mxu0 0.0
        %5391 = vmatpush1.msra.mxu0 0.0
        %5392 = vmatprep.subr.mxu0 0.0
        %5393 = vmatpush1.msra.mxu0 0.0
        %5394 = vmatprep.subr.mxu0 0.0
        %5395 = vmatpush1.msra.mxu0 0.0
        %5396 = vmatprep.subr.mxu0 0.0
        %5397 = vmatpush1.msra.mxu0 0.0
        %5398 = vmatprep.subr.mxu0 0.0
        %5399 = vmatpush1.msra.mxu0 0.0
        %5400 = vmatprep.subr.mxu0 0.0
        %5401 = vmatpush1.msra.mxu0 0.0
        %5402 = vmatprep.subr.mxu0 0.0
        %5403 = vmatpush1.msra.mxu0 0.0
        %5404 = vmatprep.subr.mxu0 0.0
        %5405 = vmatpush1.msra.mxu0 0.0
        %5406 = vmatprep.subr.mxu0 0.0
        %5407 = vmatpush1.msra.mxu0 0.0
        %5408 = vmatprep.subr.mxu0 0.0
        %5409 = vmatpush1.msra.mxu0 0.0
        %5410 = vmatprep.subr.mxu0 0.0
        %5411 = vmatpush1.msra.mxu0 0.0
        %5412 = vmatprep.subr.mxu0 0.0
        %5413 = vmatpush1.msra.mxu0 0.0
        %5414 = vmatprep.mubr.f32.mxu0 0.0
        %5415 = vmatmul.mubr.f32.gmra.mrb[0].mxu0 %v4998
        %v5416 = vpop.f32.mrb[0].mxu0
        %v5417 = vadd.f32 %v4980, %v5416
        %v5418 = vpop.f32.mrb[0].mxu0
        %5419 = vdwg.mxu0
        %5420 = vmatprep.subr.mxu0 0.0
        %5421 = vmatpush1.msra.mxu0 %v4936
        %5422 = vmatprep.subr.mxu0 0.0
        %5423 = vmatpush1.msra.mxu0 %v4937
        %5424 = vmatprep.subr.mxu0 0.0
        %5425 = vmatpush1.msra.mxu0 0.0
        %5426 = vmatprep.subr.mxu0 0.0
        %5427 = vmatpush1.msra.mxu0 0.0
        %5428 = vmatprep.subr.mxu0 0.0
        %5429 = vmatpush1.msra.mxu0 0.0
        %5430 = vmatprep.subr.mxu0 0.0
        %5431 = vmatpush1.msra.mxu0 0.0
        %5432 = vmatprep.subr.mxu0 0.0
        %5433 = vmatpush1.msra.mxu0 0.0
        %5434 = vmatprep.subr.mxu0 0.0
        %5435 = vmatpush1.msra.mxu0 0.0
        %5436 = vmatprep.subr.mxu0 0.0
        %5437 = vmatpush1.msra.mxu0 0.0
        %5438 = vmatprep.subr.mxu0 0.0
        %5439 = vmatpush1.msra.mxu0 0.0
        %5440 = vmatprep.subr.mxu0 0.0
        %5441 = vmatpush1.msra.mxu0 0.0
        %5442 = vmatprep.subr.mxu0 0.0
        %5443 = vmatpush1.msra.mxu0 0.0
        %5444 = vmatprep.subr.mxu0 0.0
        %5445 = vmatpush1.msra.mxu0 0.0
        %5446 = vmatprep.subr.mxu0 0.0
        %5447 = vmatpush1.msra.mxu0 0.0
        %5448 = vmatprep.subr.mxu0 0.0
        %5449 = vmatpush1.msra.mxu0 0.0
        %5450 = vmatprep.subr.mxu0 0.0
        %5451 = vmatpush1.msra.mxu0 0.0
        %5452 = vmatprep.subr.mxu0 0.0
        %5453 = vmatpush1.msra.mxu0 0.0
        %5454 = vmatprep.subr.mxu0 0.0
        %5455 = vmatpush1.msra.mxu0 0.0
        %5456 = vmatprep.subr.mxu0 0.0
        %5457 = vmatpush1.msra.mxu0 0.0
        %5458 = vmatprep.subr.mxu0 0.0
        %5459 = vmatpush1.msra.mxu0 0.0
        %5460 = vmatprep.subr.mxu0 0.0
        %5461 = vmatpush1.msra.mxu0 0.0
        %5462 = vmatprep.subr.mxu0 0.0
        %5463 = vmatpush1.msra.mxu0 0.0
        %5464 = vmatprep.subr.mxu0 0.0
        %5465 = vmatpush1.msra.mxu0 0.0
        %5466 = vmatprep.subr.mxu0 0.0
        %5467 = vmatpush1.msra.mxu0 0.0
        %5468 = vmatprep.subr.mxu0 0.0
        %5469 = vmatpush1.msra.mxu0 0.0
        %5470 = vmatprep.subr.mxu0 0.0
        %5471 = vmatpush1.msra.mxu0 0.0
        %5472 = vmatprep.subr.mxu0 0.0
        %5473 = vmatpush1.msra.mxu0 0.0
        %5474 = vmatprep.subr.mxu0 0.0
        %5475 = vmatpush1.msra.mxu0 0.0
        %5476 = vmatprep.subr.mxu0 0.0
        %5477 = vmatpush1.msra.mxu0 0.0
        %5478 = vmatprep.subr.mxu0 0.0
        %5479 = vmatpush1.msra.mxu0 0.0
        %5480 = vmatprep.subr.mxu0 0.0
        %5481 = vmatpush1.msra.mxu0 0.0
        %5482 = vmatprep.subr.mxu0 0.0
        %5483 = vmatpush1.msra.mxu0 0.0
        %5484 = vmatprep.mubr.f32.mxu0 0.0
        %5485 = vmatmul.mubr.f32.gmra.mrb[0].mxu0 %v4998
        %v5486 = vpop.f32.mrb[0].mxu0
        %v5487 = vadd.f32 %v4984, %v5486
        %v5488 = vpop.f32.mrb[0].mxu0
        %5489 = vdwg.mxu0
        %5490 = vmatprep.subr.mxu0 0.0
        %5491 = vmatpush1.msra.mxu0 %v4938
        %5492 = vmatprep.subr.mxu0 0.0
        %5493 = vmatpush1.msra.mxu0 %v4939
        %5494 = vmatprep.subr.mxu0 0.0
        %5495 = vmatpush1.msra.mxu0 0.0
        %5496 = vmatprep.subr.mxu0 0.0
        %5497 = vmatpush1.msra.mxu0 0.0
        %5498 = vmatprep.subr.mxu0 0.0
        %5499 = vmatpush1.msra.mxu0 0.0
        %5500 = vmatprep.subr.mxu0 0.0
        %5501 = vmatpush1.msra.mxu0 0.0
        %5502 = vmatprep.subr.mxu0 0.0
        %5503 = vmatpush1.msra.mxu0 0.0
        %5504 = vmatprep.subr.mxu0 0.0
        %5505 = vmatpush1.msra.mxu0 0.0
        %5506 = vmatprep.subr.mxu0 0.0
        %5507 = vmatpush1.msra.mxu0 0.0
        %5508 = vmatprep.subr.mxu0 0.0
        %5509 = vmatpush1.msra.mxu0 0.0
        %5510 = vmatprep.subr.mxu0 0.0
        %5511 = vmatpush1.msra.mxu0 0.0
        %5512 = vmatprep.subr.mxu0 0.0
        %5513 = vmatpush1.msra.mxu0 0.0
        %5514 = vmatprep.subr.mxu0 0.0
        %5515 = vmatpush1.msra.mxu0 0.0
        %5516 = vmatprep.subr.mxu0 0.0
        %5517 = vmatpush1.msra.mxu0 0.0
        %5518 = vmatprep.subr.mxu0 0.0
        %5519 = vmatpush1.msra.mxu0 0.0
        %5520 = vmatprep.subr.mxu0 0.0
        %5521 = vmatpush1.msra.mxu0 0.0
        %5522 = vmatprep.subr.mxu0 0.0
        %5523 = vmatpush1.msra.mxu0 0.0
        %5524 = vmatprep.subr.mxu0 0.0
        %5525 = vmatpush1.msra.mxu0 0.0
        %5526 = vmatprep.subr.mxu0 0.0
        %5527 = vmatpush1.msra.mxu0 0.0
        %5528 = vmatprep.subr.mxu0 0.0
        %5529 = vmatpush1.msra.mxu0 0.0
        %5530 = vmatprep.subr.mxu0 0.0
        %5531 = vmatpush1.msra.mxu0 0.0
        %5532 = vmatprep.subr.mxu0 0.0
        %5533 = vmatpush1.msra.mxu0 0.0
        %5534 = vmatprep.subr.mxu0 0.0
        %5535 = vmatpush1.msra.mxu0 0.0
        %5536 = vmatprep.subr.mxu0 0.0
        %5537 = vmatpush1.msra.mxu0 0.0
        %5538 = vmatprep.subr.mxu0 0.0
        %5539 = vmatpush1.msra.mxu0 0.0
        %5540 = vmatprep.subr.mxu0 0.0
        %5541 = vmatpush1.msra.mxu0 0.0
        %5542 = vmatprep.subr.mxu0 0.0
        %5543 = vmatpush1.msra.mxu0 0.0
        %5544 = vmatprep.subr.mxu0 0.0
        %5545 = vmatpush1.msra.mxu0 0.0
        %5546 = vmatprep.subr.mxu0 0.0
        %5547 = vmatpush1.msra.mxu0 0.0
        %5548 = vmatprep.subr.mxu0 0.0
        %5549 = vmatpush1.msra.mxu0 0.0
        %5550 = vmatprep.subr.mxu0 0.0
        %5551 = vmatpush1.msra.mxu0 0.0
        %5552 = vmatprep.subr.mxu0 0.0
        %5553 = vmatpush1.msra.mxu0 0.0
        %5554 = vmatprep.mubr.f32.mxu0 0.0
        %5555 = vmatmul.mubr.f32.gmra.mrb[0].mxu0 %v4998
        %v5556 = vpop.f32.mrb[0].mxu0
        %v5557 = vadd.f32 %v4988, %v5556
        %v5558 = vpop.f32.mrb[0].mxu0
        %5559 = vdwg.mxu0
        %s5560 = scalar_lea.vmem %s2, 640
        %v5561 = vld [vmem:[%s5560] sm:$0xff]
        %v5562 = vld [vmem:[%s5560 + $0x8] sm:$0xff]
        %v5563 = vld [vmem:[%s5560 + $0x10] sm:$0xff]
        %v5564 = vld [vmem:[%s5560 + $0x18] sm:$0xff]
        %v5565 = vld [vmem:[%s5560 + $0x20] sm:$0xff]
        %v5566 = vld [vmem:[%s5560 + $0x28] sm:$0xff]
        %v5567 = vld [vmem:[%s5560 + $0x30] sm:$0xff]
        %v5568 = vld [vmem:[%s5560 + $0x38] sm:$0xff]
        %v5569 = vld [vmem:[%s5560 + $0x40] sm:$0xff]
        %v5570 = vld [vmem:[%s5560 + $0x48] sm:$0xff]
        %v5571 = vld [vmem:[%s5560 + $0x50] sm:$0xff]
        %v5572 = vld [vmem:[%s5560 + $0x58] sm:$0xff]
        %v5573 = vld [vmem:[%s5560 + $0x60] sm:$0xff]
        %v5574 = vld [vmem:[%s5560 + $0x68] sm:$0xff]
        %v5575 = vld [vmem:[%s5560 + $0x70] sm:$0xff]
        %v5576 = vld [vmem:[%s5560 + $0x78] sm:$0xff]
        %s5577 = scalar_lea.vmem [#allocation5], 40
        %v5578 = vld [vmem:[%s5577] sm:$0x1]
        %v5579 = vld [vmem:[%s5577 + $0x1] sm:$0x1]
        %v5580 = vld [vmem:[%s5577 + $0x2] sm:$0x1]
        %v5581 = vld [vmem:[%s5577 + $0x3] sm:$0x1]
        %v5582 = vld [vmem:[%s5577 + $0x4] sm:$0x1]
        %v5583 = vld [vmem:[%s5577 + $0x5] sm:$0x1]
        %v5584 = vld [vmem:[%s5577 + $0x6] sm:$0x1]
        %v5585 = vld [vmem:[%s5577 + $0x7] sm:$0x1]
        %v5594 = vlaneseq
        %v5595 = vshrl.u32 %v5594, 7
        %v5596 = vsub.s32 0, %v5595
        %v5597 = vrot.slane %v5578, %v5596
        %v5598 = vlaneseq
        %v5599 = vshrl.u32 %v5598, 7
        %v5600 = vsub.s32 0, %v5599
        %v5601 = vrot.slane %v5579, %v5600
        %v5602 = vlaneseq
        %v5603 = vshrl.u32 %v5602, 7
        %v5604 = vsub.s32 0, %v5603
        %v5605 = vrot.slane %v5580, %v5604
        %v5606 = vlaneseq
        %v5607 = vshrl.u32 %v5606, 7
        %v5608 = vsub.s32 0, %v5607
        %v5609 = vrot.slane %v5581, %v5608
        %v5610 = vlaneseq
        %v5611 = vshrl.u32 %v5610, 7
        %v5612 = vsub.s32 0, %v5611
        %v5613 = vrot.slane %v5582, %v5612
        %v5614 = vlaneseq
        %v5615 = vshrl.u32 %v5614, 7
        %v5616 = vsub.s32 0, %v5615
        %v5617 = vrot.slane %v5583, %v5616
        %v5618 = vlaneseq
        %v5619 = vshrl.u32 %v5618, 7
        %v5620 = vsub.s32 0, %v5619
        %v5621 = vrot.slane %v5584, %v5620
        %v5622 = vlaneseq
        %v5623 = vshrl.u32 %v5622, 7
        %v5624 = vsub.s32 0, %v5623
        %v5625 = vrot.slane %v5585, %v5624
        %5634 = vmatprep.subr.mxu0 0.0
        %5635 = vmatpush1.msra.mxu0 %v5561
        %5636 = vmatprep.subr.mxu0 0.0
        %5637 = vmatpush1.msra.mxu0 %v5562
        %5638 = vmatprep.subr.mxu0 0.0
        %5639 = vmatpush1.msra.mxu0 0.0
        %5640 = vmatprep.subr.mxu0 0.0
        %5641 = vmatpush1.msra.mxu0 0.0
        %5642 = vmatprep.subr.mxu0 0.0
        %5643 = vmatpush1.msra.mxu0 0.0
        %5644 = vmatprep.subr.mxu0 0.0
        %5645 = vmatpush1.msra.mxu0 0.0
        %5646 = vmatprep.subr.mxu0 0.0
        %5647 = vmatpush1.msra.mxu0 0.0
        %5648 = vmatprep.subr.mxu0 0.0
        %5649 = vmatpush1.msra.mxu0 0.0
        %5650 = vmatprep.subr.mxu0 0.0
        %5651 = vmatpush1.msra.mxu0 0.0
        %5652 = vmatprep.subr.mxu0 0.0
        %5653 = vmatpush1.msra.mxu0 0.0
        %5654 = vmatprep.subr.mxu0 0.0
        %5655 = vmatpush1.msra.mxu0 0.0
        %5656 = vmatprep.subr.mxu0 0.0
        %5657 = vmatpush1.msra.mxu0 0.0
        %5658 = vmatprep.subr.mxu0 0.0
        %5659 = vmatpush1.msra.mxu0 0.0
        %5660 = vmatprep.subr.mxu0 0.0
        %5661 = vmatpush1.msra.mxu0 0.0
        %5662 = vmatprep.subr.mxu0 0.0
        %5663 = vmatpush1.msra.mxu0 0.0
        %5664 = vmatprep.subr.mxu0 0.0
        %5665 = vmatpush1.msra.mxu0 0.0
        %5666 = vmatprep.subr.mxu0 0.0
        %5667 = vmatpush1.msra.mxu0 0.0
        %5668 = vmatprep.subr.mxu0 0.0
        %5669 = vmatpush1.msra.mxu0 0.0
        %5670 = vmatprep.subr.mxu0 0.0
        %5671 = vmatpush1.msra.mxu0 0.0
        %5672 = vmatprep.subr.mxu0 0.0
        %5673 = vmatpush1.msra.mxu0 0.0
        %5674 = vmatprep.subr.mxu0 0.0
        %5675 = vmatpush1.msra.mxu0 0.0
        %5676 = vmatprep.subr.mxu0 0.0
        %5677 = vmatpush1.msra.mxu0 0.0
        %5678 = vmatprep.subr.mxu0 0.0
        %5679 = vmatpush1.msra.mxu0 0.0
        %5680 = vmatprep.subr.mxu0 0.0
        %5681 = vmatpush1.msra.mxu0 0.0
        %5682 = vmatprep.subr.mxu0 0.0
        %5683 = vmatpush1.msra.mxu0 0.0
        %5684 = vmatprep.subr.mxu0 0.0
        %5685 = vmatpush1.msra.mxu0 0.0
        %5686 = vmatprep.subr.mxu0 0.0
        %5687 = vmatpush1.msra.mxu0 0.0
        %5688 = vmatprep.subr.mxu0 0.0
        %5689 = vmatpush1.msra.mxu0 0.0
        %5690 = vmatprep.subr.mxu0 0.0
        %5691 = vmatpush1.msra.mxu0 0.0
        %5692 = vmatprep.subr.mxu0 0.0
        %5693 = vmatpush1.msra.mxu0 0.0
        %5694 = vmatprep.subr.mxu0 0.0
        %5695 = vmatpush1.msra.mxu0 0.0
        %5696 = vmatprep.subr.mxu0 0.0
        %5697 = vmatpush1.msra.mxu0 0.0
        %5698 = vmatprep.mubr.f32.mxu0 0.0
        %5699 = vmatmul.mubr.f32.gmra.mrb[0].mxu0 %v4998
        %v5700 = vpop.f32.mrb[0].mxu0
        %v5701 = vadd.f32 %v5597, %v5700
        %v5702 = vpop.f32.mrb[0].mxu0
        %5703 = vdwg.mxu0
        %5704 = vmatprep.subr.mxu0 0.0
        %5705 = vmatpush1.msra.mxu0 %v5563
        %5706 = vmatprep.subr.mxu0 0.0
        %5707 = vmatpush1.msra.mxu0 %v5564
        %5708 = vmatprep.subr.mxu0 0.0
        %5709 = vmatpush1.msra.mxu0 0.0
        %5710 = vmatprep.subr.mxu0 0.0
        %5711 = vmatpush1.msra.mxu0 0.0
        %5712 = vmatprep.subr.mxu0 0.0
        %5713 = vmatpush1.msra.mxu0 0.0
        %5714 = vmatprep.subr.mxu0 0.0
        %5715 = vmatpush1.msra.mxu0 0.0
        %5716 = vmatprep.subr.mxu0 0.0
        %5717 = vmatpush1.msra.mxu0 0.0
        %5718 = vmatprep.subr.mxu0 0.0
        %5719 = vmatpush1.msra.mxu0 0.0
        %5720 = vmatprep.subr.mxu0 0.0
        %5721 = vmatpush1.msra.mxu0 0.0
        %5722 = vmatprep.subr.mxu0 0.0
        %5723 = vmatpush1.msra.mxu0 0.0
        %5724 = vmatprep.subr.mxu0 0.0
        %5725 = vmatpush1.msra.mxu0 0.0
        %5726 = vmatprep.subr.mxu0 0.0
        %5727 = vmatpush1.msra.mxu0 0.0
        %5728 = vmatprep.subr.mxu0 0.0
        %5729 = vmatpush1.msra.mxu0 0.0
        %5730 = vmatprep.subr.mxu0 0.0
        %5731 = vmatpush1.msra.mxu0 0.0
        %5732 = vmatprep.subr.mxu0 0.0
        %5733 = vmatpush1.msra.mxu0 0.0
        %5734 = vmatprep.subr.mxu0 0.0
        %5735 = vmatpush1.msra.mxu0 0.0
        %5736 = vmatprep.subr.mxu0 0.0
        %5737 = vmatpush1.msra.mxu0 0.0
        %5738 = vmatprep.subr.mxu0 0.0
        %5739 = vmatpush1.msra.mxu0 0.0
        %5740 = vmatprep.subr.mxu0 0.0
        %5741 = vmatpush1.msra.mxu0 0.0
        %5742 = vmatprep.subr.mxu0 0.0
        %5743 = vmatpush1.msra.mxu0 0.0
        %5744 = vmatprep.subr.mxu0 0.0
        %5745 = vmatpush1.msra.mxu0 0.0
        %5746 = vmatprep.subr.mxu0 0.0
        %5747 = vmatpush1.msra.mxu0 0.0
        %5748 = vmatprep.subr.mxu0 0.0
        %5749 = vmatpush1.msra.mxu0 0.0
        %5750 = vmatprep.subr.mxu0 0.0
        %5751 = vmatpush1.msra.mxu0 0.0
        %5752 = vmatprep.subr.mxu0 0.0
        %5753 = vmatpush1.msra.mxu0 0.0
        %5754 = vmatprep.subr.mxu0 0.0
        %5755 = vmatpush1.msra.mxu0 0.0
        %5756 = vmatprep.subr.mxu0 0.0
        %5757 = vmatpush1.msra.mxu0 0.0
        %5758 = vmatprep.subr.mxu0 0.0
        %5759 = vmatpush1.msra.mxu0 0.0
        %5760 = vmatprep.subr.mxu0 0.0
        %5761 = vmatpush1.msra.mxu0 0.0
        %5762 = vmatprep.subr.mxu0 0.0
        %5763 = vmatpush1.msra.mxu0 0.0
        %5764 = vmatprep.subr.mxu0 0.0
        %5765 = vmatpush1.msra.mxu0 0.0
        %5766 = vmatprep.subr.mxu0 0.0
        %5767 = vmatpush1.msra.mxu0 0.0
        %5768 = vmatprep.mubr.f32.mxu0 0.0
        %5769 = vmatmul.mubr.f32.gmra.mrb[0].mxu0 %v4998
        %v5770 = vpop.f32.mrb[0].mxu0
        %v5771 = vadd.f32 %v5601, %v5770
        %v5772 = vpop.f32.mrb[0].mxu0
        %5773 = vdwg.mxu0
        %5774 = vmatprep.subr.mxu0 0.0
        %5775 = vmatpush1.msra.mxu0 %v5565
        %5776 = vmatprep.subr.mxu0 0.0
        %5777 = vmatpush1.msra.mxu0 %v5566
        %5778 = vmatprep.subr.mxu0 0.0
        %5779 = vmatpush1.msra.mxu0 0.0
        %5780 = vmatprep.subr.mxu0 0.0
        %5781 = vmatpush1.msra.mxu0 0.0
        %5782 = vmatprep.subr.mxu0 0.0
        %5783 = vmatpush1.msra.mxu0 0.0
        %5784 = vmatprep.subr.mxu0 0.0
        %5785 = vmatpush1.msra.mxu0 0.0
        %5786 = vmatprep.subr.mxu0 0.0
        %5787 = vmatpush1.msra.mxu0 0.0
        %5788 = vmatprep.subr.mxu0 0.0
        %5789 = vmatpush1.msra.mxu0 0.0
        %5790 = vmatprep.subr.mxu0 0.0
        %5791 = vmatpush1.msra.mxu0 0.0
        %5792 = vmatprep.subr.mxu0 0.0
        %5793 = vmatpush1.msra.mxu0 0.0
        %5794 = vmatprep.subr.mxu0 0.0
        %5795 = vmatpush1.msra.mxu0 0.0
        %5796 = vmatprep.subr.mxu0 0.0
        %5797 = vmatpush1.msra.mxu0 0.0
        %5798 = vmatprep.subr.mxu0 0.0
        %5799 = vmatpush1.msra.mxu0 0.0
        %5800 = vmatprep.subr.mxu0 0.0
        %5801 = vmatpush1.msra.mxu0 0.0
        %5802 = vmatprep.subr.mxu0 0.0
        %5803 = vmatpush1.msra.mxu0 0.0
        %5804 = vmatprep.subr.mxu0 0.0
        %5805 = vmatpush1.msra.mxu0 0.0
        %5806 = vmatprep.subr.mxu0 0.0
        %5807 = vmatpush1.msra.mxu0 0.0
        %5808 = vmatprep.subr.mxu0 0.0
        %5809 = vmatpush1.msra.mxu0 0.0
        %5810 = vmatprep.subr.mxu0 0.0
        %5811 = vmatpush1.msra.mxu0 0.0
        %5812 = vmatprep.subr.mxu0 0.0
        %5813 = vmatpush1.msra.mxu0 0.0
        %5814 = vmatprep.subr.mxu0 0.0
        %5815 = vmatpush1.msra.mxu0 0.0
        %5816 = vmatprep.subr.mxu0 0.0
        %5817 = vmatpush1.msra.mxu0 0.0
        %5818 = vmatprep.subr.mxu0 0.0
        %5819 = vmatpush1.msra.mxu0 0.0
        %5820 = vmatprep.subr.mxu0 0.0
        %5821 = vmatpush1.msra.mxu0 0.0
        %5822 = vmatprep.subr.mxu0 0.0
        %5823 = vmatpush1.msra.mxu0 0.0
        %5824 = vmatprep.subr.mxu0 0.0
        %5825 = vmatpush1.msra.mxu0 0.0
        %5826 = vmatprep.subr.mxu0 0.0
        %5827 = vmatpush1.msra.mxu0 0.0
        %5828 = vmatprep.subr.mxu0 0.0
        %5829 = vmatpush1.msra.mxu0 0.0
        %5830 = vmatprep.subr.mxu0 0.0
        %5831 = vmatpush1.msra.mxu0 0.0
        %5832 = vmatprep.subr.mxu0 0.0
        %5833 = vmatpush1.msra.mxu0 0.0
        %5834 = vmatprep.subr.mxu0 0.0
        %5835 = vmatpush1.msra.mxu0 0.0
        %5836 = vmatprep.subr.mxu0 0.0
        %5837 = vmatpush1.msra.mxu0 0.0
        %5838 = vmatprep.mubr.f32.mxu0 0.0
        %5839 = vmatmul.mubr.f32.gmra.mrb[0].mxu0 %v4998
        %v5840 = vpop.f32.mrb[0].mxu0
        %v5841 = vadd.f32 %v5605, %v5840
        %v5842 = vpop.f32.mrb[0].mxu0
        %5843 = vdwg.mxu0
        %5844 = vmatprep.subr.mxu0 0.0
        %5845 = vmatpush1.msra.mxu0 %v5567
        %5846 = vmatprep.subr.mxu0 0.0
        %5847 = vmatpush1.msra.mxu0 %v5568
        %5848 = vmatprep.subr.mxu0 0.0
        %5849 = vmatpush1.msra.mxu0 0.0
        %5850 = vmatprep.subr.mxu0 0.0
        %5851 = vmatpush1.msra.mxu0 0.0
        %5852 = vmatprep.subr.mxu0 0.0
        %5853 = vmatpush1.msra.mxu0 0.0
        %5854 = vmatprep.subr.mxu0 0.0
        %5855 = vmatpush1.msra.mxu0 0.0
        %5856 = vmatprep.subr.mxu0 0.0
        %5857 = vmatpush1.msra.mxu0 0.0
        %5858 = vmatprep.subr.mxu0 0.0
        %5859 = vmatpush1.msra.mxu0 0.0
        %5860 = vmatprep.subr.mxu0 0.0
        %5861 = vmatpush1.msra.mxu0 0.0
        %5862 = vmatprep.subr.mxu0 0.0
        %5863 = vmatpush1.msra.mxu0 0.0
        %5864 = vmatprep.subr.mxu0 0.0
        %5865 = vmatpush1.msra.mxu0 0.0
        %5866 = vmatprep.subr.mxu0 0.0
        %5867 = vmatpush1.msra.mxu0 0.0
        %5868 = vmatprep.subr.mxu0 0.0
        %5869 = vmatpush1.msra.mxu0 0.0
        %5870 = vmatprep.subr.mxu0 0.0
        %5871 = vmatpush1.msra.mxu0 0.0
        %5872 = vmatprep.subr.mxu0 0.0
        %5873 = vmatpush1.msra.mxu0 0.0
        %5874 = vmatprep.subr.mxu0 0.0
        %5875 = vmatpush1.msra.mxu0 0.0
        %5876 = vmatprep.subr.mxu0 0.0
        %5877 = vmatpush1.msra.mxu0 0.0
        %5878 = vmatprep.subr.mxu0 0.0
        %5879 = vmatpush1.msra.mxu0 0.0
        %5880 = vmatprep.subr.mxu0 0.0
        %5881 = vmatpush1.msra.mxu0 0.0
        %5882 = vmatprep.subr.mxu0 0.0
        %5883 = vmatpush1.msra.mxu0 0.0
        %5884 = vmatprep.subr.mxu0 0.0
        %5885 = vmatpush1.msra.mxu0 0.0
        %5886 = vmatprep.subr.mxu0 0.0
        %5887 = vmatpush1.msra.mxu0 0.0
        %5888 = vmatprep.subr.mxu0 0.0
        %5889 = vmatpush1.msra.mxu0 0.0
        %5890 = vmatprep.subr.mxu0 0.0
        %5891 = vmatpush1.msra.mxu0 0.0
        %5892 = vmatprep.subr.mxu0 0.0
        %5893 = vmatpush1.msra.mxu0 0.0
        %5894 = vmatprep.subr.mxu0 0.0
        %5895 = vmatpush1.msra.mxu0 0.0
        %5896 = vmatprep.subr.mxu0 0.0
        %5897 = vmatpush1.msra.mxu0 0.0
        %5898 = vmatprep.subr.mxu0 0.0
        %5899 = vmatpush1.msra.mxu0 0.0
        %5900 = vmatprep.subr.mxu0 0.0
        %5901 = vmatpush1.msra.mxu0 0.0
        %5902 = vmatprep.subr.mxu0 0.0
        %5903 = vmatpush1.msra.mxu0 0.0
        %5904 = vmatprep.subr.mxu0 0.0
        %5905 = vmatpush1.msra.mxu0 0.0
        %5906 = vmatprep.subr.mxu0 0.0
        %5907 = vmatpush1.msra.mxu0 0.0
        %5908 = vmatprep.mubr.f32.mxu0 0.0
        %5909 = vmatmul.mubr.f32.gmra.mrb[0].mxu0 %v4998
        %v5910 = vpop.f32.mrb[0].mxu0
        %v5911 = vadd.f32 %v5609, %v5910
        %v5912 = vpop.f32.mrb[0].mxu0
        %5913 = vdwg.mxu0
        %5914 = vmatprep.subr.mxu0 0.0
        %5915 = vmatpush1.msra.mxu0 %v5569
        %5916 = vmatprep.subr.mxu0 0.0
        %5917 = vmatpush1.msra.mxu0 %v5570
        %5918 = vmatprep.subr.mxu0 0.0
        %5919 = vmatpush1.msra.mxu0 0.0
        %5920 = vmatprep.subr.mxu0 0.0
        %5921 = vmatpush1.msra.mxu0 0.0
        %5922 = vmatprep.subr.mxu0 0.0
        %5923 = vmatpush1.msra.mxu0 0.0
        %5924 = vmatprep.subr.mxu0 0.0
        %5925 = vmatpush1.msra.mxu0 0.0
        %5926 = vmatprep.subr.mxu0 0.0
        %5927 = vmatpush1.msra.mxu0 0.0
        %5928 = vmatprep.subr.mxu0 0.0
        %5929 = vmatpush1.msra.mxu0 0.0
        %5930 = vmatprep.subr.mxu0 0.0
        %5931 = vmatpush1.msra.mxu0 0.0
        %5932 = vmatprep.subr.mxu0 0.0
        %5933 = vmatpush1.msra.mxu0 0.0
        %5934 = vmatprep.subr.mxu0 0.0
        %5935 = vmatpush1.msra.mxu0 0.0
        %5936 = vmatprep.subr.mxu0 0.0
        %5937 = vmatpush1.msra.mxu0 0.0
        %5938 = vmatprep.subr.mxu0 0.0
        %5939 = vmatpush1.msra.mxu0 0.0
        %5940 = vmatprep.subr.mxu0 0.0
        %5941 = vmatpush1.msra.mxu0 0.0
        %5942 = vmatprep.subr.mxu0 0.0
        %5943 = vmatpush1.msra.mxu0 0.0
        %5944 = vmatprep.subr.mxu0 0.0
        %5945 = vmatpush1.msra.mxu0 0.0
        %5946 = vmatprep.subr.mxu0 0.0
        %5947 = vmatpush1.msra.mxu0 0.0
        %5948 = vmatprep.subr.mxu0 0.0
        %5949 = vmatpush1.msra.mxu0 0.0
        %5950 = vmatprep.subr.mxu0 0.0
        %5951 = vmatpush1.msra.mxu0 0.0
        %5952 = vmatprep.subr.mxu0 0.0
        %5953 = vmatpush1.msra.mxu0 0.0
        %5954 = vmatprep.subr.mxu0 0.0
        %5955 = vmatpush1.msra.mxu0 0.0
        %5956 = vmatprep.subr.mxu0 0.0
        %5957 = vmatpush1.msra.mxu0 0.0
        %5958 = vmatprep.subr.mxu0 0.0
        %5959 = vmatpush1.msra.mxu0 0.0
        %5960 = vmatprep.subr.mxu0 0.0
        %5961 = vmatpush1.msra.mxu0 0.0
        %5962 = vmatprep.subr.mxu0 0.0
        %5963 = vmatpush1.msra.mxu0 0.0
        %5964 = vmatprep.subr.mxu0 0.0
        %5965 = vmatpush1.msra.mxu0 0.0
        %5966 = vmatprep.subr.mxu0 0.0
        %5967 = vmatpush1.msra.mxu0 0.0
        %5968 = vmatprep.subr.mxu0 0.0
        %5969 = vmatpush1.msra.mxu0 0.0
        %5970 = vmatprep.subr.mxu0 0.0
        %5971 = vmatpush1.msra.mxu0 0.0
        %5972 = vmatprep.subr.mxu0 0.0
        %5973 = vmatpush1.msra.mxu0 0.0
        %5974 = vmatprep.subr.mxu0 0.0
        %5975 = vmatpush1.msra.mxu0 0.0
        %5976 = vmatprep.subr.mxu0 0.0
        %5977 = vmatpush1.msra.mxu0 0.0
        %5978 = vmatprep.mubr.f32.mxu0 0.0
        %5979 = vmatmul.mubr.f32.gmra.mrb[0].mxu0 %v4998
        %v5980 = vpop.f32.mrb[0].mxu0
        %v5981 = vadd.f32 %v5613, %v5980
        %v5982 = vpop.f32.mrb[0].mxu0
        %5983 = vdwg.mxu0
        %5984 = vmatprep.subr.mxu0 0.0
        %5985 = vmatpush1.msra.mxu0 %v5571
        %5986 = vmatprep.subr.mxu0 0.0
        %5987 = vmatpush1.msra.mxu0 %v5572
        %5988 = vmatprep.subr.mxu0 0.0
        %5989 = vmatpush1.msra.mxu0 0.0
        %5990 = vmatprep.subr.mxu0 0.0
        %5991 = vmatpush1.msra.mxu0 0.0
        %5992 = vmatprep.subr.mxu0 0.0
        %5993 = vmatpush1.msra.mxu0 0.0
        %5994 = vmatprep.subr.mxu0 0.0
        %5995 = vmatpush1.msra.mxu0 0.0
        %5996 = vmatprep.subr.mxu0 0.0
        %5997 = vmatpush1.msra.mxu0 0.0
        %5998 = vmatprep.subr.mxu0 0.0
        %5999 = vmatpush1.msra.mxu0 0.0
        %6000 = vmatprep.subr.mxu0 0.0
        %6001 = vmatpush1.msra.mxu0 0.0
        %6002 = vmatprep.subr.mxu0 0.0
        %6003 = vmatpush1.msra.mxu0 0.0
        %6004 = vmatprep.subr.mxu0 0.0
        %6005 = vmatpush1.msra.mxu0 0.0
        %6006 = vmatprep.subr.mxu0 0.0
        %6007 = vmatpush1.msra.mxu0 0.0
        %6008 = vmatprep.subr.mxu0 0.0
        %6009 = vmatpush1.msra.mxu0 0.0
        %6010 = vmatprep.subr.mxu0 0.0
        %6011 = vmatpush1.msra.mxu0 0.0
        %6012 = vmatprep.subr.mxu0 0.0
        %6013 = vmatpush1.msra.mxu0 0.0
        %6014 = vmatprep.subr.mxu0 0.0
        %6015 = vmatpush1.msra.mxu0 0.0
        %6016 = vmatprep.subr.mxu0 0.0
        %6017 = vmatpush1.msra.mxu0 0.0
        %6018 = vmatprep.subr.mxu0 0.0
        %6019 = vmatpush1.msra.mxu0 0.0
        %6020 = vmatprep.subr.mxu0 0.0
        %6021 = vmatpush1.msra.mxu0 0.0
        %6022 = vmatprep.subr.mxu0 0.0
        %6023 = vmatpush1.msra.mxu0 0.0
        %6024 = vmatprep.subr.mxu0 0.0
        %6025 = vmatpush1.msra.mxu0 0.0
        %6026 = vmatprep.subr.mxu0 0.0
        %6027 = vmatpush1.msra.mxu0 0.0
        %6028 = vmatprep.subr.mxu0 0.0
        %6029 = vmatpush1.msra.mxu0 0.0
        %6030 = vmatprep.subr.mxu0 0.0
        %6031 = vmatpush1.msra.mxu0 0.0
        %6032 = vmatprep.subr.mxu0 0.0
        %6033 = vmatpush1.msra.mxu0 0.0
        %6034 = vmatprep.subr.mxu0 0.0
        %6035 = vmatpush1.msra.mxu0 0.0
        %6036 = vmatprep.subr.mxu0 0.0
        %6037 = vmatpush1.msra.mxu0 0.0
        %6038 = vmatprep.subr.mxu0 0.0
        %6039 = vmatpush1.msra.mxu0 0.0
        %6040 = vmatprep.subr.mxu0 0.0
        %6041 = vmatpush1.msra.mxu0 0.0
        %6042 = vmatprep.subr.mxu0 0.0
        %6043 = vmatpush1.msra.mxu0 0.0
        %6044 = vmatprep.subr.mxu0 0.0
        %6045 = vmatpush1.msra.mxu0 0.0
        %6046 = vmatprep.subr.mxu0 0.0
        %6047 = vmatpush1.msra.mxu0 0.0
        %6048 = vmatprep.mubr.f32.mxu0 0.0
        %6049 = vmatmul.mubr.f32.gmra.mrb[0].mxu0 %v4998
        %v6050 = vpop.f32.mrb[0].mxu0
        %v6051 = vadd.f32 %v5617, %v6050
        %v6052 = vpop.f32.mrb[0].mxu0
        %6053 = vdwg.mxu0
        %6054 = vmatprep.subr.mxu0 0.0
        %6055 = vmatpush1.msra.mxu0 %v5573
        %6056 = vmatprep.subr.mxu0 0.0
        %6057 = vmatpush1.msra.mxu0 %v5574
        %6058 = vmatprep.subr.mxu0 0.0
        %6059 = vmatpush1.msra.mxu0 0.0
        %6060 = vmatprep.subr.mxu0 0.0
        %6061 = vmatpush1.msra.mxu0 0.0
        %6062 = vmatprep.subr.mxu0 0.0
        %6063 = vmatpush1.msra.mxu0 0.0
        %6064 = vmatprep.subr.mxu0 0.0
        %6065 = vmatpush1.msra.mxu0 0.0
        %6066 = vmatprep.subr.mxu0 0.0
        %6067 = vmatpush1.msra.mxu0 0.0
        %6068 = vmatprep.subr.mxu0 0.0
        %6069 = vmatpush1.msra.mxu0 0.0
        %6070 = vmatprep.subr.mxu0 0.0
        %6071 = vmatpush1.msra.mxu0 0.0
        %6072 = vmatprep.subr.mxu0 0.0
        %6073 = vmatpush1.msra.mxu0 0.0
        %6074 = vmatprep.subr.mxu0 0.0
        %6075 = vmatpush1.msra.mxu0 0.0
        %6076 = vmatprep.subr.mxu0 0.0
        %6077 = vmatpush1.msra.mxu0 0.0
        %6078 = vmatprep.subr.mxu0 0.0
        %6079 = vmatpush1.msra.mxu0 0.0
        %6080 = vmatprep.subr.mxu0 0.0
        %6081 = vmatpush1.msra.mxu0 0.0
        %6082 = vmatprep.subr.mxu0 0.0
        %6083 = vmatpush1.msra.mxu0 0.0
        %6084 = vmatprep.subr.mxu0 0.0
        %6085 = vmatpush1.msra.mxu0 0.0
        %6086 = vmatprep.subr.mxu0 0.0
        %6087 = vmatpush1.msra.mxu0 0.0
        %6088 = vmatprep.subr.mxu0 0.0
        %6089 = vmatpush1.msra.mxu0 0.0
        %6090 = vmatprep.subr.mxu0 0.0
        %6091 = vmatpush1.msra.mxu0 0.0
        %6092 = vmatprep.subr.mxu0 0.0
        %6093 = vmatpush1.msra.mxu0 0.0
        %6094 = vmatprep.subr.mxu0 0.0
        %6095 = vmatpush1.msra.mxu0 0.0
        %6096 = vmatprep.subr.mxu0 0.0
        %6097 = vmatpush1.msra.mxu0 0.0
        %6098 = vmatprep.subr.mxu0 0.0
        %6099 = vmatpush1.msra.mxu0 0.0
        %6100 = vmatprep.subr.mxu0 0.0
        %6101 = vmatpush1.msra.mxu0 0.0
        %6102 = vmatprep.subr.mxu0 0.0
        %6103 = vmatpush1.msra.mxu0 0.0
        %6104 = vmatprep.subr.mxu0 0.0
        %6105 = vmatpush1.msra.mxu0 0.0
        %6106 = vmatprep.subr.mxu0 0.0
        %6107 = vmatpush1.msra.mxu0 0.0
        %6108 = vmatprep.subr.mxu0 0.0
        %6109 = vmatpush1.msra.mxu0 0.0
        %6110 = vmatprep.subr.mxu0 0.0
        %6111 = vmatpush1.msra.mxu0 0.0
        %6112 = vmatprep.subr.mxu0 0.0
        %6113 = vmatpush1.msra.mxu0 0.0
        %6114 = vmatprep.subr.mxu0 0.0
        %6115 = vmatpush1.msra.mxu0 0.0
        %6116 = vmatprep.subr.mxu0 0.0
        %6117 = vmatpush1.msra.mxu0 0.0
        %6118 = vmatprep.mubr.f32.mxu0 0.0
        %6119 = vmatmul.mubr.f32.gmra.mrb[0].mxu0 %v4998
        %v6120 = vpop.f32.mrb[0].mxu0
        %v6121 = vadd.f32 %v5621, %v6120
        %v6122 = vpop.f32.mrb[0].mxu0
        %6123 = vdwg.mxu0
        %6124 = vmatprep.subr.mxu0 0.0
        %6125 = vmatpush1.msra.mxu0 %v5575
        %6126 = vmatprep.subr.mxu0 0.0
        %6127 = vmatpush1.msra.mxu0 %v5576
        %6128 = vmatprep.subr.mxu0 0.0
        %6129 = vmatpush1.msra.mxu0 0.0
        %6130 = vmatprep.subr.mxu0 0.0
        %6131 = vmatpush1.msra.mxu0 0.0
        %6132 = vmatprep.subr.mxu0 0.0
        %6133 = vmatpush1.msra.mxu0 0.0
        %6134 = vmatprep.subr.mxu0 0.0
        %6135 = vmatpush1.msra.mxu0 0.0
        %6136 = vmatprep.subr.mxu0 0.0
        %6137 = vmatpush1.msra.mxu0 0.0
        %6138 = vmatprep.subr.mxu0 0.0
        %6139 = vmatpush1.msra.mxu0 0.0
        %6140 = vmatprep.subr.mxu0 0.0
        %6141 = vmatpush1.msra.mxu0 0.0
        %6142 = vmatprep.subr.mxu0 0.0
        %6143 = vmatpush1.msra.mxu0 0.0
        %6144 = vmatprep.subr.mxu0 0.0
        %6145 = vmatpush1.msra.mxu0 0.0
        %6146 = vmatprep.subr.mxu0 0.0
        %6147 = vmatpush1.msra.mxu0 0.0
        %6148 = vmatprep.subr.mxu0 0.0
        %6149 = vmatpush1.msra.mxu0 0.0
        %6150 = vmatprep.subr.mxu0 0.0
        %6151 = vmatpush1.msra.mxu0 0.0
        %6152 = vmatprep.subr.mxu0 0.0
        %6153 = vmatpush1.msra.mxu0 0.0
        %6154 = vmatprep.subr.mxu0 0.0
        %6155 = vmatpush1.msra.mxu0 0.0
        %6156 = vmatprep.subr.mxu0 0.0
        %6157 = vmatpush1.msra.mxu0 0.0
        %6158 = vmatprep.subr.mxu0 0.0
        %6159 = vmatpush1.msra.mxu0 0.0
        %6160 = vmatprep.subr.mxu0 0.0
        %6161 = vmatpush1.msra.mxu0 0.0
        %6162 = vmatprep.subr.mxu0 0.0
        %6163 = vmatpush1.msra.mxu0 0.0
        %6164 = vmatprep.subr.mxu0 0.0
        %6165 = vmatpush1.msra.mxu0 0.0
        %6166 = vmatprep.subr.mxu0 0.0
        %6167 = vmatpush1.msra.mxu0 0.0
        %6168 = vmatprep.subr.mxu0 0.0
        %6169 = vmatpush1.msra.mxu0 0.0
        %6170 = vmatprep.subr.mxu0 0.0
        %6171 = vmatpush1.msra.mxu0 0.0
        %6172 = vmatprep.subr.mxu0 0.0
        %6173 = vmatpush1.msra.mxu0 0.0
        %6174 = vmatprep.subr.mxu0 0.0
        %6175 = vmatpush1.msra.mxu0 0.0
        %6176 = vmatprep.subr.mxu0 0.0
        %6177 = vmatpush1.msra.mxu0 0.0
        %6178 = vmatprep.subr.mxu0 0.0
        %6179 = vmatpush1.msra.mxu0 0.0
        %6180 = vmatprep.subr.mxu0 0.0
        %6181 = vmatpush1.msra.mxu0 0.0
        %6182 = vmatprep.subr.mxu0 0.0
        %6183 = vmatpush1.msra.mxu0 0.0
        %6184 = vmatprep.subr.mxu0 0.0
        %6185 = vmatpush1.msra.mxu0 0.0
        %6186 = vmatprep.subr.mxu0 0.0
        %6187 = vmatpush1.msra.mxu0 0.0
        %6188 = vmatprep.mubr.f32.mxu0 0.0
        %6189 = vmatmul.mubr.f32.gmra.mrb[0].mxu0 %v4998
        %v6190 = vpop.f32.mrb[0].mxu0
        %v6191 = vadd.f32 %v5625, %v6190
        %v6192 = vpop.f32.mrb[0].mxu0
        %6193 = vdwg.mxu0
        %v6195 = vsel %vm2232, %v4430, 0
        %v6198 = vsel %vm2232, %v5067, 0
        %6200 = vmatprep.subr.mxu0 0.0
        %6201 = vmatpush1.xpose.msra.mxu0 %v6198
        %6202 = vmatprep.subr.mxu0 0.0
        %6203 = vmatpush1.xpose.msra.mxu0 0.0
        %6204 = vmatprep.subr.mxu0 0.0
        %6205 = vmatpush1.xpose.msra.mxu0 0.0
        %6206 = vmatprep.subr.mxu0 0.0
        %6207 = vmatpush1.xpose.msra.mxu0 0.0
        %6208 = vmatprep.subr.mxu0 0.0
        %6209 = vmatpush1.xpose.msra.mxu0 0.0
        %6210 = vmatprep.subr.mxu0 0.0
        %6211 = vmatpush1.xpose.msra.mxu0 0.0
        %6212 = vmatprep.subr.mxu0 0.0
        %6213 = vmatpush1.xpose.msra.mxu0 0.0
        %6214 = vmatprep.subr.mxu0 0.0
        %6215 = vmatpush1.xpose.msra.mxu0 0.0
        %6216 = vmatprep.subr.mxu0 0.0
        %6217 = vmatpush1.xpose.msra.mxu0 0.0
        %6218 = vmatprep.subr.mxu0 0.0
        %6219 = vmatpush1.xpose.msra.mxu0 0.0
        %6220 = vmatprep.subr.mxu0 0.0
        %6221 = vmatpush1.xpose.msra.mxu0 0.0
        %6222 = vmatprep.subr.mxu0 0.0
        %6223 = vmatpush1.xpose.msra.mxu0 0.0
        %6224 = vmatprep.subr.mxu0 0.0
        %6225 = vmatpush1.xpose.msra.mxu0 0.0
        %6226 = vmatprep.subr.mxu0 0.0
        %6227 = vmatpush1.xpose.msra.mxu0 0.0
        %6228 = vmatprep.subr.mxu0 0.0
        %6229 = vmatpush1.xpose.msra.mxu0 0.0
        %6230 = vmatprep.subr.mxu0 0.0
        %6231 = vmatpush1.xpose.msra.mxu0 0.0
        %6232 = vmatprep.subr.mxu0 0.0
        %6233 = vmatpush1.xpose.msra.mxu0 0.0
        %6234 = vmatprep.subr.mxu0 0.0
        %6235 = vmatpush1.xpose.msra.mxu0 0.0
        %6236 = vmatprep.subr.mxu0 0.0
        %6237 = vmatpush1.xpose.msra.mxu0 0.0
        %6238 = vmatprep.subr.mxu0 0.0
        %6239 = vmatpush1.xpose.msra.mxu0 0.0
        %6240 = vmatprep.subr.mxu0 0.0
        %6241 = vmatpush1.xpose.msra.mxu0 0.0
        %6242 = vmatprep.subr.mxu0 0.0
        %6243 = vmatpush1.xpose.msra.mxu0 0.0
        %6244 = vmatprep.subr.mxu0 0.0
        %6245 = vmatpush1.xpose.msra.mxu0 0.0
        %6246 = vmatprep.subr.mxu0 0.0
        %6247 = vmatpush1.xpose.msra.mxu0 0.0
        %6248 = vmatprep.subr.mxu0 0.0
        %6249 = vmatpush1.xpose.msra.mxu0 0.0
        %6250 = vmatprep.subr.mxu0 0.0
        %6251 = vmatpush1.xpose.msra.mxu0 0.0
        %6252 = vmatprep.subr.mxu0 0.0
        %6253 = vmatpush1.xpose.msra.mxu0 0.0
        %6254 = vmatprep.subr.mxu0 0.0
        %6255 = vmatpush1.xpose.msra.mxu0 0.0
        %6256 = vmatprep.subr.mxu0 0.0
        %6257 = vmatpush1.xpose.msra.mxu0 0.0
        %6258 = vmatprep.subr.mxu0 0.0
        %6259 = vmatpush1.xpose.msra.mxu0 0.0
        %6260 = vmatprep.subr.mxu0 0.0
        %6261 = vmatpush1.xpose.msra.mxu0 0.0
        %6262 = vmatprep.subr.mxu0 0.0
        %6263 = vmatpush1.xpose.msra.mxu0 0.0
        %6264 = vmatprep.mubr.f32.mxu0 0.0
        %6265 = vmatmul.mubr.f32.gmra.mrb[0].mxu0 %v6195
        %v6266 = vpop.f32.mrb[0].mxu0
        %v6267 = vadd.f32 0.0, %v6266
        %v6268 = vpop.f32.mrb[0].mxu0
        %6269 = vdwg.mxu0
        %v6271 = vsel %vm2232, %v4500, 0
        %v6274 = vsel %vm2232, %v5137, 0
        %6276 = vmatprep.subr.mxu0 0.0
        %6277 = vmatpush1.xpose.msra.mxu0 %v6274
        %6278 = vmatprep.subr.mxu0 0.0
        %6279 = vmatpush1.xpose.msra.mxu0 0.0
        %6280 = vmatprep.subr.mxu0 0.0
        %6281 = vmatpush1.xpose.msra.mxu0 0.0
        %6282 = vmatprep.subr.mxu0 0.0
        %6283 = vmatpush1.xpose.msra.mxu0 0.0
        %6284 = vmatprep.subr.mxu0 0.0
        %6285 = vmatpush1.xpose.msra.mxu0 0.0
        %6286 = vmatprep.subr.mxu0 0.0
        %6287 = vmatpush1.xpose.msra.mxu0 0.0
        %6288 = vmatprep.subr.mxu0 0.0
        %6289 = vmatpush1.xpose.msra.mxu0 0.0
        %6290 = vmatprep.subr.mxu0 0.0
        %6291 = vmatpush1.xpose.msra.mxu0 0.0
        %6292 = vmatprep.subr.mxu0 0.0
        %6293 = vmatpush1.xpose.msra.mxu0 0.0
        %6294 = vmatprep.subr.mxu0 0.0
        %6295 = vmatpush1.xpose.msra.mxu0 0.0
        %6296 = vmatprep.subr.mxu0 0.0
        %6297 = vmatpush1.xpose.msra.mxu0 0.0
        %6298 = vmatprep.subr.mxu0 0.0
        %6299 = vmatpush1.xpose.msra.mxu0 0.0
        %6300 = vmatprep.subr.mxu0 0.0
        %6301 = vmatpush1.xpose.msra.mxu0 0.0
        %6302 = vmatprep.subr.mxu0 0.0
        %6303 = vmatpush1.xpose.msra.mxu0 0.0
        %6304 = vmatprep.subr.mxu0 0.0
        %6305 = vmatpush1.xpose.msra.mxu0 0.0
        %6306 = vmatprep.subr.mxu0 0.0
        %6307 = vmatpush1.xpose.msra.mxu0 0.0
        %6308 = vmatprep.subr.mxu0 0.0
        %6309 = vmatpush1.xpose.msra.mxu0 0.0
        %6310 = vmatprep.subr.mxu0 0.0
        %6311 = vmatpush1.xpose.msra.mxu0 0.0
        %6312 = vmatprep.subr.mxu0 0.0
        %6313 = vmatpush1.xpose.msra.mxu0 0.0
        %6314 = vmatprep.subr.mxu0 0.0
        %6315 = vmatpush1.xpose.msra.mxu0 0.0
        %6316 = vmatprep.subr.mxu0 0.0
        %6317 = vmatpush1.xpose.msra.mxu0 0.0
        %6318 = vmatprep.subr.mxu0 0.0
        %6319 = vmatpush1.xpose.msra.mxu0 0.0
        %6320 = vmatprep.subr.mxu0 0.0
        %6321 = vmatpush1.xpose.msra.mxu0 0.0
        %6322 = vmatprep.subr.mxu0 0.0
        %6323 = vmatpush1.xpose.msra.mxu0 0.0
        %6324 = vmatprep.subr.mxu0 0.0
        %6325 = vmatpush1.xpose.msra.mxu0 0.0
        %6326 = vmatprep.subr.mxu0 0.0
        %6327 = vmatpush1.xpose.msra.mxu0 0.0
        %6328 = vmatprep.subr.mxu0 0.0
        %6329 = vmatpush1.xpose.msra.mxu0 0.0
        %6330 = vmatprep.subr.mxu0 0.0
        %6331 = vmatpush1.xpose.msra.mxu0 0.0
        %6332 = vmatprep.subr.mxu0 0.0
        %6333 = vmatpush1.xpose.msra.mxu0 0.0
        %6334 = vmatprep.subr.mxu0 0.0
        %6335 = vmatpush1.xpose.msra.mxu0 0.0
        %6336 = vmatprep.subr.mxu0 0.0
        %6337 = vmatpush1.xpose.msra.mxu0 0.0
        %6338 = vmatprep.subr.mxu0 0.0
        %6339 = vmatpush1.xpose.msra.mxu0 0.0
        %6340 = vmatprep.mubr.f32.mxu0 0.0
        %6341 = vmatmul.mubr.f32.gmra.mrb[0].mxu0 %v6271
        %v6342 = vpop.f32.mrb[0].mxu0
        %v6343 = vadd.f32 0.0, %v6342
        %v6344 = vpop.f32.mrb[0].mxu0
        %6345 = vdwg.mxu0
        %v6347 = vsel %vm2232, %v4570, 0
        %v6350 = vsel %vm2232, %v5207, 0
        %6352 = vmatprep.subr.mxu0 0.0
        %6353 = vmatpush1.xpose.msra.mxu0 %v6350
        %6354 = vmatprep.subr.mxu0 0.0
        %6355 = vmatpush1.xpose.msra.mxu0 0.0
        %6356 = vmatprep.subr.mxu0 0.0
        %6357 = vmatpush1.xpose.msra.mxu0 0.0
        %6358 = vmatprep.subr.mxu0 0.0
        %6359 = vmatpush1.xpose.msra.mxu0 0.0
        %6360 = vmatprep.subr.mxu0 0.0
        %6361 = vmatpush1.xpose.msra.mxu0 0.0
        %6362 = vmatprep.subr.mxu0 0.0
        %6363 = vmatpush1.xpose.msra.mxu0 0.0
        %6364 = vmatprep.subr.mxu0 0.0
        %6365 = vmatpush1.xpose.msra.mxu0 0.0
        %6366 = vmatprep.subr.mxu0 0.0
        %6367 = vmatpush1.xpose.msra.mxu0 0.0
        %6368 = vmatprep.subr.mxu0 0.0
        %6369 = vmatpush1.xpose.msra.mxu0 0.0
        %6370 = vmatprep.subr.mxu0 0.0
        %6371 = vmatpush1.xpose.msra.mxu0 0.0
        %6372 = vmatprep.subr.mxu0 0.0
        %6373 = vmatpush1.xpose.msra.mxu0 0.0
        %6374 = vmatprep.subr.mxu0 0.0
        %6375 = vmatpush1.xpose.msra.mxu0 0.0
        %6376 = vmatprep.subr.mxu0 0.0
        %6377 = vmatpush1.xpose.msra.mxu0 0.0
        %6378 = vmatprep.subr.mxu0 0.0
        %6379 = vmatpush1.xpose.msra.mxu0 0.0
        %6380 = vmatprep.subr.mxu0 0.0
        %6381 = vmatpush1.xpose.msra.mxu0 0.0
        %6382 = vmatprep.subr.mxu0 0.0
        %6383 = vmatpush1.xpose.msra.mxu0 0.0
        %6384 = vmatprep.subr.mxu0 0.0
        %6385 = vmatpush1.xpose.msra.mxu0 0.0
        %6386 = vmatprep.subr.mxu0 0.0
        %6387 = vmatpush1.xpose.msra.mxu0 0.0
        %6388 = vmatprep.subr.mxu0 0.0
        %6389 = vmatpush1.xpose.msra.mxu0 0.0
        %6390 = vmatprep.subr.mxu0 0.0
        %6391 = vmatpush1.xpose.msra.mxu0 0.0
        %6392 = vmatprep.subr.mxu0 0.0
        %6393 = vmatpush1.xpose.msra.mxu0 0.0
        %6394 = vmatprep.subr.mxu0 0.0
        %6395 = vmatpush1.xpose.msra.mxu0 0.0
        %6396 = vmatprep.subr.mxu0 0.0
        %6397 = vmatpush1.xpose.msra.mxu0 0.0
        %6398 = vmatprep.subr.mxu0 0.0
        %6399 = vmatpush1.xpose.msra.mxu0 0.0
        %6400 = vmatprep.subr.mxu0 0.0
        %6401 = vmatpush1.xpose.msra.mxu0 0.0
        %6402 = vmatprep.subr.mxu0 0.0
        %6403 = vmatpush1.xpose.msra.mxu0 0.0
        %6404 = vmatprep.subr.mxu0 0.0
        %6405 = vmatpush1.xpose.msra.mxu0 0.0
        %6406 = vmatprep.subr.mxu0 0.0
        %6407 = vmatpush1.xpose.msra.mxu0 0.0
        %6408 = vmatprep.subr.mxu0 0.0
        %6409 = vmatpush1.xpose.msra.mxu0 0.0
        %6410 = vmatprep.subr.mxu0 0.0
        %6411 = vmatpush1.xpose.msra.mxu0 0.0
        %6412 = vmatprep.subr.mxu0 0.0
        %6413 = vmatpush1.xpose.msra.mxu0 0.0
        %6414 = vmatprep.subr.mxu0 0.0
        %6415 = vmatpush1.xpose.msra.mxu0 0.0
        %6416 = vmatprep.mubr.f32.mxu0 0.0
        %6417 = vmatmul.mubr.f32.gmra.mrb[0].mxu0 %v6347
        %v6418 = vpop.f32.mrb[0].mxu0
        %v6419 = vadd.f32 0.0, %v6418
        %v6420 = vpop.f32.mrb[0].mxu0
        %6421 = vdwg.mxu0
        %v6423 = vsel %vm2232, %v4640, 0
        %v6426 = vsel %vm2232, %v5277, 0
        %6428 = vmatprep.subr.mxu0 0.0
        %6429 = vmatpush1.xpose.msra.mxu0 %v6426
        %6430 = vmatprep.subr.mxu0 0.0
        %6431 = vmatpush1.xpose.msra.mxu0 0.0
        %6432 = vmatprep.subr.mxu0 0.0
        %6433 = vmatpush1.xpose.msra.mxu0 0.0
        %6434 = vmatprep.subr.mxu0 0.0
        %6435 = vmatpush1.xpose.msra.mxu0 0.0
        %6436 = vmatprep.subr.mxu0 0.0
        %6437 = vmatpush1.xpose.msra.mxu0 0.0
        %6438 = vmatprep.subr.mxu0 0.0
        %6439 = vmatpush1.xpose.msra.mxu0 0.0
        %6440 = vmatprep.subr.mxu0 0.0
        %6441 = vmatpush1.xpose.msra.mxu0 0.0
        %6442 = vmatprep.subr.mxu0 0.0
        %6443 = vmatpush1.xpose.msra.mxu0 0.0
        %6444 = vmatprep.subr.mxu0 0.0
        %6445 = vmatpush1.xpose.msra.mxu0 0.0
        %6446 = vmatprep.subr.mxu0 0.0
        %6447 = vmatpush1.xpose.msra.mxu0 0.0
        %6448 = vmatprep.subr.mxu0 0.0
        %6449 = vmatpush1.xpose.msra.mxu0 0.0
        %6450 = vmatprep.subr.mxu0 0.0
        %6451 = vmatpush1.xpose.msra.mxu0 0.0
        %6452 = vmatprep.subr.mxu0 0.0
        %6453 = vmatpush1.xpose.msra.mxu0 0.0
        %6454 = vmatprep.subr.mxu0 0.0
        %6455 = vmatpush1.xpose.msra.mxu0 0.0
        %6456 = vmatprep.subr.mxu0 0.0
        %6457 = vmatpush1.xpose.msra.mxu0 0.0
        %6458 = vmatprep.subr.mxu0 0.0
        %6459 = vmatpush1.xpose.msra.mxu0 0.0
        %6460 = vmatprep.subr.mxu0 0.0
        %6461 = vmatpush1.xpose.msra.mxu0 0.0
        %6462 = vmatprep.subr.mxu0 0.0
        %6463 = vmatpush1.xpose.msra.mxu0 0.0
        %6464 = vmatprep.subr.mxu0 0.0
        %6465 = vmatpush1.xpose.msra.mxu0 0.0
        %6466 = vmatprep.subr.mxu0 0.0
        %6467 = vmatpush1.xpose.msra.mxu0 0.0
        %6468 = vmatprep.subr.mxu0 0.0
        %6469 = vmatpush1.xpose.msra.mxu0 0.0
        %6470 = vmatprep.subr.mxu0 0.0
        %6471 = vmatpush1.xpose.msra.mxu0 0.0
        %6472 = vmatprep.subr.mxu0 0.0
        %6473 = vmatpush1.xpose.msra.mxu0 0.0
        %6474 = vmatprep.subr.mxu0 0.0
        %6475 = vmatpush1.xpose.msra.mxu0 0.0
        %6476 = vmatprep.subr.mxu0 0.0
        %6477 = vmatpush1.xpose.msra.mxu0 0.0
        %6478 = vmatprep.subr.mxu0 0.0
        %6479 = vmatpush1.xpose.msra.mxu0 0.0
        %6480 = vmatprep.subr.mxu0 0.0
        %6481 = vmatpush1.xpose.msra.mxu0 0.0
        %6482 = vmatprep.subr.mxu0 0.0
        %6483 = vmatpush1.xpose.msra.mxu0 0.0
        %6484 = vmatprep.subr.mxu0 0.0
        %6485 = vmatpush1.xpose.msra.mxu0 0.0
        %6486 = vmatprep.subr.mxu0 0.0
        %6487 = vmatpush1.xpose.msra.mxu0 0.0
        %6488 = vmatprep.subr.mxu0 0.0
        %6489 = vmatpush1.xpose.msra.mxu0 0.0
        %6490 = vmatprep.subr.mxu0 0.0
        %6491 = vmatpush1.xpose.msra.mxu0 0.0
        %6492 = vmatprep.mubr.f32.mxu0 0.0
        %6493 = vmatmul.mubr.f32.gmra.mrb[0].mxu0 %v6423
        %v6494 = vpop.f32.mrb[0].mxu0
        %v6495 = vadd.f32 0.0, %v6494
        %v6496 = vpop.f32.mrb[0].mxu0
        %6497 = vdwg.mxu0
        %v6499 = vsel %vm2232, %v4710, 0
        %v6502 = vsel %vm2232, %v5347, 0
        %6504 = vmatprep.subr.mxu0 0.0
        %6505 = vmatpush1.xpose.msra.mxu0 %v6502
        %6506 = vmatprep.subr.mxu0 0.0
        %6507 = vmatpush1.xpose.msra.mxu0 0.0
        %6508 = vmatprep.subr.mxu0 0.0
        %6509 = vmatpush1.xpose.msra.mxu0 0.0
        %6510 = vmatprep.subr.mxu0 0.0
        %6511 = vmatpush1.xpose.msra.mxu0 0.0
        %6512 = vmatprep.subr.mxu0 0.0
        %6513 = vmatpush1.xpose.msra.mxu0 0.0
        %6514 = vmatprep.subr.mxu0 0.0
        %6515 = vmatpush1.xpose.msra.mxu0 0.0
        %6516 = vmatprep.subr.mxu0 0.0
        %6517 = vmatpush1.xpose.msra.mxu0 0.0
        %6518 = vmatprep.subr.mxu0 0.0
        %6519 = vmatpush1.xpose.msra.mxu0 0.0
        %6520 = vmatprep.subr.mxu0 0.0
        %6521 = vmatpush1.xpose.msra.mxu0 0.0
        %6522 = vmatprep.subr.mxu0 0.0
        %6523 = vmatpush1.xpose.msra.mxu0 0.0
        %6524 = vmatprep.subr.mxu0 0.0
        %6525 = vmatpush1.xpose.msra.mxu0 0.0
        %6526 = vmatprep.subr.mxu0 0.0
        %6527 = vmatpush1.xpose.msra.mxu0 0.0
        %6528 = vmatprep.subr.mxu0 0.0
        %6529 = vmatpush1.xpose.msra.mxu0 0.0
        %6530 = vmatprep.subr.mxu0 0.0
        %6531 = vmatpush1.xpose.msra.mxu0 0.0
        %6532 = vmatprep.subr.mxu0 0.0
        %6533 = vmatpush1.xpose.msra.mxu0 0.0
        %6534 = vmatprep.subr.mxu0 0.0
        %6535 = vmatpush1.xpose.msra.mxu0 0.0
        %6536 = vmatprep.subr.mxu0 0.0
        %6537 = vmatpush1.xpose.msra.mxu0 0.0
        %6538 = vmatprep.subr.mxu0 0.0
        %6539 = vmatpush1.xpose.msra.mxu0 0.0
        %6540 = vmatprep.subr.mxu0 0.0
        %6541 = vmatpush1.xpose.msra.mxu0 0.0
        %6542 = vmatprep.subr.mxu0 0.0
        %6543 = vmatpush1.xpose.msra.mxu0 0.0
        %6544 = vmatprep.subr.mxu0 0.0
        %6545 = vmatpush1.xpose.msra.mxu0 0.0
        %6546 = vmatprep.subr.mxu0 0.0
        %6547 = vmatpush1.xpose.msra.mxu0 0.0
        %6548 = vmatprep.subr.mxu0 0.0
        %6549 = vmatpush1.xpose.msra.mxu0 0.0
        %6550 = vmatprep.subr.mxu0 0.0
        %6551 = vmatpush1.xpose.msra.mxu0 0.0
        %6552 = vmatprep.subr.mxu0 0.0
        %6553 = vmatpush1.xpose.msra.mxu0 0.0
        %6554 = vmatprep.subr.mxu0 0.0
        %6555 = vmatpush1.xpose.msra.mxu0 0.0
        %6556 = vmatprep.subr.mxu0 0.0
        %6557 = vmatpush1.xpose.msra.mxu0 0.0
        %6558 = vmatprep.subr.mxu0 0.0
        %6559 = vmatpush1.xpose.msra.mxu0 0.0
        %6560 = vmatprep.subr.mxu0 0.0
        %6561 = vmatpush1.xpose.msra.mxu0 0.0
        %6562 = vmatprep.subr.mxu0 0.0
        %6563 = vmatpush1.xpose.msra.mxu0 0.0
        %6564 = vmatprep.subr.mxu0 0.0
        %6565 = vmatpush1.xpose.msra.mxu0 0.0
        %6566 = vmatprep.subr.mxu0 0.0
        %6567 = vmatpush1.xpose.msra.mxu0 0.0
        %6568 = vmatprep.mubr.f32.mxu0 0.0
        %6569 = vmatmul.mubr.f32.gmra.mrb[0].mxu0 %v6499
        %v6570 = vpop.f32.mrb[0].mxu0
        %v6571 = vadd.f32 0.0, %v6570
        %v6572 = vpop.f32.mrb[0].mxu0
        %6573 = vdwg.mxu0
        %v6575 = vsel %vm2232, %v4780, 0
        %v6578 = vsel %vm2232, %v5417, 0
        %6580 = vmatprep.subr.mxu0 0.0
        %6581 = vmatpush1.xpose.msra.mxu0 %v6578
        %6582 = vmatprep.subr.mxu0 0.0
        %6583 = vmatpush1.xpose.msra.mxu0 0.0
        %6584 = vmatprep.subr.mxu0 0.0
        %6585 = vmatpush1.xpose.msra.mxu0 0.0
        %6586 = vmatprep.subr.mxu0 0.0
        %6587 = vmatpush1.xpose.msra.mxu0 0.0
        %6588 = vmatprep.subr.mxu0 0.0
        %6589 = vmatpush1.xpose.msra.mxu0 0.0
        %6590 = vmatprep.subr.mxu0 0.0
        %6591 = vmatpush1.xpose.msra.mxu0 0.0
        %6592 = vmatprep.subr.mxu0 0.0
        %6593 = vmatpush1.xpose.msra.mxu0 0.0
        %6594 = vmatprep.subr.mxu0 0.0
        %6595 = vmatpush1.xpose.msra.mxu0 0.0
        %6596 = vmatprep.subr.mxu0 0.0
        %6597 = vmatpush1.xpose.msra.mxu0 0.0
        %6598 = vmatprep.subr.mxu0 0.0
        %6599 = vmatpush1.xpose.msra.mxu0 0.0
        %6600 = vmatprep.subr.mxu0 0.0
        %6601 = vmatpush1.xpose.msra.mxu0 0.0
        %6602 = vmatprep.subr.mxu0 0.0
        %6603 = vmatpush1.xpose.msra.mxu0 0.0
        %6604 = vmatprep.subr.mxu0 0.0
        %6605 = vmatpush1.xpose.msra.mxu0 0.0
        %6606 = vmatprep.subr.mxu0 0.0
        %6607 = vmatpush1.xpose.msra.mxu0 0.0
        %6608 = vmatprep.subr.mxu0 0.0
        %6609 = vmatpush1.xpose.msra.mxu0 0.0
        %6610 = vmatprep.subr.mxu0 0.0
        %6611 = vmatpush1.xpose.msra.mxu0 0.0
        %6612 = vmatprep.subr.mxu0 0.0
        %6613 = vmatpush1.xpose.msra.mxu0 0.0
        %6614 = vmatprep.subr.mxu0 0.0
        %6615 = vmatpush1.xpose.msra.mxu0 0.0
        %6616 = vmatprep.subr.mxu0 0.0
        %6617 = vmatpush1.xpose.msra.mxu0 0.0
        %6618 = vmatprep.subr.mxu0 0.0
        %6619 = vmatpush1.xpose.msra.mxu0 0.0
        %6620 = vmatprep.subr.mxu0 0.0
        %6621 = vmatpush1.xpose.msra.mxu0 0.0
        %6622 = vmatprep.subr.mxu0 0.0
        %6623 = vmatpush1.xpose.msra.mxu0 0.0
        %6624 = vmatprep.subr.mxu0 0.0
        %6625 = vmatpush1.xpose.msra.mxu0 0.0
        %6626 = vmatprep.subr.mxu0 0.0
        %6627 = vmatpush1.xpose.msra.mxu0 0.0
        %6628 = vmatprep.subr.mxu0 0.0
        %6629 = vmatpush1.xpose.msra.mxu0 0.0
        %6630 = vmatprep.subr.mxu0 0.0
        %6631 = vmatpush1.xpose.msra.mxu0 0.0
        %6632 = vmatprep.subr.mxu0 0.0
        %6633 = vmatpush1.xpose.msra.mxu0 0.0
        %6634 = vmatprep.subr.mxu0 0.0
        %6635 = vmatpush1.xpose.msra.mxu0 0.0
        %6636 = vmatprep.subr.mxu0 0.0
        %6637 = vmatpush1.xpose.msra.mxu0 0.0
        %6638 = vmatprep.subr.mxu0 0.0
        %6639 = vmatpush1.xpose.msra.mxu0 0.0
        %6640 = vmatprep.subr.mxu0 0.0
        %6641 = vmatpush1.xpose.msra.mxu0 0.0
        %6642 = vmatprep.subr.mxu0 0.0
        %6643 = vmatpush1.xpose.msra.mxu0 0.0
        %6644 = vmatprep.mubr.f32.mxu0 0.0
        %6645 = vmatmul.mubr.f32.gmra.mrb[0].mxu0 %v6575
        %v6646 = vpop.f32.mrb[0].mxu0
        %v6647 = vadd.f32 0.0, %v6646
        %v6648 = vpop.f32.mrb[0].mxu0
        %6649 = vdwg.mxu0
        %v6651 = vsel %vm2232, %v4850, 0
        %v6654 = vsel %vm2232, %v5487, 0
        %6656 = vmatprep.subr.mxu0 0.0
        %6657 = vmatpush1.xpose.msra.mxu0 %v6654
        %6658 = vmatprep.subr.mxu0 0.0
        %6659 = vmatpush1.xpose.msra.mxu0 0.0
        %6660 = vmatprep.subr.mxu0 0.0
        %6661 = vmatpush1.xpose.msra.mxu0 0.0
        %6662 = vmatprep.subr.mxu0 0.0
        %6663 = vmatpush1.xpose.msra.mxu0 0.0
        %6664 = vmatprep.subr.mxu0 0.0
        %6665 = vmatpush1.xpose.msra.mxu0 0.0
        %6666 = vmatprep.subr.mxu0 0.0
        %6667 = vmatpush1.xpose.msra.mxu0 0.0
        %6668 = vmatprep.subr.mxu0 0.0
        %6669 = vmatpush1.xpose.msra.mxu0 0.0
        %6670 = vmatprep.subr.mxu0 0.0
        %6671 = vmatpush1.xpose.msra.mxu0 0.0
        %6672 = vmatprep.subr.mxu0 0.0
        %6673 = vmatpush1.xpose.msra.mxu0 0.0
        %6674 = vmatprep.subr.mxu0 0.0
        %6675 = vmatpush1.xpose.msra.mxu0 0.0
        %6676 = vmatprep.subr.mxu0 0.0
        %6677 = vmatpush1.xpose.msra.mxu0 0.0
        %6678 = vmatprep.subr.mxu0 0.0
        %6679 = vmatpush1.xpose.msra.mxu0 0.0
        %6680 = vmatprep.subr.mxu0 0.0
        %6681 = vmatpush1.xpose.msra.mxu0 0.0
        %6682 = vmatprep.subr.mxu0 0.0
        %6683 = vmatpush1.xpose.msra.mxu0 0.0
        %6684 = vmatprep.subr.mxu0 0.0
        %6685 = vmatpush1.xpose.msra.mxu0 0.0
        %6686 = vmatprep.subr.mxu0 0.0
        %6687 = vmatpush1.xpose.msra.mxu0 0.0
        %6688 = vmatprep.subr.mxu0 0.0
        %6689 = vmatpush1.xpose.msra.mxu0 0.0
        %6690 = vmatprep.subr.mxu0 0.0
        %6691 = vmatpush1.xpose.msra.mxu0 0.0
        %6692 = vmatprep.subr.mxu0 0.0
        %6693 = vmatpush1.xpose.msra.mxu0 0.0
        %6694 = vmatprep.subr.mxu0 0.0
        %6695 = vmatpush1.xpose.msra.mxu0 0.0
        %6696 = vmatprep.subr.mxu0 0.0
        %6697 = vmatpush1.xpose.msra.mxu0 0.0
        %6698 = vmatprep.subr.mxu0 0.0
        %6699 = vmatpush1.xpose.msra.mxu0 0.0
        %6700 = vmatprep.subr.mxu0 0.0
        %6701 = vmatpush1.xpose.msra.mxu0 0.0
        %6702 = vmatprep.subr.mxu0 0.0
        %6703 = vmatpush1.xpose.msra.mxu0 0.0
        %6704 = vmatprep.subr.mxu0 0.0
        %6705 = vmatpush1.xpose.msra.mxu0 0.0
        %6706 = vmatprep.subr.mxu0 0.0
        %6707 = vmatpush1.xpose.msra.mxu0 0.0
        %6708 = vmatprep.subr.mxu0 0.0
        %6709 = vmatpush1.xpose.msra.mxu0 0.0
        %6710 = vmatprep.subr.mxu0 0.0
        %6711 = vmatpush1.xpose.msra.mxu0 0.0
        %6712 = vmatprep.subr.mxu0 0.0
        %6713 = vmatpush1.xpose.msra.mxu0 0.0
        %6714 = vmatprep.subr.mxu0 0.0
        %6715 = vmatpush1.xpose.msra.mxu0 0.0
        %6716 = vmatprep.subr.mxu0 0.0
        %6717 = vmatpush1.xpose.msra.mxu0 0.0
        %6718 = vmatprep.subr.mxu0 0.0
        %6719 = vmatpush1.xpose.msra.mxu0 0.0
        %6720 = vmatprep.mubr.f32.mxu0 0.0
        %6721 = vmatmul.mubr.f32.gmra.mrb[0].mxu0 %v6651
        %v6722 = vpop.f32.mrb[0].mxu0
        %v6723 = vadd.f32 0.0, %v6722
        %v6724 = vpop.f32.mrb[0].mxu0
        %6725 = vdwg.mxu0
        %v6727 = vsel %vm2232, %v4920, 0
        %v6730 = vsel %vm2232, %v5557, 0
        %6732 = vmatprep.subr.mxu0 0.0
        %6733 = vmatpush1.xpose.msra.mxu0 %v6730
        %6734 = vmatprep.subr.mxu0 0.0
        %6735 = vmatpush1.xpose.msra.mxu0 0.0
        %6736 = vmatprep.subr.mxu0 0.0
        %6737 = vmatpush1.xpose.msra.mxu0 0.0
        %6738 = vmatprep.subr.mxu0 0.0
        %6739 = vmatpush1.xpose.msra.mxu0 0.0
        %6740 = vmatprep.subr.mxu0 0.0
        %6741 = vmatpush1.xpose.msra.mxu0 0.0
        %6742 = vmatprep.subr.mxu0 0.0
        %6743 = vmatpush1.xpose.msra.mxu0 0.0
        %6744 = vmatprep.subr.mxu0 0.0
        %6745 = vmatpush1.xpose.msra.mxu0 0.0
        %6746 = vmatprep.subr.mxu0 0.0
        %6747 = vmatpush1.xpose.msra.mxu0 0.0
        %6748 = vmatprep.subr.mxu0 0.0
        %6749 = vmatpush1.xpose.msra.mxu0 0.0
        %6750 = vmatprep.subr.mxu0 0.0
        %6751 = vmatpush1.xpose.msra.mxu0 0.0
        %6752 = vmatprep.subr.mxu0 0.0
        %6753 = vmatpush1.xpose.msra.mxu0 0.0
        %6754 = vmatprep.subr.mxu0 0.0
        %6755 = vmatpush1.xpose.msra.mxu0 0.0
        %6756 = vmatprep.subr.mxu0 0.0
        %6757 = vmatpush1.xpose.msra.mxu0 0.0
        %6758 = vmatprep.subr.mxu0 0.0
        %6759 = vmatpush1.xpose.msra.mxu0 0.0
        %6760 = vmatprep.subr.mxu0 0.0
        %6761 = vmatpush1.xpose.msra.mxu0 0.0
        %6762 = vmatprep.subr.mxu0 0.0
        %6763 = vmatpush1.xpose.msra.mxu0 0.0
        %6764 = vmatprep.subr.mxu0 0.0
        %6765 = vmatpush1.xpose.msra.mxu0 0.0
        %6766 = vmatprep.subr.mxu0 0.0
        %6767 = vmatpush1.xpose.msra.mxu0 0.0
        %6768 = vmatprep.subr.mxu0 0.0
        %6769 = vmatpush1.xpose.msra.mxu0 0.0
        %6770 = vmatprep.subr.mxu0 0.0
        %6771 = vmatpush1.xpose.msra.mxu0 0.0
        %6772 = vmatprep.subr.mxu0 0.0
        %6773 = vmatpush1.xpose.msra.mxu0 0.0
        %6774 = vmatprep.subr.mxu0 0.0
        %6775 = vmatpush1.xpose.msra.mxu0 0.0
        %6776 = vmatprep.subr.mxu0 0.0
        %6777 = vmatpush1.xpose.msra.mxu0 0.0
        %6778 = vmatprep.subr.mxu0 0.0
        %6779 = vmatpush1.xpose.msra.mxu0 0.0
        %6780 = vmatprep.subr.mxu0 0.0
        %6781 = vmatpush1.xpose.msra.mxu0 0.0
        %6782 = vmatprep.subr.mxu0 0.0
        %6783 = vmatpush1.xpose.msra.mxu0 0.0
        %6784 = vmatprep.subr.mxu0 0.0
        %6785 = vmatpush1.xpose.msra.mxu0 0.0
        %6786 = vmatprep.subr.mxu0 0.0
        %6787 = vmatpush1.xpose.msra.mxu0 0.0
        %6788 = vmatprep.subr.mxu0 0.0
        %6789 = vmatpush1.xpose.msra.mxu0 0.0
        %6790 = vmatprep.subr.mxu0 0.0
        %6791 = vmatpush1.xpose.msra.mxu0 0.0
        %6792 = vmatprep.subr.mxu0 0.0
        %6793 = vmatpush1.xpose.msra.mxu0 0.0
        %6794 = vmatprep.subr.mxu0 0.0
        %6795 = vmatpush1.xpose.msra.mxu0 0.0
        %6796 = vmatprep.mubr.f32.mxu0 0.0
        %6797 = vmatmul.mubr.f32.gmra.mrb[0].mxu0 %v6727
        %v6798 = vpop.f32.mrb[0].mxu0
        %v6799 = vadd.f32 0.0, %v6798
        %v6800 = vpop.f32.mrb[0].mxu0
        %6801 = vdwg.mxu0
        %v6802 = vmul.f32 %v6267, 0.17677669
        %v6803 = vmul.f32 %v6343, 0.17677669
        %v6804 = vmul.f32 %v6419, 0.17677669
        %v6805 = vmul.f32 %v6495, 0.17677669
        %v6806 = vmul.f32 %v6571, 0.17677669
        %v6807 = vmul.f32 %v6647, 0.17677669
        %v6808 = vmul.f32 %v6723, 0.17677669
        %v6809 = vmul.f32 %v6799, 0.17677669
        %vm6810 = vcmask 31744
        %v6811 = vsel %vm6810, %v6802, -inf
        %6812 = vmax.xlane.f32.xlu0 %v6811
        %v6813 = vpop.xlane.xlu0 %6812
        %v6814 = vsel %vm6810, %v6803, -inf
        %6815 = vmax.xlane.f32.xlu0 %v6814
        %v6816 = vpop.xlane.xlu0 %6815
        %v6817 = vsel %vm6810, %v6804, -inf
        %6818 = vmax.xlane.f32.xlu0 %v6817
        %v6819 = vpop.xlane.xlu0 %6818
        %v6820 = vsel %vm6810, %v6805, -inf
        %6821 = vmax.xlane.f32.xlu0 %v6820
        %v6822 = vpop.xlane.xlu0 %6821
        %v6823 = vsel %vm6810, %v6806, -inf
        %6824 = vmax.xlane.f32.xlu0 %v6823
        %v6825 = vpop.xlane.xlu0 %6824
        %v6826 = vsel %vm6810, %v6807, -inf
        %6827 = vmax.xlane.f32.xlu0 %v6826
        %v6828 = vpop.xlane.xlu0 %6827
        %v6829 = vsel %vm6810, %v6808, -inf
        %6830 = vmax.xlane.f32.xlu0 %v6829
        %v6831 = vpop.xlane.xlu0 %6830
        %v6832 = vsel %vm6810, %v6809, -inf
        %6833 = vmax.xlane.f32.xlu0 %v6832
        %v6834 = vpop.xlane.xlu0 %6833
        %v6835 = vsub.f32 %v6802, %v6813
        %v6836 = vsub.f32 %v6803, %v6816
        %v6837 = vsub.f32 %v6804, %v6819
        %v6838 = vsub.f32 %v6805, %v6822
        %v6839 = vsub.f32 %v6806, %v6825
        %v6840 = vsub.f32 %v6807, %v6828
        %v6841 = vsub.f32 %v6808, %v6831
        %v6842 = vsub.f32 %v6809, %v6834
        %v6843 = vmul.f32 %v6835, 1.442695
        %v6844 = vpow.pop %v6843
        %v6845 = vmul.f32 %v6836, 1.442695
        %v6846 = vpow.pop %v6845
        %v6847 = vmul.f32 %v6837, 1.442695
        %v6848 = vpow.pop %v6847
        %v6849 = vmul.f32 %v6838, 1.442695
        %v6850 = vpow.pop %v6849
        %v6851 = vmul.f32 %v6839, 1.442695
        %v6852 = vpow.pop %v6851
        %v6853 = vmul.f32 %v6840, 1.442695
        %v6854 = vpow.pop %v6853
        %v6855 = vmul.f32 %v6841, 1.442695
        %v6856 = vpow.pop %v6855
        %v6857 = vmul.f32 %v6842, 1.442695
        %v6858 = vpow.pop %v6857
        %v6859 = vsel %vm6810, %v6844, 0.0
        %6860 = vadd.xlane.f32.xlu0 %v6859
        %v6861 = vpop.xlane.xlu0 %6860
        %v6862 = vsel %vm6810, %v6846, 0.0
        %6863 = vadd.xlane.f32.xlu0 %v6862
        %v6864 = vpop.xlane.xlu0 %6863
        %v6865 = vsel %vm6810, %v6848, 0.0
        %6866 = vadd.xlane.f32.xlu0 %v6865
        %v6867 = vpop.xlane.xlu0 %6866
        %v6868 = vsel %vm6810, %v6850, 0.0
        %6869 = vadd.xlane.f32.xlu0 %v6868
        %v6870 = vpop.xlane.xlu0 %6869
        %v6871 = vsel %vm6810, %v6852, 0.0
        %6872 = vadd.xlane.f32.xlu0 %v6871
        %v6873 = vpop.xlane.xlu0 %6872
        %v6874 = vsel %vm6810, %v6854, 0.0
        %6875 = vadd.xlane.f32.xlu0 %v6874
        %v6876 = vpop.xlane.xlu0 %6875
        %v6877 = vsel %vm6810, %v6856, 0.0
        %6878 = vadd.xlane.f32.xlu0 %v6877
        %v6879 = vpop.xlane.xlu0 %6878
        %v6880 = vsel %vm6810, %v6858, 0.0
        %6881 = vadd.xlane.f32.xlu0 %v6880
        %v6882 = vpop.xlane.xlu0 %6881
        %v6883 = vrcp.pop %v6861
        %v6884 = vmul.f32 %v6844, %v6883
        %v6885 = vrcp.pop %v6864
        %v6886 = vmul.f32 %v6846, %v6885
        %v6887 = vrcp.pop %v6867
        %v6888 = vmul.f32 %v6848, %v6887
        %v6889 = vrcp.pop %v6870
        %v6890 = vmul.f32 %v6850, %v6889
        %v6891 = vrcp.pop %v6873
        %v6892 = vmul.f32 %v6852, %v6891
        %v6893 = vrcp.pop %v6876
        %v6894 = vmul.f32 %v6854, %v6893
        %v6895 = vrcp.pop %v6879
        %v6896 = vmul.f32 %v6856, %v6895
        %v6897 = vrcp.pop %v6882
        %v6898 = vmul.f32 %v6858, %v6897
        %v6900 = vsel %vm6810, %v6884, 0
        %vm6902 = vcmask 1043456
        %v6904 = vsel %vm6902, %v5701, 0
        %6906 = vmatprep.subr.mxu0 0.0
        %6907 = vmatpush1.msra.mxu0 %v6904
        %6908 = vmatprep.subr.mxu0 0.0
        %6909 = vmatpush1.msra.mxu0 0.0
        %6910 = vmatprep.subr.mxu0 0.0
        %6911 = vmatpush1.msra.mxu0 0.0
        %6912 = vmatprep.subr.mxu0 0.0
        %6913 = vmatpush1.msra.mxu0 0.0
        %6914 = vmatprep.subr.mxu0 0.0
        %6915 = vmatpush1.msra.mxu0 0.0
        %6916 = vmatprep.subr.mxu0 0.0
        %6917 = vmatpush1.msra.mxu0 0.0
        %6918 = vmatprep.subr.mxu0 0.0
        %6919 = vmatpush1.msra.mxu0 0.0
        %6920 = vmatprep.subr.mxu0 0.0
        %6921 = vmatpush1.msra.mxu0 0.0
        %6922 = vmatprep.subr.mxu0 0.0
        %6923 = vmatpush1.msra.mxu0 0.0
        %6924 = vmatprep.subr.mxu0 0.0
        %6925 = vmatpush1.msra.mxu0 0.0
        %6926 = vmatprep.subr.mxu0 0.0
        %6927 = vmatpush1.msra.mxu0 0.0
        %6928 = vmatprep.subr.mxu0 0.0
        %6929 = vmatpush1.msra.mxu0 0.0
        %6930 = vmatprep.subr.mxu0 0.0
        %6931 = vmatpush1.msra.mxu0 0.0
        %6932 = vmatprep.subr.mxu0 0.0
        %6933 = vmatpush1.msra.mxu0 0.0
        %6934 = vmatprep.subr.mxu0 0.0
        %6935 = vmatpush1.msra.mxu0 0.0
        %6936 = vmatprep.subr.mxu0 0.0
        %6937 = vmatpush1.msra.mxu0 0.0
        %6938 = vmatprep.subr.mxu0 0.0
        %6939 = vmatpush1.msra.mxu0 0.0
        %6940 = vmatprep.subr.mxu0 0.0
        %6941 = vmatpush1.msra.mxu0 0.0
        %6942 = vmatprep.subr.mxu0 0.0
        %6943 = vmatpush1.msra.mxu0 0.0
        %6944 = vmatprep.subr.mxu0 0.0
        %6945 = vmatpush1.msra.mxu0 0.0
        %6946 = vmatprep.subr.mxu0 0.0
        %6947 = vmatpush1.msra.mxu0 0.0
        %6948 = vmatprep.subr.mxu0 0.0
        %6949 = vmatpush1.msra.mxu0 0.0
        %6950 = vmatprep.subr.mxu0 0.0
        %6951 = vmatpush1.msra.mxu0 0.0
        %6952 = vmatprep.subr.mxu0 0.0
        %6953 = vmatpush1.msra.mxu0 0.0
        %6954 = vmatprep.subr.mxu0 0.0
        %6955 = vmatpush1.msra.mxu0 0.0
        %6956 = vmatprep.subr.mxu0 0.0
        %6957 = vmatpush1.msra.mxu0 0.0
        %6958 = vmatprep.subr.mxu0 0.0
        %6959 = vmatpush1.msra.mxu0 0.0
        %6960 = vmatprep.subr.mxu0 0.0
        %6961 = vmatpush1.msra.mxu0 0.0
        %6962 = vmatprep.subr.mxu0 0.0
        %6963 = vmatpush1.msra.mxu0 0.0
        %6964 = vmatprep.subr.mxu0 0.0
        %6965 = vmatpush1.msra.mxu0 0.0
        %6966 = vmatprep.subr.mxu0 0.0
        %6967 = vmatpush1.msra.mxu0 0.0
        %6968 = vmatprep.subr.mxu0 0.0
        %6969 = vmatpush1.msra.mxu0 0.0
        %6970 = vmatprep.mubr.f32.mxu0 0.0
        %6971 = vmatmul.mubr.f32.gmra.mrb[0].mxu0 %v6900
        %v6972 = vpop.f32.mrb[0].mxu0
        %v6973 = vadd.f32 0.0, %v6972
        %v6974 = vpop.f32.mrb[0].mxu0
        %6975 = vdwg.mxu0
        %v6977 = vsel %vm6810, %v6886, 0
        %v6980 = vsel %vm6902, %v5771, 0
        %6982 = vmatprep.subr.mxu0 0.0
        %6983 = vmatpush1.msra.mxu0 %v6980
        %6984 = vmatprep.subr.mxu0 0.0
        %6985 = vmatpush1.msra.mxu0 0.0
        %6986 = vmatprep.subr.mxu0 0.0
        %6987 = vmatpush1.msra.mxu0 0.0
        %6988 = vmatprep.subr.mxu0 0.0
        %6989 = vmatpush1.msra.mxu0 0.0
        %6990 = vmatprep.subr.mxu0 0.0
        %6991 = vmatpush1.msra.mxu0 0.0
        %6992 = vmatprep.subr.mxu0 0.0
        %6993 = vmatpush1.msra.mxu0 0.0
        %6994 = vmatprep.subr.mxu0 0.0
        %6995 = vmatpush1.msra.mxu0 0.0
        %6996 = vmatprep.subr.mxu0 0.0
        %6997 = vmatpush1.msra.mxu0 0.0
        %6998 = vmatprep.subr.mxu0 0.0
        %6999 = vmatpush1.msra.mxu0 0.0
        %7000 = vmatprep.subr.mxu0 0.0
        %7001 = vmatpush1.msra.mxu0 0.0
        %7002 = vmatprep.subr.mxu0 0.0
        %7003 = vmatpush1.msra.mxu0 0.0
        %7004 = vmatprep.subr.mxu0 0.0
        %7005 = vmatpush1.msra.mxu0 0.0
        %7006 = vmatprep.subr.mxu0 0.0
        %7007 = vmatpush1.msra.mxu0 0.0
        %7008 = vmatprep.subr.mxu0 0.0
        %7009 = vmatpush1.msra.mxu0 0.0
        %7010 = vmatprep.subr.mxu0 0.0
        %7011 = vmatpush1.msra.mxu0 0.0
        %7012 = vmatprep.subr.mxu0 0.0
        %7013 = vmatpush1.msra.mxu0 0.0
        %7014 = vmatprep.subr.mxu0 0.0
        %7015 = vmatpush1.msra.mxu0 0.0
        %7016 = vmatprep.subr.mxu0 0.0
        %7017 = vmatpush1.msra.mxu0 0.0
        %7018 = vmatprep.subr.mxu0 0.0
        %7019 = vmatpush1.msra.mxu0 0.0
        %7020 = vmatprep.subr.mxu0 0.0
        %7021 = vmatpush1.msra.mxu0 0.0
        %7022 = vmatprep.subr.mxu0 0.0
        %7023 = vmatpush1.msra.mxu0 0.0
        %7024 = vmatprep.subr.mxu0 0.0
        %7025 = vmatpush1.msra.mxu0 0.0
        %7026 = vmatprep.subr.mxu0 0.0
        %7027 = vmatpush1.msra.mxu0 0.0
        %7028 = vmatprep.subr.mxu0 0.0
        %7029 = vmatpush1.msra.mxu0 0.0
        %7030 = vmatprep.subr.mxu0 0.0
        %7031 = vmatpush1.msra.mxu0 0.0
        %7032 = vmatprep.subr.mxu0 0.0
        %7033 = vmatpush1.msra.mxu0 0.0
        %7034 = vmatprep.subr.mxu0 0.0
        %7035 = vmatpush1.msra.mxu0 0.0
        %7036 = vmatprep.subr.mxu0 0.0
        %7037 = vmatpush1.msra.mxu0 0.0
        %7038 = vmatprep.subr.mxu0 0.0
        %7039 = vmatpush1.msra.mxu0 0.0
        %7040 = vmatprep.subr.mxu0 0.0
        %7041 = vmatpush1.msra.mxu0 0.0
        %7042 = vmatprep.subr.mxu0 0.0
        %7043 = vmatpush1.msra.mxu0 0.0
        %7044 = vmatprep.subr.mxu0 0.0
        %7045 = vmatpush1.msra.mxu0 0.0
        %7046 = vmatprep.mubr.f32.mxu0 0.0
        %7047 = vmatmul.mubr.f32.gmra.mrb[0].mxu0 %v6977
        %v7048 = vpop.f32.mrb[0].mxu0
        %v7049 = vadd.f32 0.0, %v7048
        %v7050 = vpop.f32.mrb[0].mxu0
        %7051 = vdwg.mxu0
        %v7053 = vsel %vm6810, %v6888, 0
        %v7056 = vsel %vm6902, %v5841, 0
        %7058 = vmatprep.subr.mxu0 0.0
        %7059 = vmatpush1.msra.mxu0 %v7056
        %7060 = vmatprep.subr.mxu0 0.0
        %7061 = vmatpush1.msra.mxu0 0.0
        %7062 = vmatprep.subr.mxu0 0.0
        %7063 = vmatpush1.msra.mxu0 0.0
        %7064 = vmatprep.subr.mxu0 0.0
        %7065 = vmatpush1.msra.mxu0 0.0
        %7066 = vmatprep.subr.mxu0 0.0
        %7067 = vmatpush1.msra.mxu0 0.0
        %7068 = vmatprep.subr.mxu0 0.0
        %7069 = vmatpush1.msra.mxu0 0.0
        %7070 = vmatprep.subr.mxu0 0.0
        %7071 = vmatpush1.msra.mxu0 0.0
        %7072 = vmatprep.subr.mxu0 0.0
        %7073 = vmatpush1.msra.mxu0 0.0
        %7074 = vmatprep.subr.mxu0 0.0
        %7075 = vmatpush1.msra.mxu0 0.0
        %7076 = vmatprep.subr.mxu0 0.0
        %7077 = vmatpush1.msra.mxu0 0.0
        %7078 = vmatprep.subr.mxu0 0.0
        %7079 = vmatpush1.msra.mxu0 0.0
        %7080 = vmatprep.subr.mxu0 0.0
        %7081 = vmatpush1.msra.mxu0 0.0
        %7082 = vmatprep.subr.mxu0 0.0
        %7083 = vmatpush1.msra.mxu0 0.0
        %7084 = vmatprep.subr.mxu0 0.0
        %7085 = vmatpush1.msra.mxu0 0.0
        %7086 = vmatprep.subr.mxu0 0.0
        %7087 = vmatpush1.msra.mxu0 0.0
        %7088 = vmatprep.subr.mxu0 0.0
        %7089 = vmatpush1.msra.mxu0 0.0
        %7090 = vmatprep.subr.mxu0 0.0
        %7091 = vmatpush1.msra.mxu0 0.0
        %7092 = vmatprep.subr.mxu0 0.0
        %7093 = vmatpush1.msra.mxu0 0.0
        %7094 = vmatprep.subr.mxu0 0.0
        %7095 = vmatpush1.msra.mxu0 0.0
        %7096 = vmatprep.subr.mxu0 0.0
        %7097 = vmatpush1.msra.mxu0 0.0
        %7098 = vmatprep.subr.mxu0 0.0
        %7099 = vmatpush1.msra.mxu0 0.0
        %7100 = vmatprep.subr.mxu0 0.0
        %7101 = vmatpush1.msra.mxu0 0.0
        %7102 = vmatprep.subr.mxu0 0.0
        %7103 = vmatpush1.msra.mxu0 0.0
        %7104 = vmatprep.subr.mxu0 0.0
        %7105 = vmatpush1.msra.mxu0 0.0
        %7106 = vmatprep.subr.mxu0 0.0
        %7107 = vmatpush1.msra.mxu0 0.0
        %7108 = vmatprep.subr.mxu0 0.0
        %7109 = vmatpush1.msra.mxu0 0.0
        %7110 = vmatprep.subr.mxu0 0.0
        %7111 = vmatpush1.msra.mxu0 0.0
        %7112 = vmatprep.subr.mxu0 0.0
        %7113 = vmatpush1.msra.mxu0 0.0
        %7114 = vmatprep.subr.mxu0 0.0
        %7115 = vmatpush1.msra.mxu0 0.0
        %7116 = vmatprep.subr.mxu0 0.0
        %7117 = vmatpush1.msra.mxu0 0.0
        %7118 = vmatprep.subr.mxu0 0.0
        %7119 = vmatpush1.msra.mxu0 0.0
        %7120 = vmatprep.subr.mxu0 0.0
        %7121 = vmatpush1.msra.mxu0 0.0
        %7122 = vmatprep.mubr.f32.mxu0 0.0
        %7123 = vmatmul.mubr.f32.gmra.mrb[0].mxu0 %v7053
        %v7124 = vpop.f32.mrb[0].mxu0
        %v7125 = vadd.f32 0.0, %v7124
        %v7126 = vpop.f32.mrb[0].mxu0
        %7127 = vdwg.mxu0
        %v7129 = vsel %vm6810, %v6890, 0
        %v7132 = vsel %vm6902, %v5911, 0
        %7134 = vmatprep.subr.mxu0 0.0
        %7135 = vmatpush1.msra.mxu0 %v7132
        %7136 = vmatprep.subr.mxu0 0.0
        %7137 = vmatpush1.msra.mxu0 0.0
        %7138 = vmatprep.subr.mxu0 0.0
        %7139 = vmatpush1.msra.mxu0 0.0
        %7140 = vmatprep.subr.mxu0 0.0
        %7141 = vmatpush1.msra.mxu0 0.0
        %7142 = vmatprep.subr.mxu0 0.0
        %7143 = vmatpush1.msra.mxu0 0.0
        %7144 = vmatprep.subr.mxu0 0.0
        %7145 = vmatpush1.msra.mxu0 0.0
        %7146 = vmatprep.subr.mxu0 0.0
        %7147 = vmatpush1.msra.mxu0 0.0
        %7148 = vmatprep.subr.mxu0 0.0
        %7149 = vmatpush1.msra.mxu0 0.0
        %7150 = vmatprep.subr.mxu0 0.0
        %7151 = vmatpush1.msra.mxu0 0.0
        %7152 = vmatprep.subr.mxu0 0.0
        %7153 = vmatpush1.msra.mxu0 0.0
        %7154 = vmatprep.subr.mxu0 0.0
        %7155 = vmatpush1.msra.mxu0 0.0
        %7156 = vmatprep.subr.mxu0 0.0
        %7157 = vmatpush1.msra.mxu0 0.0
        %7158 = vmatprep.subr.mxu0 0.0
        %7159 = vmatpush1.msra.mxu0 0.0
        %7160 = vmatprep.subr.mxu0 0.0
        %7161 = vmatpush1.msra.mxu0 0.0
        %7162 = vmatprep.subr.mxu0 0.0
        %7163 = vmatpush1.msra.mxu0 0.0
        %7164 = vmatprep.subr.mxu0 0.0
        %7165 = vmatpush1.msra.mxu0 0.0
        %7166 = vmatprep.subr.mxu0 0.0
        %7167 = vmatpush1.msra.mxu0 0.0
        %7168 = vmatprep.subr.mxu0 0.0
        %7169 = vmatpush1.msra.mxu0 0.0
        %7170 = vmatprep.subr.mxu0 0.0
        %7171 = vmatpush1.msra.mxu0 0.0
        %7172 = vmatprep.subr.mxu0 0.0
        %7173 = vmatpush1.msra.mxu0 0.0
        %7174 = vmatprep.subr.mxu0 0.0
        %7175 = vmatpush1.msra.mxu0 0.0
        %7176 = vmatprep.subr.mxu0 0.0
        %7177 = vmatpush1.msra.mxu0 0.0
        %7178 = vmatprep.subr.mxu0 0.0
        %7179 = vmatpush1.msra.mxu0 0.0
        %7180 = vmatprep.subr.mxu0 0.0
        %7181 = vmatpush1.msra.mxu0 0.0
        %7182 = vmatprep.subr.mxu0 0.0
        %7183 = vmatpush1.msra.mxu0 0.0
        %7184 = vmatprep.subr.mxu0 0.0
        %7185 = vmatpush1.msra.mxu0 0.0
        %7186 = vmatprep.subr.mxu0 0.0
        %7187 = vmatpush1.msra.mxu0 0.0
        %7188 = vmatprep.subr.mxu0 0.0
        %7189 = vmatpush1.msra.mxu0 0.0
        %7190 = vmatprep.subr.mxu0 0.0
        %7191 = vmatpush1.msra.mxu0 0.0
        %7192 = vmatprep.subr.mxu0 0.0
        %7193 = vmatpush1.msra.mxu0 0.0
        %7194 = vmatprep.subr.mxu0 0.0
        %7195 = vmatpush1.msra.mxu0 0.0
        %7196 = vmatprep.subr.mxu0 0.0
        %7197 = vmatpush1.msra.mxu0 0.0
        %7198 = vmatprep.mubr.f32.mxu0 0.0
        %7199 = vmatmul.mubr.f32.gmra.mrb[0].mxu0 %v7129
        %v7200 = vpop.f32.mrb[0].mxu0
        %v7201 = vadd.f32 0.0, %v7200
        %v7202 = vpop.f32.mrb[0].mxu0
        %7203 = vdwg.mxu0
        %v7205 = vsel %vm6810, %v6892, 0
        %v7208 = vsel %vm6902, %v5981, 0
        %7210 = vmatprep.subr.mxu0 0.0
        %7211 = vmatpush1.msra.mxu0 %v7208
        %7212 = vmatprep.subr.mxu0 0.0
        %7213 = vmatpush1.msra.mxu0 0.0
        %7214 = vmatprep.subr.mxu0 0.0
        %7215 = vmatpush1.msra.mxu0 0.0
        %7216 = vmatprep.subr.mxu0 0.0
        %7217 = vmatpush1.msra.mxu0 0.0
        %7218 = vmatprep.subr.mxu0 0.0
        %7219 = vmatpush1.msra.mxu0 0.0
        %7220 = vmatprep.subr.mxu0 0.0
        %7221 = vmatpush1.msra.mxu0 0.0
        %7222 = vmatprep.subr.mxu0 0.0
        %7223 = vmatpush1.msra.mxu0 0.0
        %7224 = vmatprep.subr.mxu0 0.0
        %7225 = vmatpush1.msra.mxu0 0.0
        %7226 = vmatprep.subr.mxu0 0.0
        %7227 = vmatpush1.msra.mxu0 0.0
        %7228 = vmatprep.subr.mxu0 0.0
        %7229 = vmatpush1.msra.mxu0 0.0
        %7230 = vmatprep.subr.mxu0 0.0
        %7231 = vmatpush1.msra.mxu0 0.0
        %7232 = vmatprep.subr.mxu0 0.0
        %7233 = vmatpush1.msra.mxu0 0.0
        %7234 = vmatprep.subr.mxu0 0.0
        %7235 = vmatpush1.msra.mxu0 0.0
        %7236 = vmatprep.subr.mxu0 0.0
        %7237 = vmatpush1.msra.mxu0 0.0
        %7238 = vmatprep.subr.mxu0 0.0
        %7239 = vmatpush1.msra.mxu0 0.0
        %7240 = vmatprep.subr.mxu0 0.0
        %7241 = vmatpush1.msra.mxu0 0.0
        %7242 = vmatprep.subr.mxu0 0.0
        %7243 = vmatpush1.msra.mxu0 0.0
        %7244 = vmatprep.subr.mxu0 0.0
        %7245 = vmatpush1.msra.mxu0 0.0
        %7246 = vmatprep.subr.mxu0 0.0
        %7247 = vmatpush1.msra.mxu0 0.0
        %7248 = vmatprep.subr.mxu0 0.0
        %7249 = vmatpush1.msra.mxu0 0.0
        %7250 = vmatprep.subr.mxu0 0.0
        %7251 = vmatpush1.msra.mxu0 0.0
        %7252 = vmatprep.subr.mxu0 0.0
        %7253 = vmatpush1.msra.mxu0 0.0
        %7254 = vmatprep.subr.mxu0 0.0
        %7255 = vmatpush1.msra.mxu0 0.0
        %7256 = vmatprep.subr.mxu0 0.0
        %7257 = vmatpush1.msra.mxu0 0.0
        %7258 = vmatprep.subr.mxu0 0.0
        %7259 = vmatpush1.msra.mxu0 0.0
        %7260 = vmatprep.subr.mxu0 0.0
        %7261 = vmatpush1.msra.mxu0 0.0
        %7262 = vmatprep.subr.mxu0 0.0
        %7263 = vmatpush1.msra.mxu0 0.0
        %7264 = vmatprep.subr.mxu0 0.0
        %7265 = vmatpush1.msra.mxu0 0.0
        %7266 = vmatprep.subr.mxu0 0.0
        %7267 = vmatpush1.msra.mxu0 0.0
        %7268 = vmatprep.subr.mxu0 0.0
        %7269 = vmatpush1.msra.mxu0 0.0
        %7270 = vmatprep.subr.mxu0 0.0
        %7271 = vmatpush1.msra.mxu0 0.0
        %7272 = vmatprep.subr.mxu0 0.0
        %7273 = vmatpush1.msra.mxu0 0.0
        %7274 = vmatprep.mubr.f32.mxu0 0.0
        %7275 = vmatmul.mubr.f32.gmra.mrb[0].mxu0 %v7205
        %v7276 = vpop.f32.mrb[0].mxu0
        %v7277 = vadd.f32 0.0, %v7276
        %v7278 = vpop.f32.mrb[0].mxu0
        %7279 = vdwg.mxu0
        %v7281 = vsel %vm6810, %v6894, 0
        %v7284 = vsel %vm6902, %v6051, 0
        %7286 = vmatprep.subr.mxu0 0.0
        %7287 = vmatpush1.msra.mxu0 %v7284
        %7288 = vmatprep.subr.mxu0 0.0
        %7289 = vmatpush1.msra.mxu0 0.0
        %7290 = vmatprep.subr.mxu0 0.0
        %7291 = vmatpush1.msra.mxu0 0.0
        %7292 = vmatprep.subr.mxu0 0.0
        %7293 = vmatpush1.msra.mxu0 0.0
        %7294 = vmatprep.subr.mxu0 0.0
        %7295 = vmatpush1.msra.mxu0 0.0
        %7296 = vmatprep.subr.mxu0 0.0
        %7297 = vmatpush1.msra.mxu0 0.0
        %7298 = vmatprep.subr.mxu0 0.0
        %7299 = vmatpush1.msra.mxu0 0.0
        %7300 = vmatprep.subr.mxu0 0.0
        %7301 = vmatpush1.msra.mxu0 0.0
        %7302 = vmatprep.subr.mxu0 0.0
        %7303 = vmatpush1.msra.mxu0 0.0
        %7304 = vmatprep.subr.mxu0 0.0
        %7305 = vmatpush1.msra.mxu0 0.0
        %7306 = vmatprep.subr.mxu0 0.0
        %7307 = vmatpush1.msra.mxu0 0.0
        %7308 = vmatprep.subr.mxu0 0.0
        %7309 = vmatpush1.msra.mxu0 0.0
        %7310 = vmatprep.subr.mxu0 0.0
        %7311 = vmatpush1.msra.mxu0 0.0
        %7312 = vmatprep.subr.mxu0 0.0
        %7313 = vmatpush1.msra.mxu0 0.0
        %7314 = vmatprep.subr.mxu0 0.0
        %7315 = vmatpush1.msra.mxu0 0.0
        %7316 = vmatprep.subr.mxu0 0.0
        %7317 = vmatpush1.msra.mxu0 0.0
        %7318 = vmatprep.subr.mxu0 0.0
        %7319 = vmatpush1.msra.mxu0 0.0
        %7320 = vmatprep.subr.mxu0 0.0
        %7321 = vmatpush1.msra.mxu0 0.0
        %7322 = vmatprep.subr.mxu0 0.0
        %7323 = vmatpush1.msra.mxu0 0.0
        %7324 = vmatprep.subr.mxu0 0.0
        %7325 = vmatpush1.msra.mxu0 0.0
        %7326 = vmatprep.subr.mxu0 0.0
        %7327 = vmatpush1.msra.mxu0 0.0
        %7328 = vmatprep.subr.mxu0 0.0
        %7329 = vmatpush1.msra.mxu0 0.0
        %7330 = vmatprep.subr.mxu0 0.0
        %7331 = vmatpush1.msra.mxu0 0.0
        %7332 = vmatprep.subr.mxu0 0.0
        %7333 = vmatpush1.msra.mxu0 0.0
        %7334 = vmatprep.subr.mxu0 0.0
        %7335 = vmatpush1.msra.mxu0 0.0
        %7336 = vmatprep.subr.mxu0 0.0
        %7337 = vmatpush1.msra.mxu0 0.0
        %7338 = vmatprep.subr.mxu0 0.0
        %7339 = vmatpush1.msra.mxu0 0.0
        %7340 = vmatprep.subr.mxu0 0.0
        %7341 = vmatpush1.msra.mxu0 0.0
        %7342 = vmatprep.subr.mxu0 0.0
        %7343 = vmatpush1.msra.mxu0 0.0
        %7344 = vmatprep.subr.mxu0 0.0
        %7345 = vmatpush1.msra.mxu0 0.0
        %7346 = vmatprep.subr.mxu0 0.0
        %7347 = vmatpush1.msra.mxu0 0.0
        %7348 = vmatprep.subr.mxu0 0.0
        %7349 = vmatpush1.msra.mxu0 0.0
        %7350 = vmatprep.mubr.f32.mxu0 0.0
        %7351 = vmatmul.mubr.f32.gmra.mrb[0].mxu0 %v7281
        %v7352 = vpop.f32.mrb[0].mxu0
        %v7353 = vadd.f32 0.0, %v7352
        %v7354 = vpop.f32.mrb[0].mxu0
        %7355 = vdwg.mxu0
        %v7357 = vsel %vm6810, %v6896, 0
        %v7360 = vsel %vm6902, %v6121, 0
        %7362 = vmatprep.subr.mxu0 0.0
        %7363 = vmatpush1.msra.mxu0 %v7360
        %7364 = vmatprep.subr.mxu0 0.0
        %7365 = vmatpush1.msra.mxu0 0.0
        %7366 = vmatprep.subr.mxu0 0.0
        %7367 = vmatpush1.msra.mxu0 0.0
        %7368 = vmatprep.subr.mxu0 0.0
        %7369 = vmatpush1.msra.mxu0 0.0
        %7370 = vmatprep.subr.mxu0 0.0
        %7371 = vmatpush1.msra.mxu0 0.0
        %7372 = vmatprep.subr.mxu0 0.0
        %7373 = vmatpush1.msra.mxu0 0.0
        %7374 = vmatprep.subr.mxu0 0.0
        %7375 = vmatpush1.msra.mxu0 0.0
        %7376 = vmatprep.subr.mxu0 0.0
        %7377 = vmatpush1.msra.mxu0 0.0
        %7378 = vmatprep.subr.mxu0 0.0
        %7379 = vmatpush1.msra.mxu0 0.0
        %7380 = vmatprep.subr.mxu0 0.0
        %7381 = vmatpush1.msra.mxu0 0.0
        %7382 = vmatprep.subr.mxu0 0.0
        %7383 = vmatpush1.msra.mxu0 0.0
        %7384 = vmatprep.subr.mxu0 0.0
        %7385 = vmatpush1.msra.mxu0 0.0
        %7386 = vmatprep.subr.mxu0 0.0
        %7387 = vmatpush1.msra.mxu0 0.0
        %7388 = vmatprep.subr.mxu0 0.0
        %7389 = vmatpush1.msra.mxu0 0.0
        %7390 = vmatprep.subr.mxu0 0.0
        %7391 = vmatpush1.msra.mxu0 0.0
        %7392 = vmatprep.subr.mxu0 0.0
        %7393 = vmatpush1.msra.mxu0 0.0
        %7394 = vmatprep.subr.mxu0 0.0
        %7395 = vmatpush1.msra.mxu0 0.0
        %7396 = vmatprep.subr.mxu0 0.0
        %7397 = vmatpush1.msra.mxu0 0.0
        %7398 = vmatprep.subr.mxu0 0.0
        %7399 = vmatpush1.msra.mxu0 0.0
        %7400 = vmatprep.subr.mxu0 0.0
        %7401 = vmatpush1.msra.mxu0 0.0
        %7402 = vmatprep.subr.mxu0 0.0
        %7403 = vmatpush1.msra.mxu0 0.0
        %7404 = vmatprep.subr.mxu0 0.0
        %7405 = vmatpush1.msra.mxu0 0.0
        %7406 = vmatprep.subr.mxu0 0.0
        %7407 = vmatpush1.msra.mxu0 0.0
        %7408 = vmatprep.subr.mxu0 0.0
        %7409 = vmatpush1.msra.mxu0 0.0
        %7410 = vmatprep.subr.mxu0 0.0
        %7411 = vmatpush1.msra.mxu0 0.0
        %7412 = vmatprep.subr.mxu0 0.0
        %7413 = vmatpush1.msra.mxu0 0.0
        %7414 = vmatprep.subr.mxu0 0.0
        %7415 = vmatpush1.msra.mxu0 0.0
        %7416 = vmatprep.subr.mxu0 0.0
        %7417 = vmatpush1.msra.mxu0 0.0
        %7418 = vmatprep.subr.mxu0 0.0
        %7419 = vmatpush1.msra.mxu0 0.0
        %7420 = vmatprep.subr.mxu0 0.0
        %7421 = vmatpush1.msra.mxu0 0.0
        %7422 = vmatprep.subr.mxu0 0.0
        %7423 = vmatpush1.msra.mxu0 0.0
        %7424 = vmatprep.subr.mxu0 0.0
        %7425 = vmatpush1.msra.mxu0 0.0
        %7426 = vmatprep.mubr.f32.mxu0 0.0
        %7427 = vmatmul.mubr.f32.gmra.mrb[0].mxu0 %v7357
        %v7428 = vpop.f32.mrb[0].mxu0
        %v7429 = vadd.f32 0.0, %v7428
        %v7430 = vpop.f32.mrb[0].mxu0
        %7431 = vdwg.mxu0
        %v7433 = vsel %vm6810, %v6898, 0
        %v7436 = vsel %vm6902, %v6191, 0
        %7438 = vmatprep.subr.mxu0 0.0
        %7439 = vmatpush1.msra.mxu0 %v7436
        %7440 = vmatprep.subr.mxu0 0.0
        %7441 = vmatpush1.msra.mxu0 0.0
        %7442 = vmatprep.subr.mxu0 0.0
        %7443 = vmatpush1.msra.mxu0 0.0
        %7444 = vmatprep.subr.mxu0 0.0
        %7445 = vmatpush1.msra.mxu0 0.0
        %7446 = vmatprep.subr.mxu0 0.0
        %7447 = vmatpush1.msra.mxu0 0.0
        %7448 = vmatprep.subr.mxu0 0.0
        %7449 = vmatpush1.msra.mxu0 0.0
        %7450 = vmatprep.subr.mxu0 0.0
        %7451 = vmatpush1.msra.mxu0 0.0
        %7452 = vmatprep.subr.mxu0 0.0
        %7453 = vmatpush1.msra.mxu0 0.0
        %7454 = vmatprep.subr.mxu0 0.0
        %7455 = vmatpush1.msra.mxu0 0.0
        %7456 = vmatprep.subr.mxu0 0.0
        %7457 = vmatpush1.msra.mxu0 0.0
        %7458 = vmatprep.subr.mxu0 0.0
        %7459 = vmatpush1.msra.mxu0 0.0
        %7460 = vmatprep.subr.mxu0 0.0
        %7461 = vmatpush1.msra.mxu0 0.0
        %7462 = vmatprep.subr.mxu0 0.0
        %7463 = vmatpush1.msra.mxu0 0.0
        %7464 = vmatprep.subr.mxu0 0.0
        %7465 = vmatpush1.msra.mxu0 0.0
        %7466 = vmatprep.subr.mxu0 0.0
        %7467 = vmatpush1.msra.mxu0 0.0
        %7468 = vmatprep.subr.mxu0 0.0
        %7469 = vmatpush1.msra.mxu0 0.0
        %7470 = vmatprep.subr.mxu0 0.0
        %7471 = vmatpush1.msra.mxu0 0.0
        %7472 = vmatprep.subr.mxu0 0.0
        %7473 = vmatpush1.msra.mxu0 0.0
        %7474 = vmatprep.subr.mxu0 0.0
        %7475 = vmatpush1.msra.mxu0 0.0
        %7476 = vmatprep.subr.mxu0 0.0
        %7477 = vmatpush1.msra.mxu0 0.0
        %7478 = vmatprep.subr.mxu0 0.0
        %7479 = vmatpush1.msra.mxu0 0.0
        %7480 = vmatprep.subr.mxu0 0.0
        %7481 = vmatpush1.msra.mxu0 0.0
        %7482 = vmatprep.subr.mxu0 0.0
        %7483 = vmatpush1.msra.mxu0 0.0
        %7484 = vmatprep.subr.mxu0 0.0
        %7485 = vmatpush1.msra.mxu0 0.0
        %7486 = vmatprep.subr.mxu0 0.0
        %7487 = vmatpush1.msra.mxu0 0.0
        %7488 = vmatprep.subr.mxu0 0.0
        %7489 = vmatpush1.msra.mxu0 0.0
        %7490 = vmatprep.subr.mxu0 0.0
        %7491 = vmatpush1.msra.mxu0 0.0
        %7492 = vmatprep.subr.mxu0 0.0
        %7493 = vmatpush1.msra.mxu0 0.0
        %7494 = vmatprep.subr.mxu0 0.0
        %7495 = vmatpush1.msra.mxu0 0.0
        %7496 = vmatprep.subr.mxu0 0.0
        %7497 = vmatpush1.msra.mxu0 0.0
        %7498 = vmatprep.subr.mxu0 0.0
        %7499 = vmatpush1.msra.mxu0 0.0
        %7500 = vmatprep.subr.mxu0 0.0
        %7501 = vmatpush1.msra.mxu0 0.0
        %7502 = vmatprep.mubr.f32.mxu0 0.0
        %7503 = vmatmul.mubr.f32.gmra.mrb[0].mxu0 %v7433
        %v7504 = vpop.f32.mrb[0].mxu0
        %v7505 = vadd.f32 0.0, %v7504
        %v7506 = vpop.f32.mrb[0].mxu0
        %7507 = vdwg.mxu0
        %s7508 = scalar_lea.vmem %s4, 256
        %v7509 = vld [vmem:[%s7508] sm:$0xff]
        %v7510 = vld [vmem:[%s7508 + $0x8] sm:$0xff]
        %v7511 = vld [vmem:[%s7508 + $0x10] sm:$0xff]
        %v7512 = vld [vmem:[%s7508 + $0x18] sm:$0xff]
        %v7513 = vld [vmem:[%s7508 + $0x20] sm:$0xff]
        %v7514 = vld [vmem:[%s7508 + $0x28] sm:$0xff]
        %v7515 = vld [vmem:[%s7508 + $0x30] sm:$0xff]
        %v7516 = vld [vmem:[%s7508 + $0x38] sm:$0xff]
        %v7517 = vld [vmem:[%s7508 + $0x40] sm:$0xff]
        %v7518 = vld [vmem:[%s7508 + $0x48] sm:$0xff]
        %v7519 = vld [vmem:[%s7508 + $0x50] sm:$0xff]
        %v7520 = vld [vmem:[%s7508 + $0x58] sm:$0xff]
        %v7521 = vld [vmem:[%s7508 + $0x60] sm:$0xff]
        %v7522 = vld [vmem:[%s7508 + $0x68] sm:$0xff]
        %v7523 = vld [vmem:[%s7508 + $0x70] sm:$0xff]
        %v7524 = vld [vmem:[%s7508 + $0x78] sm:$0xff]
        %v7525 = vld [vmem:[%s7508 + $0x80] sm:$0xff]
        %v7526 = vld [vmem:[%s7508 + $0x88] sm:$0xff]
        %v7527 = vld [vmem:[%s7508 + $0x90] sm:$0xff]
        %v7528 = vld [vmem:[%s7508 + $0x98] sm:$0xff]
        %v7529 = vld [vmem:[%s7508 + $0xa0] sm:$0xff]
        %v7530 = vld [vmem:[%s7508 + $0xa8] sm:$0xff]
        %v7531 = vld [vmem:[%s7508 + $0xb0] sm:$0xff]
        %v7532 = vld [vmem:[%s7508 + $0xb8] sm:$0xff]
        %v7533 = vld [vmem:[%s7508 + $0xc0] sm:$0xff]
        %v7534 = vld [vmem:[%s7508 + $0xc8] sm:$0xff]
        %v7535 = vld [vmem:[%s7508 + $0xd0] sm:$0xff]
        %v7536 = vld [vmem:[%s7508 + $0xd8] sm:$0xff]
        %v7537 = vld [vmem:[%s7508 + $0xe0] sm:$0xff]
        %v7538 = vld [vmem:[%s7508 + $0xe8] sm:$0xff]
        %v7539 = vld [vmem:[%s7508 + $0xf0] sm:$0xff]
        %v7540 = vld [vmem:[%s7508 + $0xf8] sm:$0xff]
        %v7542 = vsel %vm2232, %v6973, 0
        %7544 = vmatprep.subr.mxu0 0.0
        %7545 = vmatpush1.msra.mxu0 %v7509
        %7546 = vmatprep.subr.mxu0 0.0
        %7547 = vmatpush1.msra.mxu0 %v7510
        %7548 = vmatprep.subr.mxu0 0.0
        %7549 = vmatpush1.msra.mxu0 %v7511
        %7550 = vmatprep.subr.mxu0 0.0
        %7551 = vmatpush1.msra.mxu0 %v7512
        %7552 = vmatprep.subr.mxu0 0.0
        %7553 = vmatpush1.msra.mxu0 0.0
        %7554 = vmatprep.subr.mxu0 0.0
        %7555 = vmatpush1.msra.mxu0 0.0
        %7556 = vmatprep.subr.mxu0 0.0
        %7557 = vmatpush1.msra.mxu0 0.0
        %7558 = vmatprep.subr.mxu0 0.0
        %7559 = vmatpush1.msra.mxu0 0.0
        %7560 = vmatprep.subr.mxu0 0.0
        %7561 = vmatpush1.msra.mxu0 0.0
        %7562 = vmatprep.subr.mxu0 0.0
        %7563 = vmatpush1.msra.mxu0 0.0
        %7564 = vmatprep.subr.mxu0 0.0
        %7565 = vmatpush1.msra.mxu0 0.0
        %7566 = vmatprep.subr.mxu0 0.0
        %7567 = vmatpush1.msra.mxu0 0.0
        %7568 = vmatprep.subr.mxu0 0.0
        %7569 = vmatpush1.msra.mxu0 0.0
        %7570 = vmatprep.subr.mxu0 0.0
        %7571 = vmatpush1.msra.mxu0 0.0
        %7572 = vmatprep.subr.mxu0 0.0
        %7573 = vmatpush1.msra.mxu0 0.0
        %7574 = vmatprep.subr.mxu0 0.0
        %7575 = vmatpush1.msra.mxu0 0.0
        %7576 = vmatprep.subr.mxu0 0.0
        %7577 = vmatpush1.msra.mxu0 0.0
        %7578 = vmatprep.subr.mxu0 0.0
        %7579 = vmatpush1.msra.mxu0 0.0
        %7580 = vmatprep.subr.mxu0 0.0
        %7581 = vmatpush1.msra.mxu0 0.0
        %7582 = vmatprep.subr.mxu0 0.0
        %7583 = vmatpush1.msra.mxu0 0.0
        %7584 = vmatprep.subr.mxu0 0.0
        %7585 = vmatpush1.msra.mxu0 0.0
        %7586 = vmatprep.subr.mxu0 0.0
        %7587 = vmatpush1.msra.mxu0 0.0
        %7588 = vmatprep.subr.mxu0 0.0
        %7589 = vmatpush1.msra.mxu0 0.0
        %7590 = vmatprep.subr.mxu0 0.0
        %7591 = vmatpush1.msra.mxu0 0.0
        %7592 = vmatprep.subr.mxu0 0.0
        %7593 = vmatpush1.msra.mxu0 0.0
        %7594 = vmatprep.subr.mxu0 0.0
        %7595 = vmatpush1.msra.mxu0 0.0
        %7596 = vmatprep.subr.mxu0 0.0
        %7597 = vmatpush1.msra.mxu0 0.0
        %7598 = vmatprep.subr.mxu0 0.0
        %7599 = vmatpush1.msra.mxu0 0.0
        %7600 = vmatprep.subr.mxu0 0.0
        %7601 = vmatpush1.msra.mxu0 0.0
        %7602 = vmatprep.subr.mxu0 0.0
        %7603 = vmatpush1.msra.mxu0 0.0
        %7604 = vmatprep.subr.mxu0 0.0
        %7605 = vmatpush1.msra.mxu0 0.0
        %7606 = vmatprep.subr.mxu0 0.0
        %7607 = vmatpush1.msra.mxu0 0.0
        %7608 = vmatprep.mubr.f32.mxu0 0.0
        %7609 = vmatmul.mubr.f32.gmra.mrb[0].mxu0 %v7542
        %v7610 = vpop.f32.mrb[0].mxu0
        %v7611 = vadd.f32 0.0, %v7610
        %v7612 = vpop.f32.mrb[0].mxu0
        %7613 = vdwg.mxu0
        %v7615 = vsel %vm2232, %v7049, 0
        %7617 = vmatprep.subr.mxu0 0.0
        %7618 = vmatpush1.msra.mxu0 %v7513
        %7619 = vmatprep.subr.mxu0 0.0
        %7620 = vmatpush1.msra.mxu0 %v7514
        %7621 = vmatprep.subr.mxu0 0.0
        %7622 = vmatpush1.msra.mxu0 %v7515
        %7623 = vmatprep.subr.mxu0 0.0
        %7624 = vmatpush1.msra.mxu0 %v7516
        %7625 = vmatprep.subr.mxu0 0.0
        %7626 = vmatpush1.msra.mxu0 0.0
        %7627 = vmatprep.subr.mxu0 0.0
        %7628 = vmatpush1.msra.mxu0 0.0
        %7629 = vmatprep.subr.mxu0 0.0
        %7630 = vmatpush1.msra.mxu0 0.0
        %7631 = vmatprep.subr.mxu0 0.0
        %7632 = vmatpush1.msra.mxu0 0.0
        %7633 = vmatprep.subr.mxu0 0.0
        %7634 = vmatpush1.msra.mxu0 0.0
        %7635 = vmatprep.subr.mxu0 0.0
        %7636 = vmatpush1.msra.mxu0 0.0
        %7637 = vmatprep.subr.mxu0 0.0
        %7638 = vmatpush1.msra.mxu0 0.0
        %7639 = vmatprep.subr.mxu0 0.0
        %7640 = vmatpush1.msra.mxu0 0.0
        %7641 = vmatprep.subr.mxu0 0.0
        %7642 = vmatpush1.msra.mxu0 0.0
        %7643 = vmatprep.subr.mxu0 0.0
        %7644 = vmatpush1.msra.mxu0 0.0
        %7645 = vmatprep.subr.mxu0 0.0
        %7646 = vmatpush1.msra.mxu0 0.0
        %7647 = vmatprep.subr.mxu0 0.0
        %7648 = vmatpush1.msra.mxu0 0.0
        %7649 = vmatprep.subr.mxu0 0.0
        %7650 = vmatpush1.msra.mxu0 0.0
        %7651 = vmatprep.subr.mxu0 0.0
        %7652 = vmatpush1.msra.mxu0 0.0
        %7653 = vmatprep.subr.mxu0 0.0
        %7654 = vmatpush1.msra.mxu0 0.0
        %7655 = vmatprep.subr.mxu0 0.0
        %7656 = vmatpush1.msra.mxu0 0.0
        %7657 = vmatprep.subr.mxu0 0.0
        %7658 = vmatpush1.msra.mxu0 0.0
        %7659 = vmatprep.subr.mxu0 0.0
        %7660 = vmatpush1.msra.mxu0 0.0
        %7661 = vmatprep.subr.mxu0 0.0
        %7662 = vmatpush1.msra.mxu0 0.0
        %7663 = vmatprep.subr.mxu0 0.0
        %7664 = vmatpush1.msra.mxu0 0.0
        %7665 = vmatprep.subr.mxu0 0.0
        %7666 = vmatpush1.msra.mxu0 0.0
        %7667 = vmatprep.subr.mxu0 0.0
        %7668 = vmatpush1.msra.mxu0 0.0
        %7669 = vmatprep.subr.mxu0 0.0
        %7670 = vmatpush1.msra.mxu0 0.0
        %7671 = vmatprep.subr.mxu0 0.0
        %7672 = vmatpush1.msra.mxu0 0.0
        %7673 = vmatprep.subr.mxu0 0.0
        %7674 = vmatpush1.msra.mxu0 0.0
        %7675 = vmatprep.subr.mxu0 0.0
        %7676 = vmatpush1.msra.mxu0 0.0
        %7677 = vmatprep.subr.mxu0 0.0
        %7678 = vmatpush1.msra.mxu0 0.0
        %7679 = vmatprep.subr.mxu0 0.0
        %7680 = vmatpush1.msra.mxu0 0.0
        %7681 = vmatprep.mubr.f32.mxu0 0.0
        %7682 = vmatmul.mubr.f32.gmra.mrb[0].mxu0 %v7615
        %v7683 = vpop.f32.mrb[0].mxu0
        %v7684 = vadd.f32 0.0, %v7683
        %v7685 = vpop.f32.mrb[0].mxu0
        %7686 = vdwg.mxu0
        %v7688 = vsel %vm2232, %v7125, 0
        %7690 = vmatprep.subr.mxu0 0.0
        %7691 = vmatpush1.msra.mxu0 %v7517
        %7692 = vmatprep.subr.mxu0 0.0
        %7693 = vmatpush1.msra.mxu0 %v7518
        %7694 = vmatprep.subr.mxu0 0.0
        %7695 = vmatpush1.msra.mxu0 %v7519
        %7696 = vmatprep.subr.mxu0 0.0
        %7697 = vmatpush1.msra.mxu0 %v7520
        %7698 = vmatprep.subr.mxu0 0.0
        %7699 = vmatpush1.msra.mxu0 0.0
        %7700 = vmatprep.subr.mxu0 0.0
        %7701 = vmatpush1.msra.mxu0 0.0
        %7702 = vmatprep.subr.mxu0 0.0
        %7703 = vmatpush1.msra.mxu0 0.0
        %7704 = vmatprep.subr.mxu0 0.0
        %7705 = vmatpush1.msra.mxu0 0.0
        %7706 = vmatprep.subr.mxu0 0.0
        %7707 = vmatpush1.msra.mxu0 0.0
        %7708 = vmatprep.subr.mxu0 0.0
        %7709 = vmatpush1.msra.mxu0 0.0
        %7710 = vmatprep.subr.mxu0 0.0
        %7711 = vmatpush1.msra.mxu0 0.0
        %7712 = vmatprep.subr.mxu0 0.0
        %7713 = vmatpush1.msra.mxu0 0.0
        %7714 = vmatprep.subr.mxu0 0.0
        %7715 = vmatpush1.msra.mxu0 0.0
        %7716 = vmatprep.subr.mxu0 0.0
        %7717 = vmatpush1.msra.mxu0 0.0
        %7718 = vmatprep.subr.mxu0 0.0
        %7719 = vmatpush1.msra.mxu0 0.0
        %7720 = vmatprep.subr.mxu0 0.0
        %7721 = vmatpush1.msra.mxu0 0.0
        %7722 = vmatprep.subr.mxu0 0.0
        %7723 = vmatpush1.msra.mxu0 0.0
        %7724 = vmatprep.subr.mxu0 0.0
        %7725 = vmatpush1.msra.mxu0 0.0
        %7726 = vmatprep.subr.mxu0 0.0
        %7727 = vmatpush1.msra.mxu0 0.0
        %7728 = vmatprep.subr.mxu0 0.0
        %7729 = vmatpush1.msra.mxu0 0.0
        %7730 = vmatprep.subr.mxu0 0.0
        %7731 = vmatpush1.msra.mxu0 0.0
        %7732 = vmatprep.subr.mxu0 0.0
        %7733 = vmatpush1.msra.mxu0 0.0
        %7734 = vmatprep.subr.mxu0 0.0
        %7735 = vmatpush1.msra.mxu0 0.0
        %7736 = vmatprep.subr.mxu0 0.0
        %7737 = vmatpush1.msra.mxu0 0.0
        %7738 = vmatprep.subr.mxu0 0.0
        %7739 = vmatpush1.msra.mxu0 0.0
        %7740 = vmatprep.subr.mxu0 0.0
        %7741 = vmatpush1.msra.mxu0 0.0
        %7742 = vmatprep.subr.mxu0 0.0
        %7743 = vmatpush1.msra.mxu0 0.0
        %7744 = vmatprep.subr.mxu0 0.0
        %7745 = vmatpush1.msra.mxu0 0.0
        %7746 = vmatprep.subr.mxu0 0.0
        %7747 = vmatpush1.msra.mxu0 0.0
        %7748 = vmatprep.subr.mxu0 0.0
        %7749 = vmatpush1.msra.mxu0 0.0
        %7750 = vmatprep.subr.mxu0 0.0
        %7751 = vmatpush1.msra.mxu0 0.0
        %7752 = vmatprep.subr.mxu0 0.0
        %7753 = vmatpush1.msra.mxu0 0.0
        %7754 = vmatprep.mubr.f32.mxu0 0.0
        %7755 = vmatmul.mubr.f32.gmra.mrb[0].mxu0 %v7688
        %v7756 = vpop.f32.mrb[0].mxu0
        %v7757 = vadd.f32 0.0, %v7756
        %v7758 = vpop.f32.mrb[0].mxu0
        %7759 = vdwg.mxu0
        %v7761 = vsel %vm2232, %v7201, 0
        %7763 = vmatprep.subr.mxu0 0.0
        %7764 = vmatpush1.msra.mxu0 %v7521
        %7765 = vmatprep.subr.mxu0 0.0
        %7766 = vmatpush1.msra.mxu0 %v7522
        %7767 = vmatprep.subr.mxu0 0.0
        %7768 = vmatpush1.msra.mxu0 %v7523
        %7769 = vmatprep.subr.mxu0 0.0
        %7770 = vmatpush1.msra.mxu0 %v7524
        %7771 = vmatprep.subr.mxu0 0.0
        %7772 = vmatpush1.msra.mxu0 0.0
        %7773 = vmatprep.subr.mxu0 0.0
        %7774 = vmatpush1.msra.mxu0 0.0
        %7775 = vmatprep.subr.mxu0 0.0
        %7776 = vmatpush1.msra.mxu0 0.0
        %7777 = vmatprep.subr.mxu0 0.0
        %7778 = vmatpush1.msra.mxu0 0.0
        %7779 = vmatprep.subr.mxu0 0.0
        %7780 = vmatpush1.msra.mxu0 0.0
        %7781 = vmatprep.subr.mxu0 0.0
        %7782 = vmatpush1.msra.mxu0 0.0
        %7783 = vmatprep.subr.mxu0 0.0
        %7784 = vmatpush1.msra.mxu0 0.0
        %7785 = vmatprep.subr.mxu0 0.0
        %7786 = vmatpush1.msra.mxu0 0.0
        %7787 = vmatprep.subr.mxu0 0.0
        %7788 = vmatpush1.msra.mxu0 0.0
        %7789 = vmatprep.subr.mxu0 0.0
        %7790 = vmatpush1.msra.mxu0 0.0
        %7791 = vmatprep.subr.mxu0 0.0
        %7792 = vmatpush1.msra.mxu0 0.0
        %7793 = vmatprep.subr.mxu0 0.0
        %7794 = vmatpush1.msra.mxu0 0.0
        %7795 = vmatprep.subr.mxu0 0.0
        %7796 = vmatpush1.msra.mxu0 0.0
        %7797 = vmatprep.subr.mxu0 0.0
        %7798 = vmatpush1.msra.mxu0 0.0
        %7799 = vmatprep.subr.mxu0 0.0
        %7800 = vmatpush1.msra.mxu0 0.0
        %7801 = vmatprep.subr.mxu0 0.0
        %7802 = vmatpush1.msra.mxu0 0.0
        %7803 = vmatprep.subr.mxu0 0.0
        %7804 = vmatpush1.msra.mxu0 0.0
        %7805 = vmatprep.subr.mxu0 0.0
        %7806 = vmatpush1.msra.mxu0 0.0
        %7807 = vmatprep.subr.mxu0 0.0
        %7808 = vmatpush1.msra.mxu0 0.0
        %7809 = vmatprep.subr.mxu0 0.0
        %7810 = vmatpush1.msra.mxu0 0.0
        %7811 = vmatprep.subr.mxu0 0.0
        %7812 = vmatpush1.msra.mxu0 0.0
        %7813 = vmatprep.subr.mxu0 0.0
        %7814 = vmatpush1.msra.mxu0 0.0
        %7815 = vmatprep.subr.mxu0 0.0
        %7816 = vmatpush1.msra.mxu0 0.0
        %7817 = vmatprep.subr.mxu0 0.0
        %7818 = vmatpush1.msra.mxu0 0.0
        %7819 = vmatprep.subr.mxu0 0.0
        %7820 = vmatpush1.msra.mxu0 0.0
        %7821 = vmatprep.subr.mxu0 0.0
        %7822 = vmatpush1.msra.mxu0 0.0
        %7823 = vmatprep.subr.mxu0 0.0
        %7824 = vmatpush1.msra.mxu0 0.0
        %7825 = vmatprep.subr.mxu0 0.0
        %7826 = vmatpush1.msra.mxu0 0.0
        %7827 = vmatprep.mubr.f32.mxu0 0.0
        %7828 = vmatmul.mubr.f32.gmra.mrb[0].mxu0 %v7761
        %v7829 = vpop.f32.mrb[0].mxu0
        %v7830 = vadd.f32 0.0, %v7829
        %v7831 = vpop.f32.mrb[0].mxu0
        %7832 = vdwg.mxu0
        %v7834 = vsel %vm2232, %v7277, 0
        %7836 = vmatprep.subr.mxu0 0.0
        %7837 = vmatpush1.msra.mxu0 %v7525
        %7838 = vmatprep.subr.mxu0 0.0
        %7839 = vmatpush1.msra.mxu0 %v7526
        %7840 = vmatprep.subr.mxu0 0.0
        %7841 = vmatpush1.msra.mxu0 %v7527
        %7842 = vmatprep.subr.mxu0 0.0
        %7843 = vmatpush1.msra.mxu0 %v7528
        %7844 = vmatprep.subr.mxu0 0.0
        %7845 = vmatpush1.msra.mxu0 0.0
        %7846 = vmatprep.subr.mxu0 0.0
        %7847 = vmatpush1.msra.mxu0 0.0
        %7848 = vmatprep.subr.mxu0 0.0
        %7849 = vmatpush1.msra.mxu0 0.0
        %7850 = vmatprep.subr.mxu0 0.0
        %7851 = vmatpush1.msra.mxu0 0.0
        %7852 = vmatprep.subr.mxu0 0.0
        %7853 = vmatpush1.msra.mxu0 0.0
        %7854 = vmatprep.subr.mxu0 0.0
        %7855 = vmatpush1.msra.mxu0 0.0
        %7856 = vmatprep.subr.mxu0 0.0
        %7857 = vmatpush1.msra.mxu0 0.0
        %7858 = vmatprep.subr.mxu0 0.0
        %7859 = vmatpush1.msra.mxu0 0.0
        %7860 = vmatprep.subr.mxu0 0.0
        %7861 = vmatpush1.msra.mxu0 0.0
        %7862 = vmatprep.subr.mxu0 0.0
        %7863 = vmatpush1.msra.mxu0 0.0
        %7864 = vmatprep.subr.mxu0 0.0
        %7865 = vmatpush1.msra.mxu0 0.0
        %7866 = vmatprep.subr.mxu0 0.0
        %7867 = vmatpush1.msra.mxu0 0.0
        %7868 = vmatprep.subr.mxu0 0.0
        %7869 = vmatpush1.msra.mxu0 0.0
        %7870 = vmatprep.subr.mxu0 0.0
        %7871 = vmatpush1.msra.mxu0 0.0
        %7872 = vmatprep.subr.mxu0 0.0
        %7873 = vmatpush1.msra.mxu0 0.0
        %7874 = vmatprep.subr.mxu0 0.0
        %7875 = vmatpush1.msra.mxu0 0.0
        %7876 = vmatprep.subr.mxu0 0.0
        %7877 = vmatpush1.msra.mxu0 0.0
        %7878 = vmatprep.subr.mxu0 0.0
        %7879 = vmatpush1.msra.mxu0 0.0
        %7880 = vmatprep.subr.mxu0 0.0
        %7881 = vmatpush1.msra.mxu0 0.0
        %7882 = vmatprep.subr.mxu0 0.0
        %7883 = vmatpush1.msra.mxu0 0.0
        %7884 = vmatprep.subr.mxu0 0.0
        %7885 = vmatpush1.msra.mxu0 0.0
        %7886 = vmatprep.subr.mxu0 0.0
        %7887 = vmatpush1.msra.mxu0 0.0
        %7888 = vmatprep.subr.mxu0 0.0
        %7889 = vmatpush1.msra.mxu0 0.0
        %7890 = vmatprep.subr.mxu0 0.0
        %7891 = vmatpush1.msra.mxu0 0.0
        %7892 = vmatprep.subr.mxu0 0.0
        %7893 = vmatpush1.msra.mxu0 0.0
        %7894 = vmatprep.subr.mxu0 0.0
        %7895 = vmatpush1.msra.mxu0 0.0
        %7896 = vmatprep.subr.mxu0 0.0
        %7897 = vmatpush1.msra.mxu0 0.0
        %7898 = vmatprep.subr.mxu0 0.0
        %7899 = vmatpush1.msra.mxu0 0.0
        %7900 = vmatprep.mubr.f32.mxu0 0.0
        %7901 = vmatmul.mubr.f32.gmra.mrb[0].mxu0 %v7834
        %v7902 = vpop.f32.mrb[0].mxu0
        %v7903 = vadd.f32 0.0, %v7902
        %v7904 = vpop.f32.mrb[0].mxu0
        %7905 = vdwg.mxu0
        %v7907 = vsel %vm2232, %v7353, 0
        %7909 = vmatprep.subr.mxu0 0.0
        %7910 = vmatpush1.msra.mxu0 %v7529
        %7911 = vmatprep.subr.mxu0 0.0
        %7912 = vmatpush1.msra.mxu0 %v7530
        %7913 = vmatprep.subr.mxu0 0.0
        %7914 = vmatpush1.msra.mxu0 %v7531
        %7915 = vmatprep.subr.mxu0 0.0
        %7916 = vmatpush1.msra.mxu0 %v7532
        %7917 = vmatprep.subr.mxu0 0.0
        %7918 = vmatpush1.msra.mxu0 0.0
        %7919 = vmatprep.subr.mxu0 0.0
        %7920 = vmatpush1.msra.mxu0 0.0
        %7921 = vmatprep.subr.mxu0 0.0
        %7922 = vmatpush1.msra.mxu0 0.0
        %7923 = vmatprep.subr.mxu0 0.0
        %7924 = vmatpush1.msra.mxu0 0.0
        %7925 = vmatprep.subr.mxu0 0.0
        %7926 = vmatpush1.msra.mxu0 0.0
        %7927 = vmatprep.subr.mxu0 0.0
        %7928 = vmatpush1.msra.mxu0 0.0
        %7929 = vmatprep.subr.mxu0 0.0
        %7930 = vmatpush1.msra.mxu0 0.0
        %7931 = vmatprep.subr.mxu0 0.0
        %7932 = vmatpush1.msra.mxu0 0.0
        %7933 = vmatprep.subr.mxu0 0.0
        %7934 = vmatpush1.msra.mxu0 0.0
        %7935 = vmatprep.subr.mxu0 0.0
        %7936 = vmatpush1.msra.mxu0 0.0
        %7937 = vmatprep.subr.mxu0 0.0
        %7938 = vmatpush1.msra.mxu0 0.0
        %7939 = vmatprep.subr.mxu0 0.0
        %7940 = vmatpush1.msra.mxu0 0.0
        %7941 = vmatprep.subr.mxu0 0.0
        %7942 = vmatpush1.msra.mxu0 0.0
        %7943 = vmatprep.subr.mxu0 0.0
        %7944 = vmatpush1.msra.mxu0 0.0
        %7945 = vmatprep.subr.mxu0 0.0
        %7946 = vmatpush1.msra.mxu0 0.0
        %7947 = vmatprep.subr.mxu0 0.0
        %7948 = vmatpush1.msra.mxu0 0.0
        %7949 = vmatprep.subr.mxu0 0.0
        %7950 = vmatpush1.msra.mxu0 0.0
        %7951 = vmatprep.subr.mxu0 0.0
        %7952 = vmatpush1.msra.mxu0 0.0
        %7953 = vmatprep.subr.mxu0 0.0
        %7954 = vmatpush1.msra.mxu0 0.0
        %7955 = vmatprep.subr.mxu0 0.0
        %7956 = vmatpush1.msra.mxu0 0.0
        %7957 = vmatprep.subr.mxu0 0.0
        %7958 = vmatpush1.msra.mxu0 0.0
        %7959 = vmatprep.subr.mxu0 0.0
        %7960 = vmatpush1.msra.mxu0 0.0
        %7961 = vmatprep.subr.mxu0 0.0
        %7962 = vmatpush1.msra.mxu0 0.0
        %7963 = vmatprep.subr.mxu0 0.0
        %7964 = vmatpush1.msra.mxu0 0.0
        %7965 = vmatprep.subr.mxu0 0.0
        %7966 = vmatpush1.msra.mxu0 0.0
        %7967 = vmatprep.subr.mxu0 0.0
        %7968 = vmatpush1.msra.mxu0 0.0
        %7969 = vmatprep.subr.mxu0 0.0
        %7970 = vmatpush1.msra.mxu0 0.0
        %7971 = vmatprep.subr.mxu0 0.0
        %7972 = vmatpush1.msra.mxu0 0.0
        %7973 = vmatprep.mubr.f32.mxu0 0.0
        %7974 = vmatmul.mubr.f32.gmra.mrb[0].mxu0 %v7907
        %v7975 = vpop.f32.mrb[0].mxu0
        %v7976 = vadd.f32 0.0, %v7975
        %v7977 = vpop.f32.mrb[0].mxu0
        %7978 = vdwg.mxu0
        %v7980 = vsel %vm2232, %v7429, 0
        %7982 = vmatprep.subr.mxu0 0.0
        %7983 = vmatpush1.msra.mxu0 %v7533
        %7984 = vmatprep.subr.mxu0 0.0
        %7985 = vmatpush1.msra.mxu0 %v7534
        %7986 = vmatprep.subr.mxu0 0.0
        %7987 = vmatpush1.msra.mxu0 %v7535
        %7988 = vmatprep.subr.mxu0 0.0
        %7989 = vmatpush1.msra.mxu0 %v7536
        %7990 = vmatprep.subr.mxu0 0.0
        %7991 = vmatpush1.msra.mxu0 0.0
        %7992 = vmatprep.subr.mxu0 0.0
        %7993 = vmatpush1.msra.mxu0 0.0
        %7994 = vmatprep.subr.mxu0 0.0
        %7995 = vmatpush1.msra.mxu0 0.0
        %7996 = vmatprep.subr.mxu0 0.0
        %7997 = vmatpush1.msra.mxu0 0.0
        %7998 = vmatprep.subr.mxu0 0.0
        %7999 = vmatpush1.msra.mxu0 0.0
        %8000 = vmatprep.subr.mxu0 0.0
        %8001 = vmatpush1.msra.mxu0 0.0
        %8002 = vmatprep.subr.mxu0 0.0
        %8003 = vmatpush1.msra.mxu0 0.0
        %8004 = vmatprep.subr.mxu0 0.0
        %8005 = vmatpush1.msra.mxu0 0.0
        %8006 = vmatprep.subr.mxu0 0.0
        %8007 = vmatpush1.msra.mxu0 0.0
        %8008 = vmatprep.subr.mxu0 0.0
        %8009 = vmatpush1.msra.mxu0 0.0
        %8010 = vmatprep.subr.mxu0 0.0
        %8011 = vmatpush1.msra.mxu0 0.0
        %8012 = vmatprep.subr.mxu0 0.0
        %8013 = vmatpush1.msra.mxu0 0.0
        %8014 = vmatprep.subr.mxu0 0.0
        %8015 = vmatpush1.msra.mxu0 0.0
        %8016 = vmatprep.subr.mxu0 0.0
        %8017 = vmatpush1.msra.mxu0 0.0
        %8018 = vmatprep.subr.mxu0 0.0
        %8019 = vmatpush1.msra.mxu0 0.0
        %8020 = vmatprep.subr.mxu0 0.0
        %8021 = vmatpush1.msra.mxu0 0.0
        %8022 = vmatprep.subr.mxu0 0.0
        %8023 = vmatpush1.msra.mxu0 0.0
        %8024 = vmatprep.subr.mxu0 0.0
        %8025 = vmatpush1.msra.mxu0 0.0
        %8026 = vmatprep.subr.mxu0 0.0
        %8027 = vmatpush1.msra.mxu0 0.0
        %8028 = vmatprep.subr.mxu0 0.0
        %8029 = vmatpush1.msra.mxu0 0.0
        %8030 = vmatprep.subr.mxu0 0.0
        %8031 = vmatpush1.msra.mxu0 0.0
        %8032 = vmatprep.subr.mxu0 0.0
        %8033 = vmatpush1.msra.mxu0 0.0
        %8034 = vmatprep.subr.mxu0 0.0
        %8035 = vmatpush1.msra.mxu0 0.0
        %8036 = vmatprep.subr.mxu0 0.0
        %8037 = vmatpush1.msra.mxu0 0.0
        %8038 = vmatprep.subr.mxu0 0.0
        %8039 = vmatpush1.msra.mxu0 0.0
        %8040 = vmatprep.subr.mxu0 0.0
        %8041 = vmatpush1.msra.mxu0 0.0
        %8042 = vmatprep.subr.mxu0 0.0
        %8043 = vmatpush1.msra.mxu0 0.0
        %8044 = vmatprep.subr.mxu0 0.0
        %8045 = vmatpush1.msra.mxu0 0.0
        %8046 = vmatprep.mubr.f32.mxu0 0.0
        %8047 = vmatmul.mubr.f32.gmra.mrb[0].mxu0 %v7980
        %v8048 = vpop.f32.mrb[0].mxu0
        %v8049 = vadd.f32 0.0, %v8048
        %v8050 = vpop.f32.mrb[0].mxu0
        %8051 = vdwg.mxu0
        %v8053 = vsel %vm2232, %v7505, 0
        %8055 = vmatprep.subr.mxu0 0.0
        %8056 = vmatpush1.msra.mxu0 %v7537
        %8057 = vmatprep.subr.mxu0 0.0
        %8058 = vmatpush1.msra.mxu0 %v7538
        %8059 = vmatprep.subr.mxu0 0.0
        %8060 = vmatpush1.msra.mxu0 %v7539
        %8061 = vmatprep.subr.mxu0 0.0
        %8062 = vmatpush1.msra.mxu0 %v7540
        %8063 = vmatprep.subr.mxu0 0.0
        %8064 = vmatpush1.msra.mxu0 0.0
        %8065 = vmatprep.subr.mxu0 0.0
        %8066 = vmatpush1.msra.mxu0 0.0
        %8067 = vmatprep.subr.mxu0 0.0
        %8068 = vmatpush1.msra.mxu0 0.0
        %8069 = vmatprep.subr.mxu0 0.0
        %8070 = vmatpush1.msra.mxu0 0.0
        %8071 = vmatprep.subr.mxu0 0.0
        %8072 = vmatpush1.msra.mxu0 0.0
        %8073 = vmatprep.subr.mxu0 0.0
        %8074 = vmatpush1.msra.mxu0 0.0
        %8075 = vmatprep.subr.mxu0 0.0
        %8076 = vmatpush1.msra.mxu0 0.0
        %8077 = vmatprep.subr.mxu0 0.0
        %8078 = vmatpush1.msra.mxu0 0.0
        %8079 = vmatprep.subr.mxu0 0.0
        %8080 = vmatpush1.msra.mxu0 0.0
        %8081 = vmatprep.subr.mxu0 0.0
        %8082 = vmatpush1.msra.mxu0 0.0
        %8083 = vmatprep.subr.mxu0 0.0
        %8084 = vmatpush1.msra.mxu0 0.0
        %8085 = vmatprep.subr.mxu0 0.0
        %8086 = vmatpush1.msra.mxu0 0.0
        %8087 = vmatprep.subr.mxu0 0.0
        %8088 = vmatpush1.msra.mxu0 0.0
        %8089 = vmatprep.subr.mxu0 0.0
        %8090 = vmatpush1.msra.mxu0 0.0
        %8091 = vmatprep.subr.mxu0 0.0
        %8092 = vmatpush1.msra.mxu0 0.0
        %8093 = vmatprep.subr.mxu0 0.0
        %8094 = vmatpush1.msra.mxu0 0.0
        %8095 = vmatprep.subr.mxu0 0.0
        %8096 = vmatpush1.msra.mxu0 0.0
        %8097 = vmatprep.subr.mxu0 0.0
        %8098 = vmatpush1.msra.mxu0 0.0
        %8099 = vmatprep.subr.mxu0 0.0
        %8100 = vmatpush1.msra.mxu0 0.0
        %8101 = vmatprep.subr.mxu0 0.0
        %8102 = vmatpush1.msra.mxu0 0.0
        %8103 = vmatprep.subr.mxu0 0.0
        %8104 = vmatpush1.msra.mxu0 0.0
        %8105 = vmatprep.subr.mxu0 0.0
        %8106 = vmatpush1.msra.mxu0 0.0
        %8107 = vmatprep.subr.mxu0 0.0
        %8108 = vmatpush1.msra.mxu0 0.0
        %8109 = vmatprep.subr.mxu0 0.0
        %8110 = vmatpush1.msra.mxu0 0.0
        %8111 = vmatprep.subr.mxu0 0.0
        %8112 = vmatpush1.msra.mxu0 0.0
        %8113 = vmatprep.subr.mxu0 0.0
        %8114 = vmatpush1.msra.mxu0 0.0
        %8115 = vmatprep.subr.mxu0 0.0
        %8116 = vmatpush1.msra.mxu0 0.0
        %8117 = vmatprep.subr.mxu0 0.0
        %8118 = vmatpush1.msra.mxu0 0.0
        %8119 = vmatprep.mubr.f32.mxu0 0.0
        %8120 = vmatmul.mubr.f32.gmra.mrb[0].mxu0 %v8053
        %v8121 = vpop.f32.mrb[0].mxu0
        %v8122 = vadd.f32 0.0, %v8121
        %v8123 = vpop.f32.mrb[0].mxu0
        %8124 = vdwg.mxu0
        %s8125 = scalar_lea.vmem %s6, 8
        %v8126 = vld [vmem:[%s8125] sm:$0xff]
        %v8127 = vsel %vm397, %v7611, 0.0
        %v8128 = vsel %vm397, %v7684, 0.0
        %v8129 = vadd.f32 %v8127, %v8128
        %v8130 = vsel %vm397, %v7757, 0.0
        %v8131 = vadd.f32 %v8129, %v8130
        %v8132 = vsel %vm397, %v7830, 0.0
        %v8133 = vadd.f32 %v8131, %v8132
        %v8134 = vsel %vm397, %v7903, 0.0
        %v8135 = vadd.f32 %v8133, %v8134
        %v8136 = vsel %vm397, %v7976, 0.0
        %v8137 = vadd.f32 %v8135, %v8136
        %v8138 = vsel %vm397, %v8049, 0.0
        %v8139 = vadd.f32 %v8137, %v8138
        %v8140 = vsel %vm397, %v8122, 0.0
        %v8141 = vadd.f32 %v8139, %v8140
        %v8142 = vlaneseq
        %v8143 = vshrl.u32 %v8142, 7
        %v8144 = vsub.s32 0, %v8143
        %v8145 = vrot.slane %v8126, %v8144
        %v8146 = vadd.f32 %v8141, %v8145
        %v8147 = vadd.f32 %v323, %v8146
        %v8148 = vsel %vm397, %v8147, 0.0
        %8149 = vadd.xlane.f32.xlu0 %v8148
        %v8150 = vpop.xlane.xlu0 %8149
        %v8151 = vmul.f32 %v8150, %v4165
        %v8152 = vsub.f32 %v8147, %v8151
        %v8153 = vmul.f32 %v8152, %v8152
        %v8154 = vsel %vm397, %v8153, 0.0
        %8155 = vadd.xlane.f32.xlu0 %v8154
        %v8156 = vpop.xlane.xlu0 %8155
        %v8157 = vmul.f32 %v8156, %v4165
        %v8158 = vadd.f32 %v8157, 1e-05
        %v8159 = vrsqrt.pop %v8158
        %v8160 = vmul.f32 %v8152, %v8159
        %v8161 = vlaneseq
        %v8162 = vshrl.u32 %v8161, 7
        %v8163 = vsub.s32 2, %v8162
        %v8164 = vrot.slane %v8126, %v8163
        %v8165 = vmul.f32 %v8160, %v8164
        %v8166 = vlaneseq
        %v8167 = vshrl.u32 %v8166, 7
        %v8168 = vsub.s32 3, %v8167
        %v8169 = vrot.slane %v8126, %v8168
        %v8170 = vadd.f32 %v8165, %v8169
        %s8171 = scalar_lea.vmem [#allocation7], 16
        %v8172 = vld [vmem:[%s8171] sm:$0xff]
        %v8173 = vld [vmem:[%s8171 + $0x8] sm:$0xff]
        %v8174 = vlaneseq
        %v8175 = vshrl.u32 %v8174, 7
        %v8176 = vsub.s32 1, %v8175
        %v8177 = vrot.slane %v8126, %v8176
        %v8179 = vsel %vm397, %v8170, 0
        %8181 = vmatprep.subr.mxu0 0.0
        %8182 = vmatpush1.msra.mxu0 %v8172
        %8183 = vmatprep.subr.mxu0 0.0
        %8184 = vmatpush1.msra.mxu0 %v8173
        %8185 = vmatprep.subr.mxu0 0.0
        %8186 = vmatpush1.msra.mxu0 0.0
        %8187 = vmatprep.subr.mxu0 0.0
        %8188 = vmatpush1.msra.mxu0 0.0
        %8189 = vmatprep.subr.mxu0 0.0
        %8190 = vmatpush1.msra.mxu0 0.0
        %8191 = vmatprep.subr.mxu0 0.0
        %8192 = vmatpush1.msra.mxu0 0.0
        %8193 = vmatprep.subr.mxu0 0.0
        %8194 = vmatpush1.msra.mxu0 0.0
        %8195 = vmatprep.subr.mxu0 0.0
        %8196 = vmatpush1.msra.mxu0 0.0
        %8197 = vmatprep.subr.mxu0 0.0
        %8198 = vmatpush1.msra.mxu0 0.0
        %8199 = vmatprep.subr.mxu0 0.0
        %8200 = vmatpush1.msra.mxu0 0.0
        %8201 = vmatprep.subr.mxu0 0.0
        %8202 = vmatpush1.msra.mxu0 0.0
        %8203 = vmatprep.subr.mxu0 0.0
        %8204 = vmatpush1.msra.mxu0 0.0
        %8205 = vmatprep.subr.mxu0 0.0
        %8206 = vmatpush1.msra.mxu0 0.0
        %8207 = vmatprep.subr.mxu0 0.0
        %8208 = vmatpush1.msra.mxu0 0.0
        %8209 = vmatprep.subr.mxu0 0.0
        %8210 = vmatpush1.msra.mxu0 0.0
        %8211 = vmatprep.subr.mxu0 0.0
        %8212 = vmatpush1.msra.mxu0 0.0
        %8213 = vmatprep.subr.mxu0 0.0
        %8214 = vmatpush1.msra.mxu0 0.0
        %8215 = vmatprep.subr.mxu0 0.0
        %8216 = vmatpush1.msra.mxu0 0.0
        %8217 = vmatprep.subr.mxu0 0.0
        %8218 = vmatpush1.msra.mxu0 0.0
        %8219 = vmatprep.subr.mxu0 0.0
        %8220 = vmatpush1.msra.mxu0 0.0
        %8221 = vmatprep.subr.mxu0 0.0
        %8222 = vmatpush1.msra.mxu0 0.0
        %8223 = vmatprep.subr.mxu0 0.0
        %8224 = vmatpush1.msra.mxu0 0.0
        %8225 = vmatprep.subr.mxu0 0.0
        %8226 = vmatpush1.msra.mxu0 0.0
        %8227 = vmatprep.subr.mxu0 0.0
        %8228 = vmatpush1.msra.mxu0 0.0
        %8229 = vmatprep.subr.mxu0 0.0
        %8230 = vmatpush1.msra.mxu0 0.0
        %8231 = vmatprep.subr.mxu0 0.0
        %8232 = vmatpush1.msra.mxu0 0.0
        %8233 = vmatprep.subr.mxu0 0.0
        %8234 = vmatpush1.msra.mxu0 0.0
        %8235 = vmatprep.subr.mxu0 0.0
        %8236 = vmatpush1.msra.mxu0 0.0
        %8237 = vmatprep.subr.mxu0 0.0
        %8238 = vmatpush1.msra.mxu0 0.0
        %8239 = vmatprep.subr.mxu0 0.0
        %8240 = vmatpush1.msra.mxu0 0.0
        %8241 = vmatprep.subr.mxu0 0.0
        %8242 = vmatpush1.msra.mxu0 0.0
        %8243 = vmatprep.subr.mxu0 0.0
        %8244 = vmatpush1.msra.mxu0 0.0
        %8245 = vmatprep.mubr.f32.mxu0 0.0
        %8246 = vmatmul.mubr.f32.gmra.mrb[0].mxu0 %v8179
        %v8247 = vpop.f32.mrb[0].mxu0
        %v8248 = vadd.f32 %v8177, %v8247
        %v8249 = vpop.f32.mrb[0].mxu0
        %8250 = vdwg.mxu0
        %v8251 = vadd.f32 %v8170, %v8248
        %v8252 = vsel %vm397, %v8251, 0.0
        %8253 = vadd.xlane.f32.xlu0 %v8252
        %v8254 = vpop.xlane.xlu0 %8253
        %v8255 = vmul.f32 %v8254, %v4165
        %v8256 = vsub.f32 %v8251, %v8255
        %v8257 = vmul.f32 %v8256, %v8256
        %v8258 = vsel %vm397, %v8257, 0.0
        %8259 = vadd.xlane.f32.xlu0 %v8258
        %v8260 = vpop.xlane.xlu0 %8259
        %v8261 = vmul.f32 %v8260, %v4165
        %v8262 = vadd.f32 %v8261, 1e-05
        %v8263 = vrsqrt.pop %v8262
        %v8264 = vmul.f32 %v8256, %v8263
        %v8265 = vlaneseq
        %v8266 = vshrl.u32 %v8265, 7
        %v8267 = vsub.s32 4, %v8266
        %v8268 = vrot.slane %v8126, %v8267
        %v8269 = vmul.f32 %v8264, %v8268
        %v8270 = vlaneseq
        %v8271 = vshrl.u32 %v8270, 7
        %v8272 = vsub.s32 5, %v8271
        %v8273 = vrot.slane %v8126, %v8272
        %v8274 = vadd.f32 %v8269, %v8273
        %8275 = vst.msk [vmem:[%s322] sm:$0xff] %vm397, %v8274
        %s8276 = sand.u32 %s185, 1
        %s8277 = scalar_lea.sflag [#allocation4], %s8276
        %s8278 = sand.u32 %s185, 1
        %s8279 = smul.addr %s8278, 8
        %s8280 = scalar_lea.vmem [#allocation8], %s8279
        // Predicated region
        $region61: #{isab_forward.1} parent=47 // pred_check
          %p8281 = pneg %p195
        $region62: #{isab_forward.1} parent=47 // pred_check_branch
          %8283 = sbr.rel (%p8281) target = $region64
        $region63: #{isab_forward.1} parent=47 // pred_region
          %s8285 = ssub.s32 128, 128
          %8286 = vsyncadd %s8277, %s8285
          %s8287 = smul.addr %s25, 128
          %s8288 = scalar_lea.hbm %s7, %s8287
          %s8290 = sshll.u32 %s8280, 4
          %s8291 = int_to_ptr.vmem [resolvable:$true] %s8290
          %8293 = dma.vmem_to_hbm [thread:$0]  %s8291, 128, %s8288, %s8277
        $region64: #{isab_forward.1} parent=47 // pred_fallthru
          _
      $region48: #{isab_forward.1} parent=5 // pred_fallthru
        _
      %p8294 = scmp.le.s32.totalorder 2, %s20
      // Predicated region
      $region65: #{isab_forward.1} parent=5 // pred_check
        %p8295 = pneg %p8294
      $region66: #{isab_forward.1} parent=5 // pred_check_branch
        %8297 = sbr.rel (%p8295) target = $region68
      $region67: #{isab_forward.1} parent=5 // pred_region
        %s8298 = ssub.s32 %s20, 2
        // Predicated region
        $region69: #{isab_forward.1} parent=67 // pred_check
          %p8299 = pneg %p201
        $region70: #{isab_forward.1} parent=67 // pred_check_branch
          %8301 = sbr.rel (%p8299) target = $region72
        $region71: #{isab_forward.1} parent=67 // pred_region
          %s8302 = sand.u32 %s186, 1
          %s8303 = scalar_lea.sflag [#allocation4], %s8302
          %s8304 = sand.u32 %s186, 1
          %s8305 = smul.addr %s8304, 8
          %s8306 = scalar_lea.vmem [#allocation8], %s8305
          %8307 = dma.done %s8303, 128
        $region72: #{isab_forward.1} parent=67 // pred_fallthru
          _
      $region68: #{isab_forward.1} parent=5 // pred_fallthru
        _
    $region6: #{isab_forward.1} parent=1 // loop_footer
      %s24 = sadd.s32 1, %s20
    $region7: #{isab_forward.1} parent=1 // loop_footer_branch
      %19 = sbr.rel target = $region3
    $region8: #{isab_forward.1} parent=1 // loop_exit
      _
    %8308 = vsyncpa [#allocation3], 1
    %s8309 = scalar_lea.sflag [#allocation3], 1
    %8310 = vsyncpa %s8309, 1
    %8311 = vsyncpa [#allocation6], 1
    %8312 = vsyncpa [#allocation4], 1
    %s8313 = scalar_lea.sflag [#allocation4], 1
    %8314 = vsyncpa %s8313, 1

</llo_original>
